<compile_context>
chip_gen: v7x
topology: tpu7x:2x2x1
jax: 0.10.0
libtpu: 0.0.40
codegen_flags: <defaults>
</compile_context>

<pallas_src>
import math

import jax
import jax.numpy as jnp
from jax.experimental import pallas as pl
from jax.experimental.pallas import tpu as pltpu

NEG_SLOPE = 0.01        # F.leaky_relu default negative_slope
LANES = 128             # TPU vreg lane width


def _round_up(x, m):
    return (x + m - 1) // m * m


def _cdiv(a, b):
    return -(-a // b)


def _vmem_capacity_bytes():
    try:
        cap = int(pltpu.get_tpu_info().vmem_capacity_bytes)
        if cap > 0:
            return cap
    except Exception:
        pass
    return 64 * 1024 * 1024        # v7x-safe fallback


def _make_conv_kernel(KH, KW, stride, th, Wo, Cin):
    """One (batch*row-tile, cout-tile) block: im2col slab + single MXU matmul."""

    def kernel(x_ref, w_ref, o_ref, slab_ref):
        # x_ref:    (1, span, W, Cin)    input row window of this tile
        # w_ref:    (KH*KW*Cin, TN)      weight slab for this Cout tile
        # o_ref:    (1, th*Wo, TN)       flat output rows (lane-dense)
        # slab_ref: (th*Wo, KH*KW*Cin)   VMEM scratch, persists across c
        c = pl.program_id(1)

        @pl.when(c == 0)                          # slab depends only on b
        def _build_slab():
            for kh in range(KH):                  # static, KH*KW small
                for kw in range(KW):
                    if stride == 1:
                        patch = x_ref[0, kh:kh + th, kw:kw + Wo, :]
                    else:
                        # strided ref read (sublane / outer dims only; lane
                        # dim Cin stays contiguous).
                        patch = x_ref[0,
                                      pl.ds(kh, th, stride=stride),
                                      pl.ds(kw, Wo, stride=stride), :]
                    col = (kh * KW + kw) * Cin
                    slab_ref[:, col:col + Cin] = patch.reshape(th * Wo, Cin)

        # Single matmul, K = KH*KW*Cin; accumulation stays in the MXU (f32).
        y = jnp.dot(slab_ref[...], w_ref[...],
                    preferred_element_type=jnp.float32)
        y = jnp.maximum(y, NEG_SLOPE * y)          # leaky_relu in f32
        o_ref[0, :, :] = y.astype(o_ref.dtype)

    return kernel


def basic_conv2d(x_nchw, weight_oihw, *, stride=1, padding=0,
                 compute_dtype=None, target_rows=1024,
                 vmem_budget_bytes=None):
    """nn.Conv2d(bias=False, stride=, padding=) + F.leaky_relu.

    NCHW / OIHW in, NCHW out (PyTorch layout). dilation / groups unsupported.
    """
    N, Cin, H, W = map(int, x_nchw.shape)
    Cout, Cin_w, KH, KW = map(int, weight_oihw.shape)
    assert Cin == Cin_w, "grouped conv not supported"
    assert isinstance(stride, int) and stride >= 1
    out_dtype = x_nchw.dtype
    if compute_dtype is None:
        compute_dtype = x_nchw.dtype
    in_bytes = jnp.dtype(compute_dtype).itemsize
    out_bytes = jnp.dtype(out_dtype).itemsize

    # ---- NCHW -> NHWC (+ spatial zero padding, mirrors Conv2d padding=) ----
    x = jnp.transpose(x_nchw, (0, 2, 3, 1)).astype(compute_dtype)
    if padding:
        ph, pw = (padding, padding) if isinstance(padding, int) else padding
        x = jnp.pad(x, ((0, 0), (ph, ph), (pw, pw), (0, 0)))
        H, W = H + 2 * ph, W + 2 * pw
    Ho = (H - KH) // stride + 1
    Wo = (W - KW) // stride + 1
    assert Ho > 0 and Wo > 0

    # ---- weights: OIHW -> (KH*KW*Cin, Coutp), Coutp lane-dense (128x) ------
    Kc = KH * KW * Cin
    Coutp = _round_up(Cout, LANES)
    w = jnp.transpose(weight_oihw, (2, 3, 1, 0)).astype(compute_dtype)
    if Coutp != Cout:
        w = jnp.pad(w, ((0, 0), (0, 0), (0, 0), (0, Coutp - Cout)))
    w = w.reshape(Kc, Coutp)                      # row = kh*KW*Cin + kw*Cin + ci

    # ---- VMEM budget / tile selection ---------------------------------------
    cap = _vmem_capacity_bytes()                  # 64 MiB on v7x, 128 MiB v5e/v6e
    budget = int(vmem_budget_bytes) if vmem_budget_bytes else int(cap * 0.75)

    # Cout tile TN (lane width of the weight / output blocks).
    tn_cands = [t for t in (512, 256, 128) if Coutp % t == 0] or [Coutp]
    TN = Coutp if Coutp <= 512 else tn_cands[0]
    for t in [TN] + [t for t in tn_cands if t < TN]:
        TN = t
        if 2 * _round_up(Kc, 8) * TN * in_bytes <= budget // 3:
            break
    CT = Coutp // TN

    def footprint(th_):
        span_ = (th_ - 1) * stride + KH
        m = _round_up(th_ * Wo, 8)
        xb = span_ * _round_up(W, 8) * _round_up(Cin, LANES) * in_bytes
        wb = _round_up(Kc, 8) * TN * in_bytes
        ob = m * TN * out_bytes
        slab = m * _round_up(Kc, LANES) * in_bytes
        return 2 * xb + 2 * wb + 2 * ob + slab    # double-buffered blocks + scratch

    # Output-row tile th: >= target_rows GEMM rows per step when possible,
    # th*Wo a sublane (8) multiple when possible, shrink to fit the budget.
    th = max(1, min(Ho, _cdiv(target_rows, Wo)))
    g = 8 // math.gcd(Wo, 8)
    if g < th < Ho:
        th = (th // g) * g
    while th > 1 and footprint(th) > budget:
        th = max(1, th // 2)
        if g < th < Ho:
            th = (th // g) * g
    # TODO(synk): if footprint(1) still exceeds the budget (giant W*Cin rows),
    # fall back to W or Cin tiling instead of relying on the compiler to cope.

    RT = _cdiv(Ho, th)
    Ho_pad = RT * th
    span = (th - 1) * stride + KH
    H_need = (Ho_pad - 1) * stride + KH
    if H_need > H:
        # extra zero rows only feed padded output rows, cropped below.
        x = jnp.pad(x, ((0, 0), (0, H_need - H), (0, 0), (0, 0)))

    # Per-row-tile input windows (KH-1 row halo duplicated in HBM) so VMEM
    # holds 2 x a window instead of 2 x the whole image.
    x_tiles = jnp.stack(
        [jax.lax.slice_in_dim(x, r * th * stride, r * th * stride + span, axis=1)
         for r in range(RT)],
        axis=1).reshape(N * RT, span, W, Cin)

    kernel = _make_conv_kernel(KH, KW, stride, th, Wo, Cin)

    B = N * RT
    flops = 2 * B * th * Wo * Kc * Coutp
    bytes_accessed = (x_tiles.size * in_bytes + w.size * in_bytes
                      + B * th * Wo * Coutp * out_bytes)
    vmem_limit = int(min(cap * 0.85,
                         max(budget, footprint(th) * 1.25, 32 * 1024 * 1024)))

    out_p = pl.pallas_call(
        kernel,
        out_shape=jax.ShapeDtypeStruct((B, th * Wo, Coutp), out_dtype),
        grid=(B, CT),
        in_specs=[
            # one row window per (batch, row-tile); constant across the Cout axis
            pl.BlockSpec((1, span, W, Cin), lambda b, c: (b, 0, 0, 0)),
            # weight slab: constant across b, streams across Cout tiles
            pl.BlockSpec((Kc, TN), lambda b, c: (0, c)),
        ],
        out_specs=pl.BlockSpec((1, th * Wo, TN), lambda b, c: (b, 0, c)),
        scratch_shapes=[pltpu.VMEM((th * Wo, Kc), compute_dtype)],
        compiler_params=pltpu.CompilerParams(
            # b shards across megacore / dual-TC; the Cout axis is "arbitrary"
            # because the im2col slab is cached across it.
            dimension_semantics=("parallel", "arbitrary"),
            vmem_limit_bytes=vmem_limit,
        ),
        cost_estimate=pl.CostEstimate(
            flops=flops, transcendentals=0, bytes_accessed=bytes_accessed),
    )(x_tiles, w)

    out = out_p.reshape(N, Ho_pad, Wo, Coutp)[:, :Ho, :, :Cout]
    return jnp.transpose(out, (0, 3, 1, 2))        # NHWC -> NCHW


if __name__ == "__main__":
    key = jax.random.PRNGKey(0)
    kx, kw_key = jax.random.split(key)

    # BasicConv2d(in_channels=4, out_channels=8, kernel_size=3)
    N, Cin, H, W = 2, 4, 16, 16
    Cout, KH, KW = 8, 3, 3

    x = jax.random.normal(kx, (N, Cin, H, W), dtype=jnp.float32)
    fan_in = Cin * KH * KW
    bound = (1.0 / fan_in) ** 0.5
    weight = jax.random.uniform(
        kw_key, (Cout, Cin, KH, KW), minval=-bound, maxval=bound,
        dtype=jnp.float32)

    def torch_ref(xv, wv, stride=1, padding=0):
        y = jax.lax.conv_general_dilated(
            xv, wv, window_strides=(stride, stride),
            padding=[(padding, padding), (padding, padding)],
            dimension_numbers=("NCHW", "OIHW", "NCHW"),
            precision=jax.lax.Precision.HIGHEST)
        return jnp.where(y > 0, y, NEG_SLOPE * y)

    # 1) f32, single row tile per image.
    ref = torch_ref(x, weight)
    y = jax.block_until_ready(basic_conv2d(x, weight))
    assert y.shape == (N, Cout, H - KH + 1, W - KW + 1), y.shape
    assert jnp.allclose(y, ref, atol=2e-3, rtol=2e-3), float(
        jnp.max(jnp.abs(y - ref)))

    # 2) several row tiles per image (exercises the halo windows, the
    #    zero-padded tail tile, and the cached-slab / Cout-axis machinery).
    y_t = jax.block_until_ready(basic_conv2d(x, weight, target_rows=64))
    assert jnp.allclose(y_t, ref, atol=2e-3, rtol=2e-3), float(
        jnp.max(jnp.abs(y_t - ref)))

    # 3) padding=1 (Conv2d padding kwarg path; handled in the wrapper).
    ref_p = torch_ref(x, weight, padding=1)
    y_p = jax.block_until_ready(basic_conv2d(x, weight, padding=1))
    assert y_p.shape == ref_p.shape, (y_p.shape, ref_p.shape)
    assert jnp.allclose(y_p, ref_p, atol=2e-3, rtol=2e-3), float(
        jnp.max(jnp.abs(y_p - ref_p)))

    # 4) bf16 operands / f32 accumulation (v6e / v7x MXU path); compare against
    #    an f32 reference evaluated on bf16-rounded inputs.
    y_bf = jax.block_until_ready(
        basic_conv2d(x, weight, compute_dtype=jnp.bfloat16))
    ref_bf = torch_ref(x.astype(jnp.bfloat16).astype(jnp.float32),
                       weight.astype(jnp.bfloat16).astype(jnp.float32))
    assert y_bf.dtype == jnp.float32
    assert jnp.allclose(y_bf, ref_bf, atol=2e-2, rtol=2e-2), float(
        jnp.max(jnp.abs(y_bf - ref_bf)))

    print("KERNEL_OK")
</pallas_src>

<mosaic_0001>
module attributes {stable_mosaic.version = 11 : i64} {
  func.func @kernel(%arg0: i32, %arg1: i32, %arg2: memref<1x16x16x4xf32, #tpu.memory_space<vmem>>, %arg3: memref<36x128xf32, #tpu.memory_space<vmem>>, %arg4: memref<1x196x128xf32, #tpu.memory_space<vmem>>, %arg5: memref<196x36xf32, #tpu.memory_space<vmem>>) attributes {dimension_semantics = [#tpu.dimension_semantics<parallel>, #tpu.dimension_semantics<arbitrary>], iteration_bounds = array<i64: 2, 1>, scalar_prefetch = 0 : i64, scratch_operands = 1 : i64, tpu.core_type = #tpu.core_type<tc>, window_params = [{transform_indices = @transform_0, window_bounds = array<i64: 1, 16, 16, 4>}, {transform_indices = @transform_1, window_bounds = array<i64: 36, 128>}, {transform_indices = @transform_2, window_bounds = array<i64: 1, 196, 128>}]} {
    %c0_i32 = arith.constant 0 : i32
    %0 = arith.cmpi eq, %arg1, %c0_i32 : i32
    %1 = arith.extui %0 : i1 to i32
    %c0_i32_0 = arith.constant 0 : i32
    %2 = arith.cmpi ne, %1, %c0_i32_0 : i32
    scf.if %2 {
      %c0_8 = arith.constant 0 : index
      %c0_9 = arith.constant 0 : index
      %c0_10 = arith.constant 0 : index
      %c0_11 = arith.constant 0 : index
      %12 = vector.load %arg2[%c0_8, %c0_9, %c0_10, %c0_11] : memref<1x16x16x4xf32, #tpu.memory_space<vmem>>, vector<1x14x14x4xf32>
      %13 = vector.shape_cast %12 : vector<1x14x14x4xf32> to vector<14x14x4xf32>
      %14 = vector.shape_cast %13 : vector<14x14x4xf32> to vector<196x4xf32>
      %c0_12 = arith.constant 0 : index
      %c0_13 = arith.constant 0 : index
      %15 = vector.load %arg5[%c0_12, %c0_13] : memref<196x36xf32, #tpu.memory_space<vmem>>, vector<196x4xf32>
      tpu.vector_store %arg5[%c0_12, %c0_13], %14 {strides = array<i32>} : memref<196x36xf32, #tpu.memory_space<vmem>>, vector<196x4xf32>,
      %c0_14 = arith.constant 0 : index
      %c0_15 = arith.constant 0 : index
      %c1 = arith.constant 1 : index
      %c0_16 = arith.constant 0 : index
      %16 = vector.load %arg2[%c0_14, %c0_15, %c1, %c0_16] : memref<1x16x16x4xf32, #tpu.memory_space<vmem>>, vector<1x14x14x4xf32>
      %17 = vector.shape_cast %16 : vector<1x14x14x4xf32> to vector<14x14x4xf32>
      %18 = vector.shape_cast %17 : vector<14x14x4xf32> to vector<196x4xf32>
      %c0_17 = arith.constant 0 : index
      %c4 = arith.constant 4 : index
      %19 = vector.load %arg5[%c0_17, %c4] : memref<196x36xf32, #tpu.memory_space<vmem>>, vector<196x4xf32>
      tpu.vector_store %arg5[%c0_17, %c4], %18 {strides = array<i32>} : memref<196x36xf32, #tpu.memory_space<vmem>>, vector<196x4xf32>,
      %c0_18 = arith.constant 0 : index
      %c0_19 = arith.constant 0 : index
      %c2 = arith.constant 2 : index
      %c0_20 = arith.constant 0 : index
      %20 = vector.load %arg2[%c0_18, %c0_19, %c2, %c0_20] : memref<1x16x16x4xf32, #tpu.memory_space<vmem>>, vector<1x14x14x4xf32>
      %21 = vector.shape_cast %20 : vector<1x14x14x4xf32> to vector<14x14x4xf32>
      %22 = vector.shape_cast %21 : vector<14x14x4xf32> to vector<196x4xf32>
      %c0_21 = arith.constant 0 : index
      %c8 = arith.constant 8 : index
      %23 = vector.load %arg5[%c0_21, %c8] : memref<196x36xf32, #tpu.memory_space<vmem>>, vector<196x4xf32>
      tpu.vector_store %arg5[%c0_21, %c8], %22 {strides = array<i32>} : memref<196x36xf32, #tpu.memory_space<vmem>>, vector<196x4xf32>,
      %c0_22 = arith.constant 0 : index
      %c1_23 = arith.constant 1 : index
      %c0_24 = arith.constant 0 : index
      %c0_25 = arith.constant 0 : index
      %24 = vector.load %arg2[%c0_22, %c1_23, %c0_24, %c0_25] : memref<1x16x16x4xf32, #tpu.memory_space<vmem>>, vector<1x14x14x4xf32>
      %25 = vector.shape_cast %24 : vector<1x14x14x4xf32> to vector<14x14x4xf32>
      %26 = vector.shape_cast %25 : vector<14x14x4xf32> to vector<196x4xf32>
      %c0_26 = arith.constant 0 : index
      %c12 = arith.constant 12 : index
      %27 = vector.load %arg5[%c0_26, %c12] : memref<196x36xf32, #tpu.memory_space<vmem>>, vector<196x4xf32>
      tpu.vector_store %arg5[%c0_26, %c12], %26 {strides = array<i32>} : memref<196x36xf32, #tpu.memory_space<vmem>>, vector<196x4xf32>,
      %c0_27 = arith.constant 0 : index
      %c1_28 = arith.constant 1 : index
      %c1_29 = arith.constant 1 : index
      %c0_30 = arith.constant 0 : index
      %28 = vector.load %arg2[%c0_27, %c1_28, %c1_29, %c0_30] : memref<1x16x16x4xf32, #tpu.memory_space<vmem>>, vector<1x14x14x4xf32>
      %29 = vector.shape_cast %28 : vector<1x14x14x4xf32> to vector<14x14x4xf32>
      %30 = vector.shape_cast %29 : vector<14x14x4xf32> to vector<196x4xf32>
      %c0_31 = arith.constant 0 : index
      %c16 = arith.constant 16 : index
      %31 = vector.load %arg5[%c0_31, %c16] : memref<196x36xf32, #tpu.memory_space<vmem>>, vector<196x4xf32>
      tpu.vector_store %arg5[%c0_31, %c16], %30 {strides = array<i32>} : memref<196x36xf32, #tpu.memory_space<vmem>>, vector<196x4xf32>,
      %c0_32 = arith.constant 0 : index
      %c1_33 = arith.constant 1 : index
      %c2_34 = arith.constant 2 : index
      %c0_35 = arith.constant 0 : index
      %32 = vector.load %arg2[%c0_32, %c1_33, %c2_34, %c0_35] : memref<1x16x16x4xf32, #tpu.memory_space<vmem>>, vector<1x14x14x4xf32>
      %33 = vector.shape_cast %32 : vector<1x14x14x4xf32> to vector<14x14x4xf32>
      %34 = vector.shape_cast %33 : vector<14x14x4xf32> to vector<196x4xf32>
      %c0_36 = arith.constant 0 : index
      %c20 = arith.constant 20 : index
      %35 = vector.load %arg5[%c0_36, %c20] : memref<196x36xf32, #tpu.memory_space<vmem>>, vector<196x4xf32>
      tpu.vector_store %arg5[%c0_36, %c20], %34 {strides = array<i32>} : memref<196x36xf32, #tpu.memory_space<vmem>>, vector<196x4xf32>,
      %c0_37 = arith.constant 0 : index
      %c2_38 = arith.constant 2 : index
      %c0_39 = arith.constant 0 : index
      %c0_40 = arith.constant 0 : index
      %36 = vector.load %arg2[%c0_37, %c2_38, %c0_39, %c0_40] : memref<1x16x16x4xf32, #tpu.memory_space<vmem>>, vector<1x14x14x4xf32>
      %37 = vector.shape_cast %36 : vector<1x14x14x4xf32> to vector<14x14x4xf32>
      %38 = vector.shape_cast %37 : vector<14x14x4xf32> to vector<196x4xf32>
      %c0_41 = arith.constant 0 : index
      %c24 = arith.constant 24 : index
      %39 = vector.load %arg5[%c0_41, %c24] : memref<196x36xf32, #tpu.memory_space<vmem>>, vector<196x4xf32>
      tpu.vector_store %arg5[%c0_41, %c24], %38 {strides = array<i32>} : memref<196x36xf32, #tpu.memory_space<vmem>>, vector<196x4xf32>,
      %c0_42 = arith.constant 0 : index
      %c2_43 = arith.constant 2 : index
      %c1_44 = arith.constant 1 : index
      %c0_45 = arith.constant 0 : index
      %40 = vector.load %arg2[%c0_42, %c2_43, %c1_44, %c0_45] : memref<1x16x16x4xf32, #tpu.memory_space<vmem>>, vector<1x14x14x4xf32>
      %41 = vector.shape_cast %40 : vector<1x14x14x4xf32> to vector<14x14x4xf32>
      %42 = vector.shape_cast %41 : vector<14x14x4xf32> to vector<196x4xf32>
      %c0_46 = arith.constant 0 : index
      %c28 = arith.constant 28 : index
      %43 = vector.load %arg5[%c0_46, %c28] : memref<196x36xf32, #tpu.memory_space<vmem>>, vector<196x4xf32>
      tpu.vector_store %arg5[%c0_46, %c28], %42 {strides = array<i32>} : memref<196x36xf32, #tpu.memory_space<vmem>>, vector<196x4xf32>,
      %c0_47 = arith.constant 0 : index
      %c2_48 = arith.constant 2 : index
      %c2_49 = arith.constant 2 : index
      %c0_50 = arith.constant 0 : index
      %44 = vector.load %arg2[%c0_47, %c2_48, %c2_49, %c0_50] : memref<1x16x16x4xf32, #tpu.memory_space<vmem>>, vector<1x14x14x4xf32>
      %45 = vector.shape_cast %44 : vector<1x14x14x4xf32> to vector<14x14x4xf32>
      %46 = vector.shape_cast %45 : vector<14x14x4xf32> to vector<196x4xf32>
      %c0_51 = arith.constant 0 : index
      %c32 = arith.constant 32 : index
      %47 = vector.load %arg5[%c0_51, %c32] : memref<196x36xf32, #tpu.memory_space<vmem>>, vector<196x4xf32>
      tpu.vector_store %arg5[%c0_51, %c32], %46 {strides = array<i32>} : memref<196x36xf32, #tpu.memory_space<vmem>>, vector<196x4xf32>,
    } else {
    }
    %c0 = arith.constant 0 : index
    %c0_1 = arith.constant 0 : index
    %3 = vector.load %arg5[%c0, %c0_1] : memref<196x36xf32, #tpu.memory_space<vmem>>, vector<196x36xf32>
    %c0_2 = arith.constant 0 : index
    %c0_3 = arith.constant 0 : index
    %4 = vector.load %arg3[%c0_2, %c0_3] : memref<36x128xf32, #tpu.memory_space<vmem>>, vector<36x128xf32>
    %cst = arith.constant dense<0.000000e+00> : vector<196x128xf32>
    %5 = tpu.matmul %3, %4, %cst {dimension_numbers = #tpu.dot_dimension_numbers<[1], [0], [0], [1], [0, 0, 1, 1], [], []>} : vector<196x36xf32>, vector<36x128xf32>, vector<196x128xf32> -> vector<196x128xf32>
    %cst_4 = arith.constant 0.00999999977 : f32
    %6 = vector.broadcast %cst_4 : f32 to vector<196x128xf32>
    %7 = arith.mulf %6, %5 : vector<196x128xf32>
    %8 = arith.maximumf %5, %7 : vector<196x128xf32>
    %c0_5 = arith.constant 0 : index
    %c0_6 = arith.constant 0 : index
    %c0_7 = arith.constant 0 : index
    %9 = vector.load %arg4[%c0_5, %c0_6, %c0_7] : memref<1x196x128xf32, #tpu.memory_space<vmem>>, vector<1x196x128xf32>
    %10 = vector.shape_cast %9 : vector<1x196x128xf32> to vector<196x128xf32>
    %11 = vector.shape_cast %8 : vector<196x128xf32> to vector<1x196x128xf32>
    tpu.vector_store %arg4[%c0_5, %c0_6, %c0_7], %11 {strides = array<i32>} : memref<1x196x128xf32, #tpu.memory_space<vmem>>, vector<1x196x128xf32>,
    return
  }
  func.func @transform_0(%arg0: i32, %arg1: i32) -> (i32, i32, i32, i32) {
    %c0_i32 = arith.constant 0 : i32
    %c0_i32_0 = arith.constant 0 : i32
    %c0_i32_1 = arith.constant 0 : i32
    %c0_i32_2 = arith.constant 0 : i32
    return %arg0, %c0_i32, %c0_i32_0, %c0_i32_1 : i32, i32, i32, i32
  }
  func.func @transform_1(%arg0: i32, %arg1: i32) -> (i32, i32) {
    %c0_i32 = arith.constant 0 : i32
    %c0_i32_0 = arith.constant 0 : i32
    return %c0_i32, %arg1 : i32, i32
  }
  func.func @transform_2(%arg0: i32, %arg1: i32) -> (i32, i32, i32) {
    %c0_i32 = arith.constant 0 : i32
    %c0_i32_0 = arith.constant 0 : i32
    return %arg0, %c0_i32, %arg1 : i32, i32, i32
  }
}

</mosaic_0001>

<llo_original>
// kernel: tpu_custom_call.1
$region0: #{tpu_custom_call.1}
  #allocation0 [shape = 'u32[]', space=smem, size = 0x4, offset = 0x4, fixed_abs, tag = 'smem constant byte address 0x4 - core index']
  #allocation1 [shape = 'u32[144,128]{1,0:T(1,128)}', space=vmem, size = 0x12000, scoped, tag = 'internal scratch']
  #allocation2 [shape = 'f32[196,36]{1,0:T(8,128)}', space=vmem, size = 0x19000, scoped, tag = 'scratch operand']
  %s0 = inlined_call_operand.vmem [shape: f32[2,16,16,4], index: 0, kind: input, shape index: {}]
  %s1 = inlined_call_operand.vmem [shape: f32[36,128], index: 1, kind: input, shape index: {}]
  %s2 = inlined_call_operand.vmem [shape: f32[2,196,128], index: 2, kind: output, shape index: {}]
  %s3 = sld [smem:[#allocation0]]
  $region45: #{tpu_custom_call.1} parent=0
    _
  %s5 = ssub.s32 1, %s3
  %s6 = scalar_select 0, %s5, %s3
  loop: start=0, step=1, limit=4
  $region2: #{tpu_custom_call.1} parent=0 // loop_pre_header
    _
  $region3: #{tpu_custom_call.1} parent=0 // loop_header
    %s8 = sphi 0, %s12
    %p9 = scmp.ge.s32.totalorder %s8, 4
    %s15 = sphi 0, %s27
    %s16 = sphi 0, %s23
    %s17 = sphi 0, %s15
    %s18 = sphi 0, %s16
    %s19 = sphi 0, %s17
    %s20 = sphi 0, %s18
    %s30 = sphi 0, %s32
    %s33 = sphi 0, %s30
    %s34 = sphi 0, %s33
    %s50 = sphi 0, %s34
    %s56 = sphi 0, %s58
    %s59 = sphi 0, %s56
    %s60 = sphi 0, %s59
    %s76 = sphi 0, %s60
    %s84 = sphi 0, %s86
    %s87 = sphi 0, %s84
    %s88 = sphi 0, %s87
    %s104 = sphi 0, %s88
  $region4: #{tpu_custom_call.1} parent=0 // loop_header_branch
    %11 = sbr.rel (%p9) target = $region8
  $region5: #{tpu_custom_call.1} parent=0 // loop_body
    %s13 = ssub.s32 %s8, 1
    %s14 = ssub.s32 %s8, 2
    %s21 = sadd.s32 1, %s16
    %p22 = scmp.ge.s32.totalorder %s21, 1
    %s23 = scalar_select %p22, 0, %s21
    %s24 = sadd.s32 1, %s15
    %s25 = scalar_select %p22, %s24, %s15
    %p26 = scmp.ge.s32.totalorder %s25, 2
    %s27 = scalar_select %p26, 0, %s25
    %s28 = ssub.s32 %s15, %s27
    %p29 = scmp.eq.s32.totalorder %s28, 0
    %s31 = sadd.s32 %s30, 1
    %s32 = scalar_select %p29, %s30, %s31
    %p35 = pneg %p29
    %p36 = scmp.eq.s32.totalorder %s8, 1
    %p37 = por %p35, %p36
    %p38 = scmp.ne.s32.totalorder %s30, %s33
    %p39 = scmp.eq.s32.totalorder %s8, 0
    %p40 = por %p38, %p39
    %p41 = scmp.ne.s32.totalorder %s30, %s33
    %p42 = scmp.eq.s32.totalorder %s13, 1
    %p43 = por %p41, %p42
    %p44 = scmp.ne.s32.totalorder %s33, %s34
    %p45 = scmp.eq.s32.totalorder %s13, 0
    %p46 = por %p44, %p45
    %p47 = scmp.ne.s32.totalorder %s33, %s34
    %p48 = scmp.eq.s32.totalorder %s14, 1
    %p49 = por %p47, %p48
    %p51 = scmp.ne.s32.totalorder %s34, %s50
    %p52 = scmp.eq.s32.totalorder %s14, 0
    %p53 = por %p51, %p52
    %s54 = ssub.s32 %s16, %s23
    %p55 = scmp.eq.s32.totalorder %s54, 0
    %s57 = sadd.s32 %s56, 1
    %s58 = scalar_select %p55, %s56, %s57
    %p61 = pneg %p55
    %p62 = scmp.eq.s32.totalorder %s8, 1
    %p63 = por %p61, %p62
    %p64 = scmp.ne.s32.totalorder %s56, %s59
    %p65 = scmp.eq.s32.totalorder %s8, 0
    %p66 = por %p64, %p65
    %p67 = scmp.ne.s32.totalorder %s56, %s59
    %p68 = scmp.eq.s32.totalorder %s13, 1
    %p69 = por %p67, %p68
    %p70 = scmp.ne.s32.totalorder %s59, %s60
    %p71 = scmp.eq.s32.totalorder %s13, 0
    %p72 = por %p70, %p71
    %p73 = scmp.ne.s32.totalorder %s59, %s60
    %p74 = scmp.eq.s32.totalorder %s14, 1
    %p75 = por %p73, %p74
    %p77 = scmp.ne.s32.totalorder %s60, %s76
    %p78 = scmp.eq.s32.totalorder %s14, 0
    %p79 = por %p77, %p78
    %s80 = ssub.s32 %s15, %s27
    %s81 = ssub.s32 %s16, %s23
    %s82 = sor.u32 %s80, %s81
    %p83 = scmp.eq.s32.totalorder %s82, 0
    %s85 = sadd.s32 %s84, 1
    %s86 = scalar_select %p83, %s84, %s85
    %p89 = pneg %p83
    %p90 = scmp.eq.s32.totalorder %s8, 1
    %p91 = por %p89, %p90
    %p92 = scmp.ne.s32.totalorder %s84, %s87
    %p93 = scmp.eq.s32.totalorder %s8, 0
    %p94 = por %p92, %p93
    %p95 = scmp.ne.s32.totalorder %s84, %s87
    %p96 = scmp.eq.s32.totalorder %s13, 1
    %p97 = por %p95, %p96
    %p98 = scmp.ne.s32.totalorder %s87, %s88
    %p99 = scmp.eq.s32.totalorder %s13, 0
    %p100 = por %p98, %p99
    %p101 = scmp.ne.s32.totalorder %s87, %s88
    %p102 = scmp.eq.s32.totalorder %s14, 1
    %p103 = por %p101, %p102
    %p105 = scmp.ne.s32.totalorder %s88, %s104
    %p106 = scmp.eq.s32.totalorder %s14, 0
    %p107 = por %p105, %p106
    %p108 = scmp.le.s32.totalorder 1, %s8
    %p109 = scmp.lt.s32.totalorder %s8, 3
    %p110 = pnand %p108, %p109
    %p111 = pneg %p110
    // Predicated region
    $region9: #{tpu_custom_call.1} parent=5 // pred_check
      _
    $region10: #{tpu_custom_call.1} parent=5 // pred_check_branch
      %113 = sbr.rel (%p110) target = $region12
    $region11: #{tpu_custom_call.1} parent=5 // pred_region
      %s114 = ssub.s32 %s8, 1
      // Predicated region
      $region13: #{tpu_custom_call.1} parent=11 // pred_check
        %p115 = pneg %p72
      $region14: #{tpu_custom_call.1} parent=11 // pred_check_branch
        %117 = sbr.rel (%p115) target = $region16
      $region15: #{tpu_custom_call.1} parent=11 // pred_region
        %p118 = scmp.lt.s32.totalorder %s18, 0
        %s119 = scalar_select %p118, %s18, 0
        %s120 = smul.addr %s119, 8
        %s121 = scalar_lea.vmem %s1, %s120
      $region16: #{tpu_custom_call.1} parent=11 // pred_fallthru
        _
    $region12: #{tpu_custom_call.1} parent=5 // pred_fallthru
      _
    %p122 = scmp.lt.s32.totalorder %s8, 2
    // Predicated region
    $region17: #{tpu_custom_call.1} parent=5 // pred_check
      %p123 = pneg %p122
    $region18: #{tpu_custom_call.1} parent=5 // pred_check_branch
      %125 = sbr.rel (%p123) target = $region20
    $region19: #{tpu_custom_call.1} parent=5 // pred_region
      // Predicated region
      $region21: #{tpu_custom_call.1} parent=19 // pred_check
        %p126 = pneg %p40
      $region22: #{tpu_custom_call.1} parent=19 // pred_check_branch
        %128 = sbr.rel (%p126) target = $region24
      $region23: #{tpu_custom_call.1} parent=19 // pred_region
        %p129 = scmp.lt.s32.totalorder %s15, 1
        %s130 = scalar_select %p129, %s15, 1
        %s131 = smul.addr %s130, 32
        %s132 = smul.addr %s131, 8
        %s133 = scalar_lea.vmem %s0, %s132
      $region24: #{tpu_custom_call.1} parent=19 // pred_fallthru
        _
    $region20: #{tpu_custom_call.1} parent=5 // pred_fallthru
      _
    %p134 = scmp.le.s32.totalorder 1, %s8
    %p135 = scmp.lt.s32.totalorder %s8, 3
    %p136 = pnand %p134, %p135
    %p137 = pneg %p136
    // Predicated region
    $region25: #{tpu_custom_call.1} parent=5 // pred_check
      _
    $region26: #{tpu_custom_call.1} parent=5 // pred_check_branch
      %139 = sbr.rel (%p136) target = $region28
    $region27: #{tpu_custom_call.1} parent=5 // pred_region
      %s140 = ssub.s32 %s8, 1
      %p141 = scmp.lt.s32.totalorder %s17, 1
      %s142 = scalar_select %p141, %s17, 1
      %s143 = smul.addr %s142, 32
      %s144 = smul.addr %s143, 8
      %s145 = scalar_lea.vmem %s0, %s144
      %p146 = pneg %p46
      %p147 = pneg %p43
      %p148 = scmp.lt.s32.totalorder %s18, 0
      %s149 = scalar_select %p148, %s18, 0
      %s150 = smul.addr %s149, 8
      %s151 = scalar_lea.vmem %s1, %s150
      %p152 = pneg %p72
      %p153 = pneg %p69
      %p154 = pneg %p100
      %p155 = pneg %p97
      %p156 = scmp.lt.s32.totalorder %s17, 1
      %s157 = scalar_select %p156, %s17, 1
      %p158 = scmp.lt.s32.totalorder %s18, 0
      %s159 = scalar_select %p158, %s18, 0
      %s160 = smul.addr %s157, 25
      %s161 = sadd.s32 %s159, %s160
      %s162 = smul.addr %s161, 8
      %s163 = scalar_lea.vmem %s2, %s162
      %p164 = scmp.lt.s32.totalorder %s17, 1
      %s165 = scalar_select %p164, %s17, 1
      %s166 = smul.addr %s165, 32
      %s167 = smul.addr %s166, 8
      %s168 = scalar_lea.vmem %s0, %s167
      %p169 = scmp.lt.s32.totalorder %s18, 0
      %s170 = scalar_select %p169, %s18, 0
      %s171 = smul.addr %s170, 8
      %s172 = scalar_lea.vmem %s1, %s171
      %p173 = scmp.lt.s32.totalorder %s17, 1
      %s174 = scalar_select %p173, %s17, 1
      %p175 = scmp.lt.s32.totalorder %s18, 0
      %s176 = scalar_select %p175, %s18, 0
      %s177 = smul.addr %s174, 25
      %s178 = sadd.s32 %s176, %s177
      %s179 = smul.addr %s178, 8
      %s180 = scalar_lea.vmem %s2, %s179
      %p181 = scmp.eq.s32.totalorder %s18, 0
      // Predicated region
      $region29: #{tpu_custom_call.1} parent=27 // pred_check
        %p182 = pneg %p181
      $region30: #{tpu_custom_call.1} parent=27 // pred_check_branch
        %184 = sbr.rel (%p182) target = $region32
      $region31: #{tpu_custom_call.1} parent=27 // pred_region
        %v185 = vld [vmem:[%s168] sm:$0xff]
        %v186 = vld [vmem:[%s168 + $0x8] sm:$0x3f]
        %v187 = vld [vmem:[%s168 + $0x10] sm:$0xff]
        %v188 = vld [vmem:[%s168 + $0x18] sm:$0x3f]
        %v189 = vld [vmem:[%s168 + $0x20] sm:$0xff]
        %v190 = vld [vmem:[%s168 + $0x28] sm:$0x3f]
        %v191 = vld [vmem:[%s168 + $0x30] sm:$0xff]
        %v192 = vld [vmem:[%s168 + $0x38] sm:$0x3f]
        %v193 = vld [vmem:[%s168 + $0x40] sm:$0xff]
        %v194 = vld [vmem:[%s168 + $0x48] sm:$0x3f]
        %v195 = vld [vmem:[%s168 + $0x50] sm:$0xff]
        %v196 = vld [vmem:[%s168 + $0x58] sm:$0x3f]
        %v197 = vld [vmem:[%s168 + $0x60] sm:$0xff]
        %v198 = vld [vmem:[%s168 + $0x68] sm:$0x3f]
        %v199 = vld [vmem:[%s168 + $0x70] sm:$0xff]
        %v200 = vld [vmem:[%s168 + $0x78] sm:$0x3f]
        %v201 = vld [vmem:[%s168 + $0x80] sm:$0xff]
        %v202 = vld [vmem:[%s168 + $0x88] sm:$0x3f]
        %v203 = vld [vmem:[%s168 + $0x90] sm:$0xff]
        %v204 = vld [vmem:[%s168 + $0x98] sm:$0x3f]
        %v205 = vld [vmem:[%s168 + $0xa0] sm:$0xff]
        %v206 = vld [vmem:[%s168 + $0xa8] sm:$0x3f]
        %v207 = vld [vmem:[%s168 + $0xb0] sm:$0xff]
        %v208 = vld [vmem:[%s168 + $0xb8] sm:$0x3f]
        %v209 = vld [vmem:[%s168 + $0xc0] sm:$0xff]
        %v210 = vld [vmem:[%s168 + $0xc8] sm:$0x3f]
        %v211 = vld [vmem:[%s168 + $0xd0] sm:$0xff]
        %v212 = vld [vmem:[%s168 + $0xd8] sm:$0x3f]
        %v241 = vcombine.high %v185, %v185
        %v243 = vunpack.c.l.s4 1983009808
        %v244 = vunpack.c.0.s8 %v243
        %v245 = vlaneseq
        %v246 = vshrl.u32 %v245, 7
        %v247 = vsub.s32 %v244, %v246
        %v248 = vrot.slane %v185, %v247
        %v250 = vunpack.c.l.s4 1983009808
        %v251 = vunpack.c.0.s8 %v250
        %v252 = vlaneseq
        %v253 = vshrl.u32 %v252, 7
        %v254 = vsub.s32 %v251, %v253
        %v255 = vrot.slane %v241, %v254
        %v256 = vcombine.high %v248, %v248
        %v257 = vcombine.high %v255, %v255
        %v258 = vcombine.high %v186, %v186
        %v260 = vunpack.c.l.s4 1983009808
        %v261 = vunpack.c.0.s8 %v260
        %v262 = vlaneseq
        %v263 = vshrl.u32 %v262, 7
        %v264 = vsub.s32 %v261, %v263
        %v265 = vrot.slane %v186, %v264
        %v267 = vunpack.c.l.s4 1983009808
        %v268 = vunpack.c.0.s8 %v267
        %v269 = vlaneseq
        %v270 = vshrl.u32 %v269, 7
        %v271 = vsub.s32 %v268, %v270
        %v272 = vrot.slane %v258, %v271
        %v273 = vcombine.high %v265, %v265
        %v274 = vcombine.high %v187, %v187
        %v276 = vunpack.c.l.s4 1983009808
        %v277 = vunpack.c.0.s8 %v276
        %v278 = vlaneseq
        %v279 = vshrl.u32 %v278, 7
        %v280 = vsub.s32 %v277, %v279
        %v281 = vrot.slane %v187, %v280
        %v283 = vunpack.c.l.s4 1983009808
        %v284 = vunpack.c.0.s8 %v283
        %v285 = vlaneseq
        %v286 = vshrl.u32 %v285, 7
        %v287 = vsub.s32 %v284, %v286
        %v288 = vrot.slane %v274, %v287
        %v289 = vcombine.high %v281, %v281
        %v290 = vcombine.high %v288, %v288
        %v291 = vcombine.high %v188, %v188
        %v293 = vunpack.c.l.s4 1983009808
        %v294 = vunpack.c.0.s8 %v293
        %v295 = vlaneseq
        %v296 = vshrl.u32 %v295, 7
        %v297 = vsub.s32 %v294, %v296
        %v298 = vrot.slane %v188, %v297
        %v300 = vunpack.c.l.s4 1983009808
        %v301 = vunpack.c.0.s8 %v300
        %v302 = vlaneseq
        %v303 = vshrl.u32 %v302, 7
        %v304 = vsub.s32 %v301, %v303
        %v305 = vrot.slane %v291, %v304
        %v306 = vcombine.high %v298, %v298
        %v307 = vcombine.high %v189, %v189
        %v309 = vunpack.c.l.s4 1983009808
        %v310 = vunpack.c.0.s8 %v309
        %v311 = vlaneseq
        %v312 = vshrl.u32 %v311, 7
        %v313 = vsub.s32 %v310, %v312
        %v314 = vrot.slane %v189, %v313
        %v316 = vunpack.c.l.s4 1983009808
        %v317 = vunpack.c.0.s8 %v316
        %v318 = vlaneseq
        %v319 = vshrl.u32 %v318, 7
        %v320 = vsub.s32 %v317, %v319
        %v321 = vrot.slane %v307, %v320
        %v322 = vcombine.high %v314, %v314
        %v323 = vcombine.high %v321, %v321
        %v324 = vcombine.high %v190, %v190
        %v326 = vunpack.c.l.s4 1983009808
        %v327 = vunpack.c.0.s8 %v326
        %v328 = vlaneseq
        %v329 = vshrl.u32 %v328, 7
        %v330 = vsub.s32 %v327, %v329
        %v331 = vrot.slane %v190, %v330
        %v333 = vunpack.c.l.s4 1983009808
        %v334 = vunpack.c.0.s8 %v333
        %v335 = vlaneseq
        %v336 = vshrl.u32 %v335, 7
        %v337 = vsub.s32 %v334, %v336
        %v338 = vrot.slane %v324, %v337
        %v339 = vcombine.high %v331, %v331
        %v340 = vcombine.high %v191, %v191
        %v342 = vunpack.c.l.s4 1983009808
        %v343 = vunpack.c.0.s8 %v342
        %v344 = vlaneseq
        %v345 = vshrl.u32 %v344, 7
        %v346 = vsub.s32 %v343, %v345
        %v347 = vrot.slane %v191, %v346
        %v349 = vunpack.c.l.s4 1983009808
        %v350 = vunpack.c.0.s8 %v349
        %v351 = vlaneseq
        %v352 = vshrl.u32 %v351, 7
        %v353 = vsub.s32 %v350, %v352
        %v354 = vrot.slane %v340, %v353
        %v355 = vcombine.high %v347, %v347
        %v356 = vcombine.high %v354, %v354
        %v357 = vcombine.high %v192, %v192
        %v359 = vunpack.c.l.s4 1983009808
        %v360 = vunpack.c.0.s8 %v359
        %v361 = vlaneseq
        %v362 = vshrl.u32 %v361, 7
        %v363 = vsub.s32 %v360, %v362
        %v364 = vrot.slane %v192, %v363
        %v366 = vunpack.c.l.s4 1983009808
        %v367 = vunpack.c.0.s8 %v366
        %v368 = vlaneseq
        %v369 = vshrl.u32 %v368, 7
        %v370 = vsub.s32 %v367, %v369
        %v371 = vrot.slane %v357, %v370
        %v372 = vcombine.high %v364, %v364
        %v373 = vcombine.high %v193, %v193
        %v375 = vunpack.c.l.s4 1983009808
        %v376 = vunpack.c.0.s8 %v375
        %v377 = vlaneseq
        %v378 = vshrl.u32 %v377, 7
        %v379 = vsub.s32 %v376, %v378
        %v380 = vrot.slane %v193, %v379
        %v382 = vunpack.c.l.s4 1983009808
        %v383 = vunpack.c.0.s8 %v382
        %v384 = vlaneseq
        %v385 = vshrl.u32 %v384, 7
        %v386 = vsub.s32 %v383, %v385
        %v387 = vrot.slane %v373, %v386
        %v388 = vcombine.high %v380, %v380
        %v389 = vcombine.high %v387, %v387
        %v390 = vcombine.high %v194, %v194
        %v392 = vunpack.c.l.s4 1983009808
        %v393 = vunpack.c.0.s8 %v392
        %v394 = vlaneseq
        %v395 = vshrl.u32 %v394, 7
        %v396 = vsub.s32 %v393, %v395
        %v397 = vrot.slane %v194, %v396
        %v399 = vunpack.c.l.s4 1983009808
        %v400 = vunpack.c.0.s8 %v399
        %v401 = vlaneseq
        %v402 = vshrl.u32 %v401, 7
        %v403 = vsub.s32 %v400, %v402
        %v404 = vrot.slane %v390, %v403
        %v405 = vcombine.high %v397, %v397
        %v406 = vcombine.high %v195, %v195
        %v408 = vunpack.c.l.s4 1983009808
        %v409 = vunpack.c.0.s8 %v408
        %v410 = vlaneseq
        %v411 = vshrl.u32 %v410, 7
        %v412 = vsub.s32 %v409, %v411
        %v413 = vrot.slane %v195, %v412
        %v415 = vunpack.c.l.s4 1983009808
        %v416 = vunpack.c.0.s8 %v415
        %v417 = vlaneseq
        %v418 = vshrl.u32 %v417, 7
        %v419 = vsub.s32 %v416, %v418
        %v420 = vrot.slane %v406, %v419
        %v421 = vcombine.high %v413, %v413
        %v422 = vcombine.high %v420, %v420
        %v423 = vcombine.high %v196, %v196
        %v425 = vunpack.c.l.s4 1983009808
        %v426 = vunpack.c.0.s8 %v425
        %v427 = vlaneseq
        %v428 = vshrl.u32 %v427, 7
        %v429 = vsub.s32 %v426, %v428
        %v430 = vrot.slane %v196, %v429
        %v432 = vunpack.c.l.s4 1983009808
        %v433 = vunpack.c.0.s8 %v432
        %v434 = vlaneseq
        %v435 = vshrl.u32 %v434, 7
        %v436 = vsub.s32 %v433, %v435
        %v437 = vrot.slane %v423, %v436
        %v438 = vcombine.high %v430, %v430
        %v439 = vcombine.high %v197, %v197
        %v441 = vunpack.c.l.s4 1983009808
        %v442 = vunpack.c.0.s8 %v441
        %v443 = vlaneseq
        %v444 = vshrl.u32 %v443, 7
        %v445 = vsub.s32 %v442, %v444
        %v446 = vrot.slane %v197, %v445
        %v448 = vunpack.c.l.s4 1983009808
        %v449 = vunpack.c.0.s8 %v448
        %v450 = vlaneseq
        %v451 = vshrl.u32 %v450, 7
        %v452 = vsub.s32 %v449, %v451
        %v453 = vrot.slane %v439, %v452
        %v454 = vcombine.high %v446, %v446
        %v455 = vcombine.high %v453, %v453
        %v456 = vcombine.high %v198, %v198
        %v458 = vunpack.c.l.s4 1983009808
        %v459 = vunpack.c.0.s8 %v458
        %v460 = vlaneseq
        %v461 = vshrl.u32 %v460, 7
        %v462 = vsub.s32 %v459, %v461
        %v463 = vrot.slane %v198, %v462
        %v465 = vunpack.c.l.s4 1983009808
        %v466 = vunpack.c.0.s8 %v465
        %v467 = vlaneseq
        %v468 = vshrl.u32 %v467, 7
        %v469 = vsub.s32 %v466, %v468
        %v470 = vrot.slane %v456, %v469
        %v471 = vcombine.high %v463, %v463
        %v472 = vcombine.high %v199, %v199
        %v474 = vunpack.c.l.s4 1983009808
        %v475 = vunpack.c.0.s8 %v474
        %v476 = vlaneseq
        %v477 = vshrl.u32 %v476, 7
        %v478 = vsub.s32 %v475, %v477
        %v479 = vrot.slane %v199, %v478
        %v481 = vunpack.c.l.s4 1983009808
        %v482 = vunpack.c.0.s8 %v481
        %v483 = vlaneseq
        %v484 = vshrl.u32 %v483, 7
        %v485 = vsub.s32 %v482, %v484
        %v486 = vrot.slane %v472, %v485
        %v487 = vcombine.high %v479, %v479
        %v488 = vcombine.high %v486, %v486
        %v489 = vcombine.high %v200, %v200
        %v491 = vunpack.c.l.s4 1983009808
        %v492 = vunpack.c.0.s8 %v491
        %v493 = vlaneseq
        %v494 = vshrl.u32 %v493, 7
        %v495 = vsub.s32 %v492, %v494
        %v496 = vrot.slane %v200, %v495
        %v498 = vunpack.c.l.s4 1983009808
        %v499 = vunpack.c.0.s8 %v498
        %v500 = vlaneseq
        %v501 = vshrl.u32 %v500, 7
        %v502 = vsub.s32 %v499, %v501
        %v503 = vrot.slane %v489, %v502
        %v504 = vcombine.high %v496, %v496
        %v505 = vcombine.high %v201, %v201
        %v507 = vunpack.c.l.s4 1983009808
        %v508 = vunpack.c.0.s8 %v507
        %v509 = vlaneseq
        %v510 = vshrl.u32 %v509, 7
        %v511 = vsub.s32 %v508, %v510
        %v512 = vrot.slane %v201, %v511
        %v514 = vunpack.c.l.s4 1983009808
        %v515 = vunpack.c.0.s8 %v514
        %v516 = vlaneseq
        %v517 = vshrl.u32 %v516, 7
        %v518 = vsub.s32 %v515, %v517
        %v519 = vrot.slane %v505, %v518
        %v520 = vcombine.high %v512, %v512
        %v521 = vcombine.high %v519, %v519
        %v522 = vcombine.high %v202, %v202
        %v524 = vunpack.c.l.s4 1983009808
        %v525 = vunpack.c.0.s8 %v524
        %v526 = vlaneseq
        %v527 = vshrl.u32 %v526, 7
        %v528 = vsub.s32 %v525, %v527
        %v529 = vrot.slane %v202, %v528
        %v531 = vunpack.c.l.s4 1983009808
        %v532 = vunpack.c.0.s8 %v531
        %v533 = vlaneseq
        %v534 = vshrl.u32 %v533, 7
        %v535 = vsub.s32 %v532, %v534
        %v536 = vrot.slane %v522, %v535
        %v537 = vcombine.high %v529, %v529
        %v538 = vcombine.high %v203, %v203
        %v540 = vunpack.c.l.s4 1983009808
        %v541 = vunpack.c.0.s8 %v540
        %v542 = vlaneseq
        %v543 = vshrl.u32 %v542, 7
        %v544 = vsub.s32 %v541, %v543
        %v545 = vrot.slane %v203, %v544
        %v547 = vunpack.c.l.s4 1983009808
        %v548 = vunpack.c.0.s8 %v547
        %v549 = vlaneseq
        %v550 = vshrl.u32 %v549, 7
        %v551 = vsub.s32 %v548, %v550
        %v552 = vrot.slane %v538, %v551
        %v553 = vcombine.high %v545, %v545
        %v554 = vcombine.high %v552, %v552
        %v555 = vcombine.high %v204, %v204
        %v557 = vunpack.c.l.s4 1983009808
        %v558 = vunpack.c.0.s8 %v557
        %v559 = vlaneseq
        %v560 = vshrl.u32 %v559, 7
        %v561 = vsub.s32 %v558, %v560
        %v562 = vrot.slane %v204, %v561
        %v564 = vunpack.c.l.s4 1983009808
        %v565 = vunpack.c.0.s8 %v564
        %v566 = vlaneseq
        %v567 = vshrl.u32 %v566, 7
        %v568 = vsub.s32 %v565, %v567
        %v569 = vrot.slane %v555, %v568
        %v570 = vcombine.high %v562, %v562
        %v571 = vcombine.high %v205, %v205
        %v573 = vunpack.c.l.s4 1983009808
        %v574 = vunpack.c.0.s8 %v573
        %v575 = vlaneseq
        %v576 = vshrl.u32 %v575, 7
        %v577 = vsub.s32 %v574, %v576
        %v578 = vrot.slane %v205, %v577
        %v580 = vunpack.c.l.s4 1983009808
        %v581 = vunpack.c.0.s8 %v580
        %v582 = vlaneseq
        %v583 = vshrl.u32 %v582, 7
        %v584 = vsub.s32 %v581, %v583
        %v585 = vrot.slane %v571, %v584
        %v586 = vcombine.high %v578, %v578
        %v587 = vcombine.high %v585, %v585
        %v588 = vcombine.high %v206, %v206
        %v590 = vunpack.c.l.s4 1983009808
        %v591 = vunpack.c.0.s8 %v590
        %v592 = vlaneseq
        %v593 = vshrl.u32 %v592, 7
        %v594 = vsub.s32 %v591, %v593
        %v595 = vrot.slane %v206, %v594
        %v597 = vunpack.c.l.s4 1983009808
        %v598 = vunpack.c.0.s8 %v597
        %v599 = vlaneseq
        %v600 = vshrl.u32 %v599, 7
        %v601 = vsub.s32 %v598, %v600
        %v602 = vrot.slane %v588, %v601
        %v603 = vcombine.high %v595, %v595
        %v604 = vcombine.high %v207, %v207
        %v606 = vunpack.c.l.s4 1983009808
        %v607 = vunpack.c.0.s8 %v606
        %v608 = vlaneseq
        %v609 = vshrl.u32 %v608, 7
        %v610 = vsub.s32 %v607, %v609
        %v611 = vrot.slane %v207, %v610
        %v613 = vunpack.c.l.s4 1983009808
        %v614 = vunpack.c.0.s8 %v613
        %v615 = vlaneseq
        %v616 = vshrl.u32 %v615, 7
        %v617 = vsub.s32 %v614, %v616
        %v618 = vrot.slane %v604, %v617
        %v619 = vcombine.high %v611, %v611
        %v620 = vcombine.high %v618, %v618
        %v621 = vcombine.high %v208, %v208
        %v623 = vunpack.c.l.s4 1983009808
        %v624 = vunpack.c.0.s8 %v623
        %v625 = vlaneseq
        %v626 = vshrl.u32 %v625, 7
        %v627 = vsub.s32 %v624, %v626
        %v628 = vrot.slane %v208, %v627
        %v630 = vunpack.c.l.s4 1983009808
        %v631 = vunpack.c.0.s8 %v630
        %v632 = vlaneseq
        %v633 = vshrl.u32 %v632, 7
        %v634 = vsub.s32 %v631, %v633
        %v635 = vrot.slane %v621, %v634
        %v636 = vcombine.high %v628, %v628
        %v637 = vcombine.high %v209, %v209
        %v639 = vunpack.c.l.s4 1983009808
        %v640 = vunpack.c.0.s8 %v639
        %v641 = vlaneseq
        %v642 = vshrl.u32 %v641, 7
        %v643 = vsub.s32 %v640, %v642
        %v644 = vrot.slane %v209, %v643
        %v646 = vunpack.c.l.s4 1983009808
        %v647 = vunpack.c.0.s8 %v646
        %v648 = vlaneseq
        %v649 = vshrl.u32 %v648, 7
        %v650 = vsub.s32 %v647, %v649
        %v651 = vrot.slane %v637, %v650
        %v652 = vcombine.high %v644, %v644
        %v653 = vcombine.high %v651, %v651
        %v654 = vcombine.high %v210, %v210
        %v656 = vunpack.c.l.s4 1983009808
        %v657 = vunpack.c.0.s8 %v656
        %v658 = vlaneseq
        %v659 = vshrl.u32 %v658, 7
        %v660 = vsub.s32 %v657, %v659
        %v661 = vrot.slane %v210, %v660
        %v663 = vunpack.c.l.s4 1983009808
        %v664 = vunpack.c.0.s8 %v663
        %v665 = vlaneseq
        %v666 = vshrl.u32 %v665, 7
        %v667 = vsub.s32 %v664, %v666
        %v668 = vrot.slane %v654, %v667
        %v669 = vcombine.high %v661, %v661
        %v670 = vcombine.high %v211, %v211
        %v672 = vunpack.c.l.s4 1983009808
        %v673 = vunpack.c.0.s8 %v672
        %v674 = vlaneseq
        %v675 = vshrl.u32 %v674, 7
        %v676 = vsub.s32 %v673, %v675
        %v677 = vrot.slane %v211, %v676
        %v679 = vunpack.c.l.s4 1983009808
        %v680 = vunpack.c.0.s8 %v679
        %v681 = vlaneseq
        %v682 = vshrl.u32 %v681, 7
        %v683 = vsub.s32 %v680, %v682
        %v684 = vrot.slane %v670, %v683
        %v685 = vcombine.high %v677, %v677
        %v686 = vcombine.high %v684, %v684
        %v687 = vcombine.high %v212, %v212
        %v689 = vunpack.c.l.s4 1983009808
        %v690 = vunpack.c.0.s8 %v689
        %v691 = vlaneseq
        %v692 = vshrl.u32 %v691, 7
        %v693 = vsub.s32 %v690, %v692
        %v694 = vrot.slane %v212, %v693
        %v696 = vunpack.c.l.s4 1983009808
        %v697 = vunpack.c.0.s8 %v696
        %v698 = vlaneseq
        %v699 = vshrl.u32 %v698, 7
        %v700 = vsub.s32 %v697, %v699
        %v701 = vrot.slane %v687, %v700
        %v702 = vcombine.high %v694, %v694
        %v703 = vcombine.low %v248, %v256
        %v704 = vcombine.low %v255, %v257
        %v706 = vunpack.c.l.s4 1983009808
        %v707 = vunpack.c.0.s8 %v706
        %v708 = vlaneseq
        %v709 = vshrl.u32 %v708, 7
        %v710 = vsub.s32 %v707, %v709
        %v711 = vrot.slane %v703, %v710
        %v713 = vunpack.c.l.s4 1983009808
        %v714 = vunpack.c.0.s8 %v713
        %v715 = vlaneseq
        %v716 = vshrl.u32 %v715, 7
        %v717 = vsub.s32 %v714, %v716
        %v718 = vrot.slane %v704, %v717
        %v719 = vcombine.low %v711, %v718
        %v720 = vcombine.low %v265, %v273
        %v721 = vcombine.low %v272, %v281
        %v723 = vunpack.c.l.s4 1983009808
        %v724 = vunpack.c.0.s8 %v723
        %v725 = vlaneseq
        %v726 = vshrl.u32 %v725, 7
        %v727 = vsub.s32 %v724, %v726
        %v728 = vrot.slane %v720, %v727
        %v730 = vunpack.c.l.s4 1983009808
        %v731 = vunpack.c.0.s8 %v730
        %v732 = vlaneseq
        %v733 = vshrl.u32 %v732, 7
        %v734 = vsub.s32 %v731, %v733
        %v735 = vrot.slane %v721, %v734
        %v736 = vcombine.low %v728, %v735
        %v737 = vcombine.low %v289, %v288
        %v738 = vcombine.low %v290, %v298
        %v740 = vunpack.c.l.s4 1983009808
        %v741 = vunpack.c.0.s8 %v740
        %v742 = vlaneseq
        %v743 = vshrl.u32 %v742, 7
        %v744 = vsub.s32 %v741, %v743
        %v745 = vrot.slane %v737, %v744
        %v747 = vunpack.c.l.s4 1983009808
        %v748 = vunpack.c.0.s8 %v747
        %v749 = vlaneseq
        %v750 = vshrl.u32 %v749, 7
        %v751 = vsub.s32 %v748, %v750
        %v752 = vrot.slane %v738, %v751
        %v753 = vcombine.low %v745, %v752
        %v754 = vcombine.low %v306, %v305
        %v755 = vcombine.low %v314, %v322
        %v757 = vunpack.c.l.s4 1983009808
        %v758 = vunpack.c.0.s8 %v757
        %v759 = vlaneseq
        %v760 = vshrl.u32 %v759, 7
        %v761 = vsub.s32 %v758, %v760
        %v762 = vrot.slane %v754, %v761
        %v764 = vunpack.c.l.s4 1983009808
        %v765 = vunpack.c.0.s8 %v764
        %v766 = vlaneseq
        %v767 = vshrl.u32 %v766, 7
        %v768 = vsub.s32 %v765, %v767
        %v769 = vrot.slane %v755, %v768
        %v770 = vcombine.low %v762, %v769
        %v771 = vcombine.low %v321, %v323
        %v772 = vcombine.low %v331, %v339
        %v774 = vunpack.c.l.s4 1983009808
        %v775 = vunpack.c.0.s8 %v774
        %v776 = vlaneseq
        %v777 = vshrl.u32 %v776, 7
        %v778 = vsub.s32 %v775, %v777
        %v779 = vrot.slane %v771, %v778
        %v781 = vunpack.c.l.s4 1983009808
        %v782 = vunpack.c.0.s8 %v781
        %v783 = vlaneseq
        %v784 = vshrl.u32 %v783, 7
        %v785 = vsub.s32 %v782, %v784
        %v786 = vrot.slane %v772, %v785
        %v787 = vcombine.low %v779, %v786
        %v788 = vcombine.low %v338, %v347
        %v789 = vcombine.low %v355, %v354
        %v791 = vunpack.c.l.s4 1983009808
        %v792 = vunpack.c.0.s8 %v791
        %v793 = vlaneseq
        %v794 = vshrl.u32 %v793, 7
        %v795 = vsub.s32 %v792, %v794
        %v796 = vrot.slane %v788, %v795
        %v798 = vunpack.c.l.s4 1983009808
        %v799 = vunpack.c.0.s8 %v798
        %v800 = vlaneseq
        %v801 = vshrl.u32 %v800, 7
        %v802 = vsub.s32 %v799, %v801
        %v803 = vrot.slane %v789, %v802
        %v804 = vcombine.low %v796, %v803
        %v805 = vcombine.low %v356, %v364
        %v806 = vcombine.low %v372, %v371
        %v808 = vunpack.c.l.s4 1983009808
        %v809 = vunpack.c.0.s8 %v808
        %v810 = vlaneseq
        %v811 = vshrl.u32 %v810, 7
        %v812 = vsub.s32 %v809, %v811
        %v813 = vrot.slane %v805, %v812
        %v815 = vunpack.c.l.s4 1983009808
        %v816 = vunpack.c.0.s8 %v815
        %v817 = vlaneseq
        %v818 = vshrl.u32 %v817, 7
        %v819 = vsub.s32 %v816, %v818
        %v820 = vrot.slane %v806, %v819
        %v821 = vcombine.low %v813, %v820
        %v822 = vcombine.low %v380, %v388
        %v823 = vcombine.low %v387, %v389
        %v825 = vunpack.c.l.s4 1983009808
        %v826 = vunpack.c.0.s8 %v825
        %v827 = vlaneseq
        %v828 = vshrl.u32 %v827, 7
        %v829 = vsub.s32 %v826, %v828
        %v830 = vrot.slane %v822, %v829
        %v832 = vunpack.c.l.s4 1983009808
        %v833 = vunpack.c.0.s8 %v832
        %v834 = vlaneseq
        %v835 = vshrl.u32 %v834, 7
        %v836 = vsub.s32 %v833, %v835
        %v837 = vrot.slane %v823, %v836
        %v838 = vcombine.low %v830, %v837
        %v839 = vcombine.low %v397, %v405
        %v840 = vcombine.low %v404, %v413
        %v842 = vunpack.c.l.s4 1983009808
        %v843 = vunpack.c.0.s8 %v842
        %v844 = vlaneseq
        %v845 = vshrl.u32 %v844, 7
        %v846 = vsub.s32 %v843, %v845
        %v847 = vrot.slane %v839, %v846
        %v849 = vunpack.c.l.s4 1983009808
        %v850 = vunpack.c.0.s8 %v849
        %v851 = vlaneseq
        %v852 = vshrl.u32 %v851, 7
        %v853 = vsub.s32 %v850, %v852
        %v854 = vrot.slane %v840, %v853
        %v855 = vcombine.low %v847, %v854
        %v856 = vcombine.low %v421, %v420
        %v857 = vcombine.low %v422, %v430
        %v859 = vunpack.c.l.s4 1983009808
        %v860 = vunpack.c.0.s8 %v859
        %v861 = vlaneseq
        %v862 = vshrl.u32 %v861, 7
        %v863 = vsub.s32 %v860, %v862
        %v864 = vrot.slane %v856, %v863
        %v866 = vunpack.c.l.s4 1983009808
        %v867 = vunpack.c.0.s8 %v866
        %v868 = vlaneseq
        %v869 = vshrl.u32 %v868, 7
        %v870 = vsub.s32 %v867, %v869
        %v871 = vrot.slane %v857, %v870
        %v872 = vcombine.low %v864, %v871
        %v873 = vcombine.low %v438, %v437
        %v874 = vcombine.low %v446, %v454
        %v876 = vunpack.c.l.s4 1983009808
        %v877 = vunpack.c.0.s8 %v876
        %v878 = vlaneseq
        %v879 = vshrl.u32 %v878, 7
        %v880 = vsub.s32 %v877, %v879
        %v881 = vrot.slane %v873, %v880
        %v883 = vunpack.c.l.s4 1983009808
        %v884 = vunpack.c.0.s8 %v883
        %v885 = vlaneseq
        %v886 = vshrl.u32 %v885, 7
        %v887 = vsub.s32 %v884, %v886
        %v888 = vrot.slane %v874, %v887
        %v889 = vcombine.low %v881, %v888
        %v890 = vcombine.low %v453, %v455
        %v891 = vcombine.low %v463, %v471
        %v893 = vunpack.c.l.s4 1983009808
        %v894 = vunpack.c.0.s8 %v893
        %v895 = vlaneseq
        %v896 = vshrl.u32 %v895, 7
        %v897 = vsub.s32 %v894, %v896
        %v898 = vrot.slane %v890, %v897
        %v900 = vunpack.c.l.s4 1983009808
        %v901 = vunpack.c.0.s8 %v900
        %v902 = vlaneseq
        %v903 = vshrl.u32 %v902, 7
        %v904 = vsub.s32 %v901, %v903
        %v905 = vrot.slane %v891, %v904
        %v906 = vcombine.low %v898, %v905
        %v907 = vcombine.low %v470, %v479
        %v908 = vcombine.low %v487, %v486
        %v910 = vunpack.c.l.s4 1983009808
        %v911 = vunpack.c.0.s8 %v910
        %v912 = vlaneseq
        %v913 = vshrl.u32 %v912, 7
        %v914 = vsub.s32 %v911, %v913
        %v915 = vrot.slane %v907, %v914
        %v917 = vunpack.c.l.s4 1983009808
        %v918 = vunpack.c.0.s8 %v917
        %v919 = vlaneseq
        %v920 = vshrl.u32 %v919, 7
        %v921 = vsub.s32 %v918, %v920
        %v922 = vrot.slane %v908, %v921
        %v923 = vcombine.low %v915, %v922
        %v924 = vcombine.low %v488, %v496
        %v925 = vcombine.low %v504, %v503
        %v927 = vunpack.c.l.s4 1983009808
        %v928 = vunpack.c.0.s8 %v927
        %v929 = vlaneseq
        %v930 = vshrl.u32 %v929, 7
        %v931 = vsub.s32 %v928, %v930
        %v932 = vrot.slane %v924, %v931
        %v934 = vunpack.c.l.s4 1983009808
        %v935 = vunpack.c.0.s8 %v934
        %v936 = vlaneseq
        %v937 = vshrl.u32 %v936, 7
        %v938 = vsub.s32 %v935, %v937
        %v939 = vrot.slane %v925, %v938
        %v940 = vcombine.low %v932, %v939
        %v941 = vcombine.low %v512, %v520
        %v942 = vcombine.low %v519, %v521
        %v944 = vunpack.c.l.s4 1983009808
        %v945 = vunpack.c.0.s8 %v944
        %v946 = vlaneseq
        %v947 = vshrl.u32 %v946, 7
        %v948 = vsub.s32 %v945, %v947
        %v949 = vrot.slane %v941, %v948
        %v951 = vunpack.c.l.s4 1983009808
        %v952 = vunpack.c.0.s8 %v951
        %v953 = vlaneseq
        %v954 = vshrl.u32 %v953, 7
        %v955 = vsub.s32 %v952, %v954
        %v956 = vrot.slane %v942, %v955
        %v957 = vcombine.low %v949, %v956
        %v958 = vcombine.low %v529, %v537
        %v959 = vcombine.low %v536, %v545
        %v961 = vunpack.c.l.s4 1983009808
        %v962 = vunpack.c.0.s8 %v961
        %v963 = vlaneseq
        %v964 = vshrl.u32 %v963, 7
        %v965 = vsub.s32 %v962, %v964
        %v966 = vrot.slane %v958, %v965
        %v968 = vunpack.c.l.s4 1983009808
        %v969 = vunpack.c.0.s8 %v968
        %v970 = vlaneseq
        %v971 = vshrl.u32 %v970, 7
        %v972 = vsub.s32 %v969, %v971
        %v973 = vrot.slane %v959, %v972
        %v974 = vcombine.low %v966, %v973
        %v975 = vcombine.low %v553, %v552
        %v976 = vcombine.low %v554, %v562
        %v978 = vunpack.c.l.s4 1983009808
        %v979 = vunpack.c.0.s8 %v978
        %v980 = vlaneseq
        %v981 = vshrl.u32 %v980, 7
        %v982 = vsub.s32 %v979, %v981
        %v983 = vrot.slane %v975, %v982
        %v985 = vunpack.c.l.s4 1983009808
        %v986 = vunpack.c.0.s8 %v985
        %v987 = vlaneseq
        %v988 = vshrl.u32 %v987, 7
        %v989 = vsub.s32 %v986, %v988
        %v990 = vrot.slane %v976, %v989
        %v991 = vcombine.low %v983, %v990
        %v992 = vcombine.low %v570, %v569
        %v993 = vcombine.low %v578, %v586
        %v995 = vunpack.c.l.s4 1983009808
        %v996 = vunpack.c.0.s8 %v995
        %v997 = vlaneseq
        %v998 = vshrl.u32 %v997, 7
        %v999 = vsub.s32 %v996, %v998
        %v1000 = vrot.slane %v992, %v999
        %v1002 = vunpack.c.l.s4 1983009808
        %v1003 = vunpack.c.0.s8 %v1002
        %v1004 = vlaneseq
        %v1005 = vshrl.u32 %v1004, 7
        %v1006 = vsub.s32 %v1003, %v1005
        %v1007 = vrot.slane %v993, %v1006
        %v1008 = vcombine.low %v1000, %v1007
        %v1009 = vcombine.low %v585, %v587
        %v1010 = vcombine.low %v595, %v603
        %v1012 = vunpack.c.l.s4 1983009808
        %v1013 = vunpack.c.0.s8 %v1012
        %v1014 = vlaneseq
        %v1015 = vshrl.u32 %v1014, 7
        %v1016 = vsub.s32 %v1013, %v1015
        %v1017 = vrot.slane %v1009, %v1016
        %v1019 = vunpack.c.l.s4 1983009808
        %v1020 = vunpack.c.0.s8 %v1019
        %v1021 = vlaneseq
        %v1022 = vshrl.u32 %v1021, 7
        %v1023 = vsub.s32 %v1020, %v1022
        %v1024 = vrot.slane %v1010, %v1023
        %v1025 = vcombine.low %v1017, %v1024
        %v1026 = vcombine.low %v602, %v611
        %v1027 = vcombine.low %v619, %v618
        %v1029 = vunpack.c.l.s4 1983009808
        %v1030 = vunpack.c.0.s8 %v1029
        %v1031 = vlaneseq
        %v1032 = vshrl.u32 %v1031, 7
        %v1033 = vsub.s32 %v1030, %v1032
        %v1034 = vrot.slane %v1026, %v1033
        %v1036 = vunpack.c.l.s4 1983009808
        %v1037 = vunpack.c.0.s8 %v1036
        %v1038 = vlaneseq
        %v1039 = vshrl.u32 %v1038, 7
        %v1040 = vsub.s32 %v1037, %v1039
        %v1041 = vrot.slane %v1027, %v1040
        %v1042 = vcombine.low %v1034, %v1041
        %v1043 = vcombine.low %v620, %v628
        %v1044 = vcombine.low %v636, %v635
        %v1046 = vunpack.c.l.s4 1983009808
        %v1047 = vunpack.c.0.s8 %v1046
        %v1048 = vlaneseq
        %v1049 = vshrl.u32 %v1048, 7
        %v1050 = vsub.s32 %v1047, %v1049
        %v1051 = vrot.slane %v1043, %v1050
        %v1053 = vunpack.c.l.s4 1983009808
        %v1054 = vunpack.c.0.s8 %v1053
        %v1055 = vlaneseq
        %v1056 = vshrl.u32 %v1055, 7
        %v1057 = vsub.s32 %v1054, %v1056
        %v1058 = vrot.slane %v1044, %v1057
        %v1059 = vcombine.low %v1051, %v1058
        %v1060 = vcombine.low %v644, %v652
        %v1061 = vcombine.low %v651, %v653
        %v1063 = vunpack.c.l.s4 1983009808
        %v1064 = vunpack.c.0.s8 %v1063
        %v1065 = vlaneseq
        %v1066 = vshrl.u32 %v1065, 7
        %v1067 = vsub.s32 %v1064, %v1066
        %v1068 = vrot.slane %v1060, %v1067
        %v1070 = vunpack.c.l.s4 1983009808
        %v1071 = vunpack.c.0.s8 %v1070
        %v1072 = vlaneseq
        %v1073 = vshrl.u32 %v1072, 7
        %v1074 = vsub.s32 %v1071, %v1073
        %v1075 = vrot.slane %v1061, %v1074
        %v1076 = vcombine.low %v1068, %v1075
        %v1077 = vcombine.low %v661, %v669
        %v1078 = vcombine.low %v668, %v677
        %v1080 = vunpack.c.l.s4 1983009808
        %v1081 = vunpack.c.0.s8 %v1080
        %v1082 = vlaneseq
        %v1083 = vshrl.u32 %v1082, 7
        %v1084 = vsub.s32 %v1081, %v1083
        %v1085 = vrot.slane %v1077, %v1084
        %v1087 = vunpack.c.l.s4 1983009808
        %v1088 = vunpack.c.0.s8 %v1087
        %v1089 = vlaneseq
        %v1090 = vshrl.u32 %v1089, 7
        %v1091 = vsub.s32 %v1088, %v1090
        %v1092 = vrot.slane %v1078, %v1091
        %v1093 = vcombine.low %v1085, %v1092
        %v1094 = vcombine.low %v685, %v684
        %v1095 = vcombine.low %v686, %v694
        %v1097 = vunpack.c.l.s4 1983009808
        %v1098 = vunpack.c.0.s8 %v1097
        %v1099 = vlaneseq
        %v1100 = vshrl.u32 %v1099, 7
        %v1101 = vsub.s32 %v1098, %v1100
        %v1102 = vrot.slane %v1094, %v1101
        %v1104 = vunpack.c.l.s4 1983009808
        %v1105 = vunpack.c.0.s8 %v1104
        %v1106 = vlaneseq
        %v1107 = vshrl.u32 %v1106, 7
        %v1108 = vsub.s32 %v1105, %v1107
        %v1109 = vrot.slane %v1095, %v1108
        %v1110 = vcombine.low %v1102, %v1109
        %v1111 = vcombine.low %v702, %v701
        %v1113 = vunpack.c.l.s4 1983009808
        %v1114 = vunpack.c.0.s8 %v1113
        %v1115 = vlaneseq
        %v1116 = vshrl.u32 %v1115, 7
        %v1117 = vsub.s32 %v1114, %v1116
        %v1118 = vrot.slane %v1111, %v1117
        %vm1144 = vcmask 31744
        %1145 = vst.msk [vmem:[#allocation2] sm:$0xff] %vm1144, %v719
        %1146 = vst.msk [vmem:[#allocation2 + $0x8] sm:$0xff] %vm1144, %v736
        %1147 = vst.msk [vmem:[#allocation2 + $0x10] sm:$0xff] %vm1144, %v753
        %1148 = vst.msk [vmem:[#allocation2 + $0x18] sm:$0xff] %vm1144, %v770
        %1149 = vst.msk [vmem:[#allocation2 + $0x20] sm:$0xff] %vm1144, %v787
        %1150 = vst.msk [vmem:[#allocation2 + $0x28] sm:$0xff] %vm1144, %v804
        %1151 = vst.msk [vmem:[#allocation2 + $0x30] sm:$0xff] %vm1144, %v821
        %1152 = vst.msk [vmem:[#allocation2 + $0x38] sm:$0xff] %vm1144, %v838
        %1153 = vst.msk [vmem:[#allocation2 + $0x40] sm:$0xff] %vm1144, %v855
        %1154 = vst.msk [vmem:[#allocation2 + $0x48] sm:$0xff] %vm1144, %v872
        %1155 = vst.msk [vmem:[#allocation2 + $0x50] sm:$0xff] %vm1144, %v889
        %1156 = vst.msk [vmem:[#allocation2 + $0x58] sm:$0xff] %vm1144, %v906
        %1157 = vst.msk [vmem:[#allocation2 + $0x60] sm:$0xff] %vm1144, %v923
        %1158 = vst.msk [vmem:[#allocation2 + $0x68] sm:$0xff] %vm1144, %v940
        %1159 = vst.msk [vmem:[#allocation2 + $0x70] sm:$0xff] %vm1144, %v957
        %1160 = vst.msk [vmem:[#allocation2 + $0x78] sm:$0xff] %vm1144, %v974
        %1161 = vst.msk [vmem:[#allocation2 + $0x80] sm:$0xff] %vm1144, %v991
        %1162 = vst.msk [vmem:[#allocation2 + $0x88] sm:$0xff] %vm1144, %v1008
        %1163 = vst.msk [vmem:[#allocation2 + $0x90] sm:$0xff] %vm1144, %v1025
        %1164 = vst.msk [vmem:[#allocation2 + $0x98] sm:$0xff] %vm1144, %v1042
        %1165 = vst.msk [vmem:[#allocation2 + $0xa0] sm:$0xff] %vm1144, %v1059
        %1166 = vst.msk [vmem:[#allocation2 + $0xa8] sm:$0xff] %vm1144, %v1076
        %1167 = vst.msk [vmem:[#allocation2 + $0xb0] sm:$0xff] %vm1144, %v1093
        %1168 = vst.msk [vmem:[#allocation2 + $0xb8] sm:$0xff] %vm1144, %v1110
        %vm1169 = vcmask 27648
        %1170 = vst.msk [vmem:[#allocation2 + $0xc0] sm:$0xf] %vm1169, %v1118
        %v1171 = vld [vmem:[%s168 + $0x1] sm:$0xff]
        %v1172 = vld [vmem:[%s168 + $0x9] sm:$0x3f]
        %v1173 = vld [vmem:[%s168 + $0x11] sm:$0xff]
        %v1174 = vld [vmem:[%s168 + $0x19] sm:$0x3f]
        %v1175 = vld [vmem:[%s168 + $0x21] sm:$0xff]
        %v1176 = vld [vmem:[%s168 + $0x29] sm:$0x3f]
        %v1177 = vld [vmem:[%s168 + $0x31] sm:$0xff]
        %v1178 = vld [vmem:[%s168 + $0x39] sm:$0x3f]
        %v1179 = vld [vmem:[%s168 + $0x41] sm:$0xff]
        %v1180 = vld [vmem:[%s168 + $0x49] sm:$0x3f]
        %v1181 = vld [vmem:[%s168 + $0x51] sm:$0xff]
        %v1182 = vld [vmem:[%s168 + $0x59] sm:$0x3f]
        %v1183 = vld [vmem:[%s168 + $0x61] sm:$0xff]
        %v1184 = vld [vmem:[%s168 + $0x69] sm:$0x3f]
        %v1185 = vld [vmem:[%s168 + $0x71] sm:$0xff]
        %v1186 = vld [vmem:[%s168 + $0x79] sm:$0x3f]
        %v1187 = vld [vmem:[%s168 + $0x81] sm:$0xff]
        %v1188 = vld [vmem:[%s168 + $0x89] sm:$0x3f]
        %v1189 = vld [vmem:[%s168 + $0x91] sm:$0xff]
        %v1190 = vld [vmem:[%s168 + $0x99] sm:$0x3f]
        %v1191 = vld [vmem:[%s168 + $0xa1] sm:$0xff]
        %v1192 = vld [vmem:[%s168 + $0xa9] sm:$0x3f]
        %v1193 = vld [vmem:[%s168 + $0xb1] sm:$0xff]
        %v1194 = vld [vmem:[%s168 + $0xb9] sm:$0x3f]
        %v1195 = vld [vmem:[%s168 + $0xc1] sm:$0xff]
        %v1196 = vld [vmem:[%s168 + $0xc9] sm:$0x3f]
        %v1197 = vld [vmem:[%s168 + $0xd1] sm:$0xff]
        %v1198 = vld [vmem:[%s168 + $0xd9] sm:$0x3f]
        %v1227 = vcombine.high %v1171, %v1171
        %v1229 = vunpack.c.l.s4 1983009808
        %v1230 = vunpack.c.0.s8 %v1229
        %v1231 = vlaneseq
        %v1232 = vshrl.u32 %v1231, 7
        %v1233 = vsub.s32 %v1230, %v1232
        %v1234 = vrot.slane %v1171, %v1233
        %v1236 = vunpack.c.l.s4 1983009808
        %v1237 = vunpack.c.0.s8 %v1236
        %v1238 = vlaneseq
        %v1239 = vshrl.u32 %v1238, 7
        %v1240 = vsub.s32 %v1237, %v1239
        %v1241 = vrot.slane %v1227, %v1240
        %v1242 = vcombine.high %v1234, %v1234
        %v1243 = vcombine.high %v1241, %v1241
        %v1244 = vcombine.high %v1172, %v1172
        %v1246 = vunpack.c.l.s4 1983009808
        %v1247 = vunpack.c.0.s8 %v1246
        %v1248 = vlaneseq
        %v1249 = vshrl.u32 %v1248, 7
        %v1250 = vsub.s32 %v1247, %v1249
        %v1251 = vrot.slane %v1172, %v1250
        %v1253 = vunpack.c.l.s4 1983009808
        %v1254 = vunpack.c.0.s8 %v1253
        %v1255 = vlaneseq
        %v1256 = vshrl.u32 %v1255, 7
        %v1257 = vsub.s32 %v1254, %v1256
        %v1258 = vrot.slane %v1244, %v1257
        %v1259 = vcombine.high %v1251, %v1251
        %v1260 = vcombine.high %v1173, %v1173
        %v1262 = vunpack.c.l.s4 1983009808
        %v1263 = vunpack.c.0.s8 %v1262
        %v1264 = vlaneseq
        %v1265 = vshrl.u32 %v1264, 7
        %v1266 = vsub.s32 %v1263, %v1265
        %v1267 = vrot.slane %v1173, %v1266
        %v1269 = vunpack.c.l.s4 1983009808
        %v1270 = vunpack.c.0.s8 %v1269
        %v1271 = vlaneseq
        %v1272 = vshrl.u32 %v1271, 7
        %v1273 = vsub.s32 %v1270, %v1272
        %v1274 = vrot.slane %v1260, %v1273
        %v1275 = vcombine.high %v1267, %v1267
        %v1276 = vcombine.high %v1274, %v1274
        %v1277 = vcombine.high %v1174, %v1174
        %v1279 = vunpack.c.l.s4 1983009808
        %v1280 = vunpack.c.0.s8 %v1279
        %v1281 = vlaneseq
        %v1282 = vshrl.u32 %v1281, 7
        %v1283 = vsub.s32 %v1280, %v1282
        %v1284 = vrot.slane %v1174, %v1283
        %v1286 = vunpack.c.l.s4 1983009808
        %v1287 = vunpack.c.0.s8 %v1286
        %v1288 = vlaneseq
        %v1289 = vshrl.u32 %v1288, 7
        %v1290 = vsub.s32 %v1287, %v1289
        %v1291 = vrot.slane %v1277, %v1290
        %v1292 = vcombine.high %v1284, %v1284
        %v1293 = vcombine.high %v1175, %v1175
        %v1295 = vunpack.c.l.s4 1983009808
        %v1296 = vunpack.c.0.s8 %v1295
        %v1297 = vlaneseq
        %v1298 = vshrl.u32 %v1297, 7
        %v1299 = vsub.s32 %v1296, %v1298
        %v1300 = vrot.slane %v1175, %v1299
        %v1302 = vunpack.c.l.s4 1983009808
        %v1303 = vunpack.c.0.s8 %v1302
        %v1304 = vlaneseq
        %v1305 = vshrl.u32 %v1304, 7
        %v1306 = vsub.s32 %v1303, %v1305
        %v1307 = vrot.slane %v1293, %v1306
        %v1308 = vcombine.high %v1300, %v1300
        %v1309 = vcombine.high %v1307, %v1307
        %v1310 = vcombine.high %v1176, %v1176
        %v1312 = vunpack.c.l.s4 1983009808
        %v1313 = vunpack.c.0.s8 %v1312
        %v1314 = vlaneseq
        %v1315 = vshrl.u32 %v1314, 7
        %v1316 = vsub.s32 %v1313, %v1315
        %v1317 = vrot.slane %v1176, %v1316
        %v1319 = vunpack.c.l.s4 1983009808
        %v1320 = vunpack.c.0.s8 %v1319
        %v1321 = vlaneseq
        %v1322 = vshrl.u32 %v1321, 7
        %v1323 = vsub.s32 %v1320, %v1322
        %v1324 = vrot.slane %v1310, %v1323
        %v1325 = vcombine.high %v1317, %v1317
        %v1326 = vcombine.high %v1177, %v1177
        %v1328 = vunpack.c.l.s4 1983009808
        %v1329 = vunpack.c.0.s8 %v1328
        %v1330 = vlaneseq
        %v1331 = vshrl.u32 %v1330, 7
        %v1332 = vsub.s32 %v1329, %v1331
        %v1333 = vrot.slane %v1177, %v1332
        %v1335 = vunpack.c.l.s4 1983009808
        %v1336 = vunpack.c.0.s8 %v1335
        %v1337 = vlaneseq
        %v1338 = vshrl.u32 %v1337, 7
        %v1339 = vsub.s32 %v1336, %v1338
        %v1340 = vrot.slane %v1326, %v1339
        %v1341 = vcombine.high %v1333, %v1333
        %v1342 = vcombine.high %v1340, %v1340
        %v1343 = vcombine.high %v1178, %v1178
        %v1345 = vunpack.c.l.s4 1983009808
        %v1346 = vunpack.c.0.s8 %v1345
        %v1347 = vlaneseq
        %v1348 = vshrl.u32 %v1347, 7
        %v1349 = vsub.s32 %v1346, %v1348
        %v1350 = vrot.slane %v1178, %v1349
        %v1352 = vunpack.c.l.s4 1983009808
        %v1353 = vunpack.c.0.s8 %v1352
        %v1354 = vlaneseq
        %v1355 = vshrl.u32 %v1354, 7
        %v1356 = vsub.s32 %v1353, %v1355
        %v1357 = vrot.slane %v1343, %v1356
        %v1358 = vcombine.high %v1350, %v1350
        %v1359 = vcombine.high %v1179, %v1179
        %v1361 = vunpack.c.l.s4 1983009808
        %v1362 = vunpack.c.0.s8 %v1361
        %v1363 = vlaneseq
        %v1364 = vshrl.u32 %v1363, 7
        %v1365 = vsub.s32 %v1362, %v1364
        %v1366 = vrot.slane %v1179, %v1365
        %v1368 = vunpack.c.l.s4 1983009808
        %v1369 = vunpack.c.0.s8 %v1368
        %v1370 = vlaneseq
        %v1371 = vshrl.u32 %v1370, 7
        %v1372 = vsub.s32 %v1369, %v1371
        %v1373 = vrot.slane %v1359, %v1372
        %v1374 = vcombine.high %v1366, %v1366
        %v1375 = vcombine.high %v1373, %v1373
        %v1376 = vcombine.high %v1180, %v1180
        %v1378 = vunpack.c.l.s4 1983009808
        %v1379 = vunpack.c.0.s8 %v1378
        %v1380 = vlaneseq
        %v1381 = vshrl.u32 %v1380, 7
        %v1382 = vsub.s32 %v1379, %v1381
        %v1383 = vrot.slane %v1180, %v1382
        %v1385 = vunpack.c.l.s4 1983009808
        %v1386 = vunpack.c.0.s8 %v1385
        %v1387 = vlaneseq
        %v1388 = vshrl.u32 %v1387, 7
        %v1389 = vsub.s32 %v1386, %v1388
        %v1390 = vrot.slane %v1376, %v1389
        %v1391 = vcombine.high %v1383, %v1383
        %v1392 = vcombine.high %v1181, %v1181
        %v1394 = vunpack.c.l.s4 1983009808
        %v1395 = vunpack.c.0.s8 %v1394
        %v1396 = vlaneseq
        %v1397 = vshrl.u32 %v1396, 7
        %v1398 = vsub.s32 %v1395, %v1397
        %v1399 = vrot.slane %v1181, %v1398
        %v1401 = vunpack.c.l.s4 1983009808
        %v1402 = vunpack.c.0.s8 %v1401
        %v1403 = vlaneseq
        %v1404 = vshrl.u32 %v1403, 7
        %v1405 = vsub.s32 %v1402, %v1404
        %v1406 = vrot.slane %v1392, %v1405
        %v1407 = vcombine.high %v1399, %v1399
        %v1408 = vcombine.high %v1406, %v1406
        %v1409 = vcombine.high %v1182, %v1182
        %v1411 = vunpack.c.l.s4 1983009808
        %v1412 = vunpack.c.0.s8 %v1411
        %v1413 = vlaneseq
        %v1414 = vshrl.u32 %v1413, 7
        %v1415 = vsub.s32 %v1412, %v1414
        %v1416 = vrot.slane %v1182, %v1415
        %v1418 = vunpack.c.l.s4 1983009808
        %v1419 = vunpack.c.0.s8 %v1418
        %v1420 = vlaneseq
        %v1421 = vshrl.u32 %v1420, 7
        %v1422 = vsub.s32 %v1419, %v1421
        %v1423 = vrot.slane %v1409, %v1422
        %v1424 = vcombine.high %v1416, %v1416
        %v1425 = vcombine.high %v1183, %v1183
        %v1427 = vunpack.c.l.s4 1983009808
        %v1428 = vunpack.c.0.s8 %v1427
        %v1429 = vlaneseq
        %v1430 = vshrl.u32 %v1429, 7
        %v1431 = vsub.s32 %v1428, %v1430
        %v1432 = vrot.slane %v1183, %v1431
        %v1434 = vunpack.c.l.s4 1983009808
        %v1435 = vunpack.c.0.s8 %v1434
        %v1436 = vlaneseq
        %v1437 = vshrl.u32 %v1436, 7
        %v1438 = vsub.s32 %v1435, %v1437
        %v1439 = vrot.slane %v1425, %v1438
        %v1440 = vcombine.high %v1432, %v1432
        %v1441 = vcombine.high %v1439, %v1439
        %v1442 = vcombine.high %v1184, %v1184
        %v1444 = vunpack.c.l.s4 1983009808
        %v1445 = vunpack.c.0.s8 %v1444
        %v1446 = vlaneseq
        %v1447 = vshrl.u32 %v1446, 7
        %v1448 = vsub.s32 %v1445, %v1447
        %v1449 = vrot.slane %v1184, %v1448
        %v1451 = vunpack.c.l.s4 1983009808
        %v1452 = vunpack.c.0.s8 %v1451
        %v1453 = vlaneseq
        %v1454 = vshrl.u32 %v1453, 7
        %v1455 = vsub.s32 %v1452, %v1454
        %v1456 = vrot.slane %v1442, %v1455
        %v1457 = vcombine.high %v1449, %v1449
        %v1458 = vcombine.high %v1185, %v1185
        %v1460 = vunpack.c.l.s4 1983009808
        %v1461 = vunpack.c.0.s8 %v1460
        %v1462 = vlaneseq
        %v1463 = vshrl.u32 %v1462, 7
        %v1464 = vsub.s32 %v1461, %v1463
        %v1465 = vrot.slane %v1185, %v1464
        %v1467 = vunpack.c.l.s4 1983009808
        %v1468 = vunpack.c.0.s8 %v1467
        %v1469 = vlaneseq
        %v1470 = vshrl.u32 %v1469, 7
        %v1471 = vsub.s32 %v1468, %v1470
        %v1472 = vrot.slane %v1458, %v1471
        %v1473 = vcombine.high %v1465, %v1465
        %v1474 = vcombine.high %v1472, %v1472
        %v1475 = vcombine.high %v1186, %v1186
        %v1477 = vunpack.c.l.s4 1983009808
        %v1478 = vunpack.c.0.s8 %v1477
        %v1479 = vlaneseq
        %v1480 = vshrl.u32 %v1479, 7
        %v1481 = vsub.s32 %v1478, %v1480
        %v1482 = vrot.slane %v1186, %v1481
        %v1484 = vunpack.c.l.s4 1983009808
        %v1485 = vunpack.c.0.s8 %v1484
        %v1486 = vlaneseq
        %v1487 = vshrl.u32 %v1486, 7
        %v1488 = vsub.s32 %v1485, %v1487
        %v1489 = vrot.slane %v1475, %v1488
        %v1490 = vcombine.high %v1482, %v1482
        %v1491 = vcombine.high %v1187, %v1187
        %v1493 = vunpack.c.l.s4 1983009808
        %v1494 = vunpack.c.0.s8 %v1493
        %v1495 = vlaneseq
        %v1496 = vshrl.u32 %v1495, 7
        %v1497 = vsub.s32 %v1494, %v1496
        %v1498 = vrot.slane %v1187, %v1497
        %v1500 = vunpack.c.l.s4 1983009808
        %v1501 = vunpack.c.0.s8 %v1500
        %v1502 = vlaneseq
        %v1503 = vshrl.u32 %v1502, 7
        %v1504 = vsub.s32 %v1501, %v1503
        %v1505 = vrot.slane %v1491, %v1504
        %v1506 = vcombine.high %v1498, %v1498
        %v1507 = vcombine.high %v1505, %v1505
        %v1508 = vcombine.high %v1188, %v1188
        %v1510 = vunpack.c.l.s4 1983009808
        %v1511 = vunpack.c.0.s8 %v1510
        %v1512 = vlaneseq
        %v1513 = vshrl.u32 %v1512, 7
        %v1514 = vsub.s32 %v1511, %v1513
        %v1515 = vrot.slane %v1188, %v1514
        %v1517 = vunpack.c.l.s4 1983009808
        %v1518 = vunpack.c.0.s8 %v1517
        %v1519 = vlaneseq
        %v1520 = vshrl.u32 %v1519, 7
        %v1521 = vsub.s32 %v1518, %v1520
        %v1522 = vrot.slane %v1508, %v1521
        %v1523 = vcombine.high %v1515, %v1515
        %v1524 = vcombine.high %v1189, %v1189
        %v1526 = vunpack.c.l.s4 1983009808
        %v1527 = vunpack.c.0.s8 %v1526
        %v1528 = vlaneseq
        %v1529 = vshrl.u32 %v1528, 7
        %v1530 = vsub.s32 %v1527, %v1529
        %v1531 = vrot.slane %v1189, %v1530
        %v1533 = vunpack.c.l.s4 1983009808
        %v1534 = vunpack.c.0.s8 %v1533
        %v1535 = vlaneseq
        %v1536 = vshrl.u32 %v1535, 7
        %v1537 = vsub.s32 %v1534, %v1536
        %v1538 = vrot.slane %v1524, %v1537
        %v1539 = vcombine.high %v1531, %v1531
        %v1540 = vcombine.high %v1538, %v1538
        %v1541 = vcombine.high %v1190, %v1190
        %v1543 = vunpack.c.l.s4 1983009808
        %v1544 = vunpack.c.0.s8 %v1543
        %v1545 = vlaneseq
        %v1546 = vshrl.u32 %v1545, 7
        %v1547 = vsub.s32 %v1544, %v1546
        %v1548 = vrot.slane %v1190, %v1547
        %v1550 = vunpack.c.l.s4 1983009808
        %v1551 = vunpack.c.0.s8 %v1550
        %v1552 = vlaneseq
        %v1553 = vshrl.u32 %v1552, 7
        %v1554 = vsub.s32 %v1551, %v1553
        %v1555 = vrot.slane %v1541, %v1554
        %v1556 = vcombine.high %v1548, %v1548
        %v1557 = vcombine.high %v1191, %v1191
        %v1559 = vunpack.c.l.s4 1983009808
        %v1560 = vunpack.c.0.s8 %v1559
        %v1561 = vlaneseq
        %v1562 = vshrl.u32 %v1561, 7
        %v1563 = vsub.s32 %v1560, %v1562
        %v1564 = vrot.slane %v1191, %v1563
        %v1566 = vunpack.c.l.s4 1983009808
        %v1567 = vunpack.c.0.s8 %v1566
        %v1568 = vlaneseq
        %v1569 = vshrl.u32 %v1568, 7
        %v1570 = vsub.s32 %v1567, %v1569
        %v1571 = vrot.slane %v1557, %v1570
        %v1572 = vcombine.high %v1564, %v1564
        %v1573 = vcombine.high %v1571, %v1571
        %v1574 = vcombine.high %v1192, %v1192
        %v1576 = vunpack.c.l.s4 1983009808
        %v1577 = vunpack.c.0.s8 %v1576
        %v1578 = vlaneseq
        %v1579 = vshrl.u32 %v1578, 7
        %v1580 = vsub.s32 %v1577, %v1579
        %v1581 = vrot.slane %v1192, %v1580
        %v1583 = vunpack.c.l.s4 1983009808
        %v1584 = vunpack.c.0.s8 %v1583
        %v1585 = vlaneseq
        %v1586 = vshrl.u32 %v1585, 7
        %v1587 = vsub.s32 %v1584, %v1586
        %v1588 = vrot.slane %v1574, %v1587
        %v1589 = vcombine.high %v1581, %v1581
        %v1590 = vcombine.high %v1193, %v1193
        %v1592 = vunpack.c.l.s4 1983009808
        %v1593 = vunpack.c.0.s8 %v1592
        %v1594 = vlaneseq
        %v1595 = vshrl.u32 %v1594, 7
        %v1596 = vsub.s32 %v1593, %v1595
        %v1597 = vrot.slane %v1193, %v1596
        %v1599 = vunpack.c.l.s4 1983009808
        %v1600 = vunpack.c.0.s8 %v1599
        %v1601 = vlaneseq
        %v1602 = vshrl.u32 %v1601, 7
        %v1603 = vsub.s32 %v1600, %v1602
        %v1604 = vrot.slane %v1590, %v1603
        %v1605 = vcombine.high %v1597, %v1597
        %v1606 = vcombine.high %v1604, %v1604
        %v1607 = vcombine.high %v1194, %v1194
        %v1609 = vunpack.c.l.s4 1983009808
        %v1610 = vunpack.c.0.s8 %v1609
        %v1611 = vlaneseq
        %v1612 = vshrl.u32 %v1611, 7
        %v1613 = vsub.s32 %v1610, %v1612
        %v1614 = vrot.slane %v1194, %v1613
        %v1616 = vunpack.c.l.s4 1983009808
        %v1617 = vunpack.c.0.s8 %v1616
        %v1618 = vlaneseq
        %v1619 = vshrl.u32 %v1618, 7
        %v1620 = vsub.s32 %v1617, %v1619
        %v1621 = vrot.slane %v1607, %v1620
        %v1622 = vcombine.high %v1614, %v1614
        %v1623 = vcombine.high %v1195, %v1195
        %v1625 = vunpack.c.l.s4 1983009808
        %v1626 = vunpack.c.0.s8 %v1625
        %v1627 = vlaneseq
        %v1628 = vshrl.u32 %v1627, 7
        %v1629 = vsub.s32 %v1626, %v1628
        %v1630 = vrot.slane %v1195, %v1629
        %v1632 = vunpack.c.l.s4 1983009808
        %v1633 = vunpack.c.0.s8 %v1632
        %v1634 = vlaneseq
        %v1635 = vshrl.u32 %v1634, 7
        %v1636 = vsub.s32 %v1633, %v1635
        %v1637 = vrot.slane %v1623, %v1636
        %v1638 = vcombine.high %v1630, %v1630
        %v1639 = vcombine.high %v1637, %v1637
        %v1640 = vcombine.high %v1196, %v1196
        %v1642 = vunpack.c.l.s4 1983009808
        %v1643 = vunpack.c.0.s8 %v1642
        %v1644 = vlaneseq
        %v1645 = vshrl.u32 %v1644, 7
        %v1646 = vsub.s32 %v1643, %v1645
        %v1647 = vrot.slane %v1196, %v1646
        %v1649 = vunpack.c.l.s4 1983009808
        %v1650 = vunpack.c.0.s8 %v1649
        %v1651 = vlaneseq
        %v1652 = vshrl.u32 %v1651, 7
        %v1653 = vsub.s32 %v1650, %v1652
        %v1654 = vrot.slane %v1640, %v1653
        %v1655 = vcombine.high %v1647, %v1647
        %v1656 = vcombine.high %v1197, %v1197
        %v1658 = vunpack.c.l.s4 1983009808
        %v1659 = vunpack.c.0.s8 %v1658
        %v1660 = vlaneseq
        %v1661 = vshrl.u32 %v1660, 7
        %v1662 = vsub.s32 %v1659, %v1661
        %v1663 = vrot.slane %v1197, %v1662
        %v1665 = vunpack.c.l.s4 1983009808
        %v1666 = vunpack.c.0.s8 %v1665
        %v1667 = vlaneseq
        %v1668 = vshrl.u32 %v1667, 7
        %v1669 = vsub.s32 %v1666, %v1668
        %v1670 = vrot.slane %v1656, %v1669
        %v1671 = vcombine.high %v1663, %v1663
        %v1672 = vcombine.high %v1670, %v1670
        %v1673 = vcombine.high %v1198, %v1198
        %v1675 = vunpack.c.l.s4 1983009808
        %v1676 = vunpack.c.0.s8 %v1675
        %v1677 = vlaneseq
        %v1678 = vshrl.u32 %v1677, 7
        %v1679 = vsub.s32 %v1676, %v1678
        %v1680 = vrot.slane %v1198, %v1679
        %v1682 = vunpack.c.l.s4 1983009808
        %v1683 = vunpack.c.0.s8 %v1682
        %v1684 = vlaneseq
        %v1685 = vshrl.u32 %v1684, 7
        %v1686 = vsub.s32 %v1683, %v1685
        %v1687 = vrot.slane %v1673, %v1686
        %v1688 = vcombine.high %v1680, %v1680
        %v1689 = vcombine.low %v1234, %v1242
        %v1690 = vcombine.low %v1241, %v1243
        %v1692 = vunpack.c.l.s4 1983009808
        %v1693 = vunpack.c.0.s8 %v1692
        %v1694 = vlaneseq
        %v1695 = vshrl.u32 %v1694, 7
        %v1696 = vsub.s32 %v1693, %v1695
        %v1697 = vrot.slane %v1689, %v1696
        %v1699 = vunpack.c.l.s4 1983009808
        %v1700 = vunpack.c.0.s8 %v1699
        %v1701 = vlaneseq
        %v1702 = vshrl.u32 %v1701, 7
        %v1703 = vsub.s32 %v1700, %v1702
        %v1704 = vrot.slane %v1690, %v1703
        %v1705 = vcombine.low %v1697, %v1704
        %v1706 = vcombine.low %v1251, %v1259
        %v1707 = vcombine.low %v1258, %v1267
        %v1709 = vunpack.c.l.s4 1983009808
        %v1710 = vunpack.c.0.s8 %v1709
        %v1711 = vlaneseq
        %v1712 = vshrl.u32 %v1711, 7
        %v1713 = vsub.s32 %v1710, %v1712
        %v1714 = vrot.slane %v1706, %v1713
        %v1716 = vunpack.c.l.s4 1983009808
        %v1717 = vunpack.c.0.s8 %v1716
        %v1718 = vlaneseq
        %v1719 = vshrl.u32 %v1718, 7
        %v1720 = vsub.s32 %v1717, %v1719
        %v1721 = vrot.slane %v1707, %v1720
        %v1722 = vcombine.low %v1714, %v1721
        %v1723 = vcombine.low %v1275, %v1274
        %v1724 = vcombine.low %v1276, %v1284
        %v1726 = vunpack.c.l.s4 1983009808
        %v1727 = vunpack.c.0.s8 %v1726
        %v1728 = vlaneseq
        %v1729 = vshrl.u32 %v1728, 7
        %v1730 = vsub.s32 %v1727, %v1729
        %v1731 = vrot.slane %v1723, %v1730
        %v1733 = vunpack.c.l.s4 1983009808
        %v1734 = vunpack.c.0.s8 %v1733
        %v1735 = vlaneseq
        %v1736 = vshrl.u32 %v1735, 7
        %v1737 = vsub.s32 %v1734, %v1736
        %v1738 = vrot.slane %v1724, %v1737
        %v1739 = vcombine.low %v1731, %v1738
        %v1740 = vcombine.low %v1292, %v1291
        %v1741 = vcombine.low %v1300, %v1308
        %v1743 = vunpack.c.l.s4 1983009808
        %v1744 = vunpack.c.0.s8 %v1743
        %v1745 = vlaneseq
        %v1746 = vshrl.u32 %v1745, 7
        %v1747 = vsub.s32 %v1744, %v1746
        %v1748 = vrot.slane %v1740, %v1747
        %v1750 = vunpack.c.l.s4 1983009808
        %v1751 = vunpack.c.0.s8 %v1750
        %v1752 = vlaneseq
        %v1753 = vshrl.u32 %v1752, 7
        %v1754 = vsub.s32 %v1751, %v1753
        %v1755 = vrot.slane %v1741, %v1754
        %v1756 = vcombine.low %v1748, %v1755
        %v1757 = vcombine.low %v1307, %v1309
        %v1758 = vcombine.low %v1317, %v1325
        %v1760 = vunpack.c.l.s4 1983009808
        %v1761 = vunpack.c.0.s8 %v1760
        %v1762 = vlaneseq
        %v1763 = vshrl.u32 %v1762, 7
        %v1764 = vsub.s32 %v1761, %v1763
        %v1765 = vrot.slane %v1757, %v1764
        %v1767 = vunpack.c.l.s4 1983009808
        %v1768 = vunpack.c.0.s8 %v1767
        %v1769 = vlaneseq
        %v1770 = vshrl.u32 %v1769, 7
        %v1771 = vsub.s32 %v1768, %v1770
        %v1772 = vrot.slane %v1758, %v1771
        %v1773 = vcombine.low %v1765, %v1772
        %v1774 = vcombine.low %v1324, %v1333
        %v1775 = vcombine.low %v1341, %v1340
        %v1777 = vunpack.c.l.s4 1983009808
        %v1778 = vunpack.c.0.s8 %v1777
        %v1779 = vlaneseq
        %v1780 = vshrl.u32 %v1779, 7
        %v1781 = vsub.s32 %v1778, %v1780
        %v1782 = vrot.slane %v1774, %v1781
        %v1784 = vunpack.c.l.s4 1983009808
        %v1785 = vunpack.c.0.s8 %v1784
        %v1786 = vlaneseq
        %v1787 = vshrl.u32 %v1786, 7
        %v1788 = vsub.s32 %v1785, %v1787
        %v1789 = vrot.slane %v1775, %v1788
        %v1790 = vcombine.low %v1782, %v1789
        %v1791 = vcombine.low %v1342, %v1350
        %v1792 = vcombine.low %v1358, %v1357
        %v1794 = vunpack.c.l.s4 1983009808
        %v1795 = vunpack.c.0.s8 %v1794
        %v1796 = vlaneseq
        %v1797 = vshrl.u32 %v1796, 7
        %v1798 = vsub.s32 %v1795, %v1797
        %v1799 = vrot.slane %v1791, %v1798
        %v1801 = vunpack.c.l.s4 1983009808
        %v1802 = vunpack.c.0.s8 %v1801
        %v1803 = vlaneseq
        %v1804 = vshrl.u32 %v1803, 7
        %v1805 = vsub.s32 %v1802, %v1804
        %v1806 = vrot.slane %v1792, %v1805
        %v1807 = vcombine.low %v1799, %v1806
        %v1808 = vcombine.low %v1366, %v1374
        %v1809 = vcombine.low %v1373, %v1375
        %v1811 = vunpack.c.l.s4 1983009808
        %v1812 = vunpack.c.0.s8 %v1811
        %v1813 = vlaneseq
        %v1814 = vshrl.u32 %v1813, 7
        %v1815 = vsub.s32 %v1812, %v1814
        %v1816 = vrot.slane %v1808, %v1815
        %v1818 = vunpack.c.l.s4 1983009808
        %v1819 = vunpack.c.0.s8 %v1818
        %v1820 = vlaneseq
        %v1821 = vshrl.u32 %v1820, 7
        %v1822 = vsub.s32 %v1819, %v1821
        %v1823 = vrot.slane %v1809, %v1822
        %v1824 = vcombine.low %v1816, %v1823
        %v1825 = vcombine.low %v1383, %v1391
        %v1826 = vcombine.low %v1390, %v1399
        %v1828 = vunpack.c.l.s4 1983009808
        %v1829 = vunpack.c.0.s8 %v1828
        %v1830 = vlaneseq
        %v1831 = vshrl.u32 %v1830, 7
        %v1832 = vsub.s32 %v1829, %v1831
        %v1833 = vrot.slane %v1825, %v1832
        %v1835 = vunpack.c.l.s4 1983009808
        %v1836 = vunpack.c.0.s8 %v1835
        %v1837 = vlaneseq
        %v1838 = vshrl.u32 %v1837, 7
        %v1839 = vsub.s32 %v1836, %v1838
        %v1840 = vrot.slane %v1826, %v1839
        %v1841 = vcombine.low %v1833, %v1840
        %v1842 = vcombine.low %v1407, %v1406
        %v1843 = vcombine.low %v1408, %v1416
        %v1845 = vunpack.c.l.s4 1983009808
        %v1846 = vunpack.c.0.s8 %v1845
        %v1847 = vlaneseq
        %v1848 = vshrl.u32 %v1847, 7
        %v1849 = vsub.s32 %v1846, %v1848
        %v1850 = vrot.slane %v1842, %v1849
        %v1852 = vunpack.c.l.s4 1983009808
        %v1853 = vunpack.c.0.s8 %v1852
        %v1854 = vlaneseq
        %v1855 = vshrl.u32 %v1854, 7
        %v1856 = vsub.s32 %v1853, %v1855
        %v1857 = vrot.slane %v1843, %v1856
        %v1858 = vcombine.low %v1850, %v1857
        %v1859 = vcombine.low %v1424, %v1423
        %v1860 = vcombine.low %v1432, %v1440
        %v1862 = vunpack.c.l.s4 1983009808
        %v1863 = vunpack.c.0.s8 %v1862
        %v1864 = vlaneseq
        %v1865 = vshrl.u32 %v1864, 7
        %v1866 = vsub.s32 %v1863, %v1865
        %v1867 = vrot.slane %v1859, %v1866
        %v1869 = vunpack.c.l.s4 1983009808
        %v1870 = vunpack.c.0.s8 %v1869
        %v1871 = vlaneseq
        %v1872 = vshrl.u32 %v1871, 7
        %v1873 = vsub.s32 %v1870, %v1872
        %v1874 = vrot.slane %v1860, %v1873
        %v1875 = vcombine.low %v1867, %v1874
        %v1876 = vcombine.low %v1439, %v1441
        %v1877 = vcombine.low %v1449, %v1457
        %v1879 = vunpack.c.l.s4 1983009808
        %v1880 = vunpack.c.0.s8 %v1879
        %v1881 = vlaneseq
        %v1882 = vshrl.u32 %v1881, 7
        %v1883 = vsub.s32 %v1880, %v1882
        %v1884 = vrot.slane %v1876, %v1883
        %v1886 = vunpack.c.l.s4 1983009808
        %v1887 = vunpack.c.0.s8 %v1886
        %v1888 = vlaneseq
        %v1889 = vshrl.u32 %v1888, 7
        %v1890 = vsub.s32 %v1887, %v1889
        %v1891 = vrot.slane %v1877, %v1890
        %v1892 = vcombine.low %v1884, %v1891
        %v1893 = vcombine.low %v1456, %v1465
        %v1894 = vcombine.low %v1473, %v1472
        %v1896 = vunpack.c.l.s4 1983009808
        %v1897 = vunpack.c.0.s8 %v1896
        %v1898 = vlaneseq
        %v1899 = vshrl.u32 %v1898, 7
        %v1900 = vsub.s32 %v1897, %v1899
        %v1901 = vrot.slane %v1893, %v1900
        %v1903 = vunpack.c.l.s4 1983009808
        %v1904 = vunpack.c.0.s8 %v1903
        %v1905 = vlaneseq
        %v1906 = vshrl.u32 %v1905, 7
        %v1907 = vsub.s32 %v1904, %v1906
        %v1908 = vrot.slane %v1894, %v1907
        %v1909 = vcombine.low %v1901, %v1908
        %v1910 = vcombine.low %v1474, %v1482
        %v1911 = vcombine.low %v1490, %v1489
        %v1913 = vunpack.c.l.s4 1983009808
        %v1914 = vunpack.c.0.s8 %v1913
        %v1915 = vlaneseq
        %v1916 = vshrl.u32 %v1915, 7
        %v1917 = vsub.s32 %v1914, %v1916
        %v1918 = vrot.slane %v1910, %v1917
        %v1920 = vunpack.c.l.s4 1983009808
        %v1921 = vunpack.c.0.s8 %v1920
        %v1922 = vlaneseq
        %v1923 = vshrl.u32 %v1922, 7
        %v1924 = vsub.s32 %v1921, %v1923
        %v1925 = vrot.slane %v1911, %v1924
        %v1926 = vcombine.low %v1918, %v1925
        %v1927 = vcombine.low %v1498, %v1506
        %v1928 = vcombine.low %v1505, %v1507
        %v1930 = vunpack.c.l.s4 1983009808
        %v1931 = vunpack.c.0.s8 %v1930
        %v1932 = vlaneseq
        %v1933 = vshrl.u32 %v1932, 7
        %v1934 = vsub.s32 %v1931, %v1933
        %v1935 = vrot.slane %v1927, %v1934
        %v1937 = vunpack.c.l.s4 1983009808
        %v1938 = vunpack.c.0.s8 %v1937
        %v1939 = vlaneseq
        %v1940 = vshrl.u32 %v1939, 7
        %v1941 = vsub.s32 %v1938, %v1940
        %v1942 = vrot.slane %v1928, %v1941
        %v1943 = vcombine.low %v1935, %v1942
        %v1944 = vcombine.low %v1515, %v1523
        %v1945 = vcombine.low %v1522, %v1531
        %v1947 = vunpack.c.l.s4 1983009808
        %v1948 = vunpack.c.0.s8 %v1947
        %v1949 = vlaneseq
        %v1950 = vshrl.u32 %v1949, 7
        %v1951 = vsub.s32 %v1948, %v1950
        %v1952 = vrot.slane %v1944, %v1951
        %v1954 = vunpack.c.l.s4 1983009808
        %v1955 = vunpack.c.0.s8 %v1954
        %v1956 = vlaneseq
        %v1957 = vshrl.u32 %v1956, 7
        %v1958 = vsub.s32 %v1955, %v1957
        %v1959 = vrot.slane %v1945, %v1958
        %v1960 = vcombine.low %v1952, %v1959
        %v1961 = vcombine.low %v1539, %v1538
        %v1962 = vcombine.low %v1540, %v1548
        %v1964 = vunpack.c.l.s4 1983009808
        %v1965 = vunpack.c.0.s8 %v1964
        %v1966 = vlaneseq
        %v1967 = vshrl.u32 %v1966, 7
        %v1968 = vsub.s32 %v1965, %v1967
        %v1969 = vrot.slane %v1961, %v1968
        %v1971 = vunpack.c.l.s4 1983009808
        %v1972 = vunpack.c.0.s8 %v1971
        %v1973 = vlaneseq
        %v1974 = vshrl.u32 %v1973, 7
        %v1975 = vsub.s32 %v1972, %v1974
        %v1976 = vrot.slane %v1962, %v1975
        %v1977 = vcombine.low %v1969, %v1976
        %v1978 = vcombine.low %v1556, %v1555
        %v1979 = vcombine.low %v1564, %v1572
        %v1981 = vunpack.c.l.s4 1983009808
        %v1982 = vunpack.c.0.s8 %v1981
        %v1983 = vlaneseq
        %v1984 = vshrl.u32 %v1983, 7
        %v1985 = vsub.s32 %v1982, %v1984
        %v1986 = vrot.slane %v1978, %v1985
        %v1988 = vunpack.c.l.s4 1983009808
        %v1989 = vunpack.c.0.s8 %v1988
        %v1990 = vlaneseq
        %v1991 = vshrl.u32 %v1990, 7
        %v1992 = vsub.s32 %v1989, %v1991
        %v1993 = vrot.slane %v1979, %v1992
        %v1994 = vcombine.low %v1986, %v1993
        %v1995 = vcombine.low %v1571, %v1573
        %v1996 = vcombine.low %v1581, %v1589
        %v1998 = vunpack.c.l.s4 1983009808
        %v1999 = vunpack.c.0.s8 %v1998
        %v2000 = vlaneseq
        %v2001 = vshrl.u32 %v2000, 7
        %v2002 = vsub.s32 %v1999, %v2001
        %v2003 = vrot.slane %v1995, %v2002
        %v2005 = vunpack.c.l.s4 1983009808
        %v2006 = vunpack.c.0.s8 %v2005
        %v2007 = vlaneseq
        %v2008 = vshrl.u32 %v2007, 7
        %v2009 = vsub.s32 %v2006, %v2008
        %v2010 = vrot.slane %v1996, %v2009
        %v2011 = vcombine.low %v2003, %v2010
        %v2012 = vcombine.low %v1588, %v1597
        %v2013 = vcombine.low %v1605, %v1604
        %v2015 = vunpack.c.l.s4 1983009808
        %v2016 = vunpack.c.0.s8 %v2015
        %v2017 = vlaneseq
        %v2018 = vshrl.u32 %v2017, 7
        %v2019 = vsub.s32 %v2016, %v2018
        %v2020 = vrot.slane %v2012, %v2019
        %v2022 = vunpack.c.l.s4 1983009808
        %v2023 = vunpack.c.0.s8 %v2022
        %v2024 = vlaneseq
        %v2025 = vshrl.u32 %v2024, 7
        %v2026 = vsub.s32 %v2023, %v2025
        %v2027 = vrot.slane %v2013, %v2026
        %v2028 = vcombine.low %v2020, %v2027
        %v2029 = vcombine.low %v1606, %v1614
        %v2030 = vcombine.low %v1622, %v1621
        %v2032 = vunpack.c.l.s4 1983009808
        %v2033 = vunpack.c.0.s8 %v2032
        %v2034 = vlaneseq
        %v2035 = vshrl.u32 %v2034, 7
        %v2036 = vsub.s32 %v2033, %v2035
        %v2037 = vrot.slane %v2029, %v2036
        %v2039 = vunpack.c.l.s4 1983009808
        %v2040 = vunpack.c.0.s8 %v2039
        %v2041 = vlaneseq
        %v2042 = vshrl.u32 %v2041, 7
        %v2043 = vsub.s32 %v2040, %v2042
        %v2044 = vrot.slane %v2030, %v2043
        %v2045 = vcombine.low %v2037, %v2044
        %v2046 = vcombine.low %v1630, %v1638
        %v2047 = vcombine.low %v1637, %v1639
        %v2049 = vunpack.c.l.s4 1983009808
        %v2050 = vunpack.c.0.s8 %v2049
        %v2051 = vlaneseq
        %v2052 = vshrl.u32 %v2051, 7
        %v2053 = vsub.s32 %v2050, %v2052
        %v2054 = vrot.slane %v2046, %v2053
        %v2056 = vunpack.c.l.s4 1983009808
        %v2057 = vunpack.c.0.s8 %v2056
        %v2058 = vlaneseq
        %v2059 = vshrl.u32 %v2058, 7
        %v2060 = vsub.s32 %v2057, %v2059
        %v2061 = vrot.slane %v2047, %v2060
        %v2062 = vcombine.low %v2054, %v2061
        %v2063 = vcombine.low %v1647, %v1655
        %v2064 = vcombine.low %v1654, %v1663
        %v2066 = vunpack.c.l.s4 1983009808
        %v2067 = vunpack.c.0.s8 %v2066
        %v2068 = vlaneseq
        %v2069 = vshrl.u32 %v2068, 7
        %v2070 = vsub.s32 %v2067, %v2069
        %v2071 = vrot.slane %v2063, %v2070
        %v2073 = vunpack.c.l.s4 1983009808
        %v2074 = vunpack.c.0.s8 %v2073
        %v2075 = vlaneseq
        %v2076 = vshrl.u32 %v2075, 7
        %v2077 = vsub.s32 %v2074, %v2076
        %v2078 = vrot.slane %v2064, %v2077
        %v2079 = vcombine.low %v2071, %v2078
        %v2080 = vcombine.low %v1671, %v1670
        %v2081 = vcombine.low %v1672, %v1680
        %v2083 = vunpack.c.l.s4 1983009808
        %v2084 = vunpack.c.0.s8 %v2083
        %v2085 = vlaneseq
        %v2086 = vshrl.u32 %v2085, 7
        %v2087 = vsub.s32 %v2084, %v2086
        %v2088 = vrot.slane %v2080, %v2087
        %v2090 = vunpack.c.l.s4 1983009808
        %v2091 = vunpack.c.0.s8 %v2090
        %v2092 = vlaneseq
        %v2093 = vshrl.u32 %v2092, 7
        %v2094 = vsub.s32 %v2091, %v2093
        %v2095 = vrot.slane %v2081, %v2094
        %v2096 = vcombine.low %v2088, %v2095
        %v2097 = vcombine.low %v1688, %v1687
        %v2099 = vunpack.c.l.s4 1983009808
        %v2100 = vunpack.c.0.s8 %v2099
        %v2101 = vlaneseq
        %v2102 = vshrl.u32 %v2101, 7
        %v2103 = vsub.s32 %v2100, %v2102
        %v2104 = vrot.slane %v2097, %v2103
        %2105 = vrot.lane.b32.xlu0 %v1705, 4
        %v2106 = vpop.permute.xlu0 %2105
        %2107 = vrot.lane.b32.xlu0 %v1722, 4
        %v2108 = vpop.permute.xlu0 %2107
        %2109 = vrot.lane.b32.xlu0 %v1739, 4
        %v2110 = vpop.permute.xlu0 %2109
        %2111 = vrot.lane.b32.xlu0 %v1756, 4
        %v2112 = vpop.permute.xlu0 %2111
        %2113 = vrot.lane.b32.xlu0 %v1773, 4
        %v2114 = vpop.permute.xlu0 %2113
        %2115 = vrot.lane.b32.xlu0 %v1790, 4
        %v2116 = vpop.permute.xlu0 %2115
        %2117 = vrot.lane.b32.xlu0 %v1807, 4
        %v2118 = vpop.permute.xlu0 %2117
        %2119 = vrot.lane.b32.xlu0 %v1824, 4
        %v2120 = vpop.permute.xlu0 %2119
        %2121 = vrot.lane.b32.xlu0 %v1841, 4
        %v2122 = vpop.permute.xlu0 %2121
        %2123 = vrot.lane.b32.xlu0 %v1858, 4
        %v2124 = vpop.permute.xlu0 %2123
        %2125 = vrot.lane.b32.xlu0 %v1875, 4
        %v2126 = vpop.permute.xlu0 %2125
        %2127 = vrot.lane.b32.xlu0 %v1892, 4
        %v2128 = vpop.permute.xlu0 %2127
        %2129 = vrot.lane.b32.xlu0 %v1909, 4
        %v2130 = vpop.permute.xlu0 %2129
        %2131 = vrot.lane.b32.xlu0 %v1926, 4
        %v2132 = vpop.permute.xlu0 %2131
        %2133 = vrot.lane.b32.xlu0 %v1943, 4
        %v2134 = vpop.permute.xlu0 %2133
        %2135 = vrot.lane.b32.xlu0 %v1960, 4
        %v2136 = vpop.permute.xlu0 %2135
        %2137 = vrot.lane.b32.xlu0 %v1977, 4
        %v2138 = vpop.permute.xlu0 %2137
        %2139 = vrot.lane.b32.xlu0 %v1994, 4
        %v2140 = vpop.permute.xlu0 %2139
        %2141 = vrot.lane.b32.xlu0 %v2011, 4
        %v2142 = vpop.permute.xlu0 %2141
        %2143 = vrot.lane.b32.xlu0 %v2028, 4
        %v2144 = vpop.permute.xlu0 %2143
        %2145 = vrot.lane.b32.xlu0 %v2045, 4
        %v2146 = vpop.permute.xlu0 %2145
        %2147 = vrot.lane.b32.xlu0 %v2062, 4
        %v2148 = vpop.permute.xlu0 %2147
        %2149 = vrot.lane.b32.xlu0 %v2079, 4
        %v2150 = vpop.permute.xlu0 %2149
        %2151 = vrot.lane.b32.xlu0 %v2096, 4
        %v2152 = vpop.permute.xlu0 %2151
        %2153 = vrot.lane.b32.xlu0 %v2104, 4
        %v2154 = vpop.permute.xlu0 %2153
        %vm2180 = vcmask 64544
        %2181 = vst.msk [vmem:[#allocation2] sm:$0xff] %vm2180, %v2106
        %2182 = vst.msk [vmem:[#allocation2 + $0x8] sm:$0xff] %vm2180, %v2108
        %2183 = vst.msk [vmem:[#allocation2 + $0x10] sm:$0xff] %vm2180, %v2110
        %2184 = vst.msk [vmem:[#allocation2 + $0x18] sm:$0xff] %vm2180, %v2112
        %2185 = vst.msk [vmem:[#allocation2 + $0x20] sm:$0xff] %vm2180, %v2114
        %2186 = vst.msk [vmem:[#allocation2 + $0x28] sm:$0xff] %vm2180, %v2116
        %2187 = vst.msk [vmem:[#allocation2 + $0x30] sm:$0xff] %vm2180, %v2118
        %2188 = vst.msk [vmem:[#allocation2 + $0x38] sm:$0xff] %vm2180, %v2120
        %2189 = vst.msk [vmem:[#allocation2 + $0x40] sm:$0xff] %vm2180, %v2122
        %2190 = vst.msk [vmem:[#allocation2 + $0x48] sm:$0xff] %vm2180, %v2124
        %2191 = vst.msk [vmem:[#allocation2 + $0x50] sm:$0xff] %vm2180, %v2126
        %2192 = vst.msk [vmem:[#allocation2 + $0x58] sm:$0xff] %vm2180, %v2128
        %2193 = vst.msk [vmem:[#allocation2 + $0x60] sm:$0xff] %vm2180, %v2130
        %2194 = vst.msk [vmem:[#allocation2 + $0x68] sm:$0xff] %vm2180, %v2132
        %2195 = vst.msk [vmem:[#allocation2 + $0x70] sm:$0xff] %vm2180, %v2134
        %2196 = vst.msk [vmem:[#allocation2 + $0x78] sm:$0xff] %vm2180, %v2136
        %2197 = vst.msk [vmem:[#allocation2 + $0x80] sm:$0xff] %vm2180, %v2138
        %2198 = vst.msk [vmem:[#allocation2 + $0x88] sm:$0xff] %vm2180, %v2140
        %2199 = vst.msk [vmem:[#allocation2 + $0x90] sm:$0xff] %vm2180, %v2142
        %2200 = vst.msk [vmem:[#allocation2 + $0x98] sm:$0xff] %vm2180, %v2144
        %2201 = vst.msk [vmem:[#allocation2 + $0xa0] sm:$0xff] %vm2180, %v2146
        %2202 = vst.msk [vmem:[#allocation2 + $0xa8] sm:$0xff] %vm2180, %v2148
        %2203 = vst.msk [vmem:[#allocation2 + $0xb0] sm:$0xff] %vm2180, %v2150
        %2204 = vst.msk [vmem:[#allocation2 + $0xb8] sm:$0xff] %vm2180, %v2152
        %vm2205 = vcmask 60448
        %2206 = vst.msk [vmem:[#allocation2 + $0xc0] sm:$0xf] %vm2205, %v2154
        %v2207 = vld [vmem:[%s168 + $0x2] sm:$0xff]
        %v2208 = vld [vmem:[%s168 + $0xa] sm:$0x3f]
        %v2209 = vld [vmem:[%s168 + $0x12] sm:$0xff]
        %v2210 = vld [vmem:[%s168 + $0x1a] sm:$0x3f]
        %v2211 = vld [vmem:[%s168 + $0x22] sm:$0xff]
        %v2212 = vld [vmem:[%s168 + $0x2a] sm:$0x3f]
        %v2213 = vld [vmem:[%s168 + $0x32] sm:$0xff]
        %v2214 = vld [vmem:[%s168 + $0x3a] sm:$0x3f]
        %v2215 = vld [vmem:[%s168 + $0x42] sm:$0xff]
        %v2216 = vld [vmem:[%s168 + $0x4a] sm:$0x3f]
        %v2217 = vld [vmem:[%s168 + $0x52] sm:$0xff]
        %v2218 = vld [vmem:[%s168 + $0x5a] sm:$0x3f]
        %v2219 = vld [vmem:[%s168 + $0x62] sm:$0xff]
        %v2220 = vld [vmem:[%s168 + $0x6a] sm:$0x3f]
        %v2221 = vld [vmem:[%s168 + $0x72] sm:$0xff]
        %v2222 = vld [vmem:[%s168 + $0x7a] sm:$0x3f]
        %v2223 = vld [vmem:[%s168 + $0x82] sm:$0xff]
        %v2224 = vld [vmem:[%s168 + $0x8a] sm:$0x3f]
        %v2225 = vld [vmem:[%s168 + $0x92] sm:$0xff]
        %v2226 = vld [vmem:[%s168 + $0x9a] sm:$0x3f]
        %v2227 = vld [vmem:[%s168 + $0xa2] sm:$0xff]
        %v2228 = vld [vmem:[%s168 + $0xaa] sm:$0x3f]
        %v2229 = vld [vmem:[%s168 + $0xb2] sm:$0xff]
        %v2230 = vld [vmem:[%s168 + $0xba] sm:$0x3f]
        %v2231 = vld [vmem:[%s168 + $0xc2] sm:$0xff]
        %v2232 = vld [vmem:[%s168 + $0xca] sm:$0x3f]
        %v2233 = vld [vmem:[%s168 + $0xd2] sm:$0xff]
        %v2234 = vld [vmem:[%s168 + $0xda] sm:$0x3f]
        %v2263 = vcombine.high %v2207, %v2207
        %v2265 = vunpack.c.l.s4 1983009808
        %v2266 = vunpack.c.0.s8 %v2265
        %v2267 = vlaneseq
        %v2268 = vshrl.u32 %v2267, 7
        %v2269 = vsub.s32 %v2266, %v2268
        %v2270 = vrot.slane %v2207, %v2269
        %v2272 = vunpack.c.l.s4 1983009808
        %v2273 = vunpack.c.0.s8 %v2272
        %v2274 = vlaneseq
        %v2275 = vshrl.u32 %v2274, 7
        %v2276 = vsub.s32 %v2273, %v2275
        %v2277 = vrot.slane %v2263, %v2276
        %v2278 = vcombine.high %v2270, %v2270
        %v2279 = vcombine.high %v2277, %v2277
        %v2280 = vcombine.high %v2208, %v2208
        %v2282 = vunpack.c.l.s4 1983009808
        %v2283 = vunpack.c.0.s8 %v2282
        %v2284 = vlaneseq
        %v2285 = vshrl.u32 %v2284, 7
        %v2286 = vsub.s32 %v2283, %v2285
        %v2287 = vrot.slane %v2208, %v2286
        %v2289 = vunpack.c.l.s4 1983009808
        %v2290 = vunpack.c.0.s8 %v2289
        %v2291 = vlaneseq
        %v2292 = vshrl.u32 %v2291, 7
        %v2293 = vsub.s32 %v2290, %v2292
        %v2294 = vrot.slane %v2280, %v2293
        %v2295 = vcombine.high %v2287, %v2287
        %v2296 = vcombine.high %v2209, %v2209
        %v2298 = vunpack.c.l.s4 1983009808
        %v2299 = vunpack.c.0.s8 %v2298
        %v2300 = vlaneseq
        %v2301 = vshrl.u32 %v2300, 7
        %v2302 = vsub.s32 %v2299, %v2301
        %v2303 = vrot.slane %v2209, %v2302
        %v2305 = vunpack.c.l.s4 1983009808
        %v2306 = vunpack.c.0.s8 %v2305
        %v2307 = vlaneseq
        %v2308 = vshrl.u32 %v2307, 7
        %v2309 = vsub.s32 %v2306, %v2308
        %v2310 = vrot.slane %v2296, %v2309
        %v2311 = vcombine.high %v2303, %v2303
        %v2312 = vcombine.high %v2310, %v2310
        %v2313 = vcombine.high %v2210, %v2210
        %v2315 = vunpack.c.l.s4 1983009808
        %v2316 = vunpack.c.0.s8 %v2315
        %v2317 = vlaneseq
        %v2318 = vshrl.u32 %v2317, 7
        %v2319 = vsub.s32 %v2316, %v2318
        %v2320 = vrot.slane %v2210, %v2319
        %v2322 = vunpack.c.l.s4 1983009808
        %v2323 = vunpack.c.0.s8 %v2322
        %v2324 = vlaneseq
        %v2325 = vshrl.u32 %v2324, 7
        %v2326 = vsub.s32 %v2323, %v2325
        %v2327 = vrot.slane %v2313, %v2326
        %v2328 = vcombine.high %v2320, %v2320
        %v2329 = vcombine.high %v2211, %v2211
        %v2331 = vunpack.c.l.s4 1983009808
        %v2332 = vunpack.c.0.s8 %v2331
        %v2333 = vlaneseq
        %v2334 = vshrl.u32 %v2333, 7
        %v2335 = vsub.s32 %v2332, %v2334
        %v2336 = vrot.slane %v2211, %v2335
        %v2338 = vunpack.c.l.s4 1983009808
        %v2339 = vunpack.c.0.s8 %v2338
        %v2340 = vlaneseq
        %v2341 = vshrl.u32 %v2340, 7
        %v2342 = vsub.s32 %v2339, %v2341
        %v2343 = vrot.slane %v2329, %v2342
        %v2344 = vcombine.high %v2336, %v2336
        %v2345 = vcombine.high %v2343, %v2343
        %v2346 = vcombine.high %v2212, %v2212
        %v2348 = vunpack.c.l.s4 1983009808
        %v2349 = vunpack.c.0.s8 %v2348
        %v2350 = vlaneseq
        %v2351 = vshrl.u32 %v2350, 7
        %v2352 = vsub.s32 %v2349, %v2351
        %v2353 = vrot.slane %v2212, %v2352
        %v2355 = vunpack.c.l.s4 1983009808
        %v2356 = vunpack.c.0.s8 %v2355
        %v2357 = vlaneseq
        %v2358 = vshrl.u32 %v2357, 7
        %v2359 = vsub.s32 %v2356, %v2358
        %v2360 = vrot.slane %v2346, %v2359
        %v2361 = vcombine.high %v2353, %v2353
        %v2362 = vcombine.high %v2213, %v2213
        %v2364 = vunpack.c.l.s4 1983009808
        %v2365 = vunpack.c.0.s8 %v2364
        %v2366 = vlaneseq
        %v2367 = vshrl.u32 %v2366, 7
        %v2368 = vsub.s32 %v2365, %v2367
        %v2369 = vrot.slane %v2213, %v2368
        %v2371 = vunpack.c.l.s4 1983009808
        %v2372 = vunpack.c.0.s8 %v2371
        %v2373 = vlaneseq
        %v2374 = vshrl.u32 %v2373, 7
        %v2375 = vsub.s32 %v2372, %v2374
        %v2376 = vrot.slane %v2362, %v2375
        %v2377 = vcombine.high %v2369, %v2369
        %v2378 = vcombine.high %v2376, %v2376
        %v2379 = vcombine.high %v2214, %v2214
        %v2381 = vunpack.c.l.s4 1983009808
        %v2382 = vunpack.c.0.s8 %v2381
        %v2383 = vlaneseq
        %v2384 = vshrl.u32 %v2383, 7
        %v2385 = vsub.s32 %v2382, %v2384
        %v2386 = vrot.slane %v2214, %v2385
        %v2388 = vunpack.c.l.s4 1983009808
        %v2389 = vunpack.c.0.s8 %v2388
        %v2390 = vlaneseq
        %v2391 = vshrl.u32 %v2390, 7
        %v2392 = vsub.s32 %v2389, %v2391
        %v2393 = vrot.slane %v2379, %v2392
        %v2394 = vcombine.high %v2386, %v2386
        %v2395 = vcombine.high %v2215, %v2215
        %v2397 = vunpack.c.l.s4 1983009808
        %v2398 = vunpack.c.0.s8 %v2397
        %v2399 = vlaneseq
        %v2400 = vshrl.u32 %v2399, 7
        %v2401 = vsub.s32 %v2398, %v2400
        %v2402 = vrot.slane %v2215, %v2401
        %v2404 = vunpack.c.l.s4 1983009808
        %v2405 = vunpack.c.0.s8 %v2404
        %v2406 = vlaneseq
        %v2407 = vshrl.u32 %v2406, 7
        %v2408 = vsub.s32 %v2405, %v2407
        %v2409 = vrot.slane %v2395, %v2408
        %v2410 = vcombine.high %v2402, %v2402
        %v2411 = vcombine.high %v2409, %v2409
        %v2412 = vcombine.high %v2216, %v2216
        %v2414 = vunpack.c.l.s4 1983009808
        %v2415 = vunpack.c.0.s8 %v2414
        %v2416 = vlaneseq
        %v2417 = vshrl.u32 %v2416, 7
        %v2418 = vsub.s32 %v2415, %v2417
        %v2419 = vrot.slane %v2216, %v2418
        %v2421 = vunpack.c.l.s4 1983009808
        %v2422 = vunpack.c.0.s8 %v2421
        %v2423 = vlaneseq
        %v2424 = vshrl.u32 %v2423, 7
        %v2425 = vsub.s32 %v2422, %v2424
        %v2426 = vrot.slane %v2412, %v2425
        %v2427 = vcombine.high %v2419, %v2419
        %v2428 = vcombine.high %v2217, %v2217
        %v2430 = vunpack.c.l.s4 1983009808
        %v2431 = vunpack.c.0.s8 %v2430
        %v2432 = vlaneseq
        %v2433 = vshrl.u32 %v2432, 7
        %v2434 = vsub.s32 %v2431, %v2433
        %v2435 = vrot.slane %v2217, %v2434
        %v2437 = vunpack.c.l.s4 1983009808
        %v2438 = vunpack.c.0.s8 %v2437
        %v2439 = vlaneseq
        %v2440 = vshrl.u32 %v2439, 7
        %v2441 = vsub.s32 %v2438, %v2440
        %v2442 = vrot.slane %v2428, %v2441
        %v2443 = vcombine.high %v2435, %v2435
        %v2444 = vcombine.high %v2442, %v2442
        %v2445 = vcombine.high %v2218, %v2218
        %v2447 = vunpack.c.l.s4 1983009808
        %v2448 = vunpack.c.0.s8 %v2447
        %v2449 = vlaneseq
        %v2450 = vshrl.u32 %v2449, 7
        %v2451 = vsub.s32 %v2448, %v2450
        %v2452 = vrot.slane %v2218, %v2451
        %v2454 = vunpack.c.l.s4 1983009808
        %v2455 = vunpack.c.0.s8 %v2454
        %v2456 = vlaneseq
        %v2457 = vshrl.u32 %v2456, 7
        %v2458 = vsub.s32 %v2455, %v2457
        %v2459 = vrot.slane %v2445, %v2458
        %v2460 = vcombine.high %v2452, %v2452
        %v2461 = vcombine.high %v2219, %v2219
        %v2463 = vunpack.c.l.s4 1983009808
        %v2464 = vunpack.c.0.s8 %v2463
        %v2465 = vlaneseq
        %v2466 = vshrl.u32 %v2465, 7
        %v2467 = vsub.s32 %v2464, %v2466
        %v2468 = vrot.slane %v2219, %v2467
        %v2470 = vunpack.c.l.s4 1983009808
        %v2471 = vunpack.c.0.s8 %v2470
        %v2472 = vlaneseq
        %v2473 = vshrl.u32 %v2472, 7
        %v2474 = vsub.s32 %v2471, %v2473
        %v2475 = vrot.slane %v2461, %v2474
        %v2476 = vcombine.high %v2468, %v2468
        %v2477 = vcombine.high %v2475, %v2475
        %v2478 = vcombine.high %v2220, %v2220
        %v2480 = vunpack.c.l.s4 1983009808
        %v2481 = vunpack.c.0.s8 %v2480
        %v2482 = vlaneseq
        %v2483 = vshrl.u32 %v2482, 7
        %v2484 = vsub.s32 %v2481, %v2483
        %v2485 = vrot.slane %v2220, %v2484
        %v2487 = vunpack.c.l.s4 1983009808
        %v2488 = vunpack.c.0.s8 %v2487
        %v2489 = vlaneseq
        %v2490 = vshrl.u32 %v2489, 7
        %v2491 = vsub.s32 %v2488, %v2490
        %v2492 = vrot.slane %v2478, %v2491
        %v2493 = vcombine.high %v2485, %v2485
        %v2494 = vcombine.high %v2221, %v2221
        %v2496 = vunpack.c.l.s4 1983009808
        %v2497 = vunpack.c.0.s8 %v2496
        %v2498 = vlaneseq
        %v2499 = vshrl.u32 %v2498, 7
        %v2500 = vsub.s32 %v2497, %v2499
        %v2501 = vrot.slane %v2221, %v2500
        %v2503 = vunpack.c.l.s4 1983009808
        %v2504 = vunpack.c.0.s8 %v2503
        %v2505 = vlaneseq
        %v2506 = vshrl.u32 %v2505, 7
        %v2507 = vsub.s32 %v2504, %v2506
        %v2508 = vrot.slane %v2494, %v2507
        %v2509 = vcombine.high %v2501, %v2501
        %v2510 = vcombine.high %v2508, %v2508
        %v2511 = vcombine.high %v2222, %v2222
        %v2513 = vunpack.c.l.s4 1983009808
        %v2514 = vunpack.c.0.s8 %v2513
        %v2515 = vlaneseq
        %v2516 = vshrl.u32 %v2515, 7
        %v2517 = vsub.s32 %v2514, %v2516
        %v2518 = vrot.slane %v2222, %v2517
        %v2520 = vunpack.c.l.s4 1983009808
        %v2521 = vunpack.c.0.s8 %v2520
        %v2522 = vlaneseq
        %v2523 = vshrl.u32 %v2522, 7
        %v2524 = vsub.s32 %v2521, %v2523
        %v2525 = vrot.slane %v2511, %v2524
        %v2526 = vcombine.high %v2518, %v2518
        %v2527 = vcombine.high %v2223, %v2223
        %v2529 = vunpack.c.l.s4 1983009808
        %v2530 = vunpack.c.0.s8 %v2529
        %v2531 = vlaneseq
        %v2532 = vshrl.u32 %v2531, 7
        %v2533 = vsub.s32 %v2530, %v2532
        %v2534 = vrot.slane %v2223, %v2533
        %v2536 = vunpack.c.l.s4 1983009808
        %v2537 = vunpack.c.0.s8 %v2536
        %v2538 = vlaneseq
        %v2539 = vshrl.u32 %v2538, 7
        %v2540 = vsub.s32 %v2537, %v2539
        %v2541 = vrot.slane %v2527, %v2540
        %v2542 = vcombine.high %v2534, %v2534
        %v2543 = vcombine.high %v2541, %v2541
        %v2544 = vcombine.high %v2224, %v2224
        %v2546 = vunpack.c.l.s4 1983009808
        %v2547 = vunpack.c.0.s8 %v2546
        %v2548 = vlaneseq
        %v2549 = vshrl.u32 %v2548, 7
        %v2550 = vsub.s32 %v2547, %v2549
        %v2551 = vrot.slane %v2224, %v2550
        %v2553 = vunpack.c.l.s4 1983009808
        %v2554 = vunpack.c.0.s8 %v2553
        %v2555 = vlaneseq
        %v2556 = vshrl.u32 %v2555, 7
        %v2557 = vsub.s32 %v2554, %v2556
        %v2558 = vrot.slane %v2544, %v2557
        %v2559 = vcombine.high %v2551, %v2551
        %v2560 = vcombine.high %v2225, %v2225
        %v2562 = vunpack.c.l.s4 1983009808
        %v2563 = vunpack.c.0.s8 %v2562
        %v2564 = vlaneseq
        %v2565 = vshrl.u32 %v2564, 7
        %v2566 = vsub.s32 %v2563, %v2565
        %v2567 = vrot.slane %v2225, %v2566
        %v2569 = vunpack.c.l.s4 1983009808
        %v2570 = vunpack.c.0.s8 %v2569
        %v2571 = vlaneseq
        %v2572 = vshrl.u32 %v2571, 7
        %v2573 = vsub.s32 %v2570, %v2572
        %v2574 = vrot.slane %v2560, %v2573
        %v2575 = vcombine.high %v2567, %v2567
        %v2576 = vcombine.high %v2574, %v2574
        %v2577 = vcombine.high %v2226, %v2226
        %v2579 = vunpack.c.l.s4 1983009808
        %v2580 = vunpack.c.0.s8 %v2579
        %v2581 = vlaneseq
        %v2582 = vshrl.u32 %v2581, 7
        %v2583 = vsub.s32 %v2580, %v2582
        %v2584 = vrot.slane %v2226, %v2583
        %v2586 = vunpack.c.l.s4 1983009808
        %v2587 = vunpack.c.0.s8 %v2586
        %v2588 = vlaneseq
        %v2589 = vshrl.u32 %v2588, 7
        %v2590 = vsub.s32 %v2587, %v2589
        %v2591 = vrot.slane %v2577, %v2590
        %v2592 = vcombine.high %v2584, %v2584
        %v2593 = vcombine.high %v2227, %v2227
        %v2595 = vunpack.c.l.s4 1983009808
        %v2596 = vunpack.c.0.s8 %v2595
        %v2597 = vlaneseq
        %v2598 = vshrl.u32 %v2597, 7
        %v2599 = vsub.s32 %v2596, %v2598
        %v2600 = vrot.slane %v2227, %v2599
        %v2602 = vunpack.c.l.s4 1983009808
        %v2603 = vunpack.c.0.s8 %v2602
        %v2604 = vlaneseq
        %v2605 = vshrl.u32 %v2604, 7
        %v2606 = vsub.s32 %v2603, %v2605
        %v2607 = vrot.slane %v2593, %v2606
        %v2608 = vcombine.high %v2600, %v2600
        %v2609 = vcombine.high %v2607, %v2607
        %v2610 = vcombine.high %v2228, %v2228
        %v2612 = vunpack.c.l.s4 1983009808
        %v2613 = vunpack.c.0.s8 %v2612
        %v2614 = vlaneseq
        %v2615 = vshrl.u32 %v2614, 7
        %v2616 = vsub.s32 %v2613, %v2615
        %v2617 = vrot.slane %v2228, %v2616
        %v2619 = vunpack.c.l.s4 1983009808
        %v2620 = vunpack.c.0.s8 %v2619
        %v2621 = vlaneseq
        %v2622 = vshrl.u32 %v2621, 7
        %v2623 = vsub.s32 %v2620, %v2622
        %v2624 = vrot.slane %v2610, %v2623
        %v2625 = vcombine.high %v2617, %v2617
        %v2626 = vcombine.high %v2229, %v2229
        %v2628 = vunpack.c.l.s4 1983009808
        %v2629 = vunpack.c.0.s8 %v2628
        %v2630 = vlaneseq
        %v2631 = vshrl.u32 %v2630, 7
        %v2632 = vsub.s32 %v2629, %v2631
        %v2633 = vrot.slane %v2229, %v2632
        %v2635 = vunpack.c.l.s4 1983009808
        %v2636 = vunpack.c.0.s8 %v2635
        %v2637 = vlaneseq
        %v2638 = vshrl.u32 %v2637, 7
        %v2639 = vsub.s32 %v2636, %v2638
        %v2640 = vrot.slane %v2626, %v2639
        %v2641 = vcombine.high %v2633, %v2633
        %v2642 = vcombine.high %v2640, %v2640
        %v2643 = vcombine.high %v2230, %v2230
        %v2645 = vunpack.c.l.s4 1983009808
        %v2646 = vunpack.c.0.s8 %v2645
        %v2647 = vlaneseq
        %v2648 = vshrl.u32 %v2647, 7
        %v2649 = vsub.s32 %v2646, %v2648
        %v2650 = vrot.slane %v2230, %v2649
        %v2652 = vunpack.c.l.s4 1983009808
        %v2653 = vunpack.c.0.s8 %v2652
        %v2654 = vlaneseq
        %v2655 = vshrl.u32 %v2654, 7
        %v2656 = vsub.s32 %v2653, %v2655
        %v2657 = vrot.slane %v2643, %v2656
        %v2658 = vcombine.high %v2650, %v2650
        %v2659 = vcombine.high %v2231, %v2231
        %v2661 = vunpack.c.l.s4 1983009808
        %v2662 = vunpack.c.0.s8 %v2661
        %v2663 = vlaneseq
        %v2664 = vshrl.u32 %v2663, 7
        %v2665 = vsub.s32 %v2662, %v2664
        %v2666 = vrot.slane %v2231, %v2665
        %v2668 = vunpack.c.l.s4 1983009808
        %v2669 = vunpack.c.0.s8 %v2668
        %v2670 = vlaneseq
        %v2671 = vshrl.u32 %v2670, 7
        %v2672 = vsub.s32 %v2669, %v2671
        %v2673 = vrot.slane %v2659, %v2672
        %v2674 = vcombine.high %v2666, %v2666
        %v2675 = vcombine.high %v2673, %v2673
        %v2676 = vcombine.high %v2232, %v2232
        %v2678 = vunpack.c.l.s4 1983009808
        %v2679 = vunpack.c.0.s8 %v2678
        %v2680 = vlaneseq
        %v2681 = vshrl.u32 %v2680, 7
        %v2682 = vsub.s32 %v2679, %v2681
        %v2683 = vrot.slane %v2232, %v2682
        %v2685 = vunpack.c.l.s4 1983009808
        %v2686 = vunpack.c.0.s8 %v2685
        %v2687 = vlaneseq
        %v2688 = vshrl.u32 %v2687, 7
        %v2689 = vsub.s32 %v2686, %v2688
        %v2690 = vrot.slane %v2676, %v2689
        %v2691 = vcombine.high %v2683, %v2683
        %v2692 = vcombine.high %v2233, %v2233
        %v2694 = vunpack.c.l.s4 1983009808
        %v2695 = vunpack.c.0.s8 %v2694
        %v2696 = vlaneseq
        %v2697 = vshrl.u32 %v2696, 7
        %v2698 = vsub.s32 %v2695, %v2697
        %v2699 = vrot.slane %v2233, %v2698
        %v2701 = vunpack.c.l.s4 1983009808
        %v2702 = vunpack.c.0.s8 %v2701
        %v2703 = vlaneseq
        %v2704 = vshrl.u32 %v2703, 7
        %v2705 = vsub.s32 %v2702, %v2704
        %v2706 = vrot.slane %v2692, %v2705
        %v2707 = vcombine.high %v2699, %v2699
        %v2708 = vcombine.high %v2706, %v2706
        %v2709 = vcombine.high %v2234, %v2234
        %v2711 = vunpack.c.l.s4 1983009808
        %v2712 = vunpack.c.0.s8 %v2711
        %v2713 = vlaneseq
        %v2714 = vshrl.u32 %v2713, 7
        %v2715 = vsub.s32 %v2712, %v2714
        %v2716 = vrot.slane %v2234, %v2715
        %v2718 = vunpack.c.l.s4 1983009808
        %v2719 = vunpack.c.0.s8 %v2718
        %v2720 = vlaneseq
        %v2721 = vshrl.u32 %v2720, 7
        %v2722 = vsub.s32 %v2719, %v2721
        %v2723 = vrot.slane %v2709, %v2722
        %v2724 = vcombine.high %v2716, %v2716
        %v2725 = vcombine.low %v2270, %v2278
        %v2726 = vcombine.low %v2277, %v2279
        %v2728 = vunpack.c.l.s4 1983009808
        %v2729 = vunpack.c.0.s8 %v2728
        %v2730 = vlaneseq
        %v2731 = vshrl.u32 %v2730, 7
        %v2732 = vsub.s32 %v2729, %v2731
        %v2733 = vrot.slane %v2725, %v2732
        %v2735 = vunpack.c.l.s4 1983009808
        %v2736 = vunpack.c.0.s8 %v2735
        %v2737 = vlaneseq
        %v2738 = vshrl.u32 %v2737, 7
        %v2739 = vsub.s32 %v2736, %v2738
        %v2740 = vrot.slane %v2726, %v2739
        %v2741 = vcombine.low %v2733, %v2740
        %v2742 = vcombine.low %v2287, %v2295
        %v2743 = vcombine.low %v2294, %v2303
        %v2745 = vunpack.c.l.s4 1983009808
        %v2746 = vunpack.c.0.s8 %v2745
        %v2747 = vlaneseq
        %v2748 = vshrl.u32 %v2747, 7
        %v2749 = vsub.s32 %v2746, %v2748
        %v2750 = vrot.slane %v2742, %v2749
        %v2752 = vunpack.c.l.s4 1983009808
        %v2753 = vunpack.c.0.s8 %v2752
        %v2754 = vlaneseq
        %v2755 = vshrl.u32 %v2754, 7
        %v2756 = vsub.s32 %v2753, %v2755
        %v2757 = vrot.slane %v2743, %v2756
        %v2758 = vcombine.low %v2750, %v2757
        %v2759 = vcombine.low %v2311, %v2310
        %v2760 = vcombine.low %v2312, %v2320
        %v2762 = vunpack.c.l.s4 1983009808
        %v2763 = vunpack.c.0.s8 %v2762
        %v2764 = vlaneseq
        %v2765 = vshrl.u32 %v2764, 7
        %v2766 = vsub.s32 %v2763, %v2765
        %v2767 = vrot.slane %v2759, %v2766
        %v2769 = vunpack.c.l.s4 1983009808
        %v2770 = vunpack.c.0.s8 %v2769
        %v2771 = vlaneseq
        %v2772 = vshrl.u32 %v2771, 7
        %v2773 = vsub.s32 %v2770, %v2772
        %v2774 = vrot.slane %v2760, %v2773
        %v2775 = vcombine.low %v2767, %v2774
        %v2776 = vcombine.low %v2328, %v2327
        %v2777 = vcombine.low %v2336, %v2344
        %v2779 = vunpack.c.l.s4 1983009808
        %v2780 = vunpack.c.0.s8 %v2779
        %v2781 = vlaneseq
        %v2782 = vshrl.u32 %v2781, 7
        %v2783 = vsub.s32 %v2780, %v2782
        %v2784 = vrot.slane %v2776, %v2783
        %v2786 = vunpack.c.l.s4 1983009808
        %v2787 = vunpack.c.0.s8 %v2786
        %v2788 = vlaneseq
        %v2789 = vshrl.u32 %v2788, 7
        %v2790 = vsub.s32 %v2787, %v2789
        %v2791 = vrot.slane %v2777, %v2790
        %v2792 = vcombine.low %v2784, %v2791
        %v2793 = vcombine.low %v2343, %v2345
        %v2794 = vcombine.low %v2353, %v2361
        %v2796 = vunpack.c.l.s4 1983009808
        %v2797 = vunpack.c.0.s8 %v2796
        %v2798 = vlaneseq
        %v2799 = vshrl.u32 %v2798, 7
        %v2800 = vsub.s32 %v2797, %v2799
        %v2801 = vrot.slane %v2793, %v2800
        %v2803 = vunpack.c.l.s4 1983009808
        %v2804 = vunpack.c.0.s8 %v2803
        %v2805 = vlaneseq
        %v2806 = vshrl.u32 %v2805, 7
        %v2807 = vsub.s32 %v2804, %v2806
        %v2808 = vrot.slane %v2794, %v2807
        %v2809 = vcombine.low %v2801, %v2808
        %v2810 = vcombine.low %v2360, %v2369
        %v2811 = vcombine.low %v2377, %v2376
        %v2813 = vunpack.c.l.s4 1983009808
        %v2814 = vunpack.c.0.s8 %v2813
        %v2815 = vlaneseq
        %v2816 = vshrl.u32 %v2815, 7
        %v2817 = vsub.s32 %v2814, %v2816
        %v2818 = vrot.slane %v2810, %v2817
        %v2820 = vunpack.c.l.s4 1983009808
        %v2821 = vunpack.c.0.s8 %v2820
        %v2822 = vlaneseq
        %v2823 = vshrl.u32 %v2822, 7
        %v2824 = vsub.s32 %v2821, %v2823
        %v2825 = vrot.slane %v2811, %v2824
        %v2826 = vcombine.low %v2818, %v2825
        %v2827 = vcombine.low %v2378, %v2386
        %v2828 = vcombine.low %v2394, %v2393
        %v2830 = vunpack.c.l.s4 1983009808
        %v2831 = vunpack.c.0.s8 %v2830
        %v2832 = vlaneseq
        %v2833 = vshrl.u32 %v2832, 7
        %v2834 = vsub.s32 %v2831, %v2833
        %v2835 = vrot.slane %v2827, %v2834
        %v2837 = vunpack.c.l.s4 1983009808
        %v2838 = vunpack.c.0.s8 %v2837
        %v2839 = vlaneseq
        %v2840 = vshrl.u32 %v2839, 7
        %v2841 = vsub.s32 %v2838, %v2840
        %v2842 = vrot.slane %v2828, %v2841
        %v2843 = vcombine.low %v2835, %v2842
        %v2844 = vcombine.low %v2402, %v2410
        %v2845 = vcombine.low %v2409, %v2411
        %v2847 = vunpack.c.l.s4 1983009808
        %v2848 = vunpack.c.0.s8 %v2847
        %v2849 = vlaneseq
        %v2850 = vshrl.u32 %v2849, 7
        %v2851 = vsub.s32 %v2848, %v2850
        %v2852 = vrot.slane %v2844, %v2851
        %v2854 = vunpack.c.l.s4 1983009808
        %v2855 = vunpack.c.0.s8 %v2854
        %v2856 = vlaneseq
        %v2857 = vshrl.u32 %v2856, 7
        %v2858 = vsub.s32 %v2855, %v2857
        %v2859 = vrot.slane %v2845, %v2858
        %v2860 = vcombine.low %v2852, %v2859
        %v2861 = vcombine.low %v2419, %v2427
        %v2862 = vcombine.low %v2426, %v2435
        %v2864 = vunpack.c.l.s4 1983009808
        %v2865 = vunpack.c.0.s8 %v2864
        %v2866 = vlaneseq
        %v2867 = vshrl.u32 %v2866, 7
        %v2868 = vsub.s32 %v2865, %v2867
        %v2869 = vrot.slane %v2861, %v2868
        %v2871 = vunpack.c.l.s4 1983009808
        %v2872 = vunpack.c.0.s8 %v2871
        %v2873 = vlaneseq
        %v2874 = vshrl.u32 %v2873, 7
        %v2875 = vsub.s32 %v2872, %v2874
        %v2876 = vrot.slane %v2862, %v2875
        %v2877 = vcombine.low %v2869, %v2876
        %v2878 = vcombine.low %v2443, %v2442
        %v2879 = vcombine.low %v2444, %v2452
        %v2881 = vunpack.c.l.s4 1983009808
        %v2882 = vunpack.c.0.s8 %v2881
        %v2883 = vlaneseq
        %v2884 = vshrl.u32 %v2883, 7
        %v2885 = vsub.s32 %v2882, %v2884
        %v2886 = vrot.slane %v2878, %v2885
        %v2888 = vunpack.c.l.s4 1983009808
        %v2889 = vunpack.c.0.s8 %v2888
        %v2890 = vlaneseq
        %v2891 = vshrl.u32 %v2890, 7
        %v2892 = vsub.s32 %v2889, %v2891
        %v2893 = vrot.slane %v2879, %v2892
        %v2894 = vcombine.low %v2886, %v2893
        %v2895 = vcombine.low %v2460, %v2459
        %v2896 = vcombine.low %v2468, %v2476
        %v2898 = vunpack.c.l.s4 1983009808
        %v2899 = vunpack.c.0.s8 %v2898
        %v2900 = vlaneseq
        %v2901 = vshrl.u32 %v2900, 7
        %v2902 = vsub.s32 %v2899, %v2901
        %v2903 = vrot.slane %v2895, %v2902
        %v2905 = vunpack.c.l.s4 1983009808
        %v2906 = vunpack.c.0.s8 %v2905
        %v2907 = vlaneseq
        %v2908 = vshrl.u32 %v2907, 7
        %v2909 = vsub.s32 %v2906, %v2908
        %v2910 = vrot.slane %v2896, %v2909
        %v2911 = vcombine.low %v2903, %v2910
        %v2912 = vcombine.low %v2475, %v2477
        %v2913 = vcombine.low %v2485, %v2493
        %v2915 = vunpack.c.l.s4 1983009808
        %v2916 = vunpack.c.0.s8 %v2915
        %v2917 = vlaneseq
        %v2918 = vshrl.u32 %v2917, 7
        %v2919 = vsub.s32 %v2916, %v2918
        %v2920 = vrot.slane %v2912, %v2919
        %v2922 = vunpack.c.l.s4 1983009808
        %v2923 = vunpack.c.0.s8 %v2922
        %v2924 = vlaneseq
        %v2925 = vshrl.u32 %v2924, 7
        %v2926 = vsub.s32 %v2923, %v2925
        %v2927 = vrot.slane %v2913, %v2926
        %v2928 = vcombine.low %v2920, %v2927
        %v2929 = vcombine.low %v2492, %v2501
        %v2930 = vcombine.low %v2509, %v2508
        %v2932 = vunpack.c.l.s4 1983009808
        %v2933 = vunpack.c.0.s8 %v2932
        %v2934 = vlaneseq
        %v2935 = vshrl.u32 %v2934, 7
        %v2936 = vsub.s32 %v2933, %v2935
        %v2937 = vrot.slane %v2929, %v2936
        %v2939 = vunpack.c.l.s4 1983009808
        %v2940 = vunpack.c.0.s8 %v2939
        %v2941 = vlaneseq
        %v2942 = vshrl.u32 %v2941, 7
        %v2943 = vsub.s32 %v2940, %v2942
        %v2944 = vrot.slane %v2930, %v2943
        %v2945 = vcombine.low %v2937, %v2944
        %v2946 = vcombine.low %v2510, %v2518
        %v2947 = vcombine.low %v2526, %v2525
        %v2949 = vunpack.c.l.s4 1983009808
        %v2950 = vunpack.c.0.s8 %v2949
        %v2951 = vlaneseq
        %v2952 = vshrl.u32 %v2951, 7
        %v2953 = vsub.s32 %v2950, %v2952
        %v2954 = vrot.slane %v2946, %v2953
        %v2956 = vunpack.c.l.s4 1983009808
        %v2957 = vunpack.c.0.s8 %v2956
        %v2958 = vlaneseq
        %v2959 = vshrl.u32 %v2958, 7
        %v2960 = vsub.s32 %v2957, %v2959
        %v2961 = vrot.slane %v2947, %v2960
        %v2962 = vcombine.low %v2954, %v2961
        %v2963 = vcombine.low %v2534, %v2542
        %v2964 = vcombine.low %v2541, %v2543
        %v2966 = vunpack.c.l.s4 1983009808
        %v2967 = vunpack.c.0.s8 %v2966
        %v2968 = vlaneseq
        %v2969 = vshrl.u32 %v2968, 7
        %v2970 = vsub.s32 %v2967, %v2969
        %v2971 = vrot.slane %v2963, %v2970
        %v2973 = vunpack.c.l.s4 1983009808
        %v2974 = vunpack.c.0.s8 %v2973
        %v2975 = vlaneseq
        %v2976 = vshrl.u32 %v2975, 7
        %v2977 = vsub.s32 %v2974, %v2976
        %v2978 = vrot.slane %v2964, %v2977
        %v2979 = vcombine.low %v2971, %v2978
        %v2980 = vcombine.low %v2551, %v2559
        %v2981 = vcombine.low %v2558, %v2567
        %v2983 = vunpack.c.l.s4 1983009808
        %v2984 = vunpack.c.0.s8 %v2983
        %v2985 = vlaneseq
        %v2986 = vshrl.u32 %v2985, 7
        %v2987 = vsub.s32 %v2984, %v2986
        %v2988 = vrot.slane %v2980, %v2987
        %v2990 = vunpack.c.l.s4 1983009808
        %v2991 = vunpack.c.0.s8 %v2990
        %v2992 = vlaneseq
        %v2993 = vshrl.u32 %v2992, 7
        %v2994 = vsub.s32 %v2991, %v2993
        %v2995 = vrot.slane %v2981, %v2994
        %v2996 = vcombine.low %v2988, %v2995
        %v2997 = vcombine.low %v2575, %v2574
        %v2998 = vcombine.low %v2576, %v2584
        %v3000 = vunpack.c.l.s4 1983009808
        %v3001 = vunpack.c.0.s8 %v3000
        %v3002 = vlaneseq
        %v3003 = vshrl.u32 %v3002, 7
        %v3004 = vsub.s32 %v3001, %v3003
        %v3005 = vrot.slane %v2997, %v3004
        %v3007 = vunpack.c.l.s4 1983009808
        %v3008 = vunpack.c.0.s8 %v3007
        %v3009 = vlaneseq
        %v3010 = vshrl.u32 %v3009, 7
        %v3011 = vsub.s32 %v3008, %v3010
        %v3012 = vrot.slane %v2998, %v3011
        %v3013 = vcombine.low %v3005, %v3012
        %v3014 = vcombine.low %v2592, %v2591
        %v3015 = vcombine.low %v2600, %v2608
        %v3017 = vunpack.c.l.s4 1983009808
        %v3018 = vunpack.c.0.s8 %v3017
        %v3019 = vlaneseq
        %v3020 = vshrl.u32 %v3019, 7
        %v3021 = vsub.s32 %v3018, %v3020
        %v3022 = vrot.slane %v3014, %v3021
        %v3024 = vunpack.c.l.s4 1983009808
        %v3025 = vunpack.c.0.s8 %v3024
        %v3026 = vlaneseq
        %v3027 = vshrl.u32 %v3026, 7
        %v3028 = vsub.s32 %v3025, %v3027
        %v3029 = vrot.slane %v3015, %v3028
        %v3030 = vcombine.low %v3022, %v3029
        %v3031 = vcombine.low %v2607, %v2609
        %v3032 = vcombine.low %v2617, %v2625
        %v3034 = vunpack.c.l.s4 1983009808
        %v3035 = vunpack.c.0.s8 %v3034
        %v3036 = vlaneseq
        %v3037 = vshrl.u32 %v3036, 7
        %v3038 = vsub.s32 %v3035, %v3037
        %v3039 = vrot.slane %v3031, %v3038
        %v3041 = vunpack.c.l.s4 1983009808
        %v3042 = vunpack.c.0.s8 %v3041
        %v3043 = vlaneseq
        %v3044 = vshrl.u32 %v3043, 7
        %v3045 = vsub.s32 %v3042, %v3044
        %v3046 = vrot.slane %v3032, %v3045
        %v3047 = vcombine.low %v3039, %v3046
        %v3048 = vcombine.low %v2624, %v2633
        %v3049 = vcombine.low %v2641, %v2640
        %v3051 = vunpack.c.l.s4 1983009808
        %v3052 = vunpack.c.0.s8 %v3051
        %v3053 = vlaneseq
        %v3054 = vshrl.u32 %v3053, 7
        %v3055 = vsub.s32 %v3052, %v3054
        %v3056 = vrot.slane %v3048, %v3055
        %v3058 = vunpack.c.l.s4 1983009808
        %v3059 = vunpack.c.0.s8 %v3058
        %v3060 = vlaneseq
        %v3061 = vshrl.u32 %v3060, 7
        %v3062 = vsub.s32 %v3059, %v3061
        %v3063 = vrot.slane %v3049, %v3062
        %v3064 = vcombine.low %v3056, %v3063
        %v3065 = vcombine.low %v2642, %v2650
        %v3066 = vcombine.low %v2658, %v2657
        %v3068 = vunpack.c.l.s4 1983009808
        %v3069 = vunpack.c.0.s8 %v3068
        %v3070 = vlaneseq
        %v3071 = vshrl.u32 %v3070, 7
        %v3072 = vsub.s32 %v3069, %v3071
        %v3073 = vrot.slane %v3065, %v3072
        %v3075 = vunpack.c.l.s4 1983009808
        %v3076 = vunpack.c.0.s8 %v3075
        %v3077 = vlaneseq
        %v3078 = vshrl.u32 %v3077, 7
        %v3079 = vsub.s32 %v3076, %v3078
        %v3080 = vrot.slane %v3066, %v3079
        %v3081 = vcombine.low %v3073, %v3080
        %v3082 = vcombine.low %v2666, %v2674
        %v3083 = vcombine.low %v2673, %v2675
        %v3085 = vunpack.c.l.s4 1983009808
        %v3086 = vunpack.c.0.s8 %v3085
        %v3087 = vlaneseq
        %v3088 = vshrl.u32 %v3087, 7
        %v3089 = vsub.s32 %v3086, %v3088
        %v3090 = vrot.slane %v3082, %v3089
        %v3092 = vunpack.c.l.s4 1983009808
        %v3093 = vunpack.c.0.s8 %v3092
        %v3094 = vlaneseq
        %v3095 = vshrl.u32 %v3094, 7
        %v3096 = vsub.s32 %v3093, %v3095
        %v3097 = vrot.slane %v3083, %v3096
        %v3098 = vcombine.low %v3090, %v3097
        %v3099 = vcombine.low %v2683, %v2691
        %v3100 = vcombine.low %v2690, %v2699
        %v3102 = vunpack.c.l.s4 1983009808
        %v3103 = vunpack.c.0.s8 %v3102
        %v3104 = vlaneseq
        %v3105 = vshrl.u32 %v3104, 7
        %v3106 = vsub.s32 %v3103, %v3105
        %v3107 = vrot.slane %v3099, %v3106
        %v3109 = vunpack.c.l.s4 1983009808
        %v3110 = vunpack.c.0.s8 %v3109
        %v3111 = vlaneseq
        %v3112 = vshrl.u32 %v3111, 7
        %v3113 = vsub.s32 %v3110, %v3112
        %v3114 = vrot.slane %v3100, %v3113
        %v3115 = vcombine.low %v3107, %v3114
        %v3116 = vcombine.low %v2707, %v2706
        %v3117 = vcombine.low %v2708, %v2716
        %v3119 = vunpack.c.l.s4 1983009808
        %v3120 = vunpack.c.0.s8 %v3119
        %v3121 = vlaneseq
        %v3122 = vshrl.u32 %v3121, 7
        %v3123 = vsub.s32 %v3120, %v3122
        %v3124 = vrot.slane %v3116, %v3123
        %v3126 = vunpack.c.l.s4 1983009808
        %v3127 = vunpack.c.0.s8 %v3126
        %v3128 = vlaneseq
        %v3129 = vshrl.u32 %v3128, 7
        %v3130 = vsub.s32 %v3127, %v3129
        %v3131 = vrot.slane %v3117, %v3130
        %v3132 = vcombine.low %v3124, %v3131
        %v3133 = vcombine.low %v2724, %v2723
        %v3135 = vunpack.c.l.s4 1983009808
        %v3136 = vunpack.c.0.s8 %v3135
        %v3137 = vlaneseq
        %v3138 = vshrl.u32 %v3137, 7
        %v3139 = vsub.s32 %v3136, %v3138
        %v3140 = vrot.slane %v3133, %v3139
        %3141 = vrot.lane.b32.xlu0 %v2741, 8
        %v3142 = vpop.permute.xlu0 %3141
        %3143 = vrot.lane.b32.xlu0 %v2758, 8
        %v3144 = vpop.permute.xlu0 %3143
        %3145 = vrot.lane.b32.xlu0 %v2775, 8
        %v3146 = vpop.permute.xlu0 %3145
        %3147 = vrot.lane.b32.xlu0 %v2792, 8
        %v3148 = vpop.permute.xlu0 %3147
        %3149 = vrot.lane.b32.xlu0 %v2809, 8
        %v3150 = vpop.permute.xlu0 %3149
        %3151 = vrot.lane.b32.xlu0 %v2826, 8
        %v3152 = vpop.permute.xlu0 %3151
        %3153 = vrot.lane.b32.xlu0 %v2843, 8
        %v3154 = vpop.permute.xlu0 %3153
        %3155 = vrot.lane.b32.xlu0 %v2860, 8
        %v3156 = vpop.permute.xlu0 %3155
        %3157 = vrot.lane.b32.xlu0 %v2877, 8
        %v3158 = vpop.permute.xlu0 %3157
        %3159 = vrot.lane.b32.xlu0 %v2894, 8
        %v3160 = vpop.permute.xlu0 %3159
        %3161 = vrot.lane.b32.xlu0 %v2911, 8
        %v3162 = vpop.permute.xlu0 %3161
        %3163 = vrot.lane.b32.xlu0 %v2928, 8
        %v3164 = vpop.permute.xlu0 %3163
        %3165 = vrot.lane.b32.xlu0 %v2945, 8
        %v3166 = vpop.permute.xlu0 %3165
        %3167 = vrot.lane.b32.xlu0 %v2962, 8
        %v3168 = vpop.permute.xlu0 %3167
        %3169 = vrot.lane.b32.xlu0 %v2979, 8
        %v3170 = vpop.permute.xlu0 %3169
        %3171 = vrot.lane.b32.xlu0 %v2996, 8
        %v3172 = vpop.permute.xlu0 %3171
        %3173 = vrot.lane.b32.xlu0 %v3013, 8
        %v3174 = vpop.permute.xlu0 %3173
        %3175 = vrot.lane.b32.xlu0 %v3030, 8
        %v3176 = vpop.permute.xlu0 %3175
        %3177 = vrot.lane.b32.xlu0 %v3047, 8
        %v3178 = vpop.permute.xlu0 %3177
        %3179 = vrot.lane.b32.xlu0 %v3064, 8
        %v3180 = vpop.permute.xlu0 %3179
        %3181 = vrot.lane.b32.xlu0 %v3081, 8
        %v3182 = vpop.permute.xlu0 %3181
        %3183 = vrot.lane.b32.xlu0 %v3098, 8
        %v3184 = vpop.permute.xlu0 %3183
        %3185 = vrot.lane.b32.xlu0 %v3115, 8
        %v3186 = vpop.permute.xlu0 %3185
        %3187 = vrot.lane.b32.xlu0 %v3132, 8
        %v3188 = vpop.permute.xlu0 %3187
        %3189 = vrot.lane.b32.xlu0 %v3140, 8
        %v3190 = vpop.permute.xlu0 %3189
        %vm3216 = vcmask 97344
        %3217 = vst.msk [vmem:[#allocation2] sm:$0xff] %vm3216, %v3142
        %3218 = vst.msk [vmem:[#allocation2 + $0x8] sm:$0xff] %vm3216, %v3144
        %3219 = vst.msk [vmem:[#allocation2 + $0x10] sm:$0xff] %vm3216, %v3146
        %3220 = vst.msk [vmem:[#allocation2 + $0x18] sm:$0xff] %vm3216, %v3148
        %3221 = vst.msk [vmem:[#allocation2 + $0x20] sm:$0xff] %vm3216, %v3150
        %3222 = vst.msk [vmem:[#allocation2 + $0x28] sm:$0xff] %vm3216, %v3152
        %3223 = vst.msk [vmem:[#allocation2 + $0x30] sm:$0xff] %vm3216, %v3154
        %3224 = vst.msk [vmem:[#allocation2 + $0x38] sm:$0xff] %vm3216, %v3156
        %3225 = vst.msk [vmem:[#allocation2 + $0x40] sm:$0xff] %vm3216, %v3158
        %3226 = vst.msk [vmem:[#allocation2 + $0x48] sm:$0xff] %vm3216, %v3160
        %3227 = vst.msk [vmem:[#allocation2 + $0x50] sm:$0xff] %vm3216, %v3162
        %3228 = vst.msk [vmem:[#allocation2 + $0x58] sm:$0xff] %vm3216, %v3164
        %3229 = vst.msk [vmem:[#allocation2 + $0x60] sm:$0xff] %vm3216, %v3166
        %3230 = vst.msk [vmem:[#allocation2 + $0x68] sm:$0xff] %vm3216, %v3168
        %3231 = vst.msk [vmem:[#allocation2 + $0x70] sm:$0xff] %vm3216, %v3170
        %3232 = vst.msk [vmem:[#allocation2 + $0x78] sm:$0xff] %vm3216, %v3172
        %3233 = vst.msk [vmem:[#allocation2 + $0x80] sm:$0xff] %vm3216, %v3174
        %3234 = vst.msk [vmem:[#allocation2 + $0x88] sm:$0xff] %vm3216, %v3176
        %3235 = vst.msk [vmem:[#allocation2 + $0x90] sm:$0xff] %vm3216, %v3178
        %3236 = vst.msk [vmem:[#allocation2 + $0x98] sm:$0xff] %vm3216, %v3180
        %3237 = vst.msk [vmem:[#allocation2 + $0xa0] sm:$0xff] %vm3216, %v3182
        %3238 = vst.msk [vmem:[#allocation2 + $0xa8] sm:$0xff] %vm3216, %v3184
        %3239 = vst.msk [vmem:[#allocation2 + $0xb0] sm:$0xff] %vm3216, %v3186
        %3240 = vst.msk [vmem:[#allocation2 + $0xb8] sm:$0xff] %vm3216, %v3188
        %vm3241 = vcmask 93248
        %3242 = vst.msk [vmem:[#allocation2 + $0xc0] sm:$0xf] %vm3241, %v3190
        %s3243 = scalar_lea.vmem %s168, 16
        %v3244 = vld [vmem:[%s3243] sm:$0xff]
        %v3245 = vld [vmem:[%s3243 + $0x8] sm:$0x3f]
        %v3246 = vld [vmem:[%s3243 + $0x10] sm:$0xff]
        %v3247 = vld [vmem:[%s3243 + $0x18] sm:$0x3f]
        %v3248 = vld [vmem:[%s3243 + $0x20] sm:$0xff]
        %v3249 = vld [vmem:[%s3243 + $0x28] sm:$0x3f]
        %v3250 = vld [vmem:[%s3243 + $0x30] sm:$0xff]
        %v3251 = vld [vmem:[%s3243 + $0x38] sm:$0x3f]
        %v3252 = vld [vmem:[%s3243 + $0x40] sm:$0xff]
        %v3253 = vld [vmem:[%s3243 + $0x48] sm:$0x3f]
        %v3254 = vld [vmem:[%s3243 + $0x50] sm:$0xff]
        %v3255 = vld [vmem:[%s3243 + $0x58] sm:$0x3f]
        %v3256 = vld [vmem:[%s3243 + $0x60] sm:$0xff]
        %v3257 = vld [vmem:[%s3243 + $0x68] sm:$0x3f]
        %v3258 = vld [vmem:[%s3243 + $0x70] sm:$0xff]
        %v3259 = vld [vmem:[%s3243 + $0x78] sm:$0x3f]
        %v3260 = vld [vmem:[%s3243 + $0x80] sm:$0xff]
        %v3261 = vld [vmem:[%s3243 + $0x88] sm:$0x3f]
        %v3262 = vld [vmem:[%s3243 + $0x90] sm:$0xff]
        %v3263 = vld [vmem:[%s3243 + $0x98] sm:$0x3f]
        %v3264 = vld [vmem:[%s3243 + $0xa0] sm:$0xff]
        %v3265 = vld [vmem:[%s3243 + $0xa8] sm:$0x3f]
        %v3266 = vld [vmem:[%s3243 + $0xb0] sm:$0xff]
        %v3267 = vld [vmem:[%s3243 + $0xb8] sm:$0x3f]
        %v3268 = vld [vmem:[%s3243 + $0xc0] sm:$0xff]
        %v3269 = vld [vmem:[%s3243 + $0xc8] sm:$0x3f]
        %v3270 = vld [vmem:[%s3243 + $0xd0] sm:$0xff]
        %v3271 = vld [vmem:[%s3243 + $0xd8] sm:$0x3f]
        %v3300 = vcombine.high %v3244, %v3244
        %v3302 = vunpack.c.l.s4 1983009808
        %v3303 = vunpack.c.0.s8 %v3302
        %v3304 = vlaneseq
        %v3305 = vshrl.u32 %v3304, 7
        %v3306 = vsub.s32 %v3303, %v3305
        %v3307 = vrot.slane %v3244, %v3306
        %v3309 = vunpack.c.l.s4 1983009808
        %v3310 = vunpack.c.0.s8 %v3309
        %v3311 = vlaneseq
        %v3312 = vshrl.u32 %v3311, 7
        %v3313 = vsub.s32 %v3310, %v3312
        %v3314 = vrot.slane %v3300, %v3313
        %v3315 = vcombine.high %v3307, %v3307
        %v3316 = vcombine.high %v3314, %v3314
        %v3317 = vcombine.high %v3245, %v3245
        %v3319 = vunpack.c.l.s4 1983009808
        %v3320 = vunpack.c.0.s8 %v3319
        %v3321 = vlaneseq
        %v3322 = vshrl.u32 %v3321, 7
        %v3323 = vsub.s32 %v3320, %v3322
        %v3324 = vrot.slane %v3245, %v3323
        %v3326 = vunpack.c.l.s4 1983009808
        %v3327 = vunpack.c.0.s8 %v3326
        %v3328 = vlaneseq
        %v3329 = vshrl.u32 %v3328, 7
        %v3330 = vsub.s32 %v3327, %v3329
        %v3331 = vrot.slane %v3317, %v3330
        %v3332 = vcombine.high %v3324, %v3324
        %v3333 = vcombine.high %v3246, %v3246
        %v3335 = vunpack.c.l.s4 1983009808
        %v3336 = vunpack.c.0.s8 %v3335
        %v3337 = vlaneseq
        %v3338 = vshrl.u32 %v3337, 7
        %v3339 = vsub.s32 %v3336, %v3338
        %v3340 = vrot.slane %v3246, %v3339
        %v3342 = vunpack.c.l.s4 1983009808
        %v3343 = vunpack.c.0.s8 %v3342
        %v3344 = vlaneseq
        %v3345 = vshrl.u32 %v3344, 7
        %v3346 = vsub.s32 %v3343, %v3345
        %v3347 = vrot.slane %v3333, %v3346
        %v3348 = vcombine.high %v3340, %v3340
        %v3349 = vcombine.high %v3347, %v3347
        %v3350 = vcombine.high %v3247, %v3247
        %v3352 = vunpack.c.l.s4 1983009808
        %v3353 = vunpack.c.0.s8 %v3352
        %v3354 = vlaneseq
        %v3355 = vshrl.u32 %v3354, 7
        %v3356 = vsub.s32 %v3353, %v3355
        %v3357 = vrot.slane %v3247, %v3356
        %v3359 = vunpack.c.l.s4 1983009808
        %v3360 = vunpack.c.0.s8 %v3359
        %v3361 = vlaneseq
        %v3362 = vshrl.u32 %v3361, 7
        %v3363 = vsub.s32 %v3360, %v3362
        %v3364 = vrot.slane %v3350, %v3363
        %v3365 = vcombine.high %v3357, %v3357
        %v3366 = vcombine.high %v3248, %v3248
        %v3368 = vunpack.c.l.s4 1983009808
        %v3369 = vunpack.c.0.s8 %v3368
        %v3370 = vlaneseq
        %v3371 = vshrl.u32 %v3370, 7
        %v3372 = vsub.s32 %v3369, %v3371
        %v3373 = vrot.slane %v3248, %v3372
        %v3375 = vunpack.c.l.s4 1983009808
        %v3376 = vunpack.c.0.s8 %v3375
        %v3377 = vlaneseq
        %v3378 = vshrl.u32 %v3377, 7
        %v3379 = vsub.s32 %v3376, %v3378
        %v3380 = vrot.slane %v3366, %v3379
        %v3381 = vcombine.high %v3373, %v3373
        %v3382 = vcombine.high %v3380, %v3380
        %v3383 = vcombine.high %v3249, %v3249
        %v3385 = vunpack.c.l.s4 1983009808
        %v3386 = vunpack.c.0.s8 %v3385
        %v3387 = vlaneseq
        %v3388 = vshrl.u32 %v3387, 7
        %v3389 = vsub.s32 %v3386, %v3388
        %v3390 = vrot.slane %v3249, %v3389
        %v3392 = vunpack.c.l.s4 1983009808
        %v3393 = vunpack.c.0.s8 %v3392
        %v3394 = vlaneseq
        %v3395 = vshrl.u32 %v3394, 7
        %v3396 = vsub.s32 %v3393, %v3395
        %v3397 = vrot.slane %v3383, %v3396
        %v3398 = vcombine.high %v3390, %v3390
        %v3399 = vcombine.high %v3250, %v3250
        %v3401 = vunpack.c.l.s4 1983009808
        %v3402 = vunpack.c.0.s8 %v3401
        %v3403 = vlaneseq
        %v3404 = vshrl.u32 %v3403, 7
        %v3405 = vsub.s32 %v3402, %v3404
        %v3406 = vrot.slane %v3250, %v3405
        %v3408 = vunpack.c.l.s4 1983009808
        %v3409 = vunpack.c.0.s8 %v3408
        %v3410 = vlaneseq
        %v3411 = vshrl.u32 %v3410, 7
        %v3412 = vsub.s32 %v3409, %v3411
        %v3413 = vrot.slane %v3399, %v3412
        %v3414 = vcombine.high %v3406, %v3406
        %v3415 = vcombine.high %v3413, %v3413
        %v3416 = vcombine.high %v3251, %v3251
        %v3418 = vunpack.c.l.s4 1983009808
        %v3419 = vunpack.c.0.s8 %v3418
        %v3420 = vlaneseq
        %v3421 = vshrl.u32 %v3420, 7
        %v3422 = vsub.s32 %v3419, %v3421
        %v3423 = vrot.slane %v3251, %v3422
        %v3425 = vunpack.c.l.s4 1983009808
        %v3426 = vunpack.c.0.s8 %v3425
        %v3427 = vlaneseq
        %v3428 = vshrl.u32 %v3427, 7
        %v3429 = vsub.s32 %v3426, %v3428
        %v3430 = vrot.slane %v3416, %v3429
        %v3431 = vcombine.high %v3423, %v3423
        %v3432 = vcombine.high %v3252, %v3252
        %v3434 = vunpack.c.l.s4 1983009808
        %v3435 = vunpack.c.0.s8 %v3434
        %v3436 = vlaneseq
        %v3437 = vshrl.u32 %v3436, 7
        %v3438 = vsub.s32 %v3435, %v3437
        %v3439 = vrot.slane %v3252, %v3438
        %v3441 = vunpack.c.l.s4 1983009808
        %v3442 = vunpack.c.0.s8 %v3441
        %v3443 = vlaneseq
        %v3444 = vshrl.u32 %v3443, 7
        %v3445 = vsub.s32 %v3442, %v3444
        %v3446 = vrot.slane %v3432, %v3445
        %v3447 = vcombine.high %v3439, %v3439
        %v3448 = vcombine.high %v3446, %v3446
        %v3449 = vcombine.high %v3253, %v3253
        %v3451 = vunpack.c.l.s4 1983009808
        %v3452 = vunpack.c.0.s8 %v3451
        %v3453 = vlaneseq
        %v3454 = vshrl.u32 %v3453, 7
        %v3455 = vsub.s32 %v3452, %v3454
        %v3456 = vrot.slane %v3253, %v3455
        %v3458 = vunpack.c.l.s4 1983009808
        %v3459 = vunpack.c.0.s8 %v3458
        %v3460 = vlaneseq
        %v3461 = vshrl.u32 %v3460, 7
        %v3462 = vsub.s32 %v3459, %v3461
        %v3463 = vrot.slane %v3449, %v3462
        %v3464 = vcombine.high %v3456, %v3456
        %v3465 = vcombine.high %v3254, %v3254
        %v3467 = vunpack.c.l.s4 1983009808
        %v3468 = vunpack.c.0.s8 %v3467
        %v3469 = vlaneseq
        %v3470 = vshrl.u32 %v3469, 7
        %v3471 = vsub.s32 %v3468, %v3470
        %v3472 = vrot.slane %v3254, %v3471
        %v3474 = vunpack.c.l.s4 1983009808
        %v3475 = vunpack.c.0.s8 %v3474
        %v3476 = vlaneseq
        %v3477 = vshrl.u32 %v3476, 7
        %v3478 = vsub.s32 %v3475, %v3477
        %v3479 = vrot.slane %v3465, %v3478
        %v3480 = vcombine.high %v3472, %v3472
        %v3481 = vcombine.high %v3479, %v3479
        %v3482 = vcombine.high %v3255, %v3255
        %v3484 = vunpack.c.l.s4 1983009808
        %v3485 = vunpack.c.0.s8 %v3484
        %v3486 = vlaneseq
        %v3487 = vshrl.u32 %v3486, 7
        %v3488 = vsub.s32 %v3485, %v3487
        %v3489 = vrot.slane %v3255, %v3488
        %v3491 = vunpack.c.l.s4 1983009808
        %v3492 = vunpack.c.0.s8 %v3491
        %v3493 = vlaneseq
        %v3494 = vshrl.u32 %v3493, 7
        %v3495 = vsub.s32 %v3492, %v3494
        %v3496 = vrot.slane %v3482, %v3495
        %v3497 = vcombine.high %v3489, %v3489
        %v3498 = vcombine.high %v3256, %v3256
        %v3500 = vunpack.c.l.s4 1983009808
        %v3501 = vunpack.c.0.s8 %v3500
        %v3502 = vlaneseq
        %v3503 = vshrl.u32 %v3502, 7
        %v3504 = vsub.s32 %v3501, %v3503
        %v3505 = vrot.slane %v3256, %v3504
        %v3507 = vunpack.c.l.s4 1983009808
        %v3508 = vunpack.c.0.s8 %v3507
        %v3509 = vlaneseq
        %v3510 = vshrl.u32 %v3509, 7
        %v3511 = vsub.s32 %v3508, %v3510
        %v3512 = vrot.slane %v3498, %v3511
        %v3513 = vcombine.high %v3505, %v3505
        %v3514 = vcombine.high %v3512, %v3512
        %v3515 = vcombine.high %v3257, %v3257
        %v3517 = vunpack.c.l.s4 1983009808
        %v3518 = vunpack.c.0.s8 %v3517
        %v3519 = vlaneseq
        %v3520 = vshrl.u32 %v3519, 7
        %v3521 = vsub.s32 %v3518, %v3520
        %v3522 = vrot.slane %v3257, %v3521
        %v3524 = vunpack.c.l.s4 1983009808
        %v3525 = vunpack.c.0.s8 %v3524
        %v3526 = vlaneseq
        %v3527 = vshrl.u32 %v3526, 7
        %v3528 = vsub.s32 %v3525, %v3527
        %v3529 = vrot.slane %v3515, %v3528
        %v3530 = vcombine.high %v3522, %v3522
        %v3531 = vcombine.high %v3258, %v3258
        %v3533 = vunpack.c.l.s4 1983009808
        %v3534 = vunpack.c.0.s8 %v3533
        %v3535 = vlaneseq
        %v3536 = vshrl.u32 %v3535, 7
        %v3537 = vsub.s32 %v3534, %v3536
        %v3538 = vrot.slane %v3258, %v3537
        %v3540 = vunpack.c.l.s4 1983009808
        %v3541 = vunpack.c.0.s8 %v3540
        %v3542 = vlaneseq
        %v3543 = vshrl.u32 %v3542, 7
        %v3544 = vsub.s32 %v3541, %v3543
        %v3545 = vrot.slane %v3531, %v3544
        %v3546 = vcombine.high %v3538, %v3538
        %v3547 = vcombine.high %v3545, %v3545
        %v3548 = vcombine.high %v3259, %v3259
        %v3550 = vunpack.c.l.s4 1983009808
        %v3551 = vunpack.c.0.s8 %v3550
        %v3552 = vlaneseq
        %v3553 = vshrl.u32 %v3552, 7
        %v3554 = vsub.s32 %v3551, %v3553
        %v3555 = vrot.slane %v3259, %v3554
        %v3557 = vunpack.c.l.s4 1983009808
        %v3558 = vunpack.c.0.s8 %v3557
        %v3559 = vlaneseq
        %v3560 = vshrl.u32 %v3559, 7
        %v3561 = vsub.s32 %v3558, %v3560
        %v3562 = vrot.slane %v3548, %v3561
        %v3563 = vcombine.high %v3555, %v3555
        %v3564 = vcombine.high %v3260, %v3260
        %v3566 = vunpack.c.l.s4 1983009808
        %v3567 = vunpack.c.0.s8 %v3566
        %v3568 = vlaneseq
        %v3569 = vshrl.u32 %v3568, 7
        %v3570 = vsub.s32 %v3567, %v3569
        %v3571 = vrot.slane %v3260, %v3570
        %v3573 = vunpack.c.l.s4 1983009808
        %v3574 = vunpack.c.0.s8 %v3573
        %v3575 = vlaneseq
        %v3576 = vshrl.u32 %v3575, 7
        %v3577 = vsub.s32 %v3574, %v3576
        %v3578 = vrot.slane %v3564, %v3577
        %v3579 = vcombine.high %v3571, %v3571
        %v3580 = vcombine.high %v3578, %v3578
        %v3581 = vcombine.high %v3261, %v3261
        %v3583 = vunpack.c.l.s4 1983009808
        %v3584 = vunpack.c.0.s8 %v3583
        %v3585 = vlaneseq
        %v3586 = vshrl.u32 %v3585, 7
        %v3587 = vsub.s32 %v3584, %v3586
        %v3588 = vrot.slane %v3261, %v3587
        %v3590 = vunpack.c.l.s4 1983009808
        %v3591 = vunpack.c.0.s8 %v3590
        %v3592 = vlaneseq
        %v3593 = vshrl.u32 %v3592, 7
        %v3594 = vsub.s32 %v3591, %v3593
        %v3595 = vrot.slane %v3581, %v3594
        %v3596 = vcombine.high %v3588, %v3588
        %v3597 = vcombine.high %v3262, %v3262
        %v3599 = vunpack.c.l.s4 1983009808
        %v3600 = vunpack.c.0.s8 %v3599
        %v3601 = vlaneseq
        %v3602 = vshrl.u32 %v3601, 7
        %v3603 = vsub.s32 %v3600, %v3602
        %v3604 = vrot.slane %v3262, %v3603
        %v3606 = vunpack.c.l.s4 1983009808
        %v3607 = vunpack.c.0.s8 %v3606
        %v3608 = vlaneseq
        %v3609 = vshrl.u32 %v3608, 7
        %v3610 = vsub.s32 %v3607, %v3609
        %v3611 = vrot.slane %v3597, %v3610
        %v3612 = vcombine.high %v3604, %v3604
        %v3613 = vcombine.high %v3611, %v3611
        %v3614 = vcombine.high %v3263, %v3263
        %v3616 = vunpack.c.l.s4 1983009808
        %v3617 = vunpack.c.0.s8 %v3616
        %v3618 = vlaneseq
        %v3619 = vshrl.u32 %v3618, 7
        %v3620 = vsub.s32 %v3617, %v3619
        %v3621 = vrot.slane %v3263, %v3620
        %v3623 = vunpack.c.l.s4 1983009808
        %v3624 = vunpack.c.0.s8 %v3623
        %v3625 = vlaneseq
        %v3626 = vshrl.u32 %v3625, 7
        %v3627 = vsub.s32 %v3624, %v3626
        %v3628 = vrot.slane %v3614, %v3627
        %v3629 = vcombine.high %v3621, %v3621
        %v3630 = vcombine.high %v3264, %v3264
        %v3632 = vunpack.c.l.s4 1983009808
        %v3633 = vunpack.c.0.s8 %v3632
        %v3634 = vlaneseq
        %v3635 = vshrl.u32 %v3634, 7
        %v3636 = vsub.s32 %v3633, %v3635
        %v3637 = vrot.slane %v3264, %v3636
        %v3639 = vunpack.c.l.s4 1983009808
        %v3640 = vunpack.c.0.s8 %v3639
        %v3641 = vlaneseq
        %v3642 = vshrl.u32 %v3641, 7
        %v3643 = vsub.s32 %v3640, %v3642
        %v3644 = vrot.slane %v3630, %v3643
        %v3645 = vcombine.high %v3637, %v3637
        %v3646 = vcombine.high %v3644, %v3644
        %v3647 = vcombine.high %v3265, %v3265
        %v3649 = vunpack.c.l.s4 1983009808
        %v3650 = vunpack.c.0.s8 %v3649
        %v3651 = vlaneseq
        %v3652 = vshrl.u32 %v3651, 7
        %v3653 = vsub.s32 %v3650, %v3652
        %v3654 = vrot.slane %v3265, %v3653
        %v3656 = vunpack.c.l.s4 1983009808
        %v3657 = vunpack.c.0.s8 %v3656
        %v3658 = vlaneseq
        %v3659 = vshrl.u32 %v3658, 7
        %v3660 = vsub.s32 %v3657, %v3659
        %v3661 = vrot.slane %v3647, %v3660
        %v3662 = vcombine.high %v3654, %v3654
        %v3663 = vcombine.high %v3266, %v3266
        %v3665 = vunpack.c.l.s4 1983009808
        %v3666 = vunpack.c.0.s8 %v3665
        %v3667 = vlaneseq
        %v3668 = vshrl.u32 %v3667, 7
        %v3669 = vsub.s32 %v3666, %v3668
        %v3670 = vrot.slane %v3266, %v3669
        %v3672 = vunpack.c.l.s4 1983009808
        %v3673 = vunpack.c.0.s8 %v3672
        %v3674 = vlaneseq
        %v3675 = vshrl.u32 %v3674, 7
        %v3676 = vsub.s32 %v3673, %v3675
        %v3677 = vrot.slane %v3663, %v3676
        %v3678 = vcombine.high %v3670, %v3670
        %v3679 = vcombine.high %v3677, %v3677
        %v3680 = vcombine.high %v3267, %v3267
        %v3682 = vunpack.c.l.s4 1983009808
        %v3683 = vunpack.c.0.s8 %v3682
        %v3684 = vlaneseq
        %v3685 = vshrl.u32 %v3684, 7
        %v3686 = vsub.s32 %v3683, %v3685
        %v3687 = vrot.slane %v3267, %v3686
        %v3689 = vunpack.c.l.s4 1983009808
        %v3690 = vunpack.c.0.s8 %v3689
        %v3691 = vlaneseq
        %v3692 = vshrl.u32 %v3691, 7
        %v3693 = vsub.s32 %v3690, %v3692
        %v3694 = vrot.slane %v3680, %v3693
        %v3695 = vcombine.high %v3687, %v3687
        %v3696 = vcombine.high %v3268, %v3268
        %v3698 = vunpack.c.l.s4 1983009808
        %v3699 = vunpack.c.0.s8 %v3698
        %v3700 = vlaneseq
        %v3701 = vshrl.u32 %v3700, 7
        %v3702 = vsub.s32 %v3699, %v3701
        %v3703 = vrot.slane %v3268, %v3702
        %v3705 = vunpack.c.l.s4 1983009808
        %v3706 = vunpack.c.0.s8 %v3705
        %v3707 = vlaneseq
        %v3708 = vshrl.u32 %v3707, 7
        %v3709 = vsub.s32 %v3706, %v3708
        %v3710 = vrot.slane %v3696, %v3709
        %v3711 = vcombine.high %v3703, %v3703
        %v3712 = vcombine.high %v3710, %v3710
        %v3713 = vcombine.high %v3269, %v3269
        %v3715 = vunpack.c.l.s4 1983009808
        %v3716 = vunpack.c.0.s8 %v3715
        %v3717 = vlaneseq
        %v3718 = vshrl.u32 %v3717, 7
        %v3719 = vsub.s32 %v3716, %v3718
        %v3720 = vrot.slane %v3269, %v3719
        %v3722 = vunpack.c.l.s4 1983009808
        %v3723 = vunpack.c.0.s8 %v3722
        %v3724 = vlaneseq
        %v3725 = vshrl.u32 %v3724, 7
        %v3726 = vsub.s32 %v3723, %v3725
        %v3727 = vrot.slane %v3713, %v3726
        %v3728 = vcombine.high %v3720, %v3720
        %v3729 = vcombine.high %v3270, %v3270
        %v3731 = vunpack.c.l.s4 1983009808
        %v3732 = vunpack.c.0.s8 %v3731
        %v3733 = vlaneseq
        %v3734 = vshrl.u32 %v3733, 7
        %v3735 = vsub.s32 %v3732, %v3734
        %v3736 = vrot.slane %v3270, %v3735
        %v3738 = vunpack.c.l.s4 1983009808
        %v3739 = vunpack.c.0.s8 %v3738
        %v3740 = vlaneseq
        %v3741 = vshrl.u32 %v3740, 7
        %v3742 = vsub.s32 %v3739, %v3741
        %v3743 = vrot.slane %v3729, %v3742
        %v3744 = vcombine.high %v3736, %v3736
        %v3745 = vcombine.high %v3743, %v3743
        %v3746 = vcombine.high %v3271, %v3271
        %v3748 = vunpack.c.l.s4 1983009808
        %v3749 = vunpack.c.0.s8 %v3748
        %v3750 = vlaneseq
        %v3751 = vshrl.u32 %v3750, 7
        %v3752 = vsub.s32 %v3749, %v3751
        %v3753 = vrot.slane %v3271, %v3752
        %v3755 = vunpack.c.l.s4 1983009808
        %v3756 = vunpack.c.0.s8 %v3755
        %v3757 = vlaneseq
        %v3758 = vshrl.u32 %v3757, 7
        %v3759 = vsub.s32 %v3756, %v3758
        %v3760 = vrot.slane %v3746, %v3759
        %v3761 = vcombine.high %v3753, %v3753
        %v3762 = vcombine.low %v3307, %v3315
        %v3763 = vcombine.low %v3314, %v3316
        %v3765 = vunpack.c.l.s4 1983009808
        %v3766 = vunpack.c.0.s8 %v3765
        %v3767 = vlaneseq
        %v3768 = vshrl.u32 %v3767, 7
        %v3769 = vsub.s32 %v3766, %v3768
        %v3770 = vrot.slane %v3762, %v3769
        %v3772 = vunpack.c.l.s4 1983009808
        %v3773 = vunpack.c.0.s8 %v3772
        %v3774 = vlaneseq
        %v3775 = vshrl.u32 %v3774, 7
        %v3776 = vsub.s32 %v3773, %v3775
        %v3777 = vrot.slane %v3763, %v3776
        %v3778 = vcombine.low %v3770, %v3777
        %v3779 = vcombine.low %v3324, %v3332
        %v3780 = vcombine.low %v3331, %v3340
        %v3782 = vunpack.c.l.s4 1983009808
        %v3783 = vunpack.c.0.s8 %v3782
        %v3784 = vlaneseq
        %v3785 = vshrl.u32 %v3784, 7
        %v3786 = vsub.s32 %v3783, %v3785
        %v3787 = vrot.slane %v3779, %v3786
        %v3789 = vunpack.c.l.s4 1983009808
        %v3790 = vunpack.c.0.s8 %v3789
        %v3791 = vlaneseq
        %v3792 = vshrl.u32 %v3791, 7
        %v3793 = vsub.s32 %v3790, %v3792
        %v3794 = vrot.slane %v3780, %v3793
        %v3795 = vcombine.low %v3787, %v3794
        %v3796 = vcombine.low %v3348, %v3347
        %v3797 = vcombine.low %v3349, %v3357
        %v3799 = vunpack.c.l.s4 1983009808
        %v3800 = vunpack.c.0.s8 %v3799
        %v3801 = vlaneseq
        %v3802 = vshrl.u32 %v3801, 7
        %v3803 = vsub.s32 %v3800, %v3802
        %v3804 = vrot.slane %v3796, %v3803
        %v3806 = vunpack.c.l.s4 1983009808
        %v3807 = vunpack.c.0.s8 %v3806
        %v3808 = vlaneseq
        %v3809 = vshrl.u32 %v3808, 7
        %v3810 = vsub.s32 %v3807, %v3809
        %v3811 = vrot.slane %v3797, %v3810
        %v3812 = vcombine.low %v3804, %v3811
        %v3813 = vcombine.low %v3365, %v3364
        %v3814 = vcombine.low %v3373, %v3381
        %v3816 = vunpack.c.l.s4 1983009808
        %v3817 = vunpack.c.0.s8 %v3816
        %v3818 = vlaneseq
        %v3819 = vshrl.u32 %v3818, 7
        %v3820 = vsub.s32 %v3817, %v3819
        %v3821 = vrot.slane %v3813, %v3820
        %v3823 = vunpack.c.l.s4 1983009808
        %v3824 = vunpack.c.0.s8 %v3823
        %v3825 = vlaneseq
        %v3826 = vshrl.u32 %v3825, 7
        %v3827 = vsub.s32 %v3824, %v3826
        %v3828 = vrot.slane %v3814, %v3827
        %v3829 = vcombine.low %v3821, %v3828
        %v3830 = vcombine.low %v3380, %v3382
        %v3831 = vcombine.low %v3390, %v3398
        %v3833 = vunpack.c.l.s4 1983009808
        %v3834 = vunpack.c.0.s8 %v3833
        %v3835 = vlaneseq
        %v3836 = vshrl.u32 %v3835, 7
        %v3837 = vsub.s32 %v3834, %v3836
        %v3838 = vrot.slane %v3830, %v3837
        %v3840 = vunpack.c.l.s4 1983009808
        %v3841 = vunpack.c.0.s8 %v3840
        %v3842 = vlaneseq
        %v3843 = vshrl.u32 %v3842, 7
        %v3844 = vsub.s32 %v3841, %v3843
        %v3845 = vrot.slane %v3831, %v3844
        %v3846 = vcombine.low %v3838, %v3845
        %v3847 = vcombine.low %v3397, %v3406
        %v3848 = vcombine.low %v3414, %v3413
        %v3850 = vunpack.c.l.s4 1983009808
        %v3851 = vunpack.c.0.s8 %v3850
        %v3852 = vlaneseq
        %v3853 = vshrl.u32 %v3852, 7
        %v3854 = vsub.s32 %v3851, %v3853
        %v3855 = vrot.slane %v3847, %v3854
        %v3857 = vunpack.c.l.s4 1983009808
        %v3858 = vunpack.c.0.s8 %v3857
        %v3859 = vlaneseq
        %v3860 = vshrl.u32 %v3859, 7
        %v3861 = vsub.s32 %v3858, %v3860
        %v3862 = vrot.slane %v3848, %v3861
        %v3863 = vcombine.low %v3855, %v3862
        %v3864 = vcombine.low %v3415, %v3423
        %v3865 = vcombine.low %v3431, %v3430
        %v3867 = vunpack.c.l.s4 1983009808
        %v3868 = vunpack.c.0.s8 %v3867
        %v3869 = vlaneseq
        %v3870 = vshrl.u32 %v3869, 7
        %v3871 = vsub.s32 %v3868, %v3870
        %v3872 = vrot.slane %v3864, %v3871
        %v3874 = vunpack.c.l.s4 1983009808
        %v3875 = vunpack.c.0.s8 %v3874
        %v3876 = vlaneseq
        %v3877 = vshrl.u32 %v3876, 7
        %v3878 = vsub.s32 %v3875, %v3877
        %v3879 = vrot.slane %v3865, %v3878
        %v3880 = vcombine.low %v3872, %v3879
        %v3881 = vcombine.low %v3439, %v3447
        %v3882 = vcombine.low %v3446, %v3448
        %v3884 = vunpack.c.l.s4 1983009808
        %v3885 = vunpack.c.0.s8 %v3884
        %v3886 = vlaneseq
        %v3887 = vshrl.u32 %v3886, 7
        %v3888 = vsub.s32 %v3885, %v3887
        %v3889 = vrot.slane %v3881, %v3888
        %v3891 = vunpack.c.l.s4 1983009808
        %v3892 = vunpack.c.0.s8 %v3891
        %v3893 = vlaneseq
        %v3894 = vshrl.u32 %v3893, 7
        %v3895 = vsub.s32 %v3892, %v3894
        %v3896 = vrot.slane %v3882, %v3895
        %v3897 = vcombine.low %v3889, %v3896
        %v3898 = vcombine.low %v3456, %v3464
        %v3899 = vcombine.low %v3463, %v3472
        %v3901 = vunpack.c.l.s4 1983009808
        %v3902 = vunpack.c.0.s8 %v3901
        %v3903 = vlaneseq
        %v3904 = vshrl.u32 %v3903, 7
        %v3905 = vsub.s32 %v3902, %v3904
        %v3906 = vrot.slane %v3898, %v3905
        %v3908 = vunpack.c.l.s4 1983009808
        %v3909 = vunpack.c.0.s8 %v3908
        %v3910 = vlaneseq
        %v3911 = vshrl.u32 %v3910, 7
        %v3912 = vsub.s32 %v3909, %v3911
        %v3913 = vrot.slane %v3899, %v3912
        %v3914 = vcombine.low %v3906, %v3913
        %v3915 = vcombine.low %v3480, %v3479
        %v3916 = vcombine.low %v3481, %v3489
        %v3918 = vunpack.c.l.s4 1983009808
        %v3919 = vunpack.c.0.s8 %v3918
        %v3920 = vlaneseq
        %v3921 = vshrl.u32 %v3920, 7
        %v3922 = vsub.s32 %v3919, %v3921
        %v3923 = vrot.slane %v3915, %v3922
        %v3925 = vunpack.c.l.s4 1983009808
        %v3926 = vunpack.c.0.s8 %v3925
        %v3927 = vlaneseq
        %v3928 = vshrl.u32 %v3927, 7
        %v3929 = vsub.s32 %v3926, %v3928
        %v3930 = vrot.slane %v3916, %v3929
        %v3931 = vcombine.low %v3923, %v3930
        %v3932 = vcombine.low %v3497, %v3496
        %v3933 = vcombine.low %v3505, %v3513
        %v3935 = vunpack.c.l.s4 1983009808
        %v3936 = vunpack.c.0.s8 %v3935
        %v3937 = vlaneseq
        %v3938 = vshrl.u32 %v3937, 7
        %v3939 = vsub.s32 %v3936, %v3938
        %v3940 = vrot.slane %v3932, %v3939
        %v3942 = vunpack.c.l.s4 1983009808
        %v3943 = vunpack.c.0.s8 %v3942
        %v3944 = vlaneseq
        %v3945 = vshrl.u32 %v3944, 7
        %v3946 = vsub.s32 %v3943, %v3945
        %v3947 = vrot.slane %v3933, %v3946
        %v3948 = vcombine.low %v3940, %v3947
        %v3949 = vcombine.low %v3512, %v3514
        %v3950 = vcombine.low %v3522, %v3530
        %v3952 = vunpack.c.l.s4 1983009808
        %v3953 = vunpack.c.0.s8 %v3952
        %v3954 = vlaneseq
        %v3955 = vshrl.u32 %v3954, 7
        %v3956 = vsub.s32 %v3953, %v3955
        %v3957 = vrot.slane %v3949, %v3956
        %v3959 = vunpack.c.l.s4 1983009808
        %v3960 = vunpack.c.0.s8 %v3959
        %v3961 = vlaneseq
        %v3962 = vshrl.u32 %v3961, 7
        %v3963 = vsub.s32 %v3960, %v3962
        %v3964 = vrot.slane %v3950, %v3963
        %v3965 = vcombine.low %v3957, %v3964
        %v3966 = vcombine.low %v3529, %v3538
        %v3967 = vcombine.low %v3546, %v3545
        %v3969 = vunpack.c.l.s4 1983009808
        %v3970 = vunpack.c.0.s8 %v3969
        %v3971 = vlaneseq
        %v3972 = vshrl.u32 %v3971, 7
        %v3973 = vsub.s32 %v3970, %v3972
        %v3974 = vrot.slane %v3966, %v3973
        %v3976 = vunpack.c.l.s4 1983009808
        %v3977 = vunpack.c.0.s8 %v3976
        %v3978 = vlaneseq
        %v3979 = vshrl.u32 %v3978, 7
        %v3980 = vsub.s32 %v3977, %v3979
        %v3981 = vrot.slane %v3967, %v3980
        %v3982 = vcombine.low %v3974, %v3981
        %v3983 = vcombine.low %v3547, %v3555
        %v3984 = vcombine.low %v3563, %v3562
        %v3986 = vunpack.c.l.s4 1983009808
        %v3987 = vunpack.c.0.s8 %v3986
        %v3988 = vlaneseq
        %v3989 = vshrl.u32 %v3988, 7
        %v3990 = vsub.s32 %v3987, %v3989
        %v3991 = vrot.slane %v3983, %v3990
        %v3993 = vunpack.c.l.s4 1983009808
        %v3994 = vunpack.c.0.s8 %v3993
        %v3995 = vlaneseq
        %v3996 = vshrl.u32 %v3995, 7
        %v3997 = vsub.s32 %v3994, %v3996
        %v3998 = vrot.slane %v3984, %v3997
        %v3999 = vcombine.low %v3991, %v3998
        %v4000 = vcombine.low %v3571, %v3579
        %v4001 = vcombine.low %v3578, %v3580
        %v4003 = vunpack.c.l.s4 1983009808
        %v4004 = vunpack.c.0.s8 %v4003
        %v4005 = vlaneseq
        %v4006 = vshrl.u32 %v4005, 7
        %v4007 = vsub.s32 %v4004, %v4006
        %v4008 = vrot.slane %v4000, %v4007
        %v4010 = vunpack.c.l.s4 1983009808
        %v4011 = vunpack.c.0.s8 %v4010
        %v4012 = vlaneseq
        %v4013 = vshrl.u32 %v4012, 7
        %v4014 = vsub.s32 %v4011, %v4013
        %v4015 = vrot.slane %v4001, %v4014
        %v4016 = vcombine.low %v4008, %v4015
        %v4017 = vcombine.low %v3588, %v3596
        %v4018 = vcombine.low %v3595, %v3604
        %v4020 = vunpack.c.l.s4 1983009808
        %v4021 = vunpack.c.0.s8 %v4020
        %v4022 = vlaneseq
        %v4023 = vshrl.u32 %v4022, 7
        %v4024 = vsub.s32 %v4021, %v4023
        %v4025 = vrot.slane %v4017, %v4024
        %v4027 = vunpack.c.l.s4 1983009808
        %v4028 = vunpack.c.0.s8 %v4027
        %v4029 = vlaneseq
        %v4030 = vshrl.u32 %v4029, 7
        %v4031 = vsub.s32 %v4028, %v4030
        %v4032 = vrot.slane %v4018, %v4031
        %v4033 = vcombine.low %v4025, %v4032
        %v4034 = vcombine.low %v3612, %v3611
        %v4035 = vcombine.low %v3613, %v3621
        %v4037 = vunpack.c.l.s4 1983009808
        %v4038 = vunpack.c.0.s8 %v4037
        %v4039 = vlaneseq
        %v4040 = vshrl.u32 %v4039, 7
        %v4041 = vsub.s32 %v4038, %v4040
        %v4042 = vrot.slane %v4034, %v4041
        %v4044 = vunpack.c.l.s4 1983009808
        %v4045 = vunpack.c.0.s8 %v4044
        %v4046 = vlaneseq
        %v4047 = vshrl.u32 %v4046, 7
        %v4048 = vsub.s32 %v4045, %v4047
        %v4049 = vrot.slane %v4035, %v4048
        %v4050 = vcombine.low %v4042, %v4049
        %v4051 = vcombine.low %v3629, %v3628
        %v4052 = vcombine.low %v3637, %v3645
        %v4054 = vunpack.c.l.s4 1983009808
        %v4055 = vunpack.c.0.s8 %v4054
        %v4056 = vlaneseq
        %v4057 = vshrl.u32 %v4056, 7
        %v4058 = vsub.s32 %v4055, %v4057
        %v4059 = vrot.slane %v4051, %v4058
        %v4061 = vunpack.c.l.s4 1983009808
        %v4062 = vunpack.c.0.s8 %v4061
        %v4063 = vlaneseq
        %v4064 = vshrl.u32 %v4063, 7
        %v4065 = vsub.s32 %v4062, %v4064
        %v4066 = vrot.slane %v4052, %v4065
        %v4067 = vcombine.low %v4059, %v4066
        %v4068 = vcombine.low %v3644, %v3646
        %v4069 = vcombine.low %v3654, %v3662
        %v4071 = vunpack.c.l.s4 1983009808
        %v4072 = vunpack.c.0.s8 %v4071
        %v4073 = vlaneseq
        %v4074 = vshrl.u32 %v4073, 7
        %v4075 = vsub.s32 %v4072, %v4074
        %v4076 = vrot.slane %v4068, %v4075
        %v4078 = vunpack.c.l.s4 1983009808
        %v4079 = vunpack.c.0.s8 %v4078
        %v4080 = vlaneseq
        %v4081 = vshrl.u32 %v4080, 7
        %v4082 = vsub.s32 %v4079, %v4081
        %v4083 = vrot.slane %v4069, %v4082
        %v4084 = vcombine.low %v4076, %v4083
        %v4085 = vcombine.low %v3661, %v3670
        %v4086 = vcombine.low %v3678, %v3677
        %v4088 = vunpack.c.l.s4 1983009808
        %v4089 = vunpack.c.0.s8 %v4088
        %v4090 = vlaneseq
        %v4091 = vshrl.u32 %v4090, 7
        %v4092 = vsub.s32 %v4089, %v4091
        %v4093 = vrot.slane %v4085, %v4092
        %v4095 = vunpack.c.l.s4 1983009808
        %v4096 = vunpack.c.0.s8 %v4095
        %v4097 = vlaneseq
        %v4098 = vshrl.u32 %v4097, 7
        %v4099 = vsub.s32 %v4096, %v4098
        %v4100 = vrot.slane %v4086, %v4099
        %v4101 = vcombine.low %v4093, %v4100
        %v4102 = vcombine.low %v3679, %v3687
        %v4103 = vcombine.low %v3695, %v3694
        %v4105 = vunpack.c.l.s4 1983009808
        %v4106 = vunpack.c.0.s8 %v4105
        %v4107 = vlaneseq
        %v4108 = vshrl.u32 %v4107, 7
        %v4109 = vsub.s32 %v4106, %v4108
        %v4110 = vrot.slane %v4102, %v4109
        %v4112 = vunpack.c.l.s4 1983009808
        %v4113 = vunpack.c.0.s8 %v4112
        %v4114 = vlaneseq
        %v4115 = vshrl.u32 %v4114, 7
        %v4116 = vsub.s32 %v4113, %v4115
        %v4117 = vrot.slane %v4103, %v4116
        %v4118 = vcombine.low %v4110, %v4117
        %v4119 = vcombine.low %v3703, %v3711
        %v4120 = vcombine.low %v3710, %v3712
        %v4122 = vunpack.c.l.s4 1983009808
        %v4123 = vunpack.c.0.s8 %v4122
        %v4124 = vlaneseq
        %v4125 = vshrl.u32 %v4124, 7
        %v4126 = vsub.s32 %v4123, %v4125
        %v4127 = vrot.slane %v4119, %v4126
        %v4129 = vunpack.c.l.s4 1983009808
        %v4130 = vunpack.c.0.s8 %v4129
        %v4131 = vlaneseq
        %v4132 = vshrl.u32 %v4131, 7
        %v4133 = vsub.s32 %v4130, %v4132
        %v4134 = vrot.slane %v4120, %v4133
        %v4135 = vcombine.low %v4127, %v4134
        %v4136 = vcombine.low %v3720, %v3728
        %v4137 = vcombine.low %v3727, %v3736
        %v4139 = vunpack.c.l.s4 1983009808
        %v4140 = vunpack.c.0.s8 %v4139
        %v4141 = vlaneseq
        %v4142 = vshrl.u32 %v4141, 7
        %v4143 = vsub.s32 %v4140, %v4142
        %v4144 = vrot.slane %v4136, %v4143
        %v4146 = vunpack.c.l.s4 1983009808
        %v4147 = vunpack.c.0.s8 %v4146
        %v4148 = vlaneseq
        %v4149 = vshrl.u32 %v4148, 7
        %v4150 = vsub.s32 %v4147, %v4149
        %v4151 = vrot.slane %v4137, %v4150
        %v4152 = vcombine.low %v4144, %v4151
        %v4153 = vcombine.low %v3744, %v3743
        %v4154 = vcombine.low %v3745, %v3753
        %v4156 = vunpack.c.l.s4 1983009808
        %v4157 = vunpack.c.0.s8 %v4156
        %v4158 = vlaneseq
        %v4159 = vshrl.u32 %v4158, 7
        %v4160 = vsub.s32 %v4157, %v4159
        %v4161 = vrot.slane %v4153, %v4160
        %v4163 = vunpack.c.l.s4 1983009808
        %v4164 = vunpack.c.0.s8 %v4163
        %v4165 = vlaneseq
        %v4166 = vshrl.u32 %v4165, 7
        %v4167 = vsub.s32 %v4164, %v4166
        %v4168 = vrot.slane %v4154, %v4167
        %v4169 = vcombine.low %v4161, %v4168
        %v4170 = vcombine.low %v3761, %v3760
        %v4172 = vunpack.c.l.s4 1983009808
        %v4173 = vunpack.c.0.s8 %v4172
        %v4174 = vlaneseq
        %v4175 = vshrl.u32 %v4174, 7
        %v4176 = vsub.s32 %v4173, %v4175
        %v4177 = vrot.slane %v4170, %v4176
        %4178 = vrot.lane.b32.xlu0 %v3778, 12
        %v4179 = vpop.permute.xlu0 %4178
        %4180 = vrot.lane.b32.xlu0 %v3795, 12
        %v4181 = vpop.permute.xlu0 %4180
        %4182 = vrot.lane.b32.xlu0 %v3812, 12
        %v4183 = vpop.permute.xlu0 %4182
        %4184 = vrot.lane.b32.xlu0 %v3829, 12
        %v4185 = vpop.permute.xlu0 %4184
        %4186 = vrot.lane.b32.xlu0 %v3846, 12
        %v4187 = vpop.permute.xlu0 %4186
        %4188 = vrot.lane.b32.xlu0 %v3863, 12
        %v4189 = vpop.permute.xlu0 %4188
        %4190 = vrot.lane.b32.xlu0 %v3880, 12
        %v4191 = vpop.permute.xlu0 %4190
        %4192 = vrot.lane.b32.xlu0 %v3897, 12
        %v4193 = vpop.permute.xlu0 %4192
        %4194 = vrot.lane.b32.xlu0 %v3914, 12
        %v4195 = vpop.permute.xlu0 %4194
        %4196 = vrot.lane.b32.xlu0 %v3931, 12
        %v4197 = vpop.permute.xlu0 %4196
        %4198 = vrot.lane.b32.xlu0 %v3948, 12
        %v4199 = vpop.permute.xlu0 %4198
        %4200 = vrot.lane.b32.xlu0 %v3965, 12
        %v4201 = vpop.permute.xlu0 %4200
        %4202 = vrot.lane.b32.xlu0 %v3982, 12
        %v4203 = vpop.permute.xlu0 %4202
        %4204 = vrot.lane.b32.xlu0 %v3999, 12
        %v4205 = vpop.permute.xlu0 %4204
        %4206 = vrot.lane.b32.xlu0 %v4016, 12
        %v4207 = vpop.permute.xlu0 %4206
        %4208 = vrot.lane.b32.xlu0 %v4033, 12
        %v4209 = vpop.permute.xlu0 %4208
        %4210 = vrot.lane.b32.xlu0 %v4050, 12
        %v4211 = vpop.permute.xlu0 %4210
        %4212 = vrot.lane.b32.xlu0 %v4067, 12
        %v4213 = vpop.permute.xlu0 %4212
        %4214 = vrot.lane.b32.xlu0 %v4084, 12
        %v4215 = vpop.permute.xlu0 %4214
        %4216 = vrot.lane.b32.xlu0 %v4101, 12
        %v4217 = vpop.permute.xlu0 %4216
        %4218 = vrot.lane.b32.xlu0 %v4118, 12
        %v4219 = vpop.permute.xlu0 %4218
        %4220 = vrot.lane.b32.xlu0 %v4135, 12
        %v4221 = vpop.permute.xlu0 %4220
        %4222 = vrot.lane.b32.xlu0 %v4152, 12
        %v4223 = vpop.permute.xlu0 %4222
        %4224 = vrot.lane.b32.xlu0 %v4169, 12
        %v4225 = vpop.permute.xlu0 %4224
        %4226 = vrot.lane.b32.xlu0 %v4177, 12
        %v4227 = vpop.permute.xlu0 %4226
        %vm4253 = vcmask 130144
        %4254 = vst.msk [vmem:[#allocation2] sm:$0xff] %vm4253, %v4179
        %4255 = vst.msk [vmem:[#allocation2 + $0x8] sm:$0xff] %vm4253, %v4181
        %4256 = vst.msk [vmem:[#allocation2 + $0x10] sm:$0xff] %vm4253, %v4183
        %4257 = vst.msk [vmem:[#allocation2 + $0x18] sm:$0xff] %vm4253, %v4185
        %4258 = vst.msk [vmem:[#allocation2 + $0x20] sm:$0xff] %vm4253, %v4187
        %4259 = vst.msk [vmem:[#allocation2 + $0x28] sm:$0xff] %vm4253, %v4189
        %4260 = vst.msk [vmem:[#allocation2 + $0x30] sm:$0xff] %vm4253, %v4191
        %4261 = vst.msk [vmem:[#allocation2 + $0x38] sm:$0xff] %vm4253, %v4193
        %4262 = vst.msk [vmem:[#allocation2 + $0x40] sm:$0xff] %vm4253, %v4195
        %4263 = vst.msk [vmem:[#allocation2 + $0x48] sm:$0xff] %vm4253, %v4197
        %4264 = vst.msk [vmem:[#allocation2 + $0x50] sm:$0xff] %vm4253, %v4199
        %4265 = vst.msk [vmem:[#allocation2 + $0x58] sm:$0xff] %vm4253, %v4201
        %4266 = vst.msk [vmem:[#allocation2 + $0x60] sm:$0xff] %vm4253, %v4203
        %4267 = vst.msk [vmem:[#allocation2 + $0x68] sm:$0xff] %vm4253, %v4205
        %4268 = vst.msk [vmem:[#allocation2 + $0x70] sm:$0xff] %vm4253, %v4207
        %4269 = vst.msk [vmem:[#allocation2 + $0x78] sm:$0xff] %vm4253, %v4209
        %4270 = vst.msk [vmem:[#allocation2 + $0x80] sm:$0xff] %vm4253, %v4211
        %4271 = vst.msk [vmem:[#allocation2 + $0x88] sm:$0xff] %vm4253, %v4213
        %4272 = vst.msk [vmem:[#allocation2 + $0x90] sm:$0xff] %vm4253, %v4215
        %4273 = vst.msk [vmem:[#allocation2 + $0x98] sm:$0xff] %vm4253, %v4217
        %4274 = vst.msk [vmem:[#allocation2 + $0xa0] sm:$0xff] %vm4253, %v4219
        %4275 = vst.msk [vmem:[#allocation2 + $0xa8] sm:$0xff] %vm4253, %v4221
        %4276 = vst.msk [vmem:[#allocation2 + $0xb0] sm:$0xff] %vm4253, %v4223
        %4277 = vst.msk [vmem:[#allocation2 + $0xb8] sm:$0xff] %vm4253, %v4225
        %vm4278 = vcmask 126048
        %4279 = vst.msk [vmem:[#allocation2 + $0xc0] sm:$0xf] %vm4278, %v4227
        %v4280 = vld [vmem:[%s3243 + $0x1] sm:$0xff]
        %v4281 = vld [vmem:[%s3243 + $0x9] sm:$0x3f]
        %v4282 = vld [vmem:[%s3243 + $0x11] sm:$0xff]
        %v4283 = vld [vmem:[%s3243 + $0x19] sm:$0x3f]
        %v4284 = vld [vmem:[%s3243 + $0x21] sm:$0xff]
        %v4285 = vld [vmem:[%s3243 + $0x29] sm:$0x3f]
        %v4286 = vld [vmem:[%s3243 + $0x31] sm:$0xff]
        %v4287 = vld [vmem:[%s3243 + $0x39] sm:$0x3f]
        %v4288 = vld [vmem:[%s3243 + $0x41] sm:$0xff]
        %v4289 = vld [vmem:[%s3243 + $0x49] sm:$0x3f]
        %v4290 = vld [vmem:[%s3243 + $0x51] sm:$0xff]
        %v4291 = vld [vmem:[%s3243 + $0x59] sm:$0x3f]
        %v4292 = vld [vmem:[%s3243 + $0x61] sm:$0xff]
        %v4293 = vld [vmem:[%s3243 + $0x69] sm:$0x3f]
        %v4294 = vld [vmem:[%s3243 + $0x71] sm:$0xff]
        %v4295 = vld [vmem:[%s3243 + $0x79] sm:$0x3f]
        %v4296 = vld [vmem:[%s3243 + $0x81] sm:$0xff]
        %v4297 = vld [vmem:[%s3243 + $0x89] sm:$0x3f]
        %v4298 = vld [vmem:[%s3243 + $0x91] sm:$0xff]
        %v4299 = vld [vmem:[%s3243 + $0x99] sm:$0x3f]
        %v4300 = vld [vmem:[%s3243 + $0xa1] sm:$0xff]
        %v4301 = vld [vmem:[%s3243 + $0xa9] sm:$0x3f]
        %v4302 = vld [vmem:[%s3243 + $0xb1] sm:$0xff]
        %v4303 = vld [vmem:[%s3243 + $0xb9] sm:$0x3f]
        %v4304 = vld [vmem:[%s3243 + $0xc1] sm:$0xff]
        %v4305 = vld [vmem:[%s3243 + $0xc9] sm:$0x3f]
        %v4306 = vld [vmem:[%s3243 + $0xd1] sm:$0xff]
        %v4307 = vld [vmem:[%s3243 + $0xd9] sm:$0x3f]
        %v4336 = vcombine.high %v4280, %v4280
        %v4338 = vunpack.c.l.s4 1983009808
        %v4339 = vunpack.c.0.s8 %v4338
        %v4340 = vlaneseq
        %v4341 = vshrl.u32 %v4340, 7
        %v4342 = vsub.s32 %v4339, %v4341
        %v4343 = vrot.slane %v4280, %v4342
        %v4345 = vunpack.c.l.s4 1983009808
        %v4346 = vunpack.c.0.s8 %v4345
        %v4347 = vlaneseq
        %v4348 = vshrl.u32 %v4347, 7
        %v4349 = vsub.s32 %v4346, %v4348
        %v4350 = vrot.slane %v4336, %v4349
        %v4351 = vcombine.high %v4343, %v4343
        %v4352 = vcombine.high %v4350, %v4350
        %v4353 = vcombine.high %v4281, %v4281
        %v4355 = vunpack.c.l.s4 1983009808
        %v4356 = vunpack.c.0.s8 %v4355
        %v4357 = vlaneseq
        %v4358 = vshrl.u32 %v4357, 7
        %v4359 = vsub.s32 %v4356, %v4358
        %v4360 = vrot.slane %v4281, %v4359
        %v4362 = vunpack.c.l.s4 1983009808
        %v4363 = vunpack.c.0.s8 %v4362
        %v4364 = vlaneseq
        %v4365 = vshrl.u32 %v4364, 7
        %v4366 = vsub.s32 %v4363, %v4365
        %v4367 = vrot.slane %v4353, %v4366
        %v4368 = vcombine.high %v4360, %v4360
        %v4369 = vcombine.high %v4282, %v4282
        %v4371 = vunpack.c.l.s4 1983009808
        %v4372 = vunpack.c.0.s8 %v4371
        %v4373 = vlaneseq
        %v4374 = vshrl.u32 %v4373, 7
        %v4375 = vsub.s32 %v4372, %v4374
        %v4376 = vrot.slane %v4282, %v4375
        %v4378 = vunpack.c.l.s4 1983009808
        %v4379 = vunpack.c.0.s8 %v4378
        %v4380 = vlaneseq
        %v4381 = vshrl.u32 %v4380, 7
        %v4382 = vsub.s32 %v4379, %v4381
        %v4383 = vrot.slane %v4369, %v4382
        %v4384 = vcombine.high %v4376, %v4376
        %v4385 = vcombine.high %v4383, %v4383
        %v4386 = vcombine.high %v4283, %v4283
        %v4388 = vunpack.c.l.s4 1983009808
        %v4389 = vunpack.c.0.s8 %v4388
        %v4390 = vlaneseq
        %v4391 = vshrl.u32 %v4390, 7
        %v4392 = vsub.s32 %v4389, %v4391
        %v4393 = vrot.slane %v4283, %v4392
        %v4395 = vunpack.c.l.s4 1983009808
        %v4396 = vunpack.c.0.s8 %v4395
        %v4397 = vlaneseq
        %v4398 = vshrl.u32 %v4397, 7
        %v4399 = vsub.s32 %v4396, %v4398
        %v4400 = vrot.slane %v4386, %v4399
        %v4401 = vcombine.high %v4393, %v4393
        %v4402 = vcombine.high %v4284, %v4284
        %v4404 = vunpack.c.l.s4 1983009808
        %v4405 = vunpack.c.0.s8 %v4404
        %v4406 = vlaneseq
        %v4407 = vshrl.u32 %v4406, 7
        %v4408 = vsub.s32 %v4405, %v4407
        %v4409 = vrot.slane %v4284, %v4408
        %v4411 = vunpack.c.l.s4 1983009808
        %v4412 = vunpack.c.0.s8 %v4411
        %v4413 = vlaneseq
        %v4414 = vshrl.u32 %v4413, 7
        %v4415 = vsub.s32 %v4412, %v4414
        %v4416 = vrot.slane %v4402, %v4415
        %v4417 = vcombine.high %v4409, %v4409
        %v4418 = vcombine.high %v4416, %v4416
        %v4419 = vcombine.high %v4285, %v4285
        %v4421 = vunpack.c.l.s4 1983009808
        %v4422 = vunpack.c.0.s8 %v4421
        %v4423 = vlaneseq
        %v4424 = vshrl.u32 %v4423, 7
        %v4425 = vsub.s32 %v4422, %v4424
        %v4426 = vrot.slane %v4285, %v4425
        %v4428 = vunpack.c.l.s4 1983009808
        %v4429 = vunpack.c.0.s8 %v4428
        %v4430 = vlaneseq
        %v4431 = vshrl.u32 %v4430, 7
        %v4432 = vsub.s32 %v4429, %v4431
        %v4433 = vrot.slane %v4419, %v4432
        %v4434 = vcombine.high %v4426, %v4426
        %v4435 = vcombine.high %v4286, %v4286
        %v4437 = vunpack.c.l.s4 1983009808
        %v4438 = vunpack.c.0.s8 %v4437
        %v4439 = vlaneseq
        %v4440 = vshrl.u32 %v4439, 7
        %v4441 = vsub.s32 %v4438, %v4440
        %v4442 = vrot.slane %v4286, %v4441
        %v4444 = vunpack.c.l.s4 1983009808
        %v4445 = vunpack.c.0.s8 %v4444
        %v4446 = vlaneseq
        %v4447 = vshrl.u32 %v4446, 7
        %v4448 = vsub.s32 %v4445, %v4447
        %v4449 = vrot.slane %v4435, %v4448
        %v4450 = vcombine.high %v4442, %v4442
        %v4451 = vcombine.high %v4449, %v4449
        %v4452 = vcombine.high %v4287, %v4287
        %v4454 = vunpack.c.l.s4 1983009808
        %v4455 = vunpack.c.0.s8 %v4454
        %v4456 = vlaneseq
        %v4457 = vshrl.u32 %v4456, 7
        %v4458 = vsub.s32 %v4455, %v4457
        %v4459 = vrot.slane %v4287, %v4458
        %v4461 = vunpack.c.l.s4 1983009808
        %v4462 = vunpack.c.0.s8 %v4461
        %v4463 = vlaneseq
        %v4464 = vshrl.u32 %v4463, 7
        %v4465 = vsub.s32 %v4462, %v4464
        %v4466 = vrot.slane %v4452, %v4465
        %v4467 = vcombine.high %v4459, %v4459
        %v4468 = vcombine.high %v4288, %v4288
        %v4470 = vunpack.c.l.s4 1983009808
        %v4471 = vunpack.c.0.s8 %v4470
        %v4472 = vlaneseq
        %v4473 = vshrl.u32 %v4472, 7
        %v4474 = vsub.s32 %v4471, %v4473
        %v4475 = vrot.slane %v4288, %v4474
        %v4477 = vunpack.c.l.s4 1983009808
        %v4478 = vunpack.c.0.s8 %v4477
        %v4479 = vlaneseq
        %v4480 = vshrl.u32 %v4479, 7
        %v4481 = vsub.s32 %v4478, %v4480
        %v4482 = vrot.slane %v4468, %v4481
        %v4483 = vcombine.high %v4475, %v4475
        %v4484 = vcombine.high %v4482, %v4482
        %v4485 = vcombine.high %v4289, %v4289
        %v4487 = vunpack.c.l.s4 1983009808
        %v4488 = vunpack.c.0.s8 %v4487
        %v4489 = vlaneseq
        %v4490 = vshrl.u32 %v4489, 7
        %v4491 = vsub.s32 %v4488, %v4490
        %v4492 = vrot.slane %v4289, %v4491
        %v4494 = vunpack.c.l.s4 1983009808
        %v4495 = vunpack.c.0.s8 %v4494
        %v4496 = vlaneseq
        %v4497 = vshrl.u32 %v4496, 7
        %v4498 = vsub.s32 %v4495, %v4497
        %v4499 = vrot.slane %v4485, %v4498
        %v4500 = vcombine.high %v4492, %v4492
        %v4501 = vcombine.high %v4290, %v4290
        %v4503 = vunpack.c.l.s4 1983009808
        %v4504 = vunpack.c.0.s8 %v4503
        %v4505 = vlaneseq
        %v4506 = vshrl.u32 %v4505, 7
        %v4507 = vsub.s32 %v4504, %v4506
        %v4508 = vrot.slane %v4290, %v4507
        %v4510 = vunpack.c.l.s4 1983009808
        %v4511 = vunpack.c.0.s8 %v4510
        %v4512 = vlaneseq
        %v4513 = vshrl.u32 %v4512, 7
        %v4514 = vsub.s32 %v4511, %v4513
        %v4515 = vrot.slane %v4501, %v4514
        %v4516 = vcombine.high %v4508, %v4508
        %v4517 = vcombine.high %v4515, %v4515
        %v4518 = vcombine.high %v4291, %v4291
        %v4520 = vunpack.c.l.s4 1983009808
        %v4521 = vunpack.c.0.s8 %v4520
        %v4522 = vlaneseq
        %v4523 = vshrl.u32 %v4522, 7
        %v4524 = vsub.s32 %v4521, %v4523
        %v4525 = vrot.slane %v4291, %v4524
        %v4527 = vunpack.c.l.s4 1983009808
        %v4528 = vunpack.c.0.s8 %v4527
        %v4529 = vlaneseq
        %v4530 = vshrl.u32 %v4529, 7
        %v4531 = vsub.s32 %v4528, %v4530
        %v4532 = vrot.slane %v4518, %v4531
        %v4533 = vcombine.high %v4525, %v4525
        %v4534 = vcombine.high %v4292, %v4292
        %v4536 = vunpack.c.l.s4 1983009808
        %v4537 = vunpack.c.0.s8 %v4536
        %v4538 = vlaneseq
        %v4539 = vshrl.u32 %v4538, 7
        %v4540 = vsub.s32 %v4537, %v4539
        %v4541 = vrot.slane %v4292, %v4540
        %v4543 = vunpack.c.l.s4 1983009808
        %v4544 = vunpack.c.0.s8 %v4543
        %v4545 = vlaneseq
        %v4546 = vshrl.u32 %v4545, 7
        %v4547 = vsub.s32 %v4544, %v4546
        %v4548 = vrot.slane %v4534, %v4547
        %v4549 = vcombine.high %v4541, %v4541
        %v4550 = vcombine.high %v4548, %v4548
        %v4551 = vcombine.high %v4293, %v4293
        %v4553 = vunpack.c.l.s4 1983009808
        %v4554 = vunpack.c.0.s8 %v4553
        %v4555 = vlaneseq
        %v4556 = vshrl.u32 %v4555, 7
        %v4557 = vsub.s32 %v4554, %v4556
        %v4558 = vrot.slane %v4293, %v4557
        %v4560 = vunpack.c.l.s4 1983009808
        %v4561 = vunpack.c.0.s8 %v4560
        %v4562 = vlaneseq
        %v4563 = vshrl.u32 %v4562, 7
        %v4564 = vsub.s32 %v4561, %v4563
        %v4565 = vrot.slane %v4551, %v4564
        %v4566 = vcombine.high %v4558, %v4558
        %v4567 = vcombine.high %v4294, %v4294
        %v4569 = vunpack.c.l.s4 1983009808
        %v4570 = vunpack.c.0.s8 %v4569
        %v4571 = vlaneseq
        %v4572 = vshrl.u32 %v4571, 7
        %v4573 = vsub.s32 %v4570, %v4572
        %v4574 = vrot.slane %v4294, %v4573
        %v4576 = vunpack.c.l.s4 1983009808
        %v4577 = vunpack.c.0.s8 %v4576
        %v4578 = vlaneseq
        %v4579 = vshrl.u32 %v4578, 7
        %v4580 = vsub.s32 %v4577, %v4579
        %v4581 = vrot.slane %v4567, %v4580
        %v4582 = vcombine.high %v4574, %v4574
        %v4583 = vcombine.high %v4581, %v4581
        %v4584 = vcombine.high %v4295, %v4295
        %v4586 = vunpack.c.l.s4 1983009808
        %v4587 = vunpack.c.0.s8 %v4586
        %v4588 = vlaneseq
        %v4589 = vshrl.u32 %v4588, 7
        %v4590 = vsub.s32 %v4587, %v4589
        %v4591 = vrot.slane %v4295, %v4590
        %v4593 = vunpack.c.l.s4 1983009808
        %v4594 = vunpack.c.0.s8 %v4593
        %v4595 = vlaneseq
        %v4596 = vshrl.u32 %v4595, 7
        %v4597 = vsub.s32 %v4594, %v4596
        %v4598 = vrot.slane %v4584, %v4597
        %v4599 = vcombine.high %v4591, %v4591
        %v4600 = vcombine.high %v4296, %v4296
        %v4602 = vunpack.c.l.s4 1983009808
        %v4603 = vunpack.c.0.s8 %v4602
        %v4604 = vlaneseq
        %v4605 = vshrl.u32 %v4604, 7
        %v4606 = vsub.s32 %v4603, %v4605
        %v4607 = vrot.slane %v4296, %v4606
        %v4609 = vunpack.c.l.s4 1983009808
        %v4610 = vunpack.c.0.s8 %v4609
        %v4611 = vlaneseq
        %v4612 = vshrl.u32 %v4611, 7
        %v4613 = vsub.s32 %v4610, %v4612
        %v4614 = vrot.slane %v4600, %v4613
        %v4615 = vcombine.high %v4607, %v4607
        %v4616 = vcombine.high %v4614, %v4614
        %v4617 = vcombine.high %v4297, %v4297
        %v4619 = vunpack.c.l.s4 1983009808
        %v4620 = vunpack.c.0.s8 %v4619
        %v4621 = vlaneseq
        %v4622 = vshrl.u32 %v4621, 7
        %v4623 = vsub.s32 %v4620, %v4622
        %v4624 = vrot.slane %v4297, %v4623
        %v4626 = vunpack.c.l.s4 1983009808
        %v4627 = vunpack.c.0.s8 %v4626
        %v4628 = vlaneseq
        %v4629 = vshrl.u32 %v4628, 7
        %v4630 = vsub.s32 %v4627, %v4629
        %v4631 = vrot.slane %v4617, %v4630
        %v4632 = vcombine.high %v4624, %v4624
        %v4633 = vcombine.high %v4298, %v4298
        %v4635 = vunpack.c.l.s4 1983009808
        %v4636 = vunpack.c.0.s8 %v4635
        %v4637 = vlaneseq
        %v4638 = vshrl.u32 %v4637, 7
        %v4639 = vsub.s32 %v4636, %v4638
        %v4640 = vrot.slane %v4298, %v4639
        %v4642 = vunpack.c.l.s4 1983009808
        %v4643 = vunpack.c.0.s8 %v4642
        %v4644 = vlaneseq
        %v4645 = vshrl.u32 %v4644, 7
        %v4646 = vsub.s32 %v4643, %v4645
        %v4647 = vrot.slane %v4633, %v4646
        %v4648 = vcombine.high %v4640, %v4640
        %v4649 = vcombine.high %v4647, %v4647
        %v4650 = vcombine.high %v4299, %v4299
        %v4652 = vunpack.c.l.s4 1983009808
        %v4653 = vunpack.c.0.s8 %v4652
        %v4654 = vlaneseq
        %v4655 = vshrl.u32 %v4654, 7
        %v4656 = vsub.s32 %v4653, %v4655
        %v4657 = vrot.slane %v4299, %v4656
        %v4659 = vunpack.c.l.s4 1983009808
        %v4660 = vunpack.c.0.s8 %v4659
        %v4661 = vlaneseq
        %v4662 = vshrl.u32 %v4661, 7
        %v4663 = vsub.s32 %v4660, %v4662
        %v4664 = vrot.slane %v4650, %v4663
        %v4665 = vcombine.high %v4657, %v4657
        %v4666 = vcombine.high %v4300, %v4300
        %v4668 = vunpack.c.l.s4 1983009808
        %v4669 = vunpack.c.0.s8 %v4668
        %v4670 = vlaneseq
        %v4671 = vshrl.u32 %v4670, 7
        %v4672 = vsub.s32 %v4669, %v4671
        %v4673 = vrot.slane %v4300, %v4672
        %v4675 = vunpack.c.l.s4 1983009808
        %v4676 = vunpack.c.0.s8 %v4675
        %v4677 = vlaneseq
        %v4678 = vshrl.u32 %v4677, 7
        %v4679 = vsub.s32 %v4676, %v4678
        %v4680 = vrot.slane %v4666, %v4679
        %v4681 = vcombine.high %v4673, %v4673
        %v4682 = vcombine.high %v4680, %v4680
        %v4683 = vcombine.high %v4301, %v4301
        %v4685 = vunpack.c.l.s4 1983009808
        %v4686 = vunpack.c.0.s8 %v4685
        %v4687 = vlaneseq
        %v4688 = vshrl.u32 %v4687, 7
        %v4689 = vsub.s32 %v4686, %v4688
        %v4690 = vrot.slane %v4301, %v4689
        %v4692 = vunpack.c.l.s4 1983009808
        %v4693 = vunpack.c.0.s8 %v4692
        %v4694 = vlaneseq
        %v4695 = vshrl.u32 %v4694, 7
        %v4696 = vsub.s32 %v4693, %v4695
        %v4697 = vrot.slane %v4683, %v4696
        %v4698 = vcombine.high %v4690, %v4690
        %v4699 = vcombine.high %v4302, %v4302
        %v4701 = vunpack.c.l.s4 1983009808
        %v4702 = vunpack.c.0.s8 %v4701
        %v4703 = vlaneseq
        %v4704 = vshrl.u32 %v4703, 7
        %v4705 = vsub.s32 %v4702, %v4704
        %v4706 = vrot.slane %v4302, %v4705
        %v4708 = vunpack.c.l.s4 1983009808
        %v4709 = vunpack.c.0.s8 %v4708
        %v4710 = vlaneseq
        %v4711 = vshrl.u32 %v4710, 7
        %v4712 = vsub.s32 %v4709, %v4711
        %v4713 = vrot.slane %v4699, %v4712
        %v4714 = vcombine.high %v4706, %v4706
        %v4715 = vcombine.high %v4713, %v4713
        %v4716 = vcombine.high %v4303, %v4303
        %v4718 = vunpack.c.l.s4 1983009808
        %v4719 = vunpack.c.0.s8 %v4718
        %v4720 = vlaneseq
        %v4721 = vshrl.u32 %v4720, 7
        %v4722 = vsub.s32 %v4719, %v4721
        %v4723 = vrot.slane %v4303, %v4722
        %v4725 = vunpack.c.l.s4 1983009808
        %v4726 = vunpack.c.0.s8 %v4725
        %v4727 = vlaneseq
        %v4728 = vshrl.u32 %v4727, 7
        %v4729 = vsub.s32 %v4726, %v4728
        %v4730 = vrot.slane %v4716, %v4729
        %v4731 = vcombine.high %v4723, %v4723
        %v4732 = vcombine.high %v4304, %v4304
        %v4734 = vunpack.c.l.s4 1983009808
        %v4735 = vunpack.c.0.s8 %v4734
        %v4736 = vlaneseq
        %v4737 = vshrl.u32 %v4736, 7
        %v4738 = vsub.s32 %v4735, %v4737
        %v4739 = vrot.slane %v4304, %v4738
        %v4741 = vunpack.c.l.s4 1983009808
        %v4742 = vunpack.c.0.s8 %v4741
        %v4743 = vlaneseq
        %v4744 = vshrl.u32 %v4743, 7
        %v4745 = vsub.s32 %v4742, %v4744
        %v4746 = vrot.slane %v4732, %v4745
        %v4747 = vcombine.high %v4739, %v4739
        %v4748 = vcombine.high %v4746, %v4746
        %v4749 = vcombine.high %v4305, %v4305
        %v4751 = vunpack.c.l.s4 1983009808
        %v4752 = vunpack.c.0.s8 %v4751
        %v4753 = vlaneseq
        %v4754 = vshrl.u32 %v4753, 7
        %v4755 = vsub.s32 %v4752, %v4754
        %v4756 = vrot.slane %v4305, %v4755
        %v4758 = vunpack.c.l.s4 1983009808
        %v4759 = vunpack.c.0.s8 %v4758
        %v4760 = vlaneseq
        %v4761 = vshrl.u32 %v4760, 7
        %v4762 = vsub.s32 %v4759, %v4761
        %v4763 = vrot.slane %v4749, %v4762
        %v4764 = vcombine.high %v4756, %v4756
        %v4765 = vcombine.high %v4306, %v4306
        %v4767 = vunpack.c.l.s4 1983009808
        %v4768 = vunpack.c.0.s8 %v4767
        %v4769 = vlaneseq
        %v4770 = vshrl.u32 %v4769, 7
        %v4771 = vsub.s32 %v4768, %v4770
        %v4772 = vrot.slane %v4306, %v4771
        %v4774 = vunpack.c.l.s4 1983009808
        %v4775 = vunpack.c.0.s8 %v4774
        %v4776 = vlaneseq
        %v4777 = vshrl.u32 %v4776, 7
        %v4778 = vsub.s32 %v4775, %v4777
        %v4779 = vrot.slane %v4765, %v4778
        %v4780 = vcombine.high %v4772, %v4772
        %v4781 = vcombine.high %v4779, %v4779
        %v4782 = vcombine.high %v4307, %v4307
        %v4784 = vunpack.c.l.s4 1983009808
        %v4785 = vunpack.c.0.s8 %v4784
        %v4786 = vlaneseq
        %v4787 = vshrl.u32 %v4786, 7
        %v4788 = vsub.s32 %v4785, %v4787
        %v4789 = vrot.slane %v4307, %v4788
        %v4791 = vunpack.c.l.s4 1983009808
        %v4792 = vunpack.c.0.s8 %v4791
        %v4793 = vlaneseq
        %v4794 = vshrl.u32 %v4793, 7
        %v4795 = vsub.s32 %v4792, %v4794
        %v4796 = vrot.slane %v4782, %v4795
        %v4797 = vcombine.high %v4789, %v4789
        %v4798 = vcombine.low %v4343, %v4351
        %v4799 = vcombine.low %v4350, %v4352
        %v4801 = vunpack.c.l.s4 1983009808
        %v4802 = vunpack.c.0.s8 %v4801
        %v4803 = vlaneseq
        %v4804 = vshrl.u32 %v4803, 7
        %v4805 = vsub.s32 %v4802, %v4804
        %v4806 = vrot.slane %v4798, %v4805
        %v4808 = vunpack.c.l.s4 1983009808
        %v4809 = vunpack.c.0.s8 %v4808
        %v4810 = vlaneseq
        %v4811 = vshrl.u32 %v4810, 7
        %v4812 = vsub.s32 %v4809, %v4811
        %v4813 = vrot.slane %v4799, %v4812
        %v4814 = vcombine.low %v4806, %v4813
        %v4815 = vcombine.low %v4360, %v4368
        %v4816 = vcombine.low %v4367, %v4376
        %v4818 = vunpack.c.l.s4 1983009808
        %v4819 = vunpack.c.0.s8 %v4818
        %v4820 = vlaneseq
        %v4821 = vshrl.u32 %v4820, 7
        %v4822 = vsub.s32 %v4819, %v4821
        %v4823 = vrot.slane %v4815, %v4822
        %v4825 = vunpack.c.l.s4 1983009808
        %v4826 = vunpack.c.0.s8 %v4825
        %v4827 = vlaneseq
        %v4828 = vshrl.u32 %v4827, 7
        %v4829 = vsub.s32 %v4826, %v4828
        %v4830 = vrot.slane %v4816, %v4829
        %v4831 = vcombine.low %v4823, %v4830
        %v4832 = vcombine.low %v4384, %v4383
        %v4833 = vcombine.low %v4385, %v4393
        %v4835 = vunpack.c.l.s4 1983009808
        %v4836 = vunpack.c.0.s8 %v4835
        %v4837 = vlaneseq
        %v4838 = vshrl.u32 %v4837, 7
        %v4839 = vsub.s32 %v4836, %v4838
        %v4840 = vrot.slane %v4832, %v4839
        %v4842 = vunpack.c.l.s4 1983009808
        %v4843 = vunpack.c.0.s8 %v4842
        %v4844 = vlaneseq
        %v4845 = vshrl.u32 %v4844, 7
        %v4846 = vsub.s32 %v4843, %v4845
        %v4847 = vrot.slane %v4833, %v4846
        %v4848 = vcombine.low %v4840, %v4847
        %v4849 = vcombine.low %v4401, %v4400
        %v4850 = vcombine.low %v4409, %v4417
        %v4852 = vunpack.c.l.s4 1983009808
        %v4853 = vunpack.c.0.s8 %v4852
        %v4854 = vlaneseq
        %v4855 = vshrl.u32 %v4854, 7
        %v4856 = vsub.s32 %v4853, %v4855
        %v4857 = vrot.slane %v4849, %v4856
        %v4859 = vunpack.c.l.s4 1983009808
        %v4860 = vunpack.c.0.s8 %v4859
        %v4861 = vlaneseq
        %v4862 = vshrl.u32 %v4861, 7
        %v4863 = vsub.s32 %v4860, %v4862
        %v4864 = vrot.slane %v4850, %v4863
        %v4865 = vcombine.low %v4857, %v4864
        %v4866 = vcombine.low %v4416, %v4418
        %v4867 = vcombine.low %v4426, %v4434
        %v4869 = vunpack.c.l.s4 1983009808
        %v4870 = vunpack.c.0.s8 %v4869
        %v4871 = vlaneseq
        %v4872 = vshrl.u32 %v4871, 7
        %v4873 = vsub.s32 %v4870, %v4872
        %v4874 = vrot.slane %v4866, %v4873
        %v4876 = vunpack.c.l.s4 1983009808
        %v4877 = vunpack.c.0.s8 %v4876
        %v4878 = vlaneseq
        %v4879 = vshrl.u32 %v4878, 7
        %v4880 = vsub.s32 %v4877, %v4879
        %v4881 = vrot.slane %v4867, %v4880
        %v4882 = vcombine.low %v4874, %v4881
        %v4883 = vcombine.low %v4433, %v4442
        %v4884 = vcombine.low %v4450, %v4449
        %v4886 = vunpack.c.l.s4 1983009808
        %v4887 = vunpack.c.0.s8 %v4886
        %v4888 = vlaneseq
        %v4889 = vshrl.u32 %v4888, 7
        %v4890 = vsub.s32 %v4887, %v4889
        %v4891 = vrot.slane %v4883, %v4890
        %v4893 = vunpack.c.l.s4 1983009808
        %v4894 = vunpack.c.0.s8 %v4893
        %v4895 = vlaneseq
        %v4896 = vshrl.u32 %v4895, 7
        %v4897 = vsub.s32 %v4894, %v4896
        %v4898 = vrot.slane %v4884, %v4897
        %v4899 = vcombine.low %v4891, %v4898
        %v4900 = vcombine.low %v4451, %v4459
        %v4901 = vcombine.low %v4467, %v4466
        %v4903 = vunpack.c.l.s4 1983009808
        %v4904 = vunpack.c.0.s8 %v4903
        %v4905 = vlaneseq
        %v4906 = vshrl.u32 %v4905, 7
        %v4907 = vsub.s32 %v4904, %v4906
        %v4908 = vrot.slane %v4900, %v4907
        %v4910 = vunpack.c.l.s4 1983009808
        %v4911 = vunpack.c.0.s8 %v4910
        %v4912 = vlaneseq
        %v4913 = vshrl.u32 %v4912, 7
        %v4914 = vsub.s32 %v4911, %v4913
        %v4915 = vrot.slane %v4901, %v4914
        %v4916 = vcombine.low %v4908, %v4915
        %v4917 = vcombine.low %v4475, %v4483
        %v4918 = vcombine.low %v4482, %v4484
        %v4920 = vunpack.c.l.s4 1983009808
        %v4921 = vunpack.c.0.s8 %v4920
        %v4922 = vlaneseq
        %v4923 = vshrl.u32 %v4922, 7
        %v4924 = vsub.s32 %v4921, %v4923
        %v4925 = vrot.slane %v4917, %v4924
        %v4927 = vunpack.c.l.s4 1983009808
        %v4928 = vunpack.c.0.s8 %v4927
        %v4929 = vlaneseq
        %v4930 = vshrl.u32 %v4929, 7
        %v4931 = vsub.s32 %v4928, %v4930
        %v4932 = vrot.slane %v4918, %v4931
        %v4933 = vcombine.low %v4925, %v4932
        %v4934 = vcombine.low %v4492, %v4500
        %v4935 = vcombine.low %v4499, %v4508
        %v4937 = vunpack.c.l.s4 1983009808
        %v4938 = vunpack.c.0.s8 %v4937
        %v4939 = vlaneseq
        %v4940 = vshrl.u32 %v4939, 7
        %v4941 = vsub.s32 %v4938, %v4940
        %v4942 = vrot.slane %v4934, %v4941
        %v4944 = vunpack.c.l.s4 1983009808
        %v4945 = vunpack.c.0.s8 %v4944
        %v4946 = vlaneseq
        %v4947 = vshrl.u32 %v4946, 7
        %v4948 = vsub.s32 %v4945, %v4947
        %v4949 = vrot.slane %v4935, %v4948
        %v4950 = vcombine.low %v4942, %v4949
        %v4951 = vcombine.low %v4516, %v4515
        %v4952 = vcombine.low %v4517, %v4525
        %v4954 = vunpack.c.l.s4 1983009808
        %v4955 = vunpack.c.0.s8 %v4954
        %v4956 = vlaneseq
        %v4957 = vshrl.u32 %v4956, 7
        %v4958 = vsub.s32 %v4955, %v4957
        %v4959 = vrot.slane %v4951, %v4958
        %v4961 = vunpack.c.l.s4 1983009808
        %v4962 = vunpack.c.0.s8 %v4961
        %v4963 = vlaneseq
        %v4964 = vshrl.u32 %v4963, 7
        %v4965 = vsub.s32 %v4962, %v4964
        %v4966 = vrot.slane %v4952, %v4965
        %v4967 = vcombine.low %v4959, %v4966
        %v4968 = vcombine.low %v4533, %v4532
        %v4969 = vcombine.low %v4541, %v4549
        %v4971 = vunpack.c.l.s4 1983009808
        %v4972 = vunpack.c.0.s8 %v4971
        %v4973 = vlaneseq
        %v4974 = vshrl.u32 %v4973, 7
        %v4975 = vsub.s32 %v4972, %v4974
        %v4976 = vrot.slane %v4968, %v4975
        %v4978 = vunpack.c.l.s4 1983009808
        %v4979 = vunpack.c.0.s8 %v4978
        %v4980 = vlaneseq
        %v4981 = vshrl.u32 %v4980, 7
        %v4982 = vsub.s32 %v4979, %v4981
        %v4983 = vrot.slane %v4969, %v4982
        %v4984 = vcombine.low %v4976, %v4983
        %v4985 = vcombine.low %v4548, %v4550
        %v4986 = vcombine.low %v4558, %v4566
        %v4988 = vunpack.c.l.s4 1983009808
        %v4989 = vunpack.c.0.s8 %v4988
        %v4990 = vlaneseq
        %v4991 = vshrl.u32 %v4990, 7
        %v4992 = vsub.s32 %v4989, %v4991
        %v4993 = vrot.slane %v4985, %v4992
        %v4995 = vunpack.c.l.s4 1983009808
        %v4996 = vunpack.c.0.s8 %v4995
        %v4997 = vlaneseq
        %v4998 = vshrl.u32 %v4997, 7
        %v4999 = vsub.s32 %v4996, %v4998
        %v5000 = vrot.slane %v4986, %v4999
        %v5001 = vcombine.low %v4993, %v5000
        %v5002 = vcombine.low %v4565, %v4574
        %v5003 = vcombine.low %v4582, %v4581
        %v5005 = vunpack.c.l.s4 1983009808
        %v5006 = vunpack.c.0.s8 %v5005
        %v5007 = vlaneseq
        %v5008 = vshrl.u32 %v5007, 7
        %v5009 = vsub.s32 %v5006, %v5008
        %v5010 = vrot.slane %v5002, %v5009
        %v5012 = vunpack.c.l.s4 1983009808
        %v5013 = vunpack.c.0.s8 %v5012
        %v5014 = vlaneseq
        %v5015 = vshrl.u32 %v5014, 7
        %v5016 = vsub.s32 %v5013, %v5015
        %v5017 = vrot.slane %v5003, %v5016
        %v5018 = vcombine.low %v5010, %v5017
        %v5019 = vcombine.low %v4583, %v4591
        %v5020 = vcombine.low %v4599, %v4598
        %v5022 = vunpack.c.l.s4 1983009808
        %v5023 = vunpack.c.0.s8 %v5022
        %v5024 = vlaneseq
        %v5025 = vshrl.u32 %v5024, 7
        %v5026 = vsub.s32 %v5023, %v5025
        %v5027 = vrot.slane %v5019, %v5026
        %v5029 = vunpack.c.l.s4 1983009808
        %v5030 = vunpack.c.0.s8 %v5029
        %v5031 = vlaneseq
        %v5032 = vshrl.u32 %v5031, 7
        %v5033 = vsub.s32 %v5030, %v5032
        %v5034 = vrot.slane %v5020, %v5033
        %v5035 = vcombine.low %v5027, %v5034
        %v5036 = vcombine.low %v4607, %v4615
        %v5037 = vcombine.low %v4614, %v4616
        %v5039 = vunpack.c.l.s4 1983009808
        %v5040 = vunpack.c.0.s8 %v5039
        %v5041 = vlaneseq
        %v5042 = vshrl.u32 %v5041, 7
        %v5043 = vsub.s32 %v5040, %v5042
        %v5044 = vrot.slane %v5036, %v5043
        %v5046 = vunpack.c.l.s4 1983009808
        %v5047 = vunpack.c.0.s8 %v5046
        %v5048 = vlaneseq
        %v5049 = vshrl.u32 %v5048, 7
        %v5050 = vsub.s32 %v5047, %v5049
        %v5051 = vrot.slane %v5037, %v5050
        %v5052 = vcombine.low %v5044, %v5051
        %v5053 = vcombine.low %v4624, %v4632
        %v5054 = vcombine.low %v4631, %v4640
        %v5056 = vunpack.c.l.s4 1983009808
        %v5057 = vunpack.c.0.s8 %v5056
        %v5058 = vlaneseq
        %v5059 = vshrl.u32 %v5058, 7
        %v5060 = vsub.s32 %v5057, %v5059
        %v5061 = vrot.slane %v5053, %v5060
        %v5063 = vunpack.c.l.s4 1983009808
        %v5064 = vunpack.c.0.s8 %v5063
        %v5065 = vlaneseq
        %v5066 = vshrl.u32 %v5065, 7
        %v5067 = vsub.s32 %v5064, %v5066
        %v5068 = vrot.slane %v5054, %v5067
        %v5069 = vcombine.low %v5061, %v5068
        %v5070 = vcombine.low %v4648, %v4647
        %v5071 = vcombine.low %v4649, %v4657
        %v5073 = vunpack.c.l.s4 1983009808
        %v5074 = vunpack.c.0.s8 %v5073
        %v5075 = vlaneseq
        %v5076 = vshrl.u32 %v5075, 7
        %v5077 = vsub.s32 %v5074, %v5076
        %v5078 = vrot.slane %v5070, %v5077
        %v5080 = vunpack.c.l.s4 1983009808
        %v5081 = vunpack.c.0.s8 %v5080
        %v5082 = vlaneseq
        %v5083 = vshrl.u32 %v5082, 7
        %v5084 = vsub.s32 %v5081, %v5083
        %v5085 = vrot.slane %v5071, %v5084
        %v5086 = vcombine.low %v5078, %v5085
        %v5087 = vcombine.low %v4665, %v4664
        %v5088 = vcombine.low %v4673, %v4681
        %v5090 = vunpack.c.l.s4 1983009808
        %v5091 = vunpack.c.0.s8 %v5090
        %v5092 = vlaneseq
        %v5093 = vshrl.u32 %v5092, 7
        %v5094 = vsub.s32 %v5091, %v5093
        %v5095 = vrot.slane %v5087, %v5094
        %v5097 = vunpack.c.l.s4 1983009808
        %v5098 = vunpack.c.0.s8 %v5097
        %v5099 = vlaneseq
        %v5100 = vshrl.u32 %v5099, 7
        %v5101 = vsub.s32 %v5098, %v5100
        %v5102 = vrot.slane %v5088, %v5101
        %v5103 = vcombine.low %v5095, %v5102
        %v5104 = vcombine.low %v4680, %v4682
        %v5105 = vcombine.low %v4690, %v4698
        %v5107 = vunpack.c.l.s4 1983009808
        %v5108 = vunpack.c.0.s8 %v5107
        %v5109 = vlaneseq
        %v5110 = vshrl.u32 %v5109, 7
        %v5111 = vsub.s32 %v5108, %v5110
        %v5112 = vrot.slane %v5104, %v5111
        %v5114 = vunpack.c.l.s4 1983009808
        %v5115 = vunpack.c.0.s8 %v5114
        %v5116 = vlaneseq
        %v5117 = vshrl.u32 %v5116, 7
        %v5118 = vsub.s32 %v5115, %v5117
        %v5119 = vrot.slane %v5105, %v5118
        %v5120 = vcombine.low %v5112, %v5119
        %v5121 = vcombine.low %v4697, %v4706
        %v5122 = vcombine.low %v4714, %v4713
        %v5124 = vunpack.c.l.s4 1983009808
        %v5125 = vunpack.c.0.s8 %v5124
        %v5126 = vlaneseq
        %v5127 = vshrl.u32 %v5126, 7
        %v5128 = vsub.s32 %v5125, %v5127
        %v5129 = vrot.slane %v5121, %v5128
        %v5131 = vunpack.c.l.s4 1983009808
        %v5132 = vunpack.c.0.s8 %v5131
        %v5133 = vlaneseq
        %v5134 = vshrl.u32 %v5133, 7
        %v5135 = vsub.s32 %v5132, %v5134
        %v5136 = vrot.slane %v5122, %v5135
        %v5137 = vcombine.low %v5129, %v5136
        %v5138 = vcombine.low %v4715, %v4723
        %v5139 = vcombine.low %v4731, %v4730
        %v5141 = vunpack.c.l.s4 1983009808
        %v5142 = vunpack.c.0.s8 %v5141
        %v5143 = vlaneseq
        %v5144 = vshrl.u32 %v5143, 7
        %v5145 = vsub.s32 %v5142, %v5144
        %v5146 = vrot.slane %v5138, %v5145
        %v5148 = vunpack.c.l.s4 1983009808
        %v5149 = vunpack.c.0.s8 %v5148
        %v5150 = vlaneseq
        %v5151 = vshrl.u32 %v5150, 7
        %v5152 = vsub.s32 %v5149, %v5151
        %v5153 = vrot.slane %v5139, %v5152
        %v5154 = vcombine.low %v5146, %v5153
        %v5155 = vcombine.low %v4739, %v4747
        %v5156 = vcombine.low %v4746, %v4748
        %v5158 = vunpack.c.l.s4 1983009808
        %v5159 = vunpack.c.0.s8 %v5158
        %v5160 = vlaneseq
        %v5161 = vshrl.u32 %v5160, 7
        %v5162 = vsub.s32 %v5159, %v5161
        %v5163 = vrot.slane %v5155, %v5162
        %v5165 = vunpack.c.l.s4 1983009808
        %v5166 = vunpack.c.0.s8 %v5165
        %v5167 = vlaneseq
        %v5168 = vshrl.u32 %v5167, 7
        %v5169 = vsub.s32 %v5166, %v5168
        %v5170 = vrot.slane %v5156, %v5169
        %v5171 = vcombine.low %v5163, %v5170
        %v5172 = vcombine.low %v4756, %v4764
        %v5173 = vcombine.low %v4763, %v4772
        %v5175 = vunpack.c.l.s4 1983009808
        %v5176 = vunpack.c.0.s8 %v5175
        %v5177 = vlaneseq
        %v5178 = vshrl.u32 %v5177, 7
        %v5179 = vsub.s32 %v5176, %v5178
        %v5180 = vrot.slane %v5172, %v5179
        %v5182 = vunpack.c.l.s4 1983009808
        %v5183 = vunpack.c.0.s8 %v5182
        %v5184 = vlaneseq
        %v5185 = vshrl.u32 %v5184, 7
        %v5186 = vsub.s32 %v5183, %v5185
        %v5187 = vrot.slane %v5173, %v5186
        %v5188 = vcombine.low %v5180, %v5187
        %v5189 = vcombine.low %v4780, %v4779
        %v5190 = vcombine.low %v4781, %v4789
        %v5192 = vunpack.c.l.s4 1983009808
        %v5193 = vunpack.c.0.s8 %v5192
        %v5194 = vlaneseq
        %v5195 = vshrl.u32 %v5194, 7
        %v5196 = vsub.s32 %v5193, %v5195
        %v5197 = vrot.slane %v5189, %v5196
        %v5199 = vunpack.c.l.s4 1983009808
        %v5200 = vunpack.c.0.s8 %v5199
        %v5201 = vlaneseq
        %v5202 = vshrl.u32 %v5201, 7
        %v5203 = vsub.s32 %v5200, %v5202
        %v5204 = vrot.slane %v5190, %v5203
        %v5205 = vcombine.low %v5197, %v5204
        %v5206 = vcombine.low %v4797, %v4796
        %v5208 = vunpack.c.l.s4 1983009808
        %v5209 = vunpack.c.0.s8 %v5208
        %v5210 = vlaneseq
        %v5211 = vshrl.u32 %v5210, 7
        %v5212 = vsub.s32 %v5209, %v5211
        %v5213 = vrot.slane %v5206, %v5212
        %5214 = vrot.lane.b32.xlu0 %v4814, 16
        %v5215 = vpop.permute.xlu0 %5214
        %5216 = vrot.lane.b32.xlu0 %v4831, 16
        %v5217 = vpop.permute.xlu0 %5216
        %5218 = vrot.lane.b32.xlu0 %v4848, 16
        %v5219 = vpop.permute.xlu0 %5218
        %5220 = vrot.lane.b32.xlu0 %v4865, 16
        %v5221 = vpop.permute.xlu0 %5220
        %5222 = vrot.lane.b32.xlu0 %v4882, 16
        %v5223 = vpop.permute.xlu0 %5222
        %5224 = vrot.lane.b32.xlu0 %v4899, 16
        %v5225 = vpop.permute.xlu0 %5224
        %5226 = vrot.lane.b32.xlu0 %v4916, 16
        %v5227 = vpop.permute.xlu0 %5226
        %5228 = vrot.lane.b32.xlu0 %v4933, 16
        %v5229 = vpop.permute.xlu0 %5228
        %5230 = vrot.lane.b32.xlu0 %v4950, 16
        %v5231 = vpop.permute.xlu0 %5230
        %5232 = vrot.lane.b32.xlu0 %v4967, 16
        %v5233 = vpop.permute.xlu0 %5232
        %5234 = vrot.lane.b32.xlu0 %v4984, 16
        %v5235 = vpop.permute.xlu0 %5234
        %5236 = vrot.lane.b32.xlu0 %v5001, 16
        %v5237 = vpop.permute.xlu0 %5236
        %5238 = vrot.lane.b32.xlu0 %v5018, 16
        %v5239 = vpop.permute.xlu0 %5238
        %5240 = vrot.lane.b32.xlu0 %v5035, 16
        %v5241 = vpop.permute.xlu0 %5240
        %5242 = vrot.lane.b32.xlu0 %v5052, 16
        %v5243 = vpop.permute.xlu0 %5242
        %5244 = vrot.lane.b32.xlu0 %v5069, 16
        %v5245 = vpop.permute.xlu0 %5244
        %5246 = vrot.lane.b32.xlu0 %v5086, 16
        %v5247 = vpop.permute.xlu0 %5246
        %5248 = vrot.lane.b32.xlu0 %v5103, 16
        %v5249 = vpop.permute.xlu0 %5248
        %5250 = vrot.lane.b32.xlu0 %v5120, 16
        %v5251 = vpop.permute.xlu0 %5250
        %5252 = vrot.lane.b32.xlu0 %v5137, 16
        %v5253 = vpop.permute.xlu0 %5252
        %5254 = vrot.lane.b32.xlu0 %v5154, 16
        %v5255 = vpop.permute.xlu0 %5254
        %5256 = vrot.lane.b32.xlu0 %v5171, 16
        %v5257 = vpop.permute.xlu0 %5256
        %5258 = vrot.lane.b32.xlu0 %v5188, 16
        %v5259 = vpop.permute.xlu0 %5258
        %5260 = vrot.lane.b32.xlu0 %v5205, 16
        %v5261 = vpop.permute.xlu0 %5260
        %5262 = vrot.lane.b32.xlu0 %v5213, 16
        %v5263 = vpop.permute.xlu0 %5262
        %vm5289 = vcmask 162944
        %5290 = vst.msk [vmem:[#allocation2] sm:$0xff] %vm5289, %v5215
        %5291 = vst.msk [vmem:[#allocation2 + $0x8] sm:$0xff] %vm5289, %v5217
        %5292 = vst.msk [vmem:[#allocation2 + $0x10] sm:$0xff] %vm5289, %v5219
        %5293 = vst.msk [vmem:[#allocation2 + $0x18] sm:$0xff] %vm5289, %v5221
        %5294 = vst.msk [vmem:[#allocation2 + $0x20] sm:$0xff] %vm5289, %v5223
        %5295 = vst.msk [vmem:[#allocation2 + $0x28] sm:$0xff] %vm5289, %v5225
        %5296 = vst.msk [vmem:[#allocation2 + $0x30] sm:$0xff] %vm5289, %v5227
        %5297 = vst.msk [vmem:[#allocation2 + $0x38] sm:$0xff] %vm5289, %v5229
        %5298 = vst.msk [vmem:[#allocation2 + $0x40] sm:$0xff] %vm5289, %v5231
        %5299 = vst.msk [vmem:[#allocation2 + $0x48] sm:$0xff] %vm5289, %v5233
        %5300 = vst.msk [vmem:[#allocation2 + $0x50] sm:$0xff] %vm5289, %v5235
        %5301 = vst.msk [vmem:[#allocation2 + $0x58] sm:$0xff] %vm5289, %v5237
        %5302 = vst.msk [vmem:[#allocation2 + $0x60] sm:$0xff] %vm5289, %v5239
        %5303 = vst.msk [vmem:[#allocation2 + $0x68] sm:$0xff] %vm5289, %v5241
        %5304 = vst.msk [vmem:[#allocation2 + $0x70] sm:$0xff] %vm5289, %v5243
        %5305 = vst.msk [vmem:[#allocation2 + $0x78] sm:$0xff] %vm5289, %v5245
        %5306 = vst.msk [vmem:[#allocation2 + $0x80] sm:$0xff] %vm5289, %v5247
        %5307 = vst.msk [vmem:[#allocation2 + $0x88] sm:$0xff] %vm5289, %v5249
        %5308 = vst.msk [vmem:[#allocation2 + $0x90] sm:$0xff] %vm5289, %v5251
        %5309 = vst.msk [vmem:[#allocation2 + $0x98] sm:$0xff] %vm5289, %v5253
        %5310 = vst.msk [vmem:[#allocation2 + $0xa0] sm:$0xff] %vm5289, %v5255
        %5311 = vst.msk [vmem:[#allocation2 + $0xa8] sm:$0xff] %vm5289, %v5257
        %5312 = vst.msk [vmem:[#allocation2 + $0xb0] sm:$0xff] %vm5289, %v5259
        %5313 = vst.msk [vmem:[#allocation2 + $0xb8] sm:$0xff] %vm5289, %v5261
        %vm5314 = vcmask 158848
        %5315 = vst.msk [vmem:[#allocation2 + $0xc0] sm:$0xf] %vm5314, %v5263
        %v5316 = vld [vmem:[%s3243 + $0x2] sm:$0xff]
        %v5317 = vld [vmem:[%s3243 + $0xa] sm:$0x3f]
        %v5318 = vld [vmem:[%s3243 + $0x12] sm:$0xff]
        %v5319 = vld [vmem:[%s3243 + $0x1a] sm:$0x3f]
        %v5320 = vld [vmem:[%s3243 + $0x22] sm:$0xff]
        %v5321 = vld [vmem:[%s3243 + $0x2a] sm:$0x3f]
        %v5322 = vld [vmem:[%s3243 + $0x32] sm:$0xff]
        %v5323 = vld [vmem:[%s3243 + $0x3a] sm:$0x3f]
        %v5324 = vld [vmem:[%s3243 + $0x42] sm:$0xff]
        %v5325 = vld [vmem:[%s3243 + $0x4a] sm:$0x3f]
        %v5326 = vld [vmem:[%s3243 + $0x52] sm:$0xff]
        %v5327 = vld [vmem:[%s3243 + $0x5a] sm:$0x3f]
        %v5328 = vld [vmem:[%s3243 + $0x62] sm:$0xff]
        %v5329 = vld [vmem:[%s3243 + $0x6a] sm:$0x3f]
        %v5330 = vld [vmem:[%s3243 + $0x72] sm:$0xff]
        %v5331 = vld [vmem:[%s3243 + $0x7a] sm:$0x3f]
        %v5332 = vld [vmem:[%s3243 + $0x82] sm:$0xff]
        %v5333 = vld [vmem:[%s3243 + $0x8a] sm:$0x3f]
        %v5334 = vld [vmem:[%s3243 + $0x92] sm:$0xff]
        %v5335 = vld [vmem:[%s3243 + $0x9a] sm:$0x3f]
        %v5336 = vld [vmem:[%s3243 + $0xa2] sm:$0xff]
        %v5337 = vld [vmem:[%s3243 + $0xaa] sm:$0x3f]
        %v5338 = vld [vmem:[%s3243 + $0xb2] sm:$0xff]
        %v5339 = vld [vmem:[%s3243 + $0xba] sm:$0x3f]
        %v5340 = vld [vmem:[%s3243 + $0xc2] sm:$0xff]
        %v5341 = vld [vmem:[%s3243 + $0xca] sm:$0x3f]
        %v5342 = vld [vmem:[%s3243 + $0xd2] sm:$0xff]
        %v5343 = vld [vmem:[%s3243 + $0xda] sm:$0x3f]
        %v5372 = vcombine.high %v5316, %v5316
        %v5374 = vunpack.c.l.s4 1983009808
        %v5375 = vunpack.c.0.s8 %v5374
        %v5376 = vlaneseq
        %v5377 = vshrl.u32 %v5376, 7
        %v5378 = vsub.s32 %v5375, %v5377
        %v5379 = vrot.slane %v5316, %v5378
        %v5381 = vunpack.c.l.s4 1983009808
        %v5382 = vunpack.c.0.s8 %v5381
        %v5383 = vlaneseq
        %v5384 = vshrl.u32 %v5383, 7
        %v5385 = vsub.s32 %v5382, %v5384
        %v5386 = vrot.slane %v5372, %v5385
        %v5387 = vcombine.high %v5379, %v5379
        %v5388 = vcombine.high %v5386, %v5386
        %v5389 = vcombine.high %v5317, %v5317
        %v5391 = vunpack.c.l.s4 1983009808
        %v5392 = vunpack.c.0.s8 %v5391
        %v5393 = vlaneseq
        %v5394 = vshrl.u32 %v5393, 7
        %v5395 = vsub.s32 %v5392, %v5394
        %v5396 = vrot.slane %v5317, %v5395
        %v5398 = vunpack.c.l.s4 1983009808
        %v5399 = vunpack.c.0.s8 %v5398
        %v5400 = vlaneseq
        %v5401 = vshrl.u32 %v5400, 7
        %v5402 = vsub.s32 %v5399, %v5401
        %v5403 = vrot.slane %v5389, %v5402
        %v5404 = vcombine.high %v5396, %v5396
        %v5405 = vcombine.high %v5318, %v5318
        %v5407 = vunpack.c.l.s4 1983009808
        %v5408 = vunpack.c.0.s8 %v5407
        %v5409 = vlaneseq
        %v5410 = vshrl.u32 %v5409, 7
        %v5411 = vsub.s32 %v5408, %v5410
        %v5412 = vrot.slane %v5318, %v5411
        %v5414 = vunpack.c.l.s4 1983009808
        %v5415 = vunpack.c.0.s8 %v5414
        %v5416 = vlaneseq
        %v5417 = vshrl.u32 %v5416, 7
        %v5418 = vsub.s32 %v5415, %v5417
        %v5419 = vrot.slane %v5405, %v5418
        %v5420 = vcombine.high %v5412, %v5412
        %v5421 = vcombine.high %v5419, %v5419
        %v5422 = vcombine.high %v5319, %v5319
        %v5424 = vunpack.c.l.s4 1983009808
        %v5425 = vunpack.c.0.s8 %v5424
        %v5426 = vlaneseq
        %v5427 = vshrl.u32 %v5426, 7
        %v5428 = vsub.s32 %v5425, %v5427
        %v5429 = vrot.slane %v5319, %v5428
        %v5431 = vunpack.c.l.s4 1983009808
        %v5432 = vunpack.c.0.s8 %v5431
        %v5433 = vlaneseq
        %v5434 = vshrl.u32 %v5433, 7
        %v5435 = vsub.s32 %v5432, %v5434
        %v5436 = vrot.slane %v5422, %v5435
        %v5437 = vcombine.high %v5429, %v5429
        %v5438 = vcombine.high %v5320, %v5320
        %v5440 = vunpack.c.l.s4 1983009808
        %v5441 = vunpack.c.0.s8 %v5440
        %v5442 = vlaneseq
        %v5443 = vshrl.u32 %v5442, 7
        %v5444 = vsub.s32 %v5441, %v5443
        %v5445 = vrot.slane %v5320, %v5444
        %v5447 = vunpack.c.l.s4 1983009808
        %v5448 = vunpack.c.0.s8 %v5447
        %v5449 = vlaneseq
        %v5450 = vshrl.u32 %v5449, 7
        %v5451 = vsub.s32 %v5448, %v5450
        %v5452 = vrot.slane %v5438, %v5451
        %v5453 = vcombine.high %v5445, %v5445
        %v5454 = vcombine.high %v5452, %v5452
        %v5455 = vcombine.high %v5321, %v5321
        %v5457 = vunpack.c.l.s4 1983009808
        %v5458 = vunpack.c.0.s8 %v5457
        %v5459 = vlaneseq
        %v5460 = vshrl.u32 %v5459, 7
        %v5461 = vsub.s32 %v5458, %v5460
        %v5462 = vrot.slane %v5321, %v5461
        %v5464 = vunpack.c.l.s4 1983009808
        %v5465 = vunpack.c.0.s8 %v5464
        %v5466 = vlaneseq
        %v5467 = vshrl.u32 %v5466, 7
        %v5468 = vsub.s32 %v5465, %v5467
        %v5469 = vrot.slane %v5455, %v5468
        %v5470 = vcombine.high %v5462, %v5462
        %v5471 = vcombine.high %v5322, %v5322
        %v5473 = vunpack.c.l.s4 1983009808
        %v5474 = vunpack.c.0.s8 %v5473
        %v5475 = vlaneseq
        %v5476 = vshrl.u32 %v5475, 7
        %v5477 = vsub.s32 %v5474, %v5476
        %v5478 = vrot.slane %v5322, %v5477
        %v5480 = vunpack.c.l.s4 1983009808
        %v5481 = vunpack.c.0.s8 %v5480
        %v5482 = vlaneseq
        %v5483 = vshrl.u32 %v5482, 7
        %v5484 = vsub.s32 %v5481, %v5483
        %v5485 = vrot.slane %v5471, %v5484
        %v5486 = vcombine.high %v5478, %v5478
        %v5487 = vcombine.high %v5485, %v5485
        %v5488 = vcombine.high %v5323, %v5323
        %v5490 = vunpack.c.l.s4 1983009808
        %v5491 = vunpack.c.0.s8 %v5490
        %v5492 = vlaneseq
        %v5493 = vshrl.u32 %v5492, 7
        %v5494 = vsub.s32 %v5491, %v5493
        %v5495 = vrot.slane %v5323, %v5494
        %v5497 = vunpack.c.l.s4 1983009808
        %v5498 = vunpack.c.0.s8 %v5497
        %v5499 = vlaneseq
        %v5500 = vshrl.u32 %v5499, 7
        %v5501 = vsub.s32 %v5498, %v5500
        %v5502 = vrot.slane %v5488, %v5501
        %v5503 = vcombine.high %v5495, %v5495
        %v5504 = vcombine.high %v5324, %v5324
        %v5506 = vunpack.c.l.s4 1983009808
        %v5507 = vunpack.c.0.s8 %v5506
        %v5508 = vlaneseq
        %v5509 = vshrl.u32 %v5508, 7
        %v5510 = vsub.s32 %v5507, %v5509
        %v5511 = vrot.slane %v5324, %v5510
        %v5513 = vunpack.c.l.s4 1983009808
        %v5514 = vunpack.c.0.s8 %v5513
        %v5515 = vlaneseq
        %v5516 = vshrl.u32 %v5515, 7
        %v5517 = vsub.s32 %v5514, %v5516
        %v5518 = vrot.slane %v5504, %v5517
        %v5519 = vcombine.high %v5511, %v5511
        %v5520 = vcombine.high %v5518, %v5518
        %v5521 = vcombine.high %v5325, %v5325
        %v5523 = vunpack.c.l.s4 1983009808
        %v5524 = vunpack.c.0.s8 %v5523
        %v5525 = vlaneseq
        %v5526 = vshrl.u32 %v5525, 7
        %v5527 = vsub.s32 %v5524, %v5526
        %v5528 = vrot.slane %v5325, %v5527
        %v5530 = vunpack.c.l.s4 1983009808
        %v5531 = vunpack.c.0.s8 %v5530
        %v5532 = vlaneseq
        %v5533 = vshrl.u32 %v5532, 7
        %v5534 = vsub.s32 %v5531, %v5533
        %v5535 = vrot.slane %v5521, %v5534
        %v5536 = vcombine.high %v5528, %v5528
        %v5537 = vcombine.high %v5326, %v5326
        %v5539 = vunpack.c.l.s4 1983009808
        %v5540 = vunpack.c.0.s8 %v5539
        %v5541 = vlaneseq
        %v5542 = vshrl.u32 %v5541, 7
        %v5543 = vsub.s32 %v5540, %v5542
        %v5544 = vrot.slane %v5326, %v5543
        %v5546 = vunpack.c.l.s4 1983009808
        %v5547 = vunpack.c.0.s8 %v5546
        %v5548 = vlaneseq
        %v5549 = vshrl.u32 %v5548, 7
        %v5550 = vsub.s32 %v5547, %v5549
        %v5551 = vrot.slane %v5537, %v5550
        %v5552 = vcombine.high %v5544, %v5544
        %v5553 = vcombine.high %v5551, %v5551
        %v5554 = vcombine.high %v5327, %v5327
        %v5556 = vunpack.c.l.s4 1983009808
        %v5557 = vunpack.c.0.s8 %v5556
        %v5558 = vlaneseq
        %v5559 = vshrl.u32 %v5558, 7
        %v5560 = vsub.s32 %v5557, %v5559
        %v5561 = vrot.slane %v5327, %v5560
        %v5563 = vunpack.c.l.s4 1983009808
        %v5564 = vunpack.c.0.s8 %v5563
        %v5565 = vlaneseq
        %v5566 = vshrl.u32 %v5565, 7
        %v5567 = vsub.s32 %v5564, %v5566
        %v5568 = vrot.slane %v5554, %v5567
        %v5569 = vcombine.high %v5561, %v5561
        %v5570 = vcombine.high %v5328, %v5328
        %v5572 = vunpack.c.l.s4 1983009808
        %v5573 = vunpack.c.0.s8 %v5572
        %v5574 = vlaneseq
        %v5575 = vshrl.u32 %v5574, 7
        %v5576 = vsub.s32 %v5573, %v5575
        %v5577 = vrot.slane %v5328, %v5576
        %v5579 = vunpack.c.l.s4 1983009808
        %v5580 = vunpack.c.0.s8 %v5579
        %v5581 = vlaneseq
        %v5582 = vshrl.u32 %v5581, 7
        %v5583 = vsub.s32 %v5580, %v5582
        %v5584 = vrot.slane %v5570, %v5583
        %v5585 = vcombine.high %v5577, %v5577
        %v5586 = vcombine.high %v5584, %v5584
        %v5587 = vcombine.high %v5329, %v5329
        %v5589 = vunpack.c.l.s4 1983009808
        %v5590 = vunpack.c.0.s8 %v5589
        %v5591 = vlaneseq
        %v5592 = vshrl.u32 %v5591, 7
        %v5593 = vsub.s32 %v5590, %v5592
        %v5594 = vrot.slane %v5329, %v5593
        %v5596 = vunpack.c.l.s4 1983009808
        %v5597 = vunpack.c.0.s8 %v5596
        %v5598 = vlaneseq
        %v5599 = vshrl.u32 %v5598, 7
        %v5600 = vsub.s32 %v5597, %v5599
        %v5601 = vrot.slane %v5587, %v5600
        %v5602 = vcombine.high %v5594, %v5594
        %v5603 = vcombine.high %v5330, %v5330
        %v5605 = vunpack.c.l.s4 1983009808
        %v5606 = vunpack.c.0.s8 %v5605
        %v5607 = vlaneseq
        %v5608 = vshrl.u32 %v5607, 7
        %v5609 = vsub.s32 %v5606, %v5608
        %v5610 = vrot.slane %v5330, %v5609
        %v5612 = vunpack.c.l.s4 1983009808
        %v5613 = vunpack.c.0.s8 %v5612
        %v5614 = vlaneseq
        %v5615 = vshrl.u32 %v5614, 7
        %v5616 = vsub.s32 %v5613, %v5615
        %v5617 = vrot.slane %v5603, %v5616
        %v5618 = vcombine.high %v5610, %v5610
        %v5619 = vcombine.high %v5617, %v5617
        %v5620 = vcombine.high %v5331, %v5331
        %v5622 = vunpack.c.l.s4 1983009808
        %v5623 = vunpack.c.0.s8 %v5622
        %v5624 = vlaneseq
        %v5625 = vshrl.u32 %v5624, 7
        %v5626 = vsub.s32 %v5623, %v5625
        %v5627 = vrot.slane %v5331, %v5626
        %v5629 = vunpack.c.l.s4 1983009808
        %v5630 = vunpack.c.0.s8 %v5629
        %v5631 = vlaneseq
        %v5632 = vshrl.u32 %v5631, 7
        %v5633 = vsub.s32 %v5630, %v5632
        %v5634 = vrot.slane %v5620, %v5633
        %v5635 = vcombine.high %v5627, %v5627
        %v5636 = vcombine.high %v5332, %v5332
        %v5638 = vunpack.c.l.s4 1983009808
        %v5639 = vunpack.c.0.s8 %v5638
        %v5640 = vlaneseq
        %v5641 = vshrl.u32 %v5640, 7
        %v5642 = vsub.s32 %v5639, %v5641
        %v5643 = vrot.slane %v5332, %v5642
        %v5645 = vunpack.c.l.s4 1983009808
        %v5646 = vunpack.c.0.s8 %v5645
        %v5647 = vlaneseq
        %v5648 = vshrl.u32 %v5647, 7
        %v5649 = vsub.s32 %v5646, %v5648
        %v5650 = vrot.slane %v5636, %v5649
        %v5651 = vcombine.high %v5643, %v5643
        %v5652 = vcombine.high %v5650, %v5650
        %v5653 = vcombine.high %v5333, %v5333
        %v5655 = vunpack.c.l.s4 1983009808
        %v5656 = vunpack.c.0.s8 %v5655
        %v5657 = vlaneseq
        %v5658 = vshrl.u32 %v5657, 7
        %v5659 = vsub.s32 %v5656, %v5658
        %v5660 = vrot.slane %v5333, %v5659
        %v5662 = vunpack.c.l.s4 1983009808
        %v5663 = vunpack.c.0.s8 %v5662
        %v5664 = vlaneseq
        %v5665 = vshrl.u32 %v5664, 7
        %v5666 = vsub.s32 %v5663, %v5665
        %v5667 = vrot.slane %v5653, %v5666
        %v5668 = vcombine.high %v5660, %v5660
        %v5669 = vcombine.high %v5334, %v5334
        %v5671 = vunpack.c.l.s4 1983009808
        %v5672 = vunpack.c.0.s8 %v5671
        %v5673 = vlaneseq
        %v5674 = vshrl.u32 %v5673, 7
        %v5675 = vsub.s32 %v5672, %v5674
        %v5676 = vrot.slane %v5334, %v5675
        %v5678 = vunpack.c.l.s4 1983009808
        %v5679 = vunpack.c.0.s8 %v5678
        %v5680 = vlaneseq
        %v5681 = vshrl.u32 %v5680, 7
        %v5682 = vsub.s32 %v5679, %v5681
        %v5683 = vrot.slane %v5669, %v5682
        %v5684 = vcombine.high %v5676, %v5676
        %v5685 = vcombine.high %v5683, %v5683
        %v5686 = vcombine.high %v5335, %v5335
        %v5688 = vunpack.c.l.s4 1983009808
        %v5689 = vunpack.c.0.s8 %v5688
        %v5690 = vlaneseq
        %v5691 = vshrl.u32 %v5690, 7
        %v5692 = vsub.s32 %v5689, %v5691
        %v5693 = vrot.slane %v5335, %v5692
        %v5695 = vunpack.c.l.s4 1983009808
        %v5696 = vunpack.c.0.s8 %v5695
        %v5697 = vlaneseq
        %v5698 = vshrl.u32 %v5697, 7
        %v5699 = vsub.s32 %v5696, %v5698
        %v5700 = vrot.slane %v5686, %v5699
        %v5701 = vcombine.high %v5693, %v5693
        %v5702 = vcombine.high %v5336, %v5336
        %v5704 = vunpack.c.l.s4 1983009808
        %v5705 = vunpack.c.0.s8 %v5704
        %v5706 = vlaneseq
        %v5707 = vshrl.u32 %v5706, 7
        %v5708 = vsub.s32 %v5705, %v5707
        %v5709 = vrot.slane %v5336, %v5708
        %v5711 = vunpack.c.l.s4 1983009808
        %v5712 = vunpack.c.0.s8 %v5711
        %v5713 = vlaneseq
        %v5714 = vshrl.u32 %v5713, 7
        %v5715 = vsub.s32 %v5712, %v5714
        %v5716 = vrot.slane %v5702, %v5715
        %v5717 = vcombine.high %v5709, %v5709
        %v5718 = vcombine.high %v5716, %v5716
        %v5719 = vcombine.high %v5337, %v5337
        %v5721 = vunpack.c.l.s4 1983009808
        %v5722 = vunpack.c.0.s8 %v5721
        %v5723 = vlaneseq
        %v5724 = vshrl.u32 %v5723, 7
        %v5725 = vsub.s32 %v5722, %v5724
        %v5726 = vrot.slane %v5337, %v5725
        %v5728 = vunpack.c.l.s4 1983009808
        %v5729 = vunpack.c.0.s8 %v5728
        %v5730 = vlaneseq
        %v5731 = vshrl.u32 %v5730, 7
        %v5732 = vsub.s32 %v5729, %v5731
        %v5733 = vrot.slane %v5719, %v5732
        %v5734 = vcombine.high %v5726, %v5726
        %v5735 = vcombine.high %v5338, %v5338
        %v5737 = vunpack.c.l.s4 1983009808
        %v5738 = vunpack.c.0.s8 %v5737
        %v5739 = vlaneseq
        %v5740 = vshrl.u32 %v5739, 7
        %v5741 = vsub.s32 %v5738, %v5740
        %v5742 = vrot.slane %v5338, %v5741
        %v5744 = vunpack.c.l.s4 1983009808
        %v5745 = vunpack.c.0.s8 %v5744
        %v5746 = vlaneseq
        %v5747 = vshrl.u32 %v5746, 7
        %v5748 = vsub.s32 %v5745, %v5747
        %v5749 = vrot.slane %v5735, %v5748
        %v5750 = vcombine.high %v5742, %v5742
        %v5751 = vcombine.high %v5749, %v5749
        %v5752 = vcombine.high %v5339, %v5339
        %v5754 = vunpack.c.l.s4 1983009808
        %v5755 = vunpack.c.0.s8 %v5754
        %v5756 = vlaneseq
        %v5757 = vshrl.u32 %v5756, 7
        %v5758 = vsub.s32 %v5755, %v5757
        %v5759 = vrot.slane %v5339, %v5758
        %v5761 = vunpack.c.l.s4 1983009808
        %v5762 = vunpack.c.0.s8 %v5761
        %v5763 = vlaneseq
        %v5764 = vshrl.u32 %v5763, 7
        %v5765 = vsub.s32 %v5762, %v5764
        %v5766 = vrot.slane %v5752, %v5765
        %v5767 = vcombine.high %v5759, %v5759
        %v5768 = vcombine.high %v5340, %v5340
        %v5770 = vunpack.c.l.s4 1983009808
        %v5771 = vunpack.c.0.s8 %v5770
        %v5772 = vlaneseq
        %v5773 = vshrl.u32 %v5772, 7
        %v5774 = vsub.s32 %v5771, %v5773
        %v5775 = vrot.slane %v5340, %v5774
        %v5777 = vunpack.c.l.s4 1983009808
        %v5778 = vunpack.c.0.s8 %v5777
        %v5779 = vlaneseq
        %v5780 = vshrl.u32 %v5779, 7
        %v5781 = vsub.s32 %v5778, %v5780
        %v5782 = vrot.slane %v5768, %v5781
        %v5783 = vcombine.high %v5775, %v5775
        %v5784 = vcombine.high %v5782, %v5782
        %v5785 = vcombine.high %v5341, %v5341
        %v5787 = vunpack.c.l.s4 1983009808
        %v5788 = vunpack.c.0.s8 %v5787
        %v5789 = vlaneseq
        %v5790 = vshrl.u32 %v5789, 7
        %v5791 = vsub.s32 %v5788, %v5790
        %v5792 = vrot.slane %v5341, %v5791
        %v5794 = vunpack.c.l.s4 1983009808
        %v5795 = vunpack.c.0.s8 %v5794
        %v5796 = vlaneseq
        %v5797 = vshrl.u32 %v5796, 7
        %v5798 = vsub.s32 %v5795, %v5797
        %v5799 = vrot.slane %v5785, %v5798
        %v5800 = vcombine.high %v5792, %v5792
        %v5801 = vcombine.high %v5342, %v5342
        %v5803 = vunpack.c.l.s4 1983009808
        %v5804 = vunpack.c.0.s8 %v5803
        %v5805 = vlaneseq
        %v5806 = vshrl.u32 %v5805, 7
        %v5807 = vsub.s32 %v5804, %v5806
        %v5808 = vrot.slane %v5342, %v5807
        %v5810 = vunpack.c.l.s4 1983009808
        %v5811 = vunpack.c.0.s8 %v5810
        %v5812 = vlaneseq
        %v5813 = vshrl.u32 %v5812, 7
        %v5814 = vsub.s32 %v5811, %v5813
        %v5815 = vrot.slane %v5801, %v5814
        %v5816 = vcombine.high %v5808, %v5808
        %v5817 = vcombine.high %v5815, %v5815
        %v5818 = vcombine.high %v5343, %v5343
        %v5820 = vunpack.c.l.s4 1983009808
        %v5821 = vunpack.c.0.s8 %v5820
        %v5822 = vlaneseq
        %v5823 = vshrl.u32 %v5822, 7
        %v5824 = vsub.s32 %v5821, %v5823
        %v5825 = vrot.slane %v5343, %v5824
        %v5827 = vunpack.c.l.s4 1983009808
        %v5828 = vunpack.c.0.s8 %v5827
        %v5829 = vlaneseq
        %v5830 = vshrl.u32 %v5829, 7
        %v5831 = vsub.s32 %v5828, %v5830
        %v5832 = vrot.slane %v5818, %v5831
        %v5833 = vcombine.high %v5825, %v5825
        %v5834 = vcombine.low %v5379, %v5387
        %v5835 = vcombine.low %v5386, %v5388
        %v5837 = vunpack.c.l.s4 1983009808
        %v5838 = vunpack.c.0.s8 %v5837
        %v5839 = vlaneseq
        %v5840 = vshrl.u32 %v5839, 7
        %v5841 = vsub.s32 %v5838, %v5840
        %v5842 = vrot.slane %v5834, %v5841
        %v5844 = vunpack.c.l.s4 1983009808
        %v5845 = vunpack.c.0.s8 %v5844
        %v5846 = vlaneseq
        %v5847 = vshrl.u32 %v5846, 7
        %v5848 = vsub.s32 %v5845, %v5847
        %v5849 = vrot.slane %v5835, %v5848
        %v5850 = vcombine.low %v5842, %v5849
        %v5851 = vcombine.low %v5396, %v5404
        %v5852 = vcombine.low %v5403, %v5412
        %v5854 = vunpack.c.l.s4 1983009808
        %v5855 = vunpack.c.0.s8 %v5854
        %v5856 = vlaneseq
        %v5857 = vshrl.u32 %v5856, 7
        %v5858 = vsub.s32 %v5855, %v5857
        %v5859 = vrot.slane %v5851, %v5858
        %v5861 = vunpack.c.l.s4 1983009808
        %v5862 = vunpack.c.0.s8 %v5861
        %v5863 = vlaneseq
        %v5864 = vshrl.u32 %v5863, 7
        %v5865 = vsub.s32 %v5862, %v5864
        %v5866 = vrot.slane %v5852, %v5865
        %v5867 = vcombine.low %v5859, %v5866
        %v5868 = vcombine.low %v5420, %v5419
        %v5869 = vcombine.low %v5421, %v5429
        %v5871 = vunpack.c.l.s4 1983009808
        %v5872 = vunpack.c.0.s8 %v5871
        %v5873 = vlaneseq
        %v5874 = vshrl.u32 %v5873, 7
        %v5875 = vsub.s32 %v5872, %v5874
        %v5876 = vrot.slane %v5868, %v5875
        %v5878 = vunpack.c.l.s4 1983009808
        %v5879 = vunpack.c.0.s8 %v5878
        %v5880 = vlaneseq
        %v5881 = vshrl.u32 %v5880, 7
        %v5882 = vsub.s32 %v5879, %v5881
        %v5883 = vrot.slane %v5869, %v5882
        %v5884 = vcombine.low %v5876, %v5883
        %v5885 = vcombine.low %v5437, %v5436
        %v5886 = vcombine.low %v5445, %v5453
        %v5888 = vunpack.c.l.s4 1983009808
        %v5889 = vunpack.c.0.s8 %v5888
        %v5890 = vlaneseq
        %v5891 = vshrl.u32 %v5890, 7
        %v5892 = vsub.s32 %v5889, %v5891
        %v5893 = vrot.slane %v5885, %v5892
        %v5895 = vunpack.c.l.s4 1983009808
        %v5896 = vunpack.c.0.s8 %v5895
        %v5897 = vlaneseq
        %v5898 = vshrl.u32 %v5897, 7
        %v5899 = vsub.s32 %v5896, %v5898
        %v5900 = vrot.slane %v5886, %v5899
        %v5901 = vcombine.low %v5893, %v5900
        %v5902 = vcombine.low %v5452, %v5454
        %v5903 = vcombine.low %v5462, %v5470
        %v5905 = vunpack.c.l.s4 1983009808
        %v5906 = vunpack.c.0.s8 %v5905
        %v5907 = vlaneseq
        %v5908 = vshrl.u32 %v5907, 7
        %v5909 = vsub.s32 %v5906, %v5908
        %v5910 = vrot.slane %v5902, %v5909
        %v5912 = vunpack.c.l.s4 1983009808
        %v5913 = vunpack.c.0.s8 %v5912
        %v5914 = vlaneseq
        %v5915 = vshrl.u32 %v5914, 7
        %v5916 = vsub.s32 %v5913, %v5915
        %v5917 = vrot.slane %v5903, %v5916
        %v5918 = vcombine.low %v5910, %v5917
        %v5919 = vcombine.low %v5469, %v5478
        %v5920 = vcombine.low %v5486, %v5485
        %v5922 = vunpack.c.l.s4 1983009808
        %v5923 = vunpack.c.0.s8 %v5922
        %v5924 = vlaneseq
        %v5925 = vshrl.u32 %v5924, 7
        %v5926 = vsub.s32 %v5923, %v5925
        %v5927 = vrot.slane %v5919, %v5926
        %v5929 = vunpack.c.l.s4 1983009808
        %v5930 = vunpack.c.0.s8 %v5929
        %v5931 = vlaneseq
        %v5932 = vshrl.u32 %v5931, 7
        %v5933 = vsub.s32 %v5930, %v5932
        %v5934 = vrot.slane %v5920, %v5933
        %v5935 = vcombine.low %v5927, %v5934
        %v5936 = vcombine.low %v5487, %v5495
        %v5937 = vcombine.low %v5503, %v5502
        %v5939 = vunpack.c.l.s4 1983009808
        %v5940 = vunpack.c.0.s8 %v5939
        %v5941 = vlaneseq
        %v5942 = vshrl.u32 %v5941, 7
        %v5943 = vsub.s32 %v5940, %v5942
        %v5944 = vrot.slane %v5936, %v5943
        %v5946 = vunpack.c.l.s4 1983009808
        %v5947 = vunpack.c.0.s8 %v5946
        %v5948 = vlaneseq
        %v5949 = vshrl.u32 %v5948, 7
        %v5950 = vsub.s32 %v5947, %v5949
        %v5951 = vrot.slane %v5937, %v5950
        %v5952 = vcombine.low %v5944, %v5951
        %v5953 = vcombine.low %v5511, %v5519
        %v5954 = vcombine.low %v5518, %v5520
        %v5956 = vunpack.c.l.s4 1983009808
        %v5957 = vunpack.c.0.s8 %v5956
        %v5958 = vlaneseq
        %v5959 = vshrl.u32 %v5958, 7
        %v5960 = vsub.s32 %v5957, %v5959
        %v5961 = vrot.slane %v5953, %v5960
        %v5963 = vunpack.c.l.s4 1983009808
        %v5964 = vunpack.c.0.s8 %v5963
        %v5965 = vlaneseq
        %v5966 = vshrl.u32 %v5965, 7
        %v5967 = vsub.s32 %v5964, %v5966
        %v5968 = vrot.slane %v5954, %v5967
        %v5969 = vcombine.low %v5961, %v5968
        %v5970 = vcombine.low %v5528, %v5536
        %v5971 = vcombine.low %v5535, %v5544
        %v5973 = vunpack.c.l.s4 1983009808
        %v5974 = vunpack.c.0.s8 %v5973
        %v5975 = vlaneseq
        %v5976 = vshrl.u32 %v5975, 7
        %v5977 = vsub.s32 %v5974, %v5976
        %v5978 = vrot.slane %v5970, %v5977
        %v5980 = vunpack.c.l.s4 1983009808
        %v5981 = vunpack.c.0.s8 %v5980
        %v5982 = vlaneseq
        %v5983 = vshrl.u32 %v5982, 7
        %v5984 = vsub.s32 %v5981, %v5983
        %v5985 = vrot.slane %v5971, %v5984
        %v5986 = vcombine.low %v5978, %v5985
        %v5987 = vcombine.low %v5552, %v5551
        %v5988 = vcombine.low %v5553, %v5561
        %v5990 = vunpack.c.l.s4 1983009808
        %v5991 = vunpack.c.0.s8 %v5990
        %v5992 = vlaneseq
        %v5993 = vshrl.u32 %v5992, 7
        %v5994 = vsub.s32 %v5991, %v5993
        %v5995 = vrot.slane %v5987, %v5994
        %v5997 = vunpack.c.l.s4 1983009808
        %v5998 = vunpack.c.0.s8 %v5997
        %v5999 = vlaneseq
        %v6000 = vshrl.u32 %v5999, 7
        %v6001 = vsub.s32 %v5998, %v6000
        %v6002 = vrot.slane %v5988, %v6001
        %v6003 = vcombine.low %v5995, %v6002
        %v6004 = vcombine.low %v5569, %v5568
        %v6005 = vcombine.low %v5577, %v5585
        %v6007 = vunpack.c.l.s4 1983009808
        %v6008 = vunpack.c.0.s8 %v6007
        %v6009 = vlaneseq
        %v6010 = vshrl.u32 %v6009, 7
        %v6011 = vsub.s32 %v6008, %v6010
        %v6012 = vrot.slane %v6004, %v6011
        %v6014 = vunpack.c.l.s4 1983009808
        %v6015 = vunpack.c.0.s8 %v6014
        %v6016 = vlaneseq
        %v6017 = vshrl.u32 %v6016, 7
        %v6018 = vsub.s32 %v6015, %v6017
        %v6019 = vrot.slane %v6005, %v6018
        %v6020 = vcombine.low %v6012, %v6019
        %v6021 = vcombine.low %v5584, %v5586
        %v6022 = vcombine.low %v5594, %v5602
        %v6024 = vunpack.c.l.s4 1983009808
        %v6025 = vunpack.c.0.s8 %v6024
        %v6026 = vlaneseq
        %v6027 = vshrl.u32 %v6026, 7
        %v6028 = vsub.s32 %v6025, %v6027
        %v6029 = vrot.slane %v6021, %v6028
        %v6031 = vunpack.c.l.s4 1983009808
        %v6032 = vunpack.c.0.s8 %v6031
        %v6033 = vlaneseq
        %v6034 = vshrl.u32 %v6033, 7
        %v6035 = vsub.s32 %v6032, %v6034
        %v6036 = vrot.slane %v6022, %v6035
        %v6037 = vcombine.low %v6029, %v6036
        %v6038 = vcombine.low %v5601, %v5610
        %v6039 = vcombine.low %v5618, %v5617
        %v6041 = vunpack.c.l.s4 1983009808
        %v6042 = vunpack.c.0.s8 %v6041
        %v6043 = vlaneseq
        %v6044 = vshrl.u32 %v6043, 7
        %v6045 = vsub.s32 %v6042, %v6044
        %v6046 = vrot.slane %v6038, %v6045
        %v6048 = vunpack.c.l.s4 1983009808
        %v6049 = vunpack.c.0.s8 %v6048
        %v6050 = vlaneseq
        %v6051 = vshrl.u32 %v6050, 7
        %v6052 = vsub.s32 %v6049, %v6051
        %v6053 = vrot.slane %v6039, %v6052
        %v6054 = vcombine.low %v6046, %v6053
        %v6055 = vcombine.low %v5619, %v5627
        %v6056 = vcombine.low %v5635, %v5634
        %v6058 = vunpack.c.l.s4 1983009808
        %v6059 = vunpack.c.0.s8 %v6058
        %v6060 = vlaneseq
        %v6061 = vshrl.u32 %v6060, 7
        %v6062 = vsub.s32 %v6059, %v6061
        %v6063 = vrot.slane %v6055, %v6062
        %v6065 = vunpack.c.l.s4 1983009808
        %v6066 = vunpack.c.0.s8 %v6065
        %v6067 = vlaneseq
        %v6068 = vshrl.u32 %v6067, 7
        %v6069 = vsub.s32 %v6066, %v6068
        %v6070 = vrot.slane %v6056, %v6069
        %v6071 = vcombine.low %v6063, %v6070
        %v6072 = vcombine.low %v5643, %v5651
        %v6073 = vcombine.low %v5650, %v5652
        %v6075 = vunpack.c.l.s4 1983009808
        %v6076 = vunpack.c.0.s8 %v6075
        %v6077 = vlaneseq
        %v6078 = vshrl.u32 %v6077, 7
        %v6079 = vsub.s32 %v6076, %v6078
        %v6080 = vrot.slane %v6072, %v6079
        %v6082 = vunpack.c.l.s4 1983009808
        %v6083 = vunpack.c.0.s8 %v6082
        %v6084 = vlaneseq
        %v6085 = vshrl.u32 %v6084, 7
        %v6086 = vsub.s32 %v6083, %v6085
        %v6087 = vrot.slane %v6073, %v6086
        %v6088 = vcombine.low %v6080, %v6087
        %v6089 = vcombine.low %v5660, %v5668
        %v6090 = vcombine.low %v5667, %v5676
        %v6092 = vunpack.c.l.s4 1983009808
        %v6093 = vunpack.c.0.s8 %v6092
        %v6094 = vlaneseq
        %v6095 = vshrl.u32 %v6094, 7
        %v6096 = vsub.s32 %v6093, %v6095
        %v6097 = vrot.slane %v6089, %v6096
        %v6099 = vunpack.c.l.s4 1983009808
        %v6100 = vunpack.c.0.s8 %v6099
        %v6101 = vlaneseq
        %v6102 = vshrl.u32 %v6101, 7
        %v6103 = vsub.s32 %v6100, %v6102
        %v6104 = vrot.slane %v6090, %v6103
        %v6105 = vcombine.low %v6097, %v6104
        %v6106 = vcombine.low %v5684, %v5683
        %v6107 = vcombine.low %v5685, %v5693
        %v6109 = vunpack.c.l.s4 1983009808
        %v6110 = vunpack.c.0.s8 %v6109
        %v6111 = vlaneseq
        %v6112 = vshrl.u32 %v6111, 7
        %v6113 = vsub.s32 %v6110, %v6112
        %v6114 = vrot.slane %v6106, %v6113
        %v6116 = vunpack.c.l.s4 1983009808
        %v6117 = vunpack.c.0.s8 %v6116
        %v6118 = vlaneseq
        %v6119 = vshrl.u32 %v6118, 7
        %v6120 = vsub.s32 %v6117, %v6119
        %v6121 = vrot.slane %v6107, %v6120
        %v6122 = vcombine.low %v6114, %v6121
        %v6123 = vcombine.low %v5701, %v5700
        %v6124 = vcombine.low %v5709, %v5717
        %v6126 = vunpack.c.l.s4 1983009808
        %v6127 = vunpack.c.0.s8 %v6126
        %v6128 = vlaneseq
        %v6129 = vshrl.u32 %v6128, 7
        %v6130 = vsub.s32 %v6127, %v6129
        %v6131 = vrot.slane %v6123, %v6130
        %v6133 = vunpack.c.l.s4 1983009808
        %v6134 = vunpack.c.0.s8 %v6133
        %v6135 = vlaneseq
        %v6136 = vshrl.u32 %v6135, 7
        %v6137 = vsub.s32 %v6134, %v6136
        %v6138 = vrot.slane %v6124, %v6137
        %v6139 = vcombine.low %v6131, %v6138
        %v6140 = vcombine.low %v5716, %v5718
        %v6141 = vcombine.low %v5726, %v5734
        %v6143 = vunpack.c.l.s4 1983009808
        %v6144 = vunpack.c.0.s8 %v6143
        %v6145 = vlaneseq
        %v6146 = vshrl.u32 %v6145, 7
        %v6147 = vsub.s32 %v6144, %v6146
        %v6148 = vrot.slane %v6140, %v6147
        %v6150 = vunpack.c.l.s4 1983009808
        %v6151 = vunpack.c.0.s8 %v6150
        %v6152 = vlaneseq
        %v6153 = vshrl.u32 %v6152, 7
        %v6154 = vsub.s32 %v6151, %v6153
        %v6155 = vrot.slane %v6141, %v6154
        %v6156 = vcombine.low %v6148, %v6155
        %v6157 = vcombine.low %v5733, %v5742
        %v6158 = vcombine.low %v5750, %v5749
        %v6160 = vunpack.c.l.s4 1983009808
        %v6161 = vunpack.c.0.s8 %v6160
        %v6162 = vlaneseq
        %v6163 = vshrl.u32 %v6162, 7
        %v6164 = vsub.s32 %v6161, %v6163
        %v6165 = vrot.slane %v6157, %v6164
        %v6167 = vunpack.c.l.s4 1983009808
        %v6168 = vunpack.c.0.s8 %v6167
        %v6169 = vlaneseq
        %v6170 = vshrl.u32 %v6169, 7
        %v6171 = vsub.s32 %v6168, %v6170
        %v6172 = vrot.slane %v6158, %v6171
        %v6173 = vcombine.low %v6165, %v6172
        %v6174 = vcombine.low %v5751, %v5759
        %v6175 = vcombine.low %v5767, %v5766
        %v6177 = vunpack.c.l.s4 1983009808
        %v6178 = vunpack.c.0.s8 %v6177
        %v6179 = vlaneseq
        %v6180 = vshrl.u32 %v6179, 7
        %v6181 = vsub.s32 %v6178, %v6180
        %v6182 = vrot.slane %v6174, %v6181
        %v6184 = vunpack.c.l.s4 1983009808
        %v6185 = vunpack.c.0.s8 %v6184
        %v6186 = vlaneseq
        %v6187 = vshrl.u32 %v6186, 7
        %v6188 = vsub.s32 %v6185, %v6187
        %v6189 = vrot.slane %v6175, %v6188
        %v6190 = vcombine.low %v6182, %v6189
        %v6191 = vcombine.low %v5775, %v5783
        %v6192 = vcombine.low %v5782, %v5784
        %v6194 = vunpack.c.l.s4 1983009808
        %v6195 = vunpack.c.0.s8 %v6194
        %v6196 = vlaneseq
        %v6197 = vshrl.u32 %v6196, 7
        %v6198 = vsub.s32 %v6195, %v6197
        %v6199 = vrot.slane %v6191, %v6198
        %v6201 = vunpack.c.l.s4 1983009808
        %v6202 = vunpack.c.0.s8 %v6201
        %v6203 = vlaneseq
        %v6204 = vshrl.u32 %v6203, 7
        %v6205 = vsub.s32 %v6202, %v6204
        %v6206 = vrot.slane %v6192, %v6205
        %v6207 = vcombine.low %v6199, %v6206
        %v6208 = vcombine.low %v5792, %v5800
        %v6209 = vcombine.low %v5799, %v5808
        %v6211 = vunpack.c.l.s4 1983009808
        %v6212 = vunpack.c.0.s8 %v6211
        %v6213 = vlaneseq
        %v6214 = vshrl.u32 %v6213, 7
        %v6215 = vsub.s32 %v6212, %v6214
        %v6216 = vrot.slane %v6208, %v6215
        %v6218 = vunpack.c.l.s4 1983009808
        %v6219 = vunpack.c.0.s8 %v6218
        %v6220 = vlaneseq
        %v6221 = vshrl.u32 %v6220, 7
        %v6222 = vsub.s32 %v6219, %v6221
        %v6223 = vrot.slane %v6209, %v6222
        %v6224 = vcombine.low %v6216, %v6223
        %v6225 = vcombine.low %v5816, %v5815
        %v6226 = vcombine.low %v5817, %v5825
        %v6228 = vunpack.c.l.s4 1983009808
        %v6229 = vunpack.c.0.s8 %v6228
        %v6230 = vlaneseq
        %v6231 = vshrl.u32 %v6230, 7
        %v6232 = vsub.s32 %v6229, %v6231
        %v6233 = vrot.slane %v6225, %v6232
        %v6235 = vunpack.c.l.s4 1983009808
        %v6236 = vunpack.c.0.s8 %v6235
        %v6237 = vlaneseq
        %v6238 = vshrl.u32 %v6237, 7
        %v6239 = vsub.s32 %v6236, %v6238
        %v6240 = vrot.slane %v6226, %v6239
        %v6241 = vcombine.low %v6233, %v6240
        %v6242 = vcombine.low %v5833, %v5832
        %v6244 = vunpack.c.l.s4 1983009808
        %v6245 = vunpack.c.0.s8 %v6244
        %v6246 = vlaneseq
        %v6247 = vshrl.u32 %v6246, 7
        %v6248 = vsub.s32 %v6245, %v6247
        %v6249 = vrot.slane %v6242, %v6248
        %6250 = vrot.lane.b32.xlu0 %v5850, 20
        %v6251 = vpop.permute.xlu0 %6250
        %6252 = vrot.lane.b32.xlu0 %v5867, 20
        %v6253 = vpop.permute.xlu0 %6252
        %6254 = vrot.lane.b32.xlu0 %v5884, 20
        %v6255 = vpop.permute.xlu0 %6254
        %6256 = vrot.lane.b32.xlu0 %v5901, 20
        %v6257 = vpop.permute.xlu0 %6256
        %6258 = vrot.lane.b32.xlu0 %v5918, 20
        %v6259 = vpop.permute.xlu0 %6258
        %6260 = vrot.lane.b32.xlu0 %v5935, 20
        %v6261 = vpop.permute.xlu0 %6260
        %6262 = vrot.lane.b32.xlu0 %v5952, 20
        %v6263 = vpop.permute.xlu0 %6262
        %6264 = vrot.lane.b32.xlu0 %v5969, 20
        %v6265 = vpop.permute.xlu0 %6264
        %6266 = vrot.lane.b32.xlu0 %v5986, 20
        %v6267 = vpop.permute.xlu0 %6266
        %6268 = vrot.lane.b32.xlu0 %v6003, 20
        %v6269 = vpop.permute.xlu0 %6268
        %6270 = vrot.lane.b32.xlu0 %v6020, 20
        %v6271 = vpop.permute.xlu0 %6270
        %6272 = vrot.lane.b32.xlu0 %v6037, 20
        %v6273 = vpop.permute.xlu0 %6272
        %6274 = vrot.lane.b32.xlu0 %v6054, 20
        %v6275 = vpop.permute.xlu0 %6274
        %6276 = vrot.lane.b32.xlu0 %v6071, 20
        %v6277 = vpop.permute.xlu0 %6276
        %6278 = vrot.lane.b32.xlu0 %v6088, 20
        %v6279 = vpop.permute.xlu0 %6278
        %6280 = vrot.lane.b32.xlu0 %v6105, 20
        %v6281 = vpop.permute.xlu0 %6280
        %6282 = vrot.lane.b32.xlu0 %v6122, 20
        %v6283 = vpop.permute.xlu0 %6282
        %6284 = vrot.lane.b32.xlu0 %v6139, 20
        %v6285 = vpop.permute.xlu0 %6284
        %6286 = vrot.lane.b32.xlu0 %v6156, 20
        %v6287 = vpop.permute.xlu0 %6286
        %6288 = vrot.lane.b32.xlu0 %v6173, 20
        %v6289 = vpop.permute.xlu0 %6288
        %6290 = vrot.lane.b32.xlu0 %v6190, 20
        %v6291 = vpop.permute.xlu0 %6290
        %6292 = vrot.lane.b32.xlu0 %v6207, 20
        %v6293 = vpop.permute.xlu0 %6292
        %6294 = vrot.lane.b32.xlu0 %v6224, 20
        %v6295 = vpop.permute.xlu0 %6294
        %6296 = vrot.lane.b32.xlu0 %v6241, 20
        %v6297 = vpop.permute.xlu0 %6296
        %6298 = vrot.lane.b32.xlu0 %v6249, 20
        %v6299 = vpop.permute.xlu0 %6298
        %vm6325 = vcmask 195744
        %6326 = vst.msk [vmem:[#allocation2] sm:$0xff] %vm6325, %v6251
        %6327 = vst.msk [vmem:[#allocation2 + $0x8] sm:$0xff] %vm6325, %v6253
        %6328 = vst.msk [vmem:[#allocation2 + $0x10] sm:$0xff] %vm6325, %v6255
        %6329 = vst.msk [vmem:[#allocation2 + $0x18] sm:$0xff] %vm6325, %v6257
        %6330 = vst.msk [vmem:[#allocation2 + $0x20] sm:$0xff] %vm6325, %v6259
        %6331 = vst.msk [vmem:[#allocation2 + $0x28] sm:$0xff] %vm6325, %v6261
        %6332 = vst.msk [vmem:[#allocation2 + $0x30] sm:$0xff] %vm6325, %v6263
        %6333 = vst.msk [vmem:[#allocation2 + $0x38] sm:$0xff] %vm6325, %v6265
        %6334 = vst.msk [vmem:[#allocation2 + $0x40] sm:$0xff] %vm6325, %v6267
        %6335 = vst.msk [vmem:[#allocation2 + $0x48] sm:$0xff] %vm6325, %v6269
        %6336 = vst.msk [vmem:[#allocation2 + $0x50] sm:$0xff] %vm6325, %v6271
        %6337 = vst.msk [vmem:[#allocation2 + $0x58] sm:$0xff] %vm6325, %v6273
        %6338 = vst.msk [vmem:[#allocation2 + $0x60] sm:$0xff] %vm6325, %v6275
        %6339 = vst.msk [vmem:[#allocation2 + $0x68] sm:$0xff] %vm6325, %v6277
        %6340 = vst.msk [vmem:[#allocation2 + $0x70] sm:$0xff] %vm6325, %v6279
        %6341 = vst.msk [vmem:[#allocation2 + $0x78] sm:$0xff] %vm6325, %v6281
        %6342 = vst.msk [vmem:[#allocation2 + $0x80] sm:$0xff] %vm6325, %v6283
        %6343 = vst.msk [vmem:[#allocation2 + $0x88] sm:$0xff] %vm6325, %v6285
        %6344 = vst.msk [vmem:[#allocation2 + $0x90] sm:$0xff] %vm6325, %v6287
        %6345 = vst.msk [vmem:[#allocation2 + $0x98] sm:$0xff] %vm6325, %v6289
        %6346 = vst.msk [vmem:[#allocation2 + $0xa0] sm:$0xff] %vm6325, %v6291
        %6347 = vst.msk [vmem:[#allocation2 + $0xa8] sm:$0xff] %vm6325, %v6293
        %6348 = vst.msk [vmem:[#allocation2 + $0xb0] sm:$0xff] %vm6325, %v6295
        %6349 = vst.msk [vmem:[#allocation2 + $0xb8] sm:$0xff] %vm6325, %v6297
        %vm6350 = vcmask 191648
        %6351 = vst.msk [vmem:[#allocation2 + $0xc0] sm:$0xf] %vm6350, %v6299
        %s6352 = scalar_lea.vmem %s168, 32
        %v6353 = vld [vmem:[%s6352] sm:$0xff]
        %v6354 = vld [vmem:[%s6352 + $0x8] sm:$0x3f]
        %v6355 = vld [vmem:[%s6352 + $0x10] sm:$0xff]
        %v6356 = vld [vmem:[%s6352 + $0x18] sm:$0x3f]
        %v6357 = vld [vmem:[%s6352 + $0x20] sm:$0xff]
        %v6358 = vld [vmem:[%s6352 + $0x28] sm:$0x3f]
        %v6359 = vld [vmem:[%s6352 + $0x30] sm:$0xff]
        %v6360 = vld [vmem:[%s6352 + $0x38] sm:$0x3f]
        %v6361 = vld [vmem:[%s6352 + $0x40] sm:$0xff]
        %v6362 = vld [vmem:[%s6352 + $0x48] sm:$0x3f]
        %v6363 = vld [vmem:[%s6352 + $0x50] sm:$0xff]
        %v6364 = vld [vmem:[%s6352 + $0x58] sm:$0x3f]
        %v6365 = vld [vmem:[%s6352 + $0x60] sm:$0xff]
        %v6366 = vld [vmem:[%s6352 + $0x68] sm:$0x3f]
        %v6367 = vld [vmem:[%s6352 + $0x70] sm:$0xff]
        %v6368 = vld [vmem:[%s6352 + $0x78] sm:$0x3f]
        %v6369 = vld [vmem:[%s6352 + $0x80] sm:$0xff]
        %v6370 = vld [vmem:[%s6352 + $0x88] sm:$0x3f]
        %v6371 = vld [vmem:[%s6352 + $0x90] sm:$0xff]
        %v6372 = vld [vmem:[%s6352 + $0x98] sm:$0x3f]
        %v6373 = vld [vmem:[%s6352 + $0xa0] sm:$0xff]
        %v6374 = vld [vmem:[%s6352 + $0xa8] sm:$0x3f]
        %v6375 = vld [vmem:[%s6352 + $0xb0] sm:$0xff]
        %v6376 = vld [vmem:[%s6352 + $0xb8] sm:$0x3f]
        %v6377 = vld [vmem:[%s6352 + $0xc0] sm:$0xff]
        %v6378 = vld [vmem:[%s6352 + $0xc8] sm:$0x3f]
        %v6379 = vld [vmem:[%s6352 + $0xd0] sm:$0xff]
        %v6380 = vld [vmem:[%s6352 + $0xd8] sm:$0x3f]
        %v6409 = vcombine.high %v6353, %v6353
        %v6411 = vunpack.c.l.s4 1983009808
        %v6412 = vunpack.c.0.s8 %v6411
        %v6413 = vlaneseq
        %v6414 = vshrl.u32 %v6413, 7
        %v6415 = vsub.s32 %v6412, %v6414
        %v6416 = vrot.slane %v6353, %v6415
        %v6418 = vunpack.c.l.s4 1983009808
        %v6419 = vunpack.c.0.s8 %v6418
        %v6420 = vlaneseq
        %v6421 = vshrl.u32 %v6420, 7
        %v6422 = vsub.s32 %v6419, %v6421
        %v6423 = vrot.slane %v6409, %v6422
        %v6424 = vcombine.high %v6416, %v6416
        %v6425 = vcombine.high %v6423, %v6423
        %v6426 = vcombine.high %v6354, %v6354
        %v6428 = vunpack.c.l.s4 1983009808
        %v6429 = vunpack.c.0.s8 %v6428
        %v6430 = vlaneseq
        %v6431 = vshrl.u32 %v6430, 7
        %v6432 = vsub.s32 %v6429, %v6431
        %v6433 = vrot.slane %v6354, %v6432
        %v6435 = vunpack.c.l.s4 1983009808
        %v6436 = vunpack.c.0.s8 %v6435
        %v6437 = vlaneseq
        %v6438 = vshrl.u32 %v6437, 7
        %v6439 = vsub.s32 %v6436, %v6438
        %v6440 = vrot.slane %v6426, %v6439
        %v6441 = vcombine.high %v6433, %v6433
        %v6442 = vcombine.high %v6355, %v6355
        %v6444 = vunpack.c.l.s4 1983009808
        %v6445 = vunpack.c.0.s8 %v6444
        %v6446 = vlaneseq
        %v6447 = vshrl.u32 %v6446, 7
        %v6448 = vsub.s32 %v6445, %v6447
        %v6449 = vrot.slane %v6355, %v6448
        %v6451 = vunpack.c.l.s4 1983009808
        %v6452 = vunpack.c.0.s8 %v6451
        %v6453 = vlaneseq
        %v6454 = vshrl.u32 %v6453, 7
        %v6455 = vsub.s32 %v6452, %v6454
        %v6456 = vrot.slane %v6442, %v6455
        %v6457 = vcombine.high %v6449, %v6449
        %v6458 = vcombine.high %v6456, %v6456
        %v6459 = vcombine.high %v6356, %v6356
        %v6461 = vunpack.c.l.s4 1983009808
        %v6462 = vunpack.c.0.s8 %v6461
        %v6463 = vlaneseq
        %v6464 = vshrl.u32 %v6463, 7
        %v6465 = vsub.s32 %v6462, %v6464
        %v6466 = vrot.slane %v6356, %v6465
        %v6468 = vunpack.c.l.s4 1983009808
        %v6469 = vunpack.c.0.s8 %v6468
        %v6470 = vlaneseq
        %v6471 = vshrl.u32 %v6470, 7
        %v6472 = vsub.s32 %v6469, %v6471
        %v6473 = vrot.slane %v6459, %v6472
        %v6474 = vcombine.high %v6466, %v6466
        %v6475 = vcombine.high %v6357, %v6357
        %v6477 = vunpack.c.l.s4 1983009808
        %v6478 = vunpack.c.0.s8 %v6477
        %v6479 = vlaneseq
        %v6480 = vshrl.u32 %v6479, 7
        %v6481 = vsub.s32 %v6478, %v6480
        %v6482 = vrot.slane %v6357, %v6481
        %v6484 = vunpack.c.l.s4 1983009808
        %v6485 = vunpack.c.0.s8 %v6484
        %v6486 = vlaneseq
        %v6487 = vshrl.u32 %v6486, 7
        %v6488 = vsub.s32 %v6485, %v6487
        %v6489 = vrot.slane %v6475, %v6488
        %v6490 = vcombine.high %v6482, %v6482
        %v6491 = vcombine.high %v6489, %v6489
        %v6492 = vcombine.high %v6358, %v6358
        %v6494 = vunpack.c.l.s4 1983009808
        %v6495 = vunpack.c.0.s8 %v6494
        %v6496 = vlaneseq
        %v6497 = vshrl.u32 %v6496, 7
        %v6498 = vsub.s32 %v6495, %v6497
        %v6499 = vrot.slane %v6358, %v6498
        %v6501 = vunpack.c.l.s4 1983009808
        %v6502 = vunpack.c.0.s8 %v6501
        %v6503 = vlaneseq
        %v6504 = vshrl.u32 %v6503, 7
        %v6505 = vsub.s32 %v6502, %v6504
        %v6506 = vrot.slane %v6492, %v6505
        %v6507 = vcombine.high %v6499, %v6499
        %v6508 = vcombine.high %v6359, %v6359
        %v6510 = vunpack.c.l.s4 1983009808
        %v6511 = vunpack.c.0.s8 %v6510
        %v6512 = vlaneseq
        %v6513 = vshrl.u32 %v6512, 7
        %v6514 = vsub.s32 %v6511, %v6513
        %v6515 = vrot.slane %v6359, %v6514
        %v6517 = vunpack.c.l.s4 1983009808
        %v6518 = vunpack.c.0.s8 %v6517
        %v6519 = vlaneseq
        %v6520 = vshrl.u32 %v6519, 7
        %v6521 = vsub.s32 %v6518, %v6520
        %v6522 = vrot.slane %v6508, %v6521
        %v6523 = vcombine.high %v6515, %v6515
        %v6524 = vcombine.high %v6522, %v6522
        %v6525 = vcombine.high %v6360, %v6360
        %v6527 = vunpack.c.l.s4 1983009808
        %v6528 = vunpack.c.0.s8 %v6527
        %v6529 = vlaneseq
        %v6530 = vshrl.u32 %v6529, 7
        %v6531 = vsub.s32 %v6528, %v6530
        %v6532 = vrot.slane %v6360, %v6531
        %v6534 = vunpack.c.l.s4 1983009808
        %v6535 = vunpack.c.0.s8 %v6534
        %v6536 = vlaneseq
        %v6537 = vshrl.u32 %v6536, 7
        %v6538 = vsub.s32 %v6535, %v6537
        %v6539 = vrot.slane %v6525, %v6538
        %v6540 = vcombine.high %v6532, %v6532
        %v6541 = vcombine.high %v6361, %v6361
        %v6543 = vunpack.c.l.s4 1983009808
        %v6544 = vunpack.c.0.s8 %v6543
        %v6545 = vlaneseq
        %v6546 = vshrl.u32 %v6545, 7
        %v6547 = vsub.s32 %v6544, %v6546
        %v6548 = vrot.slane %v6361, %v6547
        %v6550 = vunpack.c.l.s4 1983009808
        %v6551 = vunpack.c.0.s8 %v6550
        %v6552 = vlaneseq
        %v6553 = vshrl.u32 %v6552, 7
        %v6554 = vsub.s32 %v6551, %v6553
        %v6555 = vrot.slane %v6541, %v6554
        %v6556 = vcombine.high %v6548, %v6548
        %v6557 = vcombine.high %v6555, %v6555
        %v6558 = vcombine.high %v6362, %v6362
        %v6560 = vunpack.c.l.s4 1983009808
        %v6561 = vunpack.c.0.s8 %v6560
        %v6562 = vlaneseq
        %v6563 = vshrl.u32 %v6562, 7
        %v6564 = vsub.s32 %v6561, %v6563
        %v6565 = vrot.slane %v6362, %v6564
        %v6567 = vunpack.c.l.s4 1983009808
        %v6568 = vunpack.c.0.s8 %v6567
        %v6569 = vlaneseq
        %v6570 = vshrl.u32 %v6569, 7
        %v6571 = vsub.s32 %v6568, %v6570
        %v6572 = vrot.slane %v6558, %v6571
        %v6573 = vcombine.high %v6565, %v6565
        %v6574 = vcombine.high %v6363, %v6363
        %v6576 = vunpack.c.l.s4 1983009808
        %v6577 = vunpack.c.0.s8 %v6576
        %v6578 = vlaneseq
        %v6579 = vshrl.u32 %v6578, 7
        %v6580 = vsub.s32 %v6577, %v6579
        %v6581 = vrot.slane %v6363, %v6580
        %v6583 = vunpack.c.l.s4 1983009808
        %v6584 = vunpack.c.0.s8 %v6583
        %v6585 = vlaneseq
        %v6586 = vshrl.u32 %v6585, 7
        %v6587 = vsub.s32 %v6584, %v6586
        %v6588 = vrot.slane %v6574, %v6587
        %v6589 = vcombine.high %v6581, %v6581
        %v6590 = vcombine.high %v6588, %v6588
        %v6591 = vcombine.high %v6364, %v6364
        %v6593 = vunpack.c.l.s4 1983009808
        %v6594 = vunpack.c.0.s8 %v6593
        %v6595 = vlaneseq
        %v6596 = vshrl.u32 %v6595, 7
        %v6597 = vsub.s32 %v6594, %v6596
        %v6598 = vrot.slane %v6364, %v6597
        %v6600 = vunpack.c.l.s4 1983009808
        %v6601 = vunpack.c.0.s8 %v6600
        %v6602 = vlaneseq
        %v6603 = vshrl.u32 %v6602, 7
        %v6604 = vsub.s32 %v6601, %v6603
        %v6605 = vrot.slane %v6591, %v6604
        %v6606 = vcombine.high %v6598, %v6598
        %v6607 = vcombine.high %v6365, %v6365
        %v6609 = vunpack.c.l.s4 1983009808
        %v6610 = vunpack.c.0.s8 %v6609
        %v6611 = vlaneseq
        %v6612 = vshrl.u32 %v6611, 7
        %v6613 = vsub.s32 %v6610, %v6612
        %v6614 = vrot.slane %v6365, %v6613
        %v6616 = vunpack.c.l.s4 1983009808
        %v6617 = vunpack.c.0.s8 %v6616
        %v6618 = vlaneseq
        %v6619 = vshrl.u32 %v6618, 7
        %v6620 = vsub.s32 %v6617, %v6619
        %v6621 = vrot.slane %v6607, %v6620
        %v6622 = vcombine.high %v6614, %v6614
        %v6623 = vcombine.high %v6621, %v6621
        %v6624 = vcombine.high %v6366, %v6366
        %v6626 = vunpack.c.l.s4 1983009808
        %v6627 = vunpack.c.0.s8 %v6626
        %v6628 = vlaneseq
        %v6629 = vshrl.u32 %v6628, 7
        %v6630 = vsub.s32 %v6627, %v6629
        %v6631 = vrot.slane %v6366, %v6630
        %v6633 = vunpack.c.l.s4 1983009808
        %v6634 = vunpack.c.0.s8 %v6633
        %v6635 = vlaneseq
        %v6636 = vshrl.u32 %v6635, 7
        %v6637 = vsub.s32 %v6634, %v6636
        %v6638 = vrot.slane %v6624, %v6637
        %v6639 = vcombine.high %v6631, %v6631
        %v6640 = vcombine.high %v6367, %v6367
        %v6642 = vunpack.c.l.s4 1983009808
        %v6643 = vunpack.c.0.s8 %v6642
        %v6644 = vlaneseq
        %v6645 = vshrl.u32 %v6644, 7
        %v6646 = vsub.s32 %v6643, %v6645
        %v6647 = vrot.slane %v6367, %v6646
        %v6649 = vunpack.c.l.s4 1983009808
        %v6650 = vunpack.c.0.s8 %v6649
        %v6651 = vlaneseq
        %v6652 = vshrl.u32 %v6651, 7
        %v6653 = vsub.s32 %v6650, %v6652
        %v6654 = vrot.slane %v6640, %v6653
        %v6655 = vcombine.high %v6647, %v6647
        %v6656 = vcombine.high %v6654, %v6654
        %v6657 = vcombine.high %v6368, %v6368
        %v6659 = vunpack.c.l.s4 1983009808
        %v6660 = vunpack.c.0.s8 %v6659
        %v6661 = vlaneseq
        %v6662 = vshrl.u32 %v6661, 7
        %v6663 = vsub.s32 %v6660, %v6662
        %v6664 = vrot.slane %v6368, %v6663
        %v6666 = vunpack.c.l.s4 1983009808
        %v6667 = vunpack.c.0.s8 %v6666
        %v6668 = vlaneseq
        %v6669 = vshrl.u32 %v6668, 7
        %v6670 = vsub.s32 %v6667, %v6669
        %v6671 = vrot.slane %v6657, %v6670
        %v6672 = vcombine.high %v6664, %v6664
        %v6673 = vcombine.high %v6369, %v6369
        %v6675 = vunpack.c.l.s4 1983009808
        %v6676 = vunpack.c.0.s8 %v6675
        %v6677 = vlaneseq
        %v6678 = vshrl.u32 %v6677, 7
        %v6679 = vsub.s32 %v6676, %v6678
        %v6680 = vrot.slane %v6369, %v6679
        %v6682 = vunpack.c.l.s4 1983009808
        %v6683 = vunpack.c.0.s8 %v6682
        %v6684 = vlaneseq
        %v6685 = vshrl.u32 %v6684, 7
        %v6686 = vsub.s32 %v6683, %v6685
        %v6687 = vrot.slane %v6673, %v6686
        %v6688 = vcombine.high %v6680, %v6680
        %v6689 = vcombine.high %v6687, %v6687
        %v6690 = vcombine.high %v6370, %v6370
        %v6692 = vunpack.c.l.s4 1983009808
        %v6693 = vunpack.c.0.s8 %v6692
        %v6694 = vlaneseq
        %v6695 = vshrl.u32 %v6694, 7
        %v6696 = vsub.s32 %v6693, %v6695
        %v6697 = vrot.slane %v6370, %v6696
        %v6699 = vunpack.c.l.s4 1983009808
        %v6700 = vunpack.c.0.s8 %v6699
        %v6701 = vlaneseq
        %v6702 = vshrl.u32 %v6701, 7
        %v6703 = vsub.s32 %v6700, %v6702
        %v6704 = vrot.slane %v6690, %v6703
        %v6705 = vcombine.high %v6697, %v6697
        %v6706 = vcombine.high %v6371, %v6371
        %v6708 = vunpack.c.l.s4 1983009808
        %v6709 = vunpack.c.0.s8 %v6708
        %v6710 = vlaneseq
        %v6711 = vshrl.u32 %v6710, 7
        %v6712 = vsub.s32 %v6709, %v6711
        %v6713 = vrot.slane %v6371, %v6712
        %v6715 = vunpack.c.l.s4 1983009808
        %v6716 = vunpack.c.0.s8 %v6715
        %v6717 = vlaneseq
        %v6718 = vshrl.u32 %v6717, 7
        %v6719 = vsub.s32 %v6716, %v6718
        %v6720 = vrot.slane %v6706, %v6719
        %v6721 = vcombine.high %v6713, %v6713
        %v6722 = vcombine.high %v6720, %v6720
        %v6723 = vcombine.high %v6372, %v6372
        %v6725 = vunpack.c.l.s4 1983009808
        %v6726 = vunpack.c.0.s8 %v6725
        %v6727 = vlaneseq
        %v6728 = vshrl.u32 %v6727, 7
        %v6729 = vsub.s32 %v6726, %v6728
        %v6730 = vrot.slane %v6372, %v6729
        %v6732 = vunpack.c.l.s4 1983009808
        %v6733 = vunpack.c.0.s8 %v6732
        %v6734 = vlaneseq
        %v6735 = vshrl.u32 %v6734, 7
        %v6736 = vsub.s32 %v6733, %v6735
        %v6737 = vrot.slane %v6723, %v6736
        %v6738 = vcombine.high %v6730, %v6730
        %v6739 = vcombine.high %v6373, %v6373
        %v6741 = vunpack.c.l.s4 1983009808
        %v6742 = vunpack.c.0.s8 %v6741
        %v6743 = vlaneseq
        %v6744 = vshrl.u32 %v6743, 7
        %v6745 = vsub.s32 %v6742, %v6744
        %v6746 = vrot.slane %v6373, %v6745
        %v6748 = vunpack.c.l.s4 1983009808
        %v6749 = vunpack.c.0.s8 %v6748
        %v6750 = vlaneseq
        %v6751 = vshrl.u32 %v6750, 7
        %v6752 = vsub.s32 %v6749, %v6751
        %v6753 = vrot.slane %v6739, %v6752
        %v6754 = vcombine.high %v6746, %v6746
        %v6755 = vcombine.high %v6753, %v6753
        %v6756 = vcombine.high %v6374, %v6374
        %v6758 = vunpack.c.l.s4 1983009808
        %v6759 = vunpack.c.0.s8 %v6758
        %v6760 = vlaneseq
        %v6761 = vshrl.u32 %v6760, 7
        %v6762 = vsub.s32 %v6759, %v6761
        %v6763 = vrot.slane %v6374, %v6762
        %v6765 = vunpack.c.l.s4 1983009808
        %v6766 = vunpack.c.0.s8 %v6765
        %v6767 = vlaneseq
        %v6768 = vshrl.u32 %v6767, 7
        %v6769 = vsub.s32 %v6766, %v6768
        %v6770 = vrot.slane %v6756, %v6769
        %v6771 = vcombine.high %v6763, %v6763
        %v6772 = vcombine.high %v6375, %v6375
        %v6774 = vunpack.c.l.s4 1983009808
        %v6775 = vunpack.c.0.s8 %v6774
        %v6776 = vlaneseq
        %v6777 = vshrl.u32 %v6776, 7
        %v6778 = vsub.s32 %v6775, %v6777
        %v6779 = vrot.slane %v6375, %v6778
        %v6781 = vunpack.c.l.s4 1983009808
        %v6782 = vunpack.c.0.s8 %v6781
        %v6783 = vlaneseq
        %v6784 = vshrl.u32 %v6783, 7
        %v6785 = vsub.s32 %v6782, %v6784
        %v6786 = vrot.slane %v6772, %v6785
        %v6787 = vcombine.high %v6779, %v6779
        %v6788 = vcombine.high %v6786, %v6786
        %v6789 = vcombine.high %v6376, %v6376
        %v6791 = vunpack.c.l.s4 1983009808
        %v6792 = vunpack.c.0.s8 %v6791
        %v6793 = vlaneseq
        %v6794 = vshrl.u32 %v6793, 7
        %v6795 = vsub.s32 %v6792, %v6794
        %v6796 = vrot.slane %v6376, %v6795
        %v6798 = vunpack.c.l.s4 1983009808
        %v6799 = vunpack.c.0.s8 %v6798
        %v6800 = vlaneseq
        %v6801 = vshrl.u32 %v6800, 7
        %v6802 = vsub.s32 %v6799, %v6801
        %v6803 = vrot.slane %v6789, %v6802
        %v6804 = vcombine.high %v6796, %v6796
        %v6805 = vcombine.high %v6377, %v6377
        %v6807 = vunpack.c.l.s4 1983009808
        %v6808 = vunpack.c.0.s8 %v6807
        %v6809 = vlaneseq
        %v6810 = vshrl.u32 %v6809, 7
        %v6811 = vsub.s32 %v6808, %v6810
        %v6812 = vrot.slane %v6377, %v6811
        %v6814 = vunpack.c.l.s4 1983009808
        %v6815 = vunpack.c.0.s8 %v6814
        %v6816 = vlaneseq
        %v6817 = vshrl.u32 %v6816, 7
        %v6818 = vsub.s32 %v6815, %v6817
        %v6819 = vrot.slane %v6805, %v6818
        %v6820 = vcombine.high %v6812, %v6812
        %v6821 = vcombine.high %v6819, %v6819
        %v6822 = vcombine.high %v6378, %v6378
        %v6824 = vunpack.c.l.s4 1983009808
        %v6825 = vunpack.c.0.s8 %v6824
        %v6826 = vlaneseq
        %v6827 = vshrl.u32 %v6826, 7
        %v6828 = vsub.s32 %v6825, %v6827
        %v6829 = vrot.slane %v6378, %v6828
        %v6831 = vunpack.c.l.s4 1983009808
        %v6832 = vunpack.c.0.s8 %v6831
        %v6833 = vlaneseq
        %v6834 = vshrl.u32 %v6833, 7
        %v6835 = vsub.s32 %v6832, %v6834
        %v6836 = vrot.slane %v6822, %v6835
        %v6837 = vcombine.high %v6829, %v6829
        %v6838 = vcombine.high %v6379, %v6379
        %v6840 = vunpack.c.l.s4 1983009808
        %v6841 = vunpack.c.0.s8 %v6840
        %v6842 = vlaneseq
        %v6843 = vshrl.u32 %v6842, 7
        %v6844 = vsub.s32 %v6841, %v6843
        %v6845 = vrot.slane %v6379, %v6844
        %v6847 = vunpack.c.l.s4 1983009808
        %v6848 = vunpack.c.0.s8 %v6847
        %v6849 = vlaneseq
        %v6850 = vshrl.u32 %v6849, 7
        %v6851 = vsub.s32 %v6848, %v6850
        %v6852 = vrot.slane %v6838, %v6851
        %v6853 = vcombine.high %v6845, %v6845
        %v6854 = vcombine.high %v6852, %v6852
        %v6855 = vcombine.high %v6380, %v6380
        %v6857 = vunpack.c.l.s4 1983009808
        %v6858 = vunpack.c.0.s8 %v6857
        %v6859 = vlaneseq
        %v6860 = vshrl.u32 %v6859, 7
        %v6861 = vsub.s32 %v6858, %v6860
        %v6862 = vrot.slane %v6380, %v6861
        %v6864 = vunpack.c.l.s4 1983009808
        %v6865 = vunpack.c.0.s8 %v6864
        %v6866 = vlaneseq
        %v6867 = vshrl.u32 %v6866, 7
        %v6868 = vsub.s32 %v6865, %v6867
        %v6869 = vrot.slane %v6855, %v6868
        %v6870 = vcombine.high %v6862, %v6862
        %v6871 = vcombine.low %v6416, %v6424
        %v6872 = vcombine.low %v6423, %v6425
        %v6874 = vunpack.c.l.s4 1983009808
        %v6875 = vunpack.c.0.s8 %v6874
        %v6876 = vlaneseq
        %v6877 = vshrl.u32 %v6876, 7
        %v6878 = vsub.s32 %v6875, %v6877
        %v6879 = vrot.slane %v6871, %v6878
        %v6881 = vunpack.c.l.s4 1983009808
        %v6882 = vunpack.c.0.s8 %v6881
        %v6883 = vlaneseq
        %v6884 = vshrl.u32 %v6883, 7
        %v6885 = vsub.s32 %v6882, %v6884
        %v6886 = vrot.slane %v6872, %v6885
        %v6887 = vcombine.low %v6879, %v6886
        %v6888 = vcombine.low %v6433, %v6441
        %v6889 = vcombine.low %v6440, %v6449
        %v6891 = vunpack.c.l.s4 1983009808
        %v6892 = vunpack.c.0.s8 %v6891
        %v6893 = vlaneseq
        %v6894 = vshrl.u32 %v6893, 7
        %v6895 = vsub.s32 %v6892, %v6894
        %v6896 = vrot.slane %v6888, %v6895
        %v6898 = vunpack.c.l.s4 1983009808
        %v6899 = vunpack.c.0.s8 %v6898
        %v6900 = vlaneseq
        %v6901 = vshrl.u32 %v6900, 7
        %v6902 = vsub.s32 %v6899, %v6901
        %v6903 = vrot.slane %v6889, %v6902
        %v6904 = vcombine.low %v6896, %v6903
        %v6905 = vcombine.low %v6457, %v6456
        %v6906 = vcombine.low %v6458, %v6466
        %v6908 = vunpack.c.l.s4 1983009808
        %v6909 = vunpack.c.0.s8 %v6908
        %v6910 = vlaneseq
        %v6911 = vshrl.u32 %v6910, 7
        %v6912 = vsub.s32 %v6909, %v6911
        %v6913 = vrot.slane %v6905, %v6912
        %v6915 = vunpack.c.l.s4 1983009808
        %v6916 = vunpack.c.0.s8 %v6915
        %v6917 = vlaneseq
        %v6918 = vshrl.u32 %v6917, 7
        %v6919 = vsub.s32 %v6916, %v6918
        %v6920 = vrot.slane %v6906, %v6919
        %v6921 = vcombine.low %v6913, %v6920
        %v6922 = vcombine.low %v6474, %v6473
        %v6923 = vcombine.low %v6482, %v6490
        %v6925 = vunpack.c.l.s4 1983009808
        %v6926 = vunpack.c.0.s8 %v6925
        %v6927 = vlaneseq
        %v6928 = vshrl.u32 %v6927, 7
        %v6929 = vsub.s32 %v6926, %v6928
        %v6930 = vrot.slane %v6922, %v6929
        %v6932 = vunpack.c.l.s4 1983009808
        %v6933 = vunpack.c.0.s8 %v6932
        %v6934 = vlaneseq
        %v6935 = vshrl.u32 %v6934, 7
        %v6936 = vsub.s32 %v6933, %v6935
        %v6937 = vrot.slane %v6923, %v6936
        %v6938 = vcombine.low %v6930, %v6937
        %v6939 = vcombine.low %v6489, %v6491
        %v6940 = vcombine.low %v6499, %v6507
        %v6942 = vunpack.c.l.s4 1983009808
        %v6943 = vunpack.c.0.s8 %v6942
        %v6944 = vlaneseq
        %v6945 = vshrl.u32 %v6944, 7
        %v6946 = vsub.s32 %v6943, %v6945
        %v6947 = vrot.slane %v6939, %v6946
        %v6949 = vunpack.c.l.s4 1983009808
        %v6950 = vunpack.c.0.s8 %v6949
        %v6951 = vlaneseq
        %v6952 = vshrl.u32 %v6951, 7
        %v6953 = vsub.s32 %v6950, %v6952
        %v6954 = vrot.slane %v6940, %v6953
        %v6955 = vcombine.low %v6947, %v6954
        %v6956 = vcombine.low %v6506, %v6515
        %v6957 = vcombine.low %v6523, %v6522
        %v6959 = vunpack.c.l.s4 1983009808
        %v6960 = vunpack.c.0.s8 %v6959
        %v6961 = vlaneseq
        %v6962 = vshrl.u32 %v6961, 7
        %v6963 = vsub.s32 %v6960, %v6962
        %v6964 = vrot.slane %v6956, %v6963
        %v6966 = vunpack.c.l.s4 1983009808
        %v6967 = vunpack.c.0.s8 %v6966
        %v6968 = vlaneseq
        %v6969 = vshrl.u32 %v6968, 7
        %v6970 = vsub.s32 %v6967, %v6969
        %v6971 = vrot.slane %v6957, %v6970
        %v6972 = vcombine.low %v6964, %v6971
        %v6973 = vcombine.low %v6524, %v6532
        %v6974 = vcombine.low %v6540, %v6539
        %v6976 = vunpack.c.l.s4 1983009808
        %v6977 = vunpack.c.0.s8 %v6976
        %v6978 = vlaneseq
        %v6979 = vshrl.u32 %v6978, 7
        %v6980 = vsub.s32 %v6977, %v6979
        %v6981 = vrot.slane %v6973, %v6980
        %v6983 = vunpack.c.l.s4 1983009808
        %v6984 = vunpack.c.0.s8 %v6983
        %v6985 = vlaneseq
        %v6986 = vshrl.u32 %v6985, 7
        %v6987 = vsub.s32 %v6984, %v6986
        %v6988 = vrot.slane %v6974, %v6987
        %v6989 = vcombine.low %v6981, %v6988
        %v6990 = vcombine.low %v6548, %v6556
        %v6991 = vcombine.low %v6555, %v6557
        %v6993 = vunpack.c.l.s4 1983009808
        %v6994 = vunpack.c.0.s8 %v6993
        %v6995 = vlaneseq
        %v6996 = vshrl.u32 %v6995, 7
        %v6997 = vsub.s32 %v6994, %v6996
        %v6998 = vrot.slane %v6990, %v6997
        %v7000 = vunpack.c.l.s4 1983009808
        %v7001 = vunpack.c.0.s8 %v7000
        %v7002 = vlaneseq
        %v7003 = vshrl.u32 %v7002, 7
        %v7004 = vsub.s32 %v7001, %v7003
        %v7005 = vrot.slane %v6991, %v7004
        %v7006 = vcombine.low %v6998, %v7005
        %v7007 = vcombine.low %v6565, %v6573
        %v7008 = vcombine.low %v6572, %v6581
        %v7010 = vunpack.c.l.s4 1983009808
        %v7011 = vunpack.c.0.s8 %v7010
        %v7012 = vlaneseq
        %v7013 = vshrl.u32 %v7012, 7
        %v7014 = vsub.s32 %v7011, %v7013
        %v7015 = vrot.slane %v7007, %v7014
        %v7017 = vunpack.c.l.s4 1983009808
        %v7018 = vunpack.c.0.s8 %v7017
        %v7019 = vlaneseq
        %v7020 = vshrl.u32 %v7019, 7
        %v7021 = vsub.s32 %v7018, %v7020
        %v7022 = vrot.slane %v7008, %v7021
        %v7023 = vcombine.low %v7015, %v7022
        %v7024 = vcombine.low %v6589, %v6588
        %v7025 = vcombine.low %v6590, %v6598
        %v7027 = vunpack.c.l.s4 1983009808
        %v7028 = vunpack.c.0.s8 %v7027
        %v7029 = vlaneseq
        %v7030 = vshrl.u32 %v7029, 7
        %v7031 = vsub.s32 %v7028, %v7030
        %v7032 = vrot.slane %v7024, %v7031
        %v7034 = vunpack.c.l.s4 1983009808
        %v7035 = vunpack.c.0.s8 %v7034
        %v7036 = vlaneseq
        %v7037 = vshrl.u32 %v7036, 7
        %v7038 = vsub.s32 %v7035, %v7037
        %v7039 = vrot.slane %v7025, %v7038
        %v7040 = vcombine.low %v7032, %v7039
        %v7041 = vcombine.low %v6606, %v6605
        %v7042 = vcombine.low %v6614, %v6622
        %v7044 = vunpack.c.l.s4 1983009808
        %v7045 = vunpack.c.0.s8 %v7044
        %v7046 = vlaneseq
        %v7047 = vshrl.u32 %v7046, 7
        %v7048 = vsub.s32 %v7045, %v7047
        %v7049 = vrot.slane %v7041, %v7048
        %v7051 = vunpack.c.l.s4 1983009808
        %v7052 = vunpack.c.0.s8 %v7051
        %v7053 = vlaneseq
        %v7054 = vshrl.u32 %v7053, 7
        %v7055 = vsub.s32 %v7052, %v7054
        %v7056 = vrot.slane %v7042, %v7055
        %v7057 = vcombine.low %v7049, %v7056
        %v7058 = vcombine.low %v6621, %v6623
        %v7059 = vcombine.low %v6631, %v6639
        %v7061 = vunpack.c.l.s4 1983009808
        %v7062 = vunpack.c.0.s8 %v7061
        %v7063 = vlaneseq
        %v7064 = vshrl.u32 %v7063, 7
        %v7065 = vsub.s32 %v7062, %v7064
        %v7066 = vrot.slane %v7058, %v7065
        %v7068 = vunpack.c.l.s4 1983009808
        %v7069 = vunpack.c.0.s8 %v7068
        %v7070 = vlaneseq
        %v7071 = vshrl.u32 %v7070, 7
        %v7072 = vsub.s32 %v7069, %v7071
        %v7073 = vrot.slane %v7059, %v7072
        %v7074 = vcombine.low %v7066, %v7073
        %v7075 = vcombine.low %v6638, %v6647
        %v7076 = vcombine.low %v6655, %v6654
        %v7078 = vunpack.c.l.s4 1983009808
        %v7079 = vunpack.c.0.s8 %v7078
        %v7080 = vlaneseq
        %v7081 = vshrl.u32 %v7080, 7
        %v7082 = vsub.s32 %v7079, %v7081
        %v7083 = vrot.slane %v7075, %v7082
        %v7085 = vunpack.c.l.s4 1983009808
        %v7086 = vunpack.c.0.s8 %v7085
        %v7087 = vlaneseq
        %v7088 = vshrl.u32 %v7087, 7
        %v7089 = vsub.s32 %v7086, %v7088
        %v7090 = vrot.slane %v7076, %v7089
        %v7091 = vcombine.low %v7083, %v7090
        %v7092 = vcombine.low %v6656, %v6664
        %v7093 = vcombine.low %v6672, %v6671
        %v7095 = vunpack.c.l.s4 1983009808
        %v7096 = vunpack.c.0.s8 %v7095
        %v7097 = vlaneseq
        %v7098 = vshrl.u32 %v7097, 7
        %v7099 = vsub.s32 %v7096, %v7098
        %v7100 = vrot.slane %v7092, %v7099
        %v7102 = vunpack.c.l.s4 1983009808
        %v7103 = vunpack.c.0.s8 %v7102
        %v7104 = vlaneseq
        %v7105 = vshrl.u32 %v7104, 7
        %v7106 = vsub.s32 %v7103, %v7105
        %v7107 = vrot.slane %v7093, %v7106
        %v7108 = vcombine.low %v7100, %v7107
        %v7109 = vcombine.low %v6680, %v6688
        %v7110 = vcombine.low %v6687, %v6689
        %v7112 = vunpack.c.l.s4 1983009808
        %v7113 = vunpack.c.0.s8 %v7112
        %v7114 = vlaneseq
        %v7115 = vshrl.u32 %v7114, 7
        %v7116 = vsub.s32 %v7113, %v7115
        %v7117 = vrot.slane %v7109, %v7116
        %v7119 = vunpack.c.l.s4 1983009808
        %v7120 = vunpack.c.0.s8 %v7119
        %v7121 = vlaneseq
        %v7122 = vshrl.u32 %v7121, 7
        %v7123 = vsub.s32 %v7120, %v7122
        %v7124 = vrot.slane %v7110, %v7123
        %v7125 = vcombine.low %v7117, %v7124
        %v7126 = vcombine.low %v6697, %v6705
        %v7127 = vcombine.low %v6704, %v6713
        %v7129 = vunpack.c.l.s4 1983009808
        %v7130 = vunpack.c.0.s8 %v7129
        %v7131 = vlaneseq
        %v7132 = vshrl.u32 %v7131, 7
        %v7133 = vsub.s32 %v7130, %v7132
        %v7134 = vrot.slane %v7126, %v7133
        %v7136 = vunpack.c.l.s4 1983009808
        %v7137 = vunpack.c.0.s8 %v7136
        %v7138 = vlaneseq
        %v7139 = vshrl.u32 %v7138, 7
        %v7140 = vsub.s32 %v7137, %v7139
        %v7141 = vrot.slane %v7127, %v7140
        %v7142 = vcombine.low %v7134, %v7141
        %v7143 = vcombine.low %v6721, %v6720
        %v7144 = vcombine.low %v6722, %v6730
        %v7146 = vunpack.c.l.s4 1983009808
        %v7147 = vunpack.c.0.s8 %v7146
        %v7148 = vlaneseq
        %v7149 = vshrl.u32 %v7148, 7
        %v7150 = vsub.s32 %v7147, %v7149
        %v7151 = vrot.slane %v7143, %v7150
        %v7153 = vunpack.c.l.s4 1983009808
        %v7154 = vunpack.c.0.s8 %v7153
        %v7155 = vlaneseq
        %v7156 = vshrl.u32 %v7155, 7
        %v7157 = vsub.s32 %v7154, %v7156
        %v7158 = vrot.slane %v7144, %v7157
        %v7159 = vcombine.low %v7151, %v7158
        %v7160 = vcombine.low %v6738, %v6737
        %v7161 = vcombine.low %v6746, %v6754
        %v7163 = vunpack.c.l.s4 1983009808
        %v7164 = vunpack.c.0.s8 %v7163
        %v7165 = vlaneseq
        %v7166 = vshrl.u32 %v7165, 7
        %v7167 = vsub.s32 %v7164, %v7166
        %v7168 = vrot.slane %v7160, %v7167
        %v7170 = vunpack.c.l.s4 1983009808
        %v7171 = vunpack.c.0.s8 %v7170
        %v7172 = vlaneseq
        %v7173 = vshrl.u32 %v7172, 7
        %v7174 = vsub.s32 %v7171, %v7173
        %v7175 = vrot.slane %v7161, %v7174
        %v7176 = vcombine.low %v7168, %v7175
        %v7177 = vcombine.low %v6753, %v6755
        %v7178 = vcombine.low %v6763, %v6771
        %v7180 = vunpack.c.l.s4 1983009808
        %v7181 = vunpack.c.0.s8 %v7180
        %v7182 = vlaneseq
        %v7183 = vshrl.u32 %v7182, 7
        %v7184 = vsub.s32 %v7181, %v7183
        %v7185 = vrot.slane %v7177, %v7184
        %v7187 = vunpack.c.l.s4 1983009808
        %v7188 = vunpack.c.0.s8 %v7187
        %v7189 = vlaneseq
        %v7190 = vshrl.u32 %v7189, 7
        %v7191 = vsub.s32 %v7188, %v7190
        %v7192 = vrot.slane %v7178, %v7191
        %v7193 = vcombine.low %v7185, %v7192
        %v7194 = vcombine.low %v6770, %v6779
        %v7195 = vcombine.low %v6787, %v6786
        %v7197 = vunpack.c.l.s4 1983009808
        %v7198 = vunpack.c.0.s8 %v7197
        %v7199 = vlaneseq
        %v7200 = vshrl.u32 %v7199, 7
        %v7201 = vsub.s32 %v7198, %v7200
        %v7202 = vrot.slane %v7194, %v7201
        %v7204 = vunpack.c.l.s4 1983009808
        %v7205 = vunpack.c.0.s8 %v7204
        %v7206 = vlaneseq
        %v7207 = vshrl.u32 %v7206, 7
        %v7208 = vsub.s32 %v7205, %v7207
        %v7209 = vrot.slane %v7195, %v7208
        %v7210 = vcombine.low %v7202, %v7209
        %v7211 = vcombine.low %v6788, %v6796
        %v7212 = vcombine.low %v6804, %v6803
        %v7214 = vunpack.c.l.s4 1983009808
        %v7215 = vunpack.c.0.s8 %v7214
        %v7216 = vlaneseq
        %v7217 = vshrl.u32 %v7216, 7
        %v7218 = vsub.s32 %v7215, %v7217
        %v7219 = vrot.slane %v7211, %v7218
        %v7221 = vunpack.c.l.s4 1983009808
        %v7222 = vunpack.c.0.s8 %v7221
        %v7223 = vlaneseq
        %v7224 = vshrl.u32 %v7223, 7
        %v7225 = vsub.s32 %v7222, %v7224
        %v7226 = vrot.slane %v7212, %v7225
        %v7227 = vcombine.low %v7219, %v7226
        %v7228 = vcombine.low %v6812, %v6820
        %v7229 = vcombine.low %v6819, %v6821
        %v7231 = vunpack.c.l.s4 1983009808
        %v7232 = vunpack.c.0.s8 %v7231
        %v7233 = vlaneseq
        %v7234 = vshrl.u32 %v7233, 7
        %v7235 = vsub.s32 %v7232, %v7234
        %v7236 = vrot.slane %v7228, %v7235
        %v7238 = vunpack.c.l.s4 1983009808
        %v7239 = vunpack.c.0.s8 %v7238
        %v7240 = vlaneseq
        %v7241 = vshrl.u32 %v7240, 7
        %v7242 = vsub.s32 %v7239, %v7241
        %v7243 = vrot.slane %v7229, %v7242
        %v7244 = vcombine.low %v7236, %v7243
        %v7245 = vcombine.low %v6829, %v6837
        %v7246 = vcombine.low %v6836, %v6845
        %v7248 = vunpack.c.l.s4 1983009808
        %v7249 = vunpack.c.0.s8 %v7248
        %v7250 = vlaneseq
        %v7251 = vshrl.u32 %v7250, 7
        %v7252 = vsub.s32 %v7249, %v7251
        %v7253 = vrot.slane %v7245, %v7252
        %v7255 = vunpack.c.l.s4 1983009808
        %v7256 = vunpack.c.0.s8 %v7255
        %v7257 = vlaneseq
        %v7258 = vshrl.u32 %v7257, 7
        %v7259 = vsub.s32 %v7256, %v7258
        %v7260 = vrot.slane %v7246, %v7259
        %v7261 = vcombine.low %v7253, %v7260
        %v7262 = vcombine.low %v6853, %v6852
        %v7263 = vcombine.low %v6854, %v6862
        %v7265 = vunpack.c.l.s4 1983009808
        %v7266 = vunpack.c.0.s8 %v7265
        %v7267 = vlaneseq
        %v7268 = vshrl.u32 %v7267, 7
        %v7269 = vsub.s32 %v7266, %v7268
        %v7270 = vrot.slane %v7262, %v7269
        %v7272 = vunpack.c.l.s4 1983009808
        %v7273 = vunpack.c.0.s8 %v7272
        %v7274 = vlaneseq
        %v7275 = vshrl.u32 %v7274, 7
        %v7276 = vsub.s32 %v7273, %v7275
        %v7277 = vrot.slane %v7263, %v7276
        %v7278 = vcombine.low %v7270, %v7277
        %v7279 = vcombine.low %v6870, %v6869
        %v7281 = vunpack.c.l.s4 1983009808
        %v7282 = vunpack.c.0.s8 %v7281
        %v7283 = vlaneseq
        %v7284 = vshrl.u32 %v7283, 7
        %v7285 = vsub.s32 %v7282, %v7284
        %v7286 = vrot.slane %v7279, %v7285
        %7287 = vrot.lane.b32.xlu0 %v6887, 24
        %v7288 = vpop.permute.xlu0 %7287
        %7289 = vrot.lane.b32.xlu0 %v6904, 24
        %v7290 = vpop.permute.xlu0 %7289
        %7291 = vrot.lane.b32.xlu0 %v6921, 24
        %v7292 = vpop.permute.xlu0 %7291
        %7293 = vrot.lane.b32.xlu0 %v6938, 24
        %v7294 = vpop.permute.xlu0 %7293
        %7295 = vrot.lane.b32.xlu0 %v6955, 24
        %v7296 = vpop.permute.xlu0 %7295
        %7297 = vrot.lane.b32.xlu0 %v6972, 24
        %v7298 = vpop.permute.xlu0 %7297
        %7299 = vrot.lane.b32.xlu0 %v6989, 24
        %v7300 = vpop.permute.xlu0 %7299
        %7301 = vrot.lane.b32.xlu0 %v7006, 24
        %v7302 = vpop.permute.xlu0 %7301
        %7303 = vrot.lane.b32.xlu0 %v7023, 24
        %v7304 = vpop.permute.xlu0 %7303
        %7305 = vrot.lane.b32.xlu0 %v7040, 24
        %v7306 = vpop.permute.xlu0 %7305
        %7307 = vrot.lane.b32.xlu0 %v7057, 24
        %v7308 = vpop.permute.xlu0 %7307
        %7309 = vrot.lane.b32.xlu0 %v7074, 24
        %v7310 = vpop.permute.xlu0 %7309
        %7311 = vrot.lane.b32.xlu0 %v7091, 24
        %v7312 = vpop.permute.xlu0 %7311
        %7313 = vrot.lane.b32.xlu0 %v7108, 24
        %v7314 = vpop.permute.xlu0 %7313
        %7315 = vrot.lane.b32.xlu0 %v7125, 24
        %v7316 = vpop.permute.xlu0 %7315
        %7317 = vrot.lane.b32.xlu0 %v7142, 24
        %v7318 = vpop.permute.xlu0 %7317
        %7319 = vrot.lane.b32.xlu0 %v7159, 24
        %v7320 = vpop.permute.xlu0 %7319
        %7321 = vrot.lane.b32.xlu0 %v7176, 24
        %v7322 = vpop.permute.xlu0 %7321
        %7323 = vrot.lane.b32.xlu0 %v7193, 24
        %v7324 = vpop.permute.xlu0 %7323
        %7325 = vrot.lane.b32.xlu0 %v7210, 24
        %v7326 = vpop.permute.xlu0 %7325
        %7327 = vrot.lane.b32.xlu0 %v7227, 24
        %v7328 = vpop.permute.xlu0 %7327
        %7329 = vrot.lane.b32.xlu0 %v7244, 24
        %v7330 = vpop.permute.xlu0 %7329
        %7331 = vrot.lane.b32.xlu0 %v7261, 24
        %v7332 = vpop.permute.xlu0 %7331
        %7333 = vrot.lane.b32.xlu0 %v7278, 24
        %v7334 = vpop.permute.xlu0 %7333
        %7335 = vrot.lane.b32.xlu0 %v7286, 24
        %v7336 = vpop.permute.xlu0 %7335
        %vm7362 = vcmask 228544
        %7363 = vst.msk [vmem:[#allocation2] sm:$0xff] %vm7362, %v7288
        %7364 = vst.msk [vmem:[#allocation2 + $0x8] sm:$0xff] %vm7362, %v7290
        %7365 = vst.msk [vmem:[#allocation2 + $0x10] sm:$0xff] %vm7362, %v7292
        %7366 = vst.msk [vmem:[#allocation2 + $0x18] sm:$0xff] %vm7362, %v7294
        %7367 = vst.msk [vmem:[#allocation2 + $0x20] sm:$0xff] %vm7362, %v7296
        %7368 = vst.msk [vmem:[#allocation2 + $0x28] sm:$0xff] %vm7362, %v7298
        %7369 = vst.msk [vmem:[#allocation2 + $0x30] sm:$0xff] %vm7362, %v7300
        %7370 = vst.msk [vmem:[#allocation2 + $0x38] sm:$0xff] %vm7362, %v7302
        %7371 = vst.msk [vmem:[#allocation2 + $0x40] sm:$0xff] %vm7362, %v7304
        %7372 = vst.msk [vmem:[#allocation2 + $0x48] sm:$0xff] %vm7362, %v7306
        %7373 = vst.msk [vmem:[#allocation2 + $0x50] sm:$0xff] %vm7362, %v7308
        %7374 = vst.msk [vmem:[#allocation2 + $0x58] sm:$0xff] %vm7362, %v7310
        %7375 = vst.msk [vmem:[#allocation2 + $0x60] sm:$0xff] %vm7362, %v7312
        %7376 = vst.msk [vmem:[#allocation2 + $0x68] sm:$0xff] %vm7362, %v7314
        %7377 = vst.msk [vmem:[#allocation2 + $0x70] sm:$0xff] %vm7362, %v7316
        %7378 = vst.msk [vmem:[#allocation2 + $0x78] sm:$0xff] %vm7362, %v7318
        %7379 = vst.msk [vmem:[#allocation2 + $0x80] sm:$0xff] %vm7362, %v7320
        %7380 = vst.msk [vmem:[#allocation2 + $0x88] sm:$0xff] %vm7362, %v7322
        %7381 = vst.msk [vmem:[#allocation2 + $0x90] sm:$0xff] %vm7362, %v7324
        %7382 = vst.msk [vmem:[#allocation2 + $0x98] sm:$0xff] %vm7362, %v7326
        %7383 = vst.msk [vmem:[#allocation2 + $0xa0] sm:$0xff] %vm7362, %v7328
        %7384 = vst.msk [vmem:[#allocation2 + $0xa8] sm:$0xff] %vm7362, %v7330
        %7385 = vst.msk [vmem:[#allocation2 + $0xb0] sm:$0xff] %vm7362, %v7332
        %7386 = vst.msk [vmem:[#allocation2 + $0xb8] sm:$0xff] %vm7362, %v7334
        %vm7387 = vcmask 224448
        %7388 = vst.msk [vmem:[#allocation2 + $0xc0] sm:$0xf] %vm7387, %v7336
        %v7389 = vld [vmem:[%s6352 + $0x1] sm:$0xff]
        %v7390 = vld [vmem:[%s6352 + $0x9] sm:$0x3f]
        %v7391 = vld [vmem:[%s6352 + $0x11] sm:$0xff]
        %v7392 = vld [vmem:[%s6352 + $0x19] sm:$0x3f]
        %v7393 = vld [vmem:[%s6352 + $0x21] sm:$0xff]
        %v7394 = vld [vmem:[%s6352 + $0x29] sm:$0x3f]
        %v7395 = vld [vmem:[%s6352 + $0x31] sm:$0xff]
        %v7396 = vld [vmem:[%s6352 + $0x39] sm:$0x3f]
        %v7397 = vld [vmem:[%s6352 + $0x41] sm:$0xff]
        %v7398 = vld [vmem:[%s6352 + $0x49] sm:$0x3f]
        %v7399 = vld [vmem:[%s6352 + $0x51] sm:$0xff]
        %v7400 = vld [vmem:[%s6352 + $0x59] sm:$0x3f]
        %v7401 = vld [vmem:[%s6352 + $0x61] sm:$0xff]
        %v7402 = vld [vmem:[%s6352 + $0x69] sm:$0x3f]
        %v7403 = vld [vmem:[%s6352 + $0x71] sm:$0xff]
        %v7404 = vld [vmem:[%s6352 + $0x79] sm:$0x3f]
        %v7405 = vld [vmem:[%s6352 + $0x81] sm:$0xff]
        %v7406 = vld [vmem:[%s6352 + $0x89] sm:$0x3f]
        %v7407 = vld [vmem:[%s6352 + $0x91] sm:$0xff]
        %v7408 = vld [vmem:[%s6352 + $0x99] sm:$0x3f]
        %v7409 = vld [vmem:[%s6352 + $0xa1] sm:$0xff]
        %v7410 = vld [vmem:[%s6352 + $0xa9] sm:$0x3f]
        %v7411 = vld [vmem:[%s6352 + $0xb1] sm:$0xff]
        %v7412 = vld [vmem:[%s6352 + $0xb9] sm:$0x3f]
        %v7413 = vld [vmem:[%s6352 + $0xc1] sm:$0xff]
        %v7414 = vld [vmem:[%s6352 + $0xc9] sm:$0x3f]
        %v7415 = vld [vmem:[%s6352 + $0xd1] sm:$0xff]
        %v7416 = vld [vmem:[%s6352 + $0xd9] sm:$0x3f]
        %v7445 = vcombine.high %v7389, %v7389
        %v7447 = vunpack.c.l.s4 1983009808
        %v7448 = vunpack.c.0.s8 %v7447
        %v7449 = vlaneseq
        %v7450 = vshrl.u32 %v7449, 7
        %v7451 = vsub.s32 %v7448, %v7450
        %v7452 = vrot.slane %v7389, %v7451
        %v7454 = vunpack.c.l.s4 1983009808
        %v7455 = vunpack.c.0.s8 %v7454
        %v7456 = vlaneseq
        %v7457 = vshrl.u32 %v7456, 7
        %v7458 = vsub.s32 %v7455, %v7457
        %v7459 = vrot.slane %v7445, %v7458
        %v7460 = vcombine.high %v7452, %v7452
        %v7461 = vcombine.high %v7459, %v7459
        %v7462 = vcombine.high %v7390, %v7390
        %v7464 = vunpack.c.l.s4 1983009808
        %v7465 = vunpack.c.0.s8 %v7464
        %v7466 = vlaneseq
        %v7467 = vshrl.u32 %v7466, 7
        %v7468 = vsub.s32 %v7465, %v7467
        %v7469 = vrot.slane %v7390, %v7468
        %v7471 = vunpack.c.l.s4 1983009808
        %v7472 = vunpack.c.0.s8 %v7471
        %v7473 = vlaneseq
        %v7474 = vshrl.u32 %v7473, 7
        %v7475 = vsub.s32 %v7472, %v7474
        %v7476 = vrot.slane %v7462, %v7475
        %v7477 = vcombine.high %v7469, %v7469
        %v7478 = vcombine.high %v7391, %v7391
        %v7480 = vunpack.c.l.s4 1983009808
        %v7481 = vunpack.c.0.s8 %v7480
        %v7482 = vlaneseq
        %v7483 = vshrl.u32 %v7482, 7
        %v7484 = vsub.s32 %v7481, %v7483
        %v7485 = vrot.slane %v7391, %v7484
        %v7487 = vunpack.c.l.s4 1983009808
        %v7488 = vunpack.c.0.s8 %v7487
        %v7489 = vlaneseq
        %v7490 = vshrl.u32 %v7489, 7
        %v7491 = vsub.s32 %v7488, %v7490
        %v7492 = vrot.slane %v7478, %v7491
        %v7493 = vcombine.high %v7485, %v7485
        %v7494 = vcombine.high %v7492, %v7492
        %v7495 = vcombine.high %v7392, %v7392
        %v7497 = vunpack.c.l.s4 1983009808
        %v7498 = vunpack.c.0.s8 %v7497
        %v7499 = vlaneseq
        %v7500 = vshrl.u32 %v7499, 7
        %v7501 = vsub.s32 %v7498, %v7500
        %v7502 = vrot.slane %v7392, %v7501
        %v7504 = vunpack.c.l.s4 1983009808
        %v7505 = vunpack.c.0.s8 %v7504
        %v7506 = vlaneseq
        %v7507 = vshrl.u32 %v7506, 7
        %v7508 = vsub.s32 %v7505, %v7507
        %v7509 = vrot.slane %v7495, %v7508
        %v7510 = vcombine.high %v7502, %v7502
        %v7511 = vcombine.high %v7393, %v7393
        %v7513 = vunpack.c.l.s4 1983009808
        %v7514 = vunpack.c.0.s8 %v7513
        %v7515 = vlaneseq
        %v7516 = vshrl.u32 %v7515, 7
        %v7517 = vsub.s32 %v7514, %v7516
        %v7518 = vrot.slane %v7393, %v7517
        %v7520 = vunpack.c.l.s4 1983009808
        %v7521 = vunpack.c.0.s8 %v7520
        %v7522 = vlaneseq
        %v7523 = vshrl.u32 %v7522, 7
        %v7524 = vsub.s32 %v7521, %v7523
        %v7525 = vrot.slane %v7511, %v7524
        %v7526 = vcombine.high %v7518, %v7518
        %v7527 = vcombine.high %v7525, %v7525
        %v7528 = vcombine.high %v7394, %v7394
        %v7530 = vunpack.c.l.s4 1983009808
        %v7531 = vunpack.c.0.s8 %v7530
        %v7532 = vlaneseq
        %v7533 = vshrl.u32 %v7532, 7
        %v7534 = vsub.s32 %v7531, %v7533
        %v7535 = vrot.slane %v7394, %v7534
        %v7537 = vunpack.c.l.s4 1983009808
        %v7538 = vunpack.c.0.s8 %v7537
        %v7539 = vlaneseq
        %v7540 = vshrl.u32 %v7539, 7
        %v7541 = vsub.s32 %v7538, %v7540
        %v7542 = vrot.slane %v7528, %v7541
        %v7543 = vcombine.high %v7535, %v7535
        %v7544 = vcombine.high %v7395, %v7395
        %v7546 = vunpack.c.l.s4 1983009808
        %v7547 = vunpack.c.0.s8 %v7546
        %v7548 = vlaneseq
        %v7549 = vshrl.u32 %v7548, 7
        %v7550 = vsub.s32 %v7547, %v7549
        %v7551 = vrot.slane %v7395, %v7550
        %v7553 = vunpack.c.l.s4 1983009808
        %v7554 = vunpack.c.0.s8 %v7553
        %v7555 = vlaneseq
        %v7556 = vshrl.u32 %v7555, 7
        %v7557 = vsub.s32 %v7554, %v7556
        %v7558 = vrot.slane %v7544, %v7557
        %v7559 = vcombine.high %v7551, %v7551
        %v7560 = vcombine.high %v7558, %v7558
        %v7561 = vcombine.high %v7396, %v7396
        %v7563 = vunpack.c.l.s4 1983009808
        %v7564 = vunpack.c.0.s8 %v7563
        %v7565 = vlaneseq
        %v7566 = vshrl.u32 %v7565, 7
        %v7567 = vsub.s32 %v7564, %v7566
        %v7568 = vrot.slane %v7396, %v7567
        %v7570 = vunpack.c.l.s4 1983009808
        %v7571 = vunpack.c.0.s8 %v7570
        %v7572 = vlaneseq
        %v7573 = vshrl.u32 %v7572, 7
        %v7574 = vsub.s32 %v7571, %v7573
        %v7575 = vrot.slane %v7561, %v7574
        %v7576 = vcombine.high %v7568, %v7568
        %v7577 = vcombine.high %v7397, %v7397
        %v7579 = vunpack.c.l.s4 1983009808
        %v7580 = vunpack.c.0.s8 %v7579
        %v7581 = vlaneseq
        %v7582 = vshrl.u32 %v7581, 7
        %v7583 = vsub.s32 %v7580, %v7582
        %v7584 = vrot.slane %v7397, %v7583
        %v7586 = vunpack.c.l.s4 1983009808
        %v7587 = vunpack.c.0.s8 %v7586
        %v7588 = vlaneseq
        %v7589 = vshrl.u32 %v7588, 7
        %v7590 = vsub.s32 %v7587, %v7589
        %v7591 = vrot.slane %v7577, %v7590
        %v7592 = vcombine.high %v7584, %v7584
        %v7593 = vcombine.high %v7591, %v7591
        %v7594 = vcombine.high %v7398, %v7398
        %v7596 = vunpack.c.l.s4 1983009808
        %v7597 = vunpack.c.0.s8 %v7596
        %v7598 = vlaneseq
        %v7599 = vshrl.u32 %v7598, 7
        %v7600 = vsub.s32 %v7597, %v7599
        %v7601 = vrot.slane %v7398, %v7600
        %v7603 = vunpack.c.l.s4 1983009808
        %v7604 = vunpack.c.0.s8 %v7603
        %v7605 = vlaneseq
        %v7606 = vshrl.u32 %v7605, 7
        %v7607 = vsub.s32 %v7604, %v7606
        %v7608 = vrot.slane %v7594, %v7607
        %v7609 = vcombine.high %v7601, %v7601
        %v7610 = vcombine.high %v7399, %v7399
        %v7612 = vunpack.c.l.s4 1983009808
        %v7613 = vunpack.c.0.s8 %v7612
        %v7614 = vlaneseq
        %v7615 = vshrl.u32 %v7614, 7
        %v7616 = vsub.s32 %v7613, %v7615
        %v7617 = vrot.slane %v7399, %v7616
        %v7619 = vunpack.c.l.s4 1983009808
        %v7620 = vunpack.c.0.s8 %v7619
        %v7621 = vlaneseq
        %v7622 = vshrl.u32 %v7621, 7
        %v7623 = vsub.s32 %v7620, %v7622
        %v7624 = vrot.slane %v7610, %v7623
        %v7625 = vcombine.high %v7617, %v7617
        %v7626 = vcombine.high %v7624, %v7624
        %v7627 = vcombine.high %v7400, %v7400
        %v7629 = vunpack.c.l.s4 1983009808
        %v7630 = vunpack.c.0.s8 %v7629
        %v7631 = vlaneseq
        %v7632 = vshrl.u32 %v7631, 7
        %v7633 = vsub.s32 %v7630, %v7632
        %v7634 = vrot.slane %v7400, %v7633
        %v7636 = vunpack.c.l.s4 1983009808
        %v7637 = vunpack.c.0.s8 %v7636
        %v7638 = vlaneseq
        %v7639 = vshrl.u32 %v7638, 7
        %v7640 = vsub.s32 %v7637, %v7639
        %v7641 = vrot.slane %v7627, %v7640
        %v7642 = vcombine.high %v7634, %v7634
        %v7643 = vcombine.high %v7401, %v7401
        %v7645 = vunpack.c.l.s4 1983009808
        %v7646 = vunpack.c.0.s8 %v7645
        %v7647 = vlaneseq
        %v7648 = vshrl.u32 %v7647, 7
        %v7649 = vsub.s32 %v7646, %v7648
        %v7650 = vrot.slane %v7401, %v7649
        %v7652 = vunpack.c.l.s4 1983009808
        %v7653 = vunpack.c.0.s8 %v7652
        %v7654 = vlaneseq
        %v7655 = vshrl.u32 %v7654, 7
        %v7656 = vsub.s32 %v7653, %v7655
        %v7657 = vrot.slane %v7643, %v7656
        %v7658 = vcombine.high %v7650, %v7650
        %v7659 = vcombine.high %v7657, %v7657
        %v7660 = vcombine.high %v7402, %v7402
        %v7662 = vunpack.c.l.s4 1983009808
        %v7663 = vunpack.c.0.s8 %v7662
        %v7664 = vlaneseq
        %v7665 = vshrl.u32 %v7664, 7
        %v7666 = vsub.s32 %v7663, %v7665
        %v7667 = vrot.slane %v7402, %v7666
        %v7669 = vunpack.c.l.s4 1983009808
        %v7670 = vunpack.c.0.s8 %v7669
        %v7671 = vlaneseq
        %v7672 = vshrl.u32 %v7671, 7
        %v7673 = vsub.s32 %v7670, %v7672
        %v7674 = vrot.slane %v7660, %v7673
        %v7675 = vcombine.high %v7667, %v7667
        %v7676 = vcombine.high %v7403, %v7403
        %v7678 = vunpack.c.l.s4 1983009808
        %v7679 = vunpack.c.0.s8 %v7678
        %v7680 = vlaneseq
        %v7681 = vshrl.u32 %v7680, 7
        %v7682 = vsub.s32 %v7679, %v7681
        %v7683 = vrot.slane %v7403, %v7682
        %v7685 = vunpack.c.l.s4 1983009808
        %v7686 = vunpack.c.0.s8 %v7685
        %v7687 = vlaneseq
        %v7688 = vshrl.u32 %v7687, 7
        %v7689 = vsub.s32 %v7686, %v7688
        %v7690 = vrot.slane %v7676, %v7689
        %v7691 = vcombine.high %v7683, %v7683
        %v7692 = vcombine.high %v7690, %v7690
        %v7693 = vcombine.high %v7404, %v7404
        %v7695 = vunpack.c.l.s4 1983009808
        %v7696 = vunpack.c.0.s8 %v7695
        %v7697 = vlaneseq
        %v7698 = vshrl.u32 %v7697, 7
        %v7699 = vsub.s32 %v7696, %v7698
        %v7700 = vrot.slane %v7404, %v7699
        %v7702 = vunpack.c.l.s4 1983009808
        %v7703 = vunpack.c.0.s8 %v7702
        %v7704 = vlaneseq
        %v7705 = vshrl.u32 %v7704, 7
        %v7706 = vsub.s32 %v7703, %v7705
        %v7707 = vrot.slane %v7693, %v7706
        %v7708 = vcombine.high %v7700, %v7700
        %v7709 = vcombine.high %v7405, %v7405
        %v7711 = vunpack.c.l.s4 1983009808
        %v7712 = vunpack.c.0.s8 %v7711
        %v7713 = vlaneseq
        %v7714 = vshrl.u32 %v7713, 7
        %v7715 = vsub.s32 %v7712, %v7714
        %v7716 = vrot.slane %v7405, %v7715
        %v7718 = vunpack.c.l.s4 1983009808
        %v7719 = vunpack.c.0.s8 %v7718
        %v7720 = vlaneseq
        %v7721 = vshrl.u32 %v7720, 7
        %v7722 = vsub.s32 %v7719, %v7721
        %v7723 = vrot.slane %v7709, %v7722
        %v7724 = vcombine.high %v7716, %v7716
        %v7725 = vcombine.high %v7723, %v7723
        %v7726 = vcombine.high %v7406, %v7406
        %v7728 = vunpack.c.l.s4 1983009808
        %v7729 = vunpack.c.0.s8 %v7728
        %v7730 = vlaneseq
        %v7731 = vshrl.u32 %v7730, 7
        %v7732 = vsub.s32 %v7729, %v7731
        %v7733 = vrot.slane %v7406, %v7732
        %v7735 = vunpack.c.l.s4 1983009808
        %v7736 = vunpack.c.0.s8 %v7735
        %v7737 = vlaneseq
        %v7738 = vshrl.u32 %v7737, 7
        %v7739 = vsub.s32 %v7736, %v7738
        %v7740 = vrot.slane %v7726, %v7739
        %v7741 = vcombine.high %v7733, %v7733
        %v7742 = vcombine.high %v7407, %v7407
        %v7744 = vunpack.c.l.s4 1983009808
        %v7745 = vunpack.c.0.s8 %v7744
        %v7746 = vlaneseq
        %v7747 = vshrl.u32 %v7746, 7
        %v7748 = vsub.s32 %v7745, %v7747
        %v7749 = vrot.slane %v7407, %v7748
        %v7751 = vunpack.c.l.s4 1983009808
        %v7752 = vunpack.c.0.s8 %v7751
        %v7753 = vlaneseq
        %v7754 = vshrl.u32 %v7753, 7
        %v7755 = vsub.s32 %v7752, %v7754
        %v7756 = vrot.slane %v7742, %v7755
        %v7757 = vcombine.high %v7749, %v7749
        %v7758 = vcombine.high %v7756, %v7756
        %v7759 = vcombine.high %v7408, %v7408
        %v7761 = vunpack.c.l.s4 1983009808
        %v7762 = vunpack.c.0.s8 %v7761
        %v7763 = vlaneseq
        %v7764 = vshrl.u32 %v7763, 7
        %v7765 = vsub.s32 %v7762, %v7764
        %v7766 = vrot.slane %v7408, %v7765
        %v7768 = vunpack.c.l.s4 1983009808
        %v7769 = vunpack.c.0.s8 %v7768
        %v7770 = vlaneseq
        %v7771 = vshrl.u32 %v7770, 7
        %v7772 = vsub.s32 %v7769, %v7771
        %v7773 = vrot.slane %v7759, %v7772
        %v7774 = vcombine.high %v7766, %v7766
        %v7775 = vcombine.high %v7409, %v7409
        %v7777 = vunpack.c.l.s4 1983009808
        %v7778 = vunpack.c.0.s8 %v7777
        %v7779 = vlaneseq
        %v7780 = vshrl.u32 %v7779, 7
        %v7781 = vsub.s32 %v7778, %v7780
        %v7782 = vrot.slane %v7409, %v7781
        %v7784 = vunpack.c.l.s4 1983009808
        %v7785 = vunpack.c.0.s8 %v7784
        %v7786 = vlaneseq
        %v7787 = vshrl.u32 %v7786, 7
        %v7788 = vsub.s32 %v7785, %v7787
        %v7789 = vrot.slane %v7775, %v7788
        %v7790 = vcombine.high %v7782, %v7782
        %v7791 = vcombine.high %v7789, %v7789
        %v7792 = vcombine.high %v7410, %v7410
        %v7794 = vunpack.c.l.s4 1983009808
        %v7795 = vunpack.c.0.s8 %v7794
        %v7796 = vlaneseq
        %v7797 = vshrl.u32 %v7796, 7
        %v7798 = vsub.s32 %v7795, %v7797
        %v7799 = vrot.slane %v7410, %v7798
        %v7801 = vunpack.c.l.s4 1983009808
        %v7802 = vunpack.c.0.s8 %v7801
        %v7803 = vlaneseq
        %v7804 = vshrl.u32 %v7803, 7
        %v7805 = vsub.s32 %v7802, %v7804
        %v7806 = vrot.slane %v7792, %v7805
        %v7807 = vcombine.high %v7799, %v7799
        %v7808 = vcombine.high %v7411, %v7411
        %v7810 = vunpack.c.l.s4 1983009808
        %v7811 = vunpack.c.0.s8 %v7810
        %v7812 = vlaneseq
        %v7813 = vshrl.u32 %v7812, 7
        %v7814 = vsub.s32 %v7811, %v7813
        %v7815 = vrot.slane %v7411, %v7814
        %v7817 = vunpack.c.l.s4 1983009808
        %v7818 = vunpack.c.0.s8 %v7817
        %v7819 = vlaneseq
        %v7820 = vshrl.u32 %v7819, 7
        %v7821 = vsub.s32 %v7818, %v7820
        %v7822 = vrot.slane %v7808, %v7821
        %v7823 = vcombine.high %v7815, %v7815
        %v7824 = vcombine.high %v7822, %v7822
        %v7825 = vcombine.high %v7412, %v7412
        %v7827 = vunpack.c.l.s4 1983009808
        %v7828 = vunpack.c.0.s8 %v7827
        %v7829 = vlaneseq
        %v7830 = vshrl.u32 %v7829, 7
        %v7831 = vsub.s32 %v7828, %v7830
        %v7832 = vrot.slane %v7412, %v7831
        %v7834 = vunpack.c.l.s4 1983009808
        %v7835 = vunpack.c.0.s8 %v7834
        %v7836 = vlaneseq
        %v7837 = vshrl.u32 %v7836, 7
        %v7838 = vsub.s32 %v7835, %v7837
        %v7839 = vrot.slane %v7825, %v7838
        %v7840 = vcombine.high %v7832, %v7832
        %v7841 = vcombine.high %v7413, %v7413
        %v7843 = vunpack.c.l.s4 1983009808
        %v7844 = vunpack.c.0.s8 %v7843
        %v7845 = vlaneseq
        %v7846 = vshrl.u32 %v7845, 7
        %v7847 = vsub.s32 %v7844, %v7846
        %v7848 = vrot.slane %v7413, %v7847
        %v7850 = vunpack.c.l.s4 1983009808
        %v7851 = vunpack.c.0.s8 %v7850
        %v7852 = vlaneseq
        %v7853 = vshrl.u32 %v7852, 7
        %v7854 = vsub.s32 %v7851, %v7853
        %v7855 = vrot.slane %v7841, %v7854
        %v7856 = vcombine.high %v7848, %v7848
        %v7857 = vcombine.high %v7855, %v7855
        %v7858 = vcombine.high %v7414, %v7414
        %v7860 = vunpack.c.l.s4 1983009808
        %v7861 = vunpack.c.0.s8 %v7860
        %v7862 = vlaneseq
        %v7863 = vshrl.u32 %v7862, 7
        %v7864 = vsub.s32 %v7861, %v7863
        %v7865 = vrot.slane %v7414, %v7864
        %v7867 = vunpack.c.l.s4 1983009808
        %v7868 = vunpack.c.0.s8 %v7867
        %v7869 = vlaneseq
        %v7870 = vshrl.u32 %v7869, 7
        %v7871 = vsub.s32 %v7868, %v7870
        %v7872 = vrot.slane %v7858, %v7871
        %v7873 = vcombine.high %v7865, %v7865
        %v7874 = vcombine.high %v7415, %v7415
        %v7876 = vunpack.c.l.s4 1983009808
        %v7877 = vunpack.c.0.s8 %v7876
        %v7878 = vlaneseq
        %v7879 = vshrl.u32 %v7878, 7
        %v7880 = vsub.s32 %v7877, %v7879
        %v7881 = vrot.slane %v7415, %v7880
        %v7883 = vunpack.c.l.s4 1983009808
        %v7884 = vunpack.c.0.s8 %v7883
        %v7885 = vlaneseq
        %v7886 = vshrl.u32 %v7885, 7
        %v7887 = vsub.s32 %v7884, %v7886
        %v7888 = vrot.slane %v7874, %v7887
        %v7889 = vcombine.high %v7881, %v7881
        %v7890 = vcombine.high %v7888, %v7888
        %v7891 = vcombine.high %v7416, %v7416
        %v7893 = vunpack.c.l.s4 1983009808
        %v7894 = vunpack.c.0.s8 %v7893
        %v7895 = vlaneseq
        %v7896 = vshrl.u32 %v7895, 7
        %v7897 = vsub.s32 %v7894, %v7896
        %v7898 = vrot.slane %v7416, %v7897
        %v7900 = vunpack.c.l.s4 1983009808
        %v7901 = vunpack.c.0.s8 %v7900
        %v7902 = vlaneseq
        %v7903 = vshrl.u32 %v7902, 7
        %v7904 = vsub.s32 %v7901, %v7903
        %v7905 = vrot.slane %v7891, %v7904
        %v7906 = vcombine.high %v7898, %v7898
        %v7907 = vcombine.low %v7452, %v7460
        %v7908 = vcombine.low %v7459, %v7461
        %v7910 = vunpack.c.l.s4 1983009808
        %v7911 = vunpack.c.0.s8 %v7910
        %v7912 = vlaneseq
        %v7913 = vshrl.u32 %v7912, 7
        %v7914 = vsub.s32 %v7911, %v7913
        %v7915 = vrot.slane %v7907, %v7914
        %v7917 = vunpack.c.l.s4 1983009808
        %v7918 = vunpack.c.0.s8 %v7917
        %v7919 = vlaneseq
        %v7920 = vshrl.u32 %v7919, 7
        %v7921 = vsub.s32 %v7918, %v7920
        %v7922 = vrot.slane %v7908, %v7921
        %v7923 = vcombine.low %v7915, %v7922
        %v7924 = vcombine.low %v7469, %v7477
        %v7925 = vcombine.low %v7476, %v7485
        %v7927 = vunpack.c.l.s4 1983009808
        %v7928 = vunpack.c.0.s8 %v7927
        %v7929 = vlaneseq
        %v7930 = vshrl.u32 %v7929, 7
        %v7931 = vsub.s32 %v7928, %v7930
        %v7932 = vrot.slane %v7924, %v7931
        %v7934 = vunpack.c.l.s4 1983009808
        %v7935 = vunpack.c.0.s8 %v7934
        %v7936 = vlaneseq
        %v7937 = vshrl.u32 %v7936, 7
        %v7938 = vsub.s32 %v7935, %v7937
        %v7939 = vrot.slane %v7925, %v7938
        %v7940 = vcombine.low %v7932, %v7939
        %v7941 = vcombine.low %v7493, %v7492
        %v7942 = vcombine.low %v7494, %v7502
        %v7944 = vunpack.c.l.s4 1983009808
        %v7945 = vunpack.c.0.s8 %v7944
        %v7946 = vlaneseq
        %v7947 = vshrl.u32 %v7946, 7
        %v7948 = vsub.s32 %v7945, %v7947
        %v7949 = vrot.slane %v7941, %v7948
        %v7951 = vunpack.c.l.s4 1983009808
        %v7952 = vunpack.c.0.s8 %v7951
        %v7953 = vlaneseq
        %v7954 = vshrl.u32 %v7953, 7
        %v7955 = vsub.s32 %v7952, %v7954
        %v7956 = vrot.slane %v7942, %v7955
        %v7957 = vcombine.low %v7949, %v7956
        %v7958 = vcombine.low %v7510, %v7509
        %v7959 = vcombine.low %v7518, %v7526
        %v7961 = vunpack.c.l.s4 1983009808
        %v7962 = vunpack.c.0.s8 %v7961
        %v7963 = vlaneseq
        %v7964 = vshrl.u32 %v7963, 7
        %v7965 = vsub.s32 %v7962, %v7964
        %v7966 = vrot.slane %v7958, %v7965
        %v7968 = vunpack.c.l.s4 1983009808
        %v7969 = vunpack.c.0.s8 %v7968
        %v7970 = vlaneseq
        %v7971 = vshrl.u32 %v7970, 7
        %v7972 = vsub.s32 %v7969, %v7971
        %v7973 = vrot.slane %v7959, %v7972
        %v7974 = vcombine.low %v7966, %v7973
        %v7975 = vcombine.low %v7525, %v7527
        %v7976 = vcombine.low %v7535, %v7543
        %v7978 = vunpack.c.l.s4 1983009808
        %v7979 = vunpack.c.0.s8 %v7978
        %v7980 = vlaneseq
        %v7981 = vshrl.u32 %v7980, 7
        %v7982 = vsub.s32 %v7979, %v7981
        %v7983 = vrot.slane %v7975, %v7982
        %v7985 = vunpack.c.l.s4 1983009808
        %v7986 = vunpack.c.0.s8 %v7985
        %v7987 = vlaneseq
        %v7988 = vshrl.u32 %v7987, 7
        %v7989 = vsub.s32 %v7986, %v7988
        %v7990 = vrot.slane %v7976, %v7989
        %v7991 = vcombine.low %v7983, %v7990
        %v7992 = vcombine.low %v7542, %v7551
        %v7993 = vcombine.low %v7559, %v7558
        %v7995 = vunpack.c.l.s4 1983009808
        %v7996 = vunpack.c.0.s8 %v7995
        %v7997 = vlaneseq
        %v7998 = vshrl.u32 %v7997, 7
        %v7999 = vsub.s32 %v7996, %v7998
        %v8000 = vrot.slane %v7992, %v7999
        %v8002 = vunpack.c.l.s4 1983009808
        %v8003 = vunpack.c.0.s8 %v8002
        %v8004 = vlaneseq
        %v8005 = vshrl.u32 %v8004, 7
        %v8006 = vsub.s32 %v8003, %v8005
        %v8007 = vrot.slane %v7993, %v8006
        %v8008 = vcombine.low %v8000, %v8007
        %v8009 = vcombine.low %v7560, %v7568
        %v8010 = vcombine.low %v7576, %v7575
        %v8012 = vunpack.c.l.s4 1983009808
        %v8013 = vunpack.c.0.s8 %v8012
        %v8014 = vlaneseq
        %v8015 = vshrl.u32 %v8014, 7
        %v8016 = vsub.s32 %v8013, %v8015
        %v8017 = vrot.slane %v8009, %v8016
        %v8019 = vunpack.c.l.s4 1983009808
        %v8020 = vunpack.c.0.s8 %v8019
        %v8021 = vlaneseq
        %v8022 = vshrl.u32 %v8021, 7
        %v8023 = vsub.s32 %v8020, %v8022
        %v8024 = vrot.slane %v8010, %v8023
        %v8025 = vcombine.low %v8017, %v8024
        %v8026 = vcombine.low %v7584, %v7592
        %v8027 = vcombine.low %v7591, %v7593
        %v8029 = vunpack.c.l.s4 1983009808
        %v8030 = vunpack.c.0.s8 %v8029
        %v8031 = vlaneseq
        %v8032 = vshrl.u32 %v8031, 7
        %v8033 = vsub.s32 %v8030, %v8032
        %v8034 = vrot.slane %v8026, %v8033
        %v8036 = vunpack.c.l.s4 1983009808
        %v8037 = vunpack.c.0.s8 %v8036
        %v8038 = vlaneseq
        %v8039 = vshrl.u32 %v8038, 7
        %v8040 = vsub.s32 %v8037, %v8039
        %v8041 = vrot.slane %v8027, %v8040
        %v8042 = vcombine.low %v8034, %v8041
        %v8043 = vcombine.low %v7601, %v7609
        %v8044 = vcombine.low %v7608, %v7617
        %v8046 = vunpack.c.l.s4 1983009808
        %v8047 = vunpack.c.0.s8 %v8046
        %v8048 = vlaneseq
        %v8049 = vshrl.u32 %v8048, 7
        %v8050 = vsub.s32 %v8047, %v8049
        %v8051 = vrot.slane %v8043, %v8050
        %v8053 = vunpack.c.l.s4 1983009808
        %v8054 = vunpack.c.0.s8 %v8053
        %v8055 = vlaneseq
        %v8056 = vshrl.u32 %v8055, 7
        %v8057 = vsub.s32 %v8054, %v8056
        %v8058 = vrot.slane %v8044, %v8057
        %v8059 = vcombine.low %v8051, %v8058
        %v8060 = vcombine.low %v7625, %v7624
        %v8061 = vcombine.low %v7626, %v7634
        %v8063 = vunpack.c.l.s4 1983009808
        %v8064 = vunpack.c.0.s8 %v8063
        %v8065 = vlaneseq
        %v8066 = vshrl.u32 %v8065, 7
        %v8067 = vsub.s32 %v8064, %v8066
        %v8068 = vrot.slane %v8060, %v8067
        %v8070 = vunpack.c.l.s4 1983009808
        %v8071 = vunpack.c.0.s8 %v8070
        %v8072 = vlaneseq
        %v8073 = vshrl.u32 %v8072, 7
        %v8074 = vsub.s32 %v8071, %v8073
        %v8075 = vrot.slane %v8061, %v8074
        %v8076 = vcombine.low %v8068, %v8075
        %v8077 = vcombine.low %v7642, %v7641
        %v8078 = vcombine.low %v7650, %v7658
        %v8080 = vunpack.c.l.s4 1983009808
        %v8081 = vunpack.c.0.s8 %v8080
        %v8082 = vlaneseq
        %v8083 = vshrl.u32 %v8082, 7
        %v8084 = vsub.s32 %v8081, %v8083
        %v8085 = vrot.slane %v8077, %v8084
        %v8087 = vunpack.c.l.s4 1983009808
        %v8088 = vunpack.c.0.s8 %v8087
        %v8089 = vlaneseq
        %v8090 = vshrl.u32 %v8089, 7
        %v8091 = vsub.s32 %v8088, %v8090
        %v8092 = vrot.slane %v8078, %v8091
        %v8093 = vcombine.low %v8085, %v8092
        %v8094 = vcombine.low %v7657, %v7659
        %v8095 = vcombine.low %v7667, %v7675
        %v8097 = vunpack.c.l.s4 1983009808
        %v8098 = vunpack.c.0.s8 %v8097
        %v8099 = vlaneseq
        %v8100 = vshrl.u32 %v8099, 7
        %v8101 = vsub.s32 %v8098, %v8100
        %v8102 = vrot.slane %v8094, %v8101
        %v8104 = vunpack.c.l.s4 1983009808
        %v8105 = vunpack.c.0.s8 %v8104
        %v8106 = vlaneseq
        %v8107 = vshrl.u32 %v8106, 7
        %v8108 = vsub.s32 %v8105, %v8107
        %v8109 = vrot.slane %v8095, %v8108
        %v8110 = vcombine.low %v8102, %v8109
        %v8111 = vcombine.low %v7674, %v7683
        %v8112 = vcombine.low %v7691, %v7690
        %v8114 = vunpack.c.l.s4 1983009808
        %v8115 = vunpack.c.0.s8 %v8114
        %v8116 = vlaneseq
        %v8117 = vshrl.u32 %v8116, 7
        %v8118 = vsub.s32 %v8115, %v8117
        %v8119 = vrot.slane %v8111, %v8118
        %v8121 = vunpack.c.l.s4 1983009808
        %v8122 = vunpack.c.0.s8 %v8121
        %v8123 = vlaneseq
        %v8124 = vshrl.u32 %v8123, 7
        %v8125 = vsub.s32 %v8122, %v8124
        %v8126 = vrot.slane %v8112, %v8125
        %v8127 = vcombine.low %v8119, %v8126
        %v8128 = vcombine.low %v7692, %v7700
        %v8129 = vcombine.low %v7708, %v7707
        %v8131 = vunpack.c.l.s4 1983009808
        %v8132 = vunpack.c.0.s8 %v8131
        %v8133 = vlaneseq
        %v8134 = vshrl.u32 %v8133, 7
        %v8135 = vsub.s32 %v8132, %v8134
        %v8136 = vrot.slane %v8128, %v8135
        %v8138 = vunpack.c.l.s4 1983009808
        %v8139 = vunpack.c.0.s8 %v8138
        %v8140 = vlaneseq
        %v8141 = vshrl.u32 %v8140, 7
        %v8142 = vsub.s32 %v8139, %v8141
        %v8143 = vrot.slane %v8129, %v8142
        %v8144 = vcombine.low %v8136, %v8143
        %v8145 = vcombine.low %v7716, %v7724
        %v8146 = vcombine.low %v7723, %v7725
        %v8148 = vunpack.c.l.s4 1983009808
        %v8149 = vunpack.c.0.s8 %v8148
        %v8150 = vlaneseq
        %v8151 = vshrl.u32 %v8150, 7
        %v8152 = vsub.s32 %v8149, %v8151
        %v8153 = vrot.slane %v8145, %v8152
        %v8155 = vunpack.c.l.s4 1983009808
        %v8156 = vunpack.c.0.s8 %v8155
        %v8157 = vlaneseq
        %v8158 = vshrl.u32 %v8157, 7
        %v8159 = vsub.s32 %v8156, %v8158
        %v8160 = vrot.slane %v8146, %v8159
        %v8161 = vcombine.low %v8153, %v8160
        %v8162 = vcombine.low %v7733, %v7741
        %v8163 = vcombine.low %v7740, %v7749
        %v8165 = vunpack.c.l.s4 1983009808
        %v8166 = vunpack.c.0.s8 %v8165
        %v8167 = vlaneseq
        %v8168 = vshrl.u32 %v8167, 7
        %v8169 = vsub.s32 %v8166, %v8168
        %v8170 = vrot.slane %v8162, %v8169
        %v8172 = vunpack.c.l.s4 1983009808
        %v8173 = vunpack.c.0.s8 %v8172
        %v8174 = vlaneseq
        %v8175 = vshrl.u32 %v8174, 7
        %v8176 = vsub.s32 %v8173, %v8175
        %v8177 = vrot.slane %v8163, %v8176
        %v8178 = vcombine.low %v8170, %v8177
        %v8179 = vcombine.low %v7757, %v7756
        %v8180 = vcombine.low %v7758, %v7766
        %v8182 = vunpack.c.l.s4 1983009808
        %v8183 = vunpack.c.0.s8 %v8182
        %v8184 = vlaneseq
        %v8185 = vshrl.u32 %v8184, 7
        %v8186 = vsub.s32 %v8183, %v8185
        %v8187 = vrot.slane %v8179, %v8186
        %v8189 = vunpack.c.l.s4 1983009808
        %v8190 = vunpack.c.0.s8 %v8189
        %v8191 = vlaneseq
        %v8192 = vshrl.u32 %v8191, 7
        %v8193 = vsub.s32 %v8190, %v8192
        %v8194 = vrot.slane %v8180, %v8193
        %v8195 = vcombine.low %v8187, %v8194
        %v8196 = vcombine.low %v7774, %v7773
        %v8197 = vcombine.low %v7782, %v7790
        %v8199 = vunpack.c.l.s4 1983009808
        %v8200 = vunpack.c.0.s8 %v8199
        %v8201 = vlaneseq
        %v8202 = vshrl.u32 %v8201, 7
        %v8203 = vsub.s32 %v8200, %v8202
        %v8204 = vrot.slane %v8196, %v8203
        %v8206 = vunpack.c.l.s4 1983009808
        %v8207 = vunpack.c.0.s8 %v8206
        %v8208 = vlaneseq
        %v8209 = vshrl.u32 %v8208, 7
        %v8210 = vsub.s32 %v8207, %v8209
        %v8211 = vrot.slane %v8197, %v8210
        %v8212 = vcombine.low %v8204, %v8211
        %v8213 = vcombine.low %v7789, %v7791
        %v8214 = vcombine.low %v7799, %v7807
        %v8216 = vunpack.c.l.s4 1983009808
        %v8217 = vunpack.c.0.s8 %v8216
        %v8218 = vlaneseq
        %v8219 = vshrl.u32 %v8218, 7
        %v8220 = vsub.s32 %v8217, %v8219
        %v8221 = vrot.slane %v8213, %v8220
        %v8223 = vunpack.c.l.s4 1983009808
        %v8224 = vunpack.c.0.s8 %v8223
        %v8225 = vlaneseq
        %v8226 = vshrl.u32 %v8225, 7
        %v8227 = vsub.s32 %v8224, %v8226
        %v8228 = vrot.slane %v8214, %v8227
        %v8229 = vcombine.low %v8221, %v8228
        %v8230 = vcombine.low %v7806, %v7815
        %v8231 = vcombine.low %v7823, %v7822
        %v8233 = vunpack.c.l.s4 1983009808
        %v8234 = vunpack.c.0.s8 %v8233
        %v8235 = vlaneseq
        %v8236 = vshrl.u32 %v8235, 7
        %v8237 = vsub.s32 %v8234, %v8236
        %v8238 = vrot.slane %v8230, %v8237
        %v8240 = vunpack.c.l.s4 1983009808
        %v8241 = vunpack.c.0.s8 %v8240
        %v8242 = vlaneseq
        %v8243 = vshrl.u32 %v8242, 7
        %v8244 = vsub.s32 %v8241, %v8243
        %v8245 = vrot.slane %v8231, %v8244
        %v8246 = vcombine.low %v8238, %v8245
        %v8247 = vcombine.low %v7824, %v7832
        %v8248 = vcombine.low %v7840, %v7839
        %v8250 = vunpack.c.l.s4 1983009808
        %v8251 = vunpack.c.0.s8 %v8250
        %v8252 = vlaneseq
        %v8253 = vshrl.u32 %v8252, 7
        %v8254 = vsub.s32 %v8251, %v8253
        %v8255 = vrot.slane %v8247, %v8254
        %v8257 = vunpack.c.l.s4 1983009808
        %v8258 = vunpack.c.0.s8 %v8257
        %v8259 = vlaneseq
        %v8260 = vshrl.u32 %v8259, 7
        %v8261 = vsub.s32 %v8258, %v8260
        %v8262 = vrot.slane %v8248, %v8261
        %v8263 = vcombine.low %v8255, %v8262
        %v8264 = vcombine.low %v7848, %v7856
        %v8265 = vcombine.low %v7855, %v7857
        %v8267 = vunpack.c.l.s4 1983009808
        %v8268 = vunpack.c.0.s8 %v8267
        %v8269 = vlaneseq
        %v8270 = vshrl.u32 %v8269, 7
        %v8271 = vsub.s32 %v8268, %v8270
        %v8272 = vrot.slane %v8264, %v8271
        %v8274 = vunpack.c.l.s4 1983009808
        %v8275 = vunpack.c.0.s8 %v8274
        %v8276 = vlaneseq
        %v8277 = vshrl.u32 %v8276, 7
        %v8278 = vsub.s32 %v8275, %v8277
        %v8279 = vrot.slane %v8265, %v8278
        %v8280 = vcombine.low %v8272, %v8279
        %v8281 = vcombine.low %v7865, %v7873
        %v8282 = vcombine.low %v7872, %v7881
        %v8284 = vunpack.c.l.s4 1983009808
        %v8285 = vunpack.c.0.s8 %v8284
        %v8286 = vlaneseq
        %v8287 = vshrl.u32 %v8286, 7
        %v8288 = vsub.s32 %v8285, %v8287
        %v8289 = vrot.slane %v8281, %v8288
        %v8291 = vunpack.c.l.s4 1983009808
        %v8292 = vunpack.c.0.s8 %v8291
        %v8293 = vlaneseq
        %v8294 = vshrl.u32 %v8293, 7
        %v8295 = vsub.s32 %v8292, %v8294
        %v8296 = vrot.slane %v8282, %v8295
        %v8297 = vcombine.low %v8289, %v8296
        %v8298 = vcombine.low %v7889, %v7888
        %v8299 = vcombine.low %v7890, %v7898
        %v8301 = vunpack.c.l.s4 1983009808
        %v8302 = vunpack.c.0.s8 %v8301
        %v8303 = vlaneseq
        %v8304 = vshrl.u32 %v8303, 7
        %v8305 = vsub.s32 %v8302, %v8304
        %v8306 = vrot.slane %v8298, %v8305
        %v8308 = vunpack.c.l.s4 1983009808
        %v8309 = vunpack.c.0.s8 %v8308
        %v8310 = vlaneseq
        %v8311 = vshrl.u32 %v8310, 7
        %v8312 = vsub.s32 %v8309, %v8311
        %v8313 = vrot.slane %v8299, %v8312
        %v8314 = vcombine.low %v8306, %v8313
        %v8315 = vcombine.low %v7906, %v7905
        %v8317 = vunpack.c.l.s4 1983009808
        %v8318 = vunpack.c.0.s8 %v8317
        %v8319 = vlaneseq
        %v8320 = vshrl.u32 %v8319, 7
        %v8321 = vsub.s32 %v8318, %v8320
        %v8322 = vrot.slane %v8315, %v8321
        %8323 = vrot.lane.b32.xlu0 %v7923, 28
        %v8324 = vpop.permute.xlu0 %8323
        %8325 = vrot.lane.b32.xlu0 %v7940, 28
        %v8326 = vpop.permute.xlu0 %8325
        %8327 = vrot.lane.b32.xlu0 %v7957, 28
        %v8328 = vpop.permute.xlu0 %8327
        %8329 = vrot.lane.b32.xlu0 %v7974, 28
        %v8330 = vpop.permute.xlu0 %8329
        %8331 = vrot.lane.b32.xlu0 %v7991, 28
        %v8332 = vpop.permute.xlu0 %8331
        %8333 = vrot.lane.b32.xlu0 %v8008, 28
        %v8334 = vpop.permute.xlu0 %8333
        %8335 = vrot.lane.b32.xlu0 %v8025, 28
        %v8336 = vpop.permute.xlu0 %8335
        %8337 = vrot.lane.b32.xlu0 %v8042, 28
        %v8338 = vpop.permute.xlu0 %8337
        %8339 = vrot.lane.b32.xlu0 %v8059, 28
        %v8340 = vpop.permute.xlu0 %8339
        %8341 = vrot.lane.b32.xlu0 %v8076, 28
        %v8342 = vpop.permute.xlu0 %8341
        %8343 = vrot.lane.b32.xlu0 %v8093, 28
        %v8344 = vpop.permute.xlu0 %8343
        %8345 = vrot.lane.b32.xlu0 %v8110, 28
        %v8346 = vpop.permute.xlu0 %8345
        %8347 = vrot.lane.b32.xlu0 %v8127, 28
        %v8348 = vpop.permute.xlu0 %8347
        %8349 = vrot.lane.b32.xlu0 %v8144, 28
        %v8350 = vpop.permute.xlu0 %8349
        %8351 = vrot.lane.b32.xlu0 %v8161, 28
        %v8352 = vpop.permute.xlu0 %8351
        %8353 = vrot.lane.b32.xlu0 %v8178, 28
        %v8354 = vpop.permute.xlu0 %8353
        %8355 = vrot.lane.b32.xlu0 %v8195, 28
        %v8356 = vpop.permute.xlu0 %8355
        %8357 = vrot.lane.b32.xlu0 %v8212, 28
        %v8358 = vpop.permute.xlu0 %8357
        %8359 = vrot.lane.b32.xlu0 %v8229, 28
        %v8360 = vpop.permute.xlu0 %8359
        %8361 = vrot.lane.b32.xlu0 %v8246, 28
        %v8362 = vpop.permute.xlu0 %8361
        %8363 = vrot.lane.b32.xlu0 %v8263, 28
        %v8364 = vpop.permute.xlu0 %8363
        %8365 = vrot.lane.b32.xlu0 %v8280, 28
        %v8366 = vpop.permute.xlu0 %8365
        %8367 = vrot.lane.b32.xlu0 %v8297, 28
        %v8368 = vpop.permute.xlu0 %8367
        %8369 = vrot.lane.b32.xlu0 %v8314, 28
        %v8370 = vpop.permute.xlu0 %8369
        %8371 = vrot.lane.b32.xlu0 %v8322, 28
        %v8372 = vpop.permute.xlu0 %8371
        %vm8398 = vcmask 261344
        %8399 = vst.msk [vmem:[#allocation2] sm:$0xff] %vm8398, %v8324
        %8400 = vst.msk [vmem:[#allocation2 + $0x8] sm:$0xff] %vm8398, %v8326
        %8401 = vst.msk [vmem:[#allocation2 + $0x10] sm:$0xff] %vm8398, %v8328
        %8402 = vst.msk [vmem:[#allocation2 + $0x18] sm:$0xff] %vm8398, %v8330
        %8403 = vst.msk [vmem:[#allocation2 + $0x20] sm:$0xff] %vm8398, %v8332
        %8404 = vst.msk [vmem:[#allocation2 + $0x28] sm:$0xff] %vm8398, %v8334
        %8405 = vst.msk [vmem:[#allocation2 + $0x30] sm:$0xff] %vm8398, %v8336
        %8406 = vst.msk [vmem:[#allocation2 + $0x38] sm:$0xff] %vm8398, %v8338
        %8407 = vst.msk [vmem:[#allocation2 + $0x40] sm:$0xff] %vm8398, %v8340
        %8408 = vst.msk [vmem:[#allocation2 + $0x48] sm:$0xff] %vm8398, %v8342
        %8409 = vst.msk [vmem:[#allocation2 + $0x50] sm:$0xff] %vm8398, %v8344
        %8410 = vst.msk [vmem:[#allocation2 + $0x58] sm:$0xff] %vm8398, %v8346
        %8411 = vst.msk [vmem:[#allocation2 + $0x60] sm:$0xff] %vm8398, %v8348
        %8412 = vst.msk [vmem:[#allocation2 + $0x68] sm:$0xff] %vm8398, %v8350
        %8413 = vst.msk [vmem:[#allocation2 + $0x70] sm:$0xff] %vm8398, %v8352
        %8414 = vst.msk [vmem:[#allocation2 + $0x78] sm:$0xff] %vm8398, %v8354
        %8415 = vst.msk [vmem:[#allocation2 + $0x80] sm:$0xff] %vm8398, %v8356
        %8416 = vst.msk [vmem:[#allocation2 + $0x88] sm:$0xff] %vm8398, %v8358
        %8417 = vst.msk [vmem:[#allocation2 + $0x90] sm:$0xff] %vm8398, %v8360
        %8418 = vst.msk [vmem:[#allocation2 + $0x98] sm:$0xff] %vm8398, %v8362
        %8419 = vst.msk [vmem:[#allocation2 + $0xa0] sm:$0xff] %vm8398, %v8364
        %8420 = vst.msk [vmem:[#allocation2 + $0xa8] sm:$0xff] %vm8398, %v8366
        %8421 = vst.msk [vmem:[#allocation2 + $0xb0] sm:$0xff] %vm8398, %v8368
        %8422 = vst.msk [vmem:[#allocation2 + $0xb8] sm:$0xff] %vm8398, %v8370
        %vm8423 = vcmask 257248
        %8424 = vst.msk [vmem:[#allocation2 + $0xc0] sm:$0xf] %vm8423, %v8372
        %v8425 = vld [vmem:[%s6352 + $0x2] sm:$0xff]
        %v8426 = vld [vmem:[%s6352 + $0xa] sm:$0x3f]
        %v8427 = vld [vmem:[%s6352 + $0x12] sm:$0xff]
        %v8428 = vld [vmem:[%s6352 + $0x1a] sm:$0x3f]
        %v8429 = vld [vmem:[%s6352 + $0x22] sm:$0xff]
        %v8430 = vld [vmem:[%s6352 + $0x2a] sm:$0x3f]
        %v8431 = vld [vmem:[%s6352 + $0x32] sm:$0xff]
        %v8432 = vld [vmem:[%s6352 + $0x3a] sm:$0x3f]
        %v8433 = vld [vmem:[%s6352 + $0x42] sm:$0xff]
        %v8434 = vld [vmem:[%s6352 + $0x4a] sm:$0x3f]
        %v8435 = vld [vmem:[%s6352 + $0x52] sm:$0xff]
        %v8436 = vld [vmem:[%s6352 + $0x5a] sm:$0x3f]
        %v8437 = vld [vmem:[%s6352 + $0x62] sm:$0xff]
        %v8438 = vld [vmem:[%s6352 + $0x6a] sm:$0x3f]
        %v8439 = vld [vmem:[%s6352 + $0x72] sm:$0xff]
        %v8440 = vld [vmem:[%s6352 + $0x7a] sm:$0x3f]
        %v8441 = vld [vmem:[%s6352 + $0x82] sm:$0xff]
        %v8442 = vld [vmem:[%s6352 + $0x8a] sm:$0x3f]
        %v8443 = vld [vmem:[%s6352 + $0x92] sm:$0xff]
        %v8444 = vld [vmem:[%s6352 + $0x9a] sm:$0x3f]
        %v8445 = vld [vmem:[%s6352 + $0xa2] sm:$0xff]
        %v8446 = vld [vmem:[%s6352 + $0xaa] sm:$0x3f]
        %v8447 = vld [vmem:[%s6352 + $0xb2] sm:$0xff]
        %v8448 = vld [vmem:[%s6352 + $0xba] sm:$0x3f]
        %v8449 = vld [vmem:[%s6352 + $0xc2] sm:$0xff]
        %v8450 = vld [vmem:[%s6352 + $0xca] sm:$0x3f]
        %v8451 = vld [vmem:[%s6352 + $0xd2] sm:$0xff]
        %v8452 = vld [vmem:[%s6352 + $0xda] sm:$0x3f]
        %v8481 = vcombine.high %v8425, %v8425
        %v8483 = vunpack.c.l.s4 1983009808
        %v8484 = vunpack.c.0.s8 %v8483
        %v8485 = vlaneseq
        %v8486 = vshrl.u32 %v8485, 7
        %v8487 = vsub.s32 %v8484, %v8486
        %v8488 = vrot.slane %v8425, %v8487
        %v8490 = vunpack.c.l.s4 1983009808
        %v8491 = vunpack.c.0.s8 %v8490
        %v8492 = vlaneseq
        %v8493 = vshrl.u32 %v8492, 7
        %v8494 = vsub.s32 %v8491, %v8493
        %v8495 = vrot.slane %v8481, %v8494
        %v8496 = vcombine.high %v8488, %v8488
        %v8497 = vcombine.high %v8495, %v8495
        %v8498 = vcombine.high %v8426, %v8426
        %v8500 = vunpack.c.l.s4 1983009808
        %v8501 = vunpack.c.0.s8 %v8500
        %v8502 = vlaneseq
        %v8503 = vshrl.u32 %v8502, 7
        %v8504 = vsub.s32 %v8501, %v8503
        %v8505 = vrot.slane %v8426, %v8504
        %v8507 = vunpack.c.l.s4 1983009808
        %v8508 = vunpack.c.0.s8 %v8507
        %v8509 = vlaneseq
        %v8510 = vshrl.u32 %v8509, 7
        %v8511 = vsub.s32 %v8508, %v8510
        %v8512 = vrot.slane %v8498, %v8511
        %v8513 = vcombine.high %v8505, %v8505
        %v8514 = vcombine.high %v8427, %v8427
        %v8516 = vunpack.c.l.s4 1983009808
        %v8517 = vunpack.c.0.s8 %v8516
        %v8518 = vlaneseq
        %v8519 = vshrl.u32 %v8518, 7
        %v8520 = vsub.s32 %v8517, %v8519
        %v8521 = vrot.slane %v8427, %v8520
        %v8523 = vunpack.c.l.s4 1983009808
        %v8524 = vunpack.c.0.s8 %v8523
        %v8525 = vlaneseq
        %v8526 = vshrl.u32 %v8525, 7
        %v8527 = vsub.s32 %v8524, %v8526
        %v8528 = vrot.slane %v8514, %v8527
        %v8529 = vcombine.high %v8521, %v8521
        %v8530 = vcombine.high %v8528, %v8528
        %v8531 = vcombine.high %v8428, %v8428
        %v8533 = vunpack.c.l.s4 1983009808
        %v8534 = vunpack.c.0.s8 %v8533
        %v8535 = vlaneseq
        %v8536 = vshrl.u32 %v8535, 7
        %v8537 = vsub.s32 %v8534, %v8536
        %v8538 = vrot.slane %v8428, %v8537
        %v8540 = vunpack.c.l.s4 1983009808
        %v8541 = vunpack.c.0.s8 %v8540
        %v8542 = vlaneseq
        %v8543 = vshrl.u32 %v8542, 7
        %v8544 = vsub.s32 %v8541, %v8543
        %v8545 = vrot.slane %v8531, %v8544
        %v8546 = vcombine.high %v8538, %v8538
        %v8547 = vcombine.high %v8429, %v8429
        %v8549 = vunpack.c.l.s4 1983009808
        %v8550 = vunpack.c.0.s8 %v8549
        %v8551 = vlaneseq
        %v8552 = vshrl.u32 %v8551, 7
        %v8553 = vsub.s32 %v8550, %v8552
        %v8554 = vrot.slane %v8429, %v8553
        %v8556 = vunpack.c.l.s4 1983009808
        %v8557 = vunpack.c.0.s8 %v8556
        %v8558 = vlaneseq
        %v8559 = vshrl.u32 %v8558, 7
        %v8560 = vsub.s32 %v8557, %v8559
        %v8561 = vrot.slane %v8547, %v8560
        %v8562 = vcombine.high %v8554, %v8554
        %v8563 = vcombine.high %v8561, %v8561
        %v8564 = vcombine.high %v8430, %v8430
        %v8566 = vunpack.c.l.s4 1983009808
        %v8567 = vunpack.c.0.s8 %v8566
        %v8568 = vlaneseq
        %v8569 = vshrl.u32 %v8568, 7
        %v8570 = vsub.s32 %v8567, %v8569
        %v8571 = vrot.slane %v8430, %v8570
        %v8573 = vunpack.c.l.s4 1983009808
        %v8574 = vunpack.c.0.s8 %v8573
        %v8575 = vlaneseq
        %v8576 = vshrl.u32 %v8575, 7
        %v8577 = vsub.s32 %v8574, %v8576
        %v8578 = vrot.slane %v8564, %v8577
        %v8579 = vcombine.high %v8571, %v8571
        %v8580 = vcombine.high %v8431, %v8431
        %v8582 = vunpack.c.l.s4 1983009808
        %v8583 = vunpack.c.0.s8 %v8582
        %v8584 = vlaneseq
        %v8585 = vshrl.u32 %v8584, 7
        %v8586 = vsub.s32 %v8583, %v8585
        %v8587 = vrot.slane %v8431, %v8586
        %v8589 = vunpack.c.l.s4 1983009808
        %v8590 = vunpack.c.0.s8 %v8589
        %v8591 = vlaneseq
        %v8592 = vshrl.u32 %v8591, 7
        %v8593 = vsub.s32 %v8590, %v8592
        %v8594 = vrot.slane %v8580, %v8593
        %v8595 = vcombine.high %v8587, %v8587
        %v8596 = vcombine.high %v8594, %v8594
        %v8597 = vcombine.high %v8432, %v8432
        %v8599 = vunpack.c.l.s4 1983009808
        %v8600 = vunpack.c.0.s8 %v8599
        %v8601 = vlaneseq
        %v8602 = vshrl.u32 %v8601, 7
        %v8603 = vsub.s32 %v8600, %v8602
        %v8604 = vrot.slane %v8432, %v8603
        %v8606 = vunpack.c.l.s4 1983009808
        %v8607 = vunpack.c.0.s8 %v8606
        %v8608 = vlaneseq
        %v8609 = vshrl.u32 %v8608, 7
        %v8610 = vsub.s32 %v8607, %v8609
        %v8611 = vrot.slane %v8597, %v8610
        %v8612 = vcombine.high %v8604, %v8604
        %v8613 = vcombine.high %v8433, %v8433
        %v8615 = vunpack.c.l.s4 1983009808
        %v8616 = vunpack.c.0.s8 %v8615
        %v8617 = vlaneseq
        %v8618 = vshrl.u32 %v8617, 7
        %v8619 = vsub.s32 %v8616, %v8618
        %v8620 = vrot.slane %v8433, %v8619
        %v8622 = vunpack.c.l.s4 1983009808
        %v8623 = vunpack.c.0.s8 %v8622
        %v8624 = vlaneseq
        %v8625 = vshrl.u32 %v8624, 7
        %v8626 = vsub.s32 %v8623, %v8625
        %v8627 = vrot.slane %v8613, %v8626
        %v8628 = vcombine.high %v8620, %v8620
        %v8629 = vcombine.high %v8627, %v8627
        %v8630 = vcombine.high %v8434, %v8434
        %v8632 = vunpack.c.l.s4 1983009808
        %v8633 = vunpack.c.0.s8 %v8632
        %v8634 = vlaneseq
        %v8635 = vshrl.u32 %v8634, 7
        %v8636 = vsub.s32 %v8633, %v8635
        %v8637 = vrot.slane %v8434, %v8636
        %v8639 = vunpack.c.l.s4 1983009808
        %v8640 = vunpack.c.0.s8 %v8639
        %v8641 = vlaneseq
        %v8642 = vshrl.u32 %v8641, 7
        %v8643 = vsub.s32 %v8640, %v8642
        %v8644 = vrot.slane %v8630, %v8643
        %v8645 = vcombine.high %v8637, %v8637
        %v8646 = vcombine.high %v8435, %v8435
        %v8648 = vunpack.c.l.s4 1983009808
        %v8649 = vunpack.c.0.s8 %v8648
        %v8650 = vlaneseq
        %v8651 = vshrl.u32 %v8650, 7
        %v8652 = vsub.s32 %v8649, %v8651
        %v8653 = vrot.slane %v8435, %v8652
        %v8655 = vunpack.c.l.s4 1983009808
        %v8656 = vunpack.c.0.s8 %v8655
        %v8657 = vlaneseq
        %v8658 = vshrl.u32 %v8657, 7
        %v8659 = vsub.s32 %v8656, %v8658
        %v8660 = vrot.slane %v8646, %v8659
        %v8661 = vcombine.high %v8653, %v8653
        %v8662 = vcombine.high %v8660, %v8660
        %v8663 = vcombine.high %v8436, %v8436
        %v8665 = vunpack.c.l.s4 1983009808
        %v8666 = vunpack.c.0.s8 %v8665
        %v8667 = vlaneseq
        %v8668 = vshrl.u32 %v8667, 7
        %v8669 = vsub.s32 %v8666, %v8668
        %v8670 = vrot.slane %v8436, %v8669
        %v8672 = vunpack.c.l.s4 1983009808
        %v8673 = vunpack.c.0.s8 %v8672
        %v8674 = vlaneseq
        %v8675 = vshrl.u32 %v8674, 7
        %v8676 = vsub.s32 %v8673, %v8675
        %v8677 = vrot.slane %v8663, %v8676
        %v8678 = vcombine.high %v8670, %v8670
        %v8679 = vcombine.high %v8437, %v8437
        %v8681 = vunpack.c.l.s4 1983009808
        %v8682 = vunpack.c.0.s8 %v8681
        %v8683 = vlaneseq
        %v8684 = vshrl.u32 %v8683, 7
        %v8685 = vsub.s32 %v8682, %v8684
        %v8686 = vrot.slane %v8437, %v8685
        %v8688 = vunpack.c.l.s4 1983009808
        %v8689 = vunpack.c.0.s8 %v8688
        %v8690 = vlaneseq
        %v8691 = vshrl.u32 %v8690, 7
        %v8692 = vsub.s32 %v8689, %v8691
        %v8693 = vrot.slane %v8679, %v8692
        %v8694 = vcombine.high %v8686, %v8686
        %v8695 = vcombine.high %v8693, %v8693
        %v8696 = vcombine.high %v8438, %v8438
        %v8698 = vunpack.c.l.s4 1983009808
        %v8699 = vunpack.c.0.s8 %v8698
        %v8700 = vlaneseq
        %v8701 = vshrl.u32 %v8700, 7
        %v8702 = vsub.s32 %v8699, %v8701
        %v8703 = vrot.slane %v8438, %v8702
        %v8705 = vunpack.c.l.s4 1983009808
        %v8706 = vunpack.c.0.s8 %v8705
        %v8707 = vlaneseq
        %v8708 = vshrl.u32 %v8707, 7
        %v8709 = vsub.s32 %v8706, %v8708
        %v8710 = vrot.slane %v8696, %v8709
        %v8711 = vcombine.high %v8703, %v8703
        %v8712 = vcombine.high %v8439, %v8439
        %v8714 = vunpack.c.l.s4 1983009808
        %v8715 = vunpack.c.0.s8 %v8714
        %v8716 = vlaneseq
        %v8717 = vshrl.u32 %v8716, 7
        %v8718 = vsub.s32 %v8715, %v8717
        %v8719 = vrot.slane %v8439, %v8718
        %v8721 = vunpack.c.l.s4 1983009808
        %v8722 = vunpack.c.0.s8 %v8721
        %v8723 = vlaneseq
        %v8724 = vshrl.u32 %v8723, 7
        %v8725 = vsub.s32 %v8722, %v8724
        %v8726 = vrot.slane %v8712, %v8725
        %v8727 = vcombine.high %v8719, %v8719
        %v8728 = vcombine.high %v8726, %v8726
        %v8729 = vcombine.high %v8440, %v8440
        %v8731 = vunpack.c.l.s4 1983009808
        %v8732 = vunpack.c.0.s8 %v8731
        %v8733 = vlaneseq
        %v8734 = vshrl.u32 %v8733, 7
        %v8735 = vsub.s32 %v8732, %v8734
        %v8736 = vrot.slane %v8440, %v8735
        %v8738 = vunpack.c.l.s4 1983009808
        %v8739 = vunpack.c.0.s8 %v8738
        %v8740 = vlaneseq
        %v8741 = vshrl.u32 %v8740, 7
        %v8742 = vsub.s32 %v8739, %v8741
        %v8743 = vrot.slane %v8729, %v8742
        %v8744 = vcombine.high %v8736, %v8736
        %v8745 = vcombine.high %v8441, %v8441
        %v8747 = vunpack.c.l.s4 1983009808
        %v8748 = vunpack.c.0.s8 %v8747
        %v8749 = vlaneseq
        %v8750 = vshrl.u32 %v8749, 7
        %v8751 = vsub.s32 %v8748, %v8750
        %v8752 = vrot.slane %v8441, %v8751
        %v8754 = vunpack.c.l.s4 1983009808
        %v8755 = vunpack.c.0.s8 %v8754
        %v8756 = vlaneseq
        %v8757 = vshrl.u32 %v8756, 7
        %v8758 = vsub.s32 %v8755, %v8757
        %v8759 = vrot.slane %v8745, %v8758
        %v8760 = vcombine.high %v8752, %v8752
        %v8761 = vcombine.high %v8759, %v8759
        %v8762 = vcombine.high %v8442, %v8442
        %v8764 = vunpack.c.l.s4 1983009808
        %v8765 = vunpack.c.0.s8 %v8764
        %v8766 = vlaneseq
        %v8767 = vshrl.u32 %v8766, 7
        %v8768 = vsub.s32 %v8765, %v8767
        %v8769 = vrot.slane %v8442, %v8768
        %v8771 = vunpack.c.l.s4 1983009808
        %v8772 = vunpack.c.0.s8 %v8771
        %v8773 = vlaneseq
        %v8774 = vshrl.u32 %v8773, 7
        %v8775 = vsub.s32 %v8772, %v8774
        %v8776 = vrot.slane %v8762, %v8775
        %v8777 = vcombine.high %v8769, %v8769
        %v8778 = vcombine.high %v8443, %v8443
        %v8780 = vunpack.c.l.s4 1983009808
        %v8781 = vunpack.c.0.s8 %v8780
        %v8782 = vlaneseq
        %v8783 = vshrl.u32 %v8782, 7
        %v8784 = vsub.s32 %v8781, %v8783
        %v8785 = vrot.slane %v8443, %v8784
        %v8787 = vunpack.c.l.s4 1983009808
        %v8788 = vunpack.c.0.s8 %v8787
        %v8789 = vlaneseq
        %v8790 = vshrl.u32 %v8789, 7
        %v8791 = vsub.s32 %v8788, %v8790
        %v8792 = vrot.slane %v8778, %v8791
        %v8793 = vcombine.high %v8785, %v8785
        %v8794 = vcombine.high %v8792, %v8792
        %v8795 = vcombine.high %v8444, %v8444
        %v8797 = vunpack.c.l.s4 1983009808
        %v8798 = vunpack.c.0.s8 %v8797
        %v8799 = vlaneseq
        %v8800 = vshrl.u32 %v8799, 7
        %v8801 = vsub.s32 %v8798, %v8800
        %v8802 = vrot.slane %v8444, %v8801
        %v8804 = vunpack.c.l.s4 1983009808
        %v8805 = vunpack.c.0.s8 %v8804
        %v8806 = vlaneseq
        %v8807 = vshrl.u32 %v8806, 7
        %v8808 = vsub.s32 %v8805, %v8807
        %v8809 = vrot.slane %v8795, %v8808
        %v8810 = vcombine.high %v8802, %v8802
        %v8811 = vcombine.high %v8445, %v8445
        %v8813 = vunpack.c.l.s4 1983009808
        %v8814 = vunpack.c.0.s8 %v8813
        %v8815 = vlaneseq
        %v8816 = vshrl.u32 %v8815, 7
        %v8817 = vsub.s32 %v8814, %v8816
        %v8818 = vrot.slane %v8445, %v8817
        %v8820 = vunpack.c.l.s4 1983009808
        %v8821 = vunpack.c.0.s8 %v8820
        %v8822 = vlaneseq
        %v8823 = vshrl.u32 %v8822, 7
        %v8824 = vsub.s32 %v8821, %v8823
        %v8825 = vrot.slane %v8811, %v8824
        %v8826 = vcombine.high %v8818, %v8818
        %v8827 = vcombine.high %v8825, %v8825
        %v8828 = vcombine.high %v8446, %v8446
        %v8830 = vunpack.c.l.s4 1983009808
        %v8831 = vunpack.c.0.s8 %v8830
        %v8832 = vlaneseq
        %v8833 = vshrl.u32 %v8832, 7
        %v8834 = vsub.s32 %v8831, %v8833
        %v8835 = vrot.slane %v8446, %v8834
        %v8837 = vunpack.c.l.s4 1983009808
        %v8838 = vunpack.c.0.s8 %v8837
        %v8839 = vlaneseq
        %v8840 = vshrl.u32 %v8839, 7
        %v8841 = vsub.s32 %v8838, %v8840
        %v8842 = vrot.slane %v8828, %v8841
        %v8843 = vcombine.high %v8835, %v8835
        %v8844 = vcombine.high %v8447, %v8447
        %v8846 = vunpack.c.l.s4 1983009808
        %v8847 = vunpack.c.0.s8 %v8846
        %v8848 = vlaneseq
        %v8849 = vshrl.u32 %v8848, 7
        %v8850 = vsub.s32 %v8847, %v8849
        %v8851 = vrot.slane %v8447, %v8850
        %v8853 = vunpack.c.l.s4 1983009808
        %v8854 = vunpack.c.0.s8 %v8853
        %v8855 = vlaneseq
        %v8856 = vshrl.u32 %v8855, 7
        %v8857 = vsub.s32 %v8854, %v8856
        %v8858 = vrot.slane %v8844, %v8857
        %v8859 = vcombine.high %v8851, %v8851
        %v8860 = vcombine.high %v8858, %v8858
        %v8861 = vcombine.high %v8448, %v8448
        %v8863 = vunpack.c.l.s4 1983009808
        %v8864 = vunpack.c.0.s8 %v8863
        %v8865 = vlaneseq
        %v8866 = vshrl.u32 %v8865, 7
        %v8867 = vsub.s32 %v8864, %v8866
        %v8868 = vrot.slane %v8448, %v8867
        %v8870 = vunpack.c.l.s4 1983009808
        %v8871 = vunpack.c.0.s8 %v8870
        %v8872 = vlaneseq
        %v8873 = vshrl.u32 %v8872, 7
        %v8874 = vsub.s32 %v8871, %v8873
        %v8875 = vrot.slane %v8861, %v8874
        %v8876 = vcombine.high %v8868, %v8868
        %v8877 = vcombine.high %v8449, %v8449
        %v8879 = vunpack.c.l.s4 1983009808
        %v8880 = vunpack.c.0.s8 %v8879
        %v8881 = vlaneseq
        %v8882 = vshrl.u32 %v8881, 7
        %v8883 = vsub.s32 %v8880, %v8882
        %v8884 = vrot.slane %v8449, %v8883
        %v8886 = vunpack.c.l.s4 1983009808
        %v8887 = vunpack.c.0.s8 %v8886
        %v8888 = vlaneseq
        %v8889 = vshrl.u32 %v8888, 7
        %v8890 = vsub.s32 %v8887, %v8889
        %v8891 = vrot.slane %v8877, %v8890
        %v8892 = vcombine.high %v8884, %v8884
        %v8893 = vcombine.high %v8891, %v8891
        %v8894 = vcombine.high %v8450, %v8450
        %v8896 = vunpack.c.l.s4 1983009808
        %v8897 = vunpack.c.0.s8 %v8896
        %v8898 = vlaneseq
        %v8899 = vshrl.u32 %v8898, 7
        %v8900 = vsub.s32 %v8897, %v8899
        %v8901 = vrot.slane %v8450, %v8900
        %v8903 = vunpack.c.l.s4 1983009808
        %v8904 = vunpack.c.0.s8 %v8903
        %v8905 = vlaneseq
        %v8906 = vshrl.u32 %v8905, 7
        %v8907 = vsub.s32 %v8904, %v8906
        %v8908 = vrot.slane %v8894, %v8907
        %v8909 = vcombine.high %v8901, %v8901
        %v8910 = vcombine.high %v8451, %v8451
        %v8912 = vunpack.c.l.s4 1983009808
        %v8913 = vunpack.c.0.s8 %v8912
        %v8914 = vlaneseq
        %v8915 = vshrl.u32 %v8914, 7
        %v8916 = vsub.s32 %v8913, %v8915
        %v8917 = vrot.slane %v8451, %v8916
        %v8919 = vunpack.c.l.s4 1983009808
        %v8920 = vunpack.c.0.s8 %v8919
        %v8921 = vlaneseq
        %v8922 = vshrl.u32 %v8921, 7
        %v8923 = vsub.s32 %v8920, %v8922
        %v8924 = vrot.slane %v8910, %v8923
        %v8925 = vcombine.high %v8917, %v8917
        %v8926 = vcombine.high %v8924, %v8924
        %v8927 = vcombine.high %v8452, %v8452
        %v8929 = vunpack.c.l.s4 1983009808
        %v8930 = vunpack.c.0.s8 %v8929
        %v8931 = vlaneseq
        %v8932 = vshrl.u32 %v8931, 7
        %v8933 = vsub.s32 %v8930, %v8932
        %v8934 = vrot.slane %v8452, %v8933
        %v8936 = vunpack.c.l.s4 1983009808
        %v8937 = vunpack.c.0.s8 %v8936
        %v8938 = vlaneseq
        %v8939 = vshrl.u32 %v8938, 7
        %v8940 = vsub.s32 %v8937, %v8939
        %v8941 = vrot.slane %v8927, %v8940
        %v8942 = vcombine.high %v8934, %v8934
        %v8943 = vcombine.low %v8488, %v8496
        %v8944 = vcombine.low %v8495, %v8497
        %v8946 = vunpack.c.l.s4 1983009808
        %v8947 = vunpack.c.0.s8 %v8946
        %v8948 = vlaneseq
        %v8949 = vshrl.u32 %v8948, 7
        %v8950 = vsub.s32 %v8947, %v8949
        %v8951 = vrot.slane %v8943, %v8950
        %v8953 = vunpack.c.l.s4 1983009808
        %v8954 = vunpack.c.0.s8 %v8953
        %v8955 = vlaneseq
        %v8956 = vshrl.u32 %v8955, 7
        %v8957 = vsub.s32 %v8954, %v8956
        %v8958 = vrot.slane %v8944, %v8957
        %v8959 = vcombine.low %v8951, %v8958
        %v8960 = vcombine.low %v8505, %v8513
        %v8961 = vcombine.low %v8512, %v8521
        %v8963 = vunpack.c.l.s4 1983009808
        %v8964 = vunpack.c.0.s8 %v8963
        %v8965 = vlaneseq
        %v8966 = vshrl.u32 %v8965, 7
        %v8967 = vsub.s32 %v8964, %v8966
        %v8968 = vrot.slane %v8960, %v8967
        %v8970 = vunpack.c.l.s4 1983009808
        %v8971 = vunpack.c.0.s8 %v8970
        %v8972 = vlaneseq
        %v8973 = vshrl.u32 %v8972, 7
        %v8974 = vsub.s32 %v8971, %v8973
        %v8975 = vrot.slane %v8961, %v8974
        %v8976 = vcombine.low %v8968, %v8975
        %v8977 = vcombine.low %v8529, %v8528
        %v8978 = vcombine.low %v8530, %v8538
        %v8980 = vunpack.c.l.s4 1983009808
        %v8981 = vunpack.c.0.s8 %v8980
        %v8982 = vlaneseq
        %v8983 = vshrl.u32 %v8982, 7
        %v8984 = vsub.s32 %v8981, %v8983
        %v8985 = vrot.slane %v8977, %v8984
        %v8987 = vunpack.c.l.s4 1983009808
        %v8988 = vunpack.c.0.s8 %v8987
        %v8989 = vlaneseq
        %v8990 = vshrl.u32 %v8989, 7
        %v8991 = vsub.s32 %v8988, %v8990
        %v8992 = vrot.slane %v8978, %v8991
        %v8993 = vcombine.low %v8985, %v8992
        %v8994 = vcombine.low %v8546, %v8545
        %v8995 = vcombine.low %v8554, %v8562
        %v8997 = vunpack.c.l.s4 1983009808
        %v8998 = vunpack.c.0.s8 %v8997
        %v8999 = vlaneseq
        %v9000 = vshrl.u32 %v8999, 7
        %v9001 = vsub.s32 %v8998, %v9000
        %v9002 = vrot.slane %v8994, %v9001
        %v9004 = vunpack.c.l.s4 1983009808
        %v9005 = vunpack.c.0.s8 %v9004
        %v9006 = vlaneseq
        %v9007 = vshrl.u32 %v9006, 7
        %v9008 = vsub.s32 %v9005, %v9007
        %v9009 = vrot.slane %v8995, %v9008
        %v9010 = vcombine.low %v9002, %v9009
        %v9011 = vcombine.low %v8561, %v8563
        %v9012 = vcombine.low %v8571, %v8579
        %v9014 = vunpack.c.l.s4 1983009808
        %v9015 = vunpack.c.0.s8 %v9014
        %v9016 = vlaneseq
        %v9017 = vshrl.u32 %v9016, 7
        %v9018 = vsub.s32 %v9015, %v9017
        %v9019 = vrot.slane %v9011, %v9018
        %v9021 = vunpack.c.l.s4 1983009808
        %v9022 = vunpack.c.0.s8 %v9021
        %v9023 = vlaneseq
        %v9024 = vshrl.u32 %v9023, 7
        %v9025 = vsub.s32 %v9022, %v9024
        %v9026 = vrot.slane %v9012, %v9025
        %v9027 = vcombine.low %v9019, %v9026
        %v9028 = vcombine.low %v8578, %v8587
        %v9029 = vcombine.low %v8595, %v8594
        %v9031 = vunpack.c.l.s4 1983009808
        %v9032 = vunpack.c.0.s8 %v9031
        %v9033 = vlaneseq
        %v9034 = vshrl.u32 %v9033, 7
        %v9035 = vsub.s32 %v9032, %v9034
        %v9036 = vrot.slane %v9028, %v9035
        %v9038 = vunpack.c.l.s4 1983009808
        %v9039 = vunpack.c.0.s8 %v9038
        %v9040 = vlaneseq
        %v9041 = vshrl.u32 %v9040, 7
        %v9042 = vsub.s32 %v9039, %v9041
        %v9043 = vrot.slane %v9029, %v9042
        %v9044 = vcombine.low %v9036, %v9043
        %v9045 = vcombine.low %v8596, %v8604
        %v9046 = vcombine.low %v8612, %v8611
        %v9048 = vunpack.c.l.s4 1983009808
        %v9049 = vunpack.c.0.s8 %v9048
        %v9050 = vlaneseq
        %v9051 = vshrl.u32 %v9050, 7
        %v9052 = vsub.s32 %v9049, %v9051
        %v9053 = vrot.slane %v9045, %v9052
        %v9055 = vunpack.c.l.s4 1983009808
        %v9056 = vunpack.c.0.s8 %v9055
        %v9057 = vlaneseq
        %v9058 = vshrl.u32 %v9057, 7
        %v9059 = vsub.s32 %v9056, %v9058
        %v9060 = vrot.slane %v9046, %v9059
        %v9061 = vcombine.low %v9053, %v9060
        %v9062 = vcombine.low %v8620, %v8628
        %v9063 = vcombine.low %v8627, %v8629
        %v9065 = vunpack.c.l.s4 1983009808
        %v9066 = vunpack.c.0.s8 %v9065
        %v9067 = vlaneseq
        %v9068 = vshrl.u32 %v9067, 7
        %v9069 = vsub.s32 %v9066, %v9068
        %v9070 = vrot.slane %v9062, %v9069
        %v9072 = vunpack.c.l.s4 1983009808
        %v9073 = vunpack.c.0.s8 %v9072
        %v9074 = vlaneseq
        %v9075 = vshrl.u32 %v9074, 7
        %v9076 = vsub.s32 %v9073, %v9075
        %v9077 = vrot.slane %v9063, %v9076
        %v9078 = vcombine.low %v9070, %v9077
        %v9079 = vcombine.low %v8637, %v8645
        %v9080 = vcombine.low %v8644, %v8653
        %v9082 = vunpack.c.l.s4 1983009808
        %v9083 = vunpack.c.0.s8 %v9082
        %v9084 = vlaneseq
        %v9085 = vshrl.u32 %v9084, 7
        %v9086 = vsub.s32 %v9083, %v9085
        %v9087 = vrot.slane %v9079, %v9086
        %v9089 = vunpack.c.l.s4 1983009808
        %v9090 = vunpack.c.0.s8 %v9089
        %v9091 = vlaneseq
        %v9092 = vshrl.u32 %v9091, 7
        %v9093 = vsub.s32 %v9090, %v9092
        %v9094 = vrot.slane %v9080, %v9093
        %v9095 = vcombine.low %v9087, %v9094
        %v9096 = vcombine.low %v8661, %v8660
        %v9097 = vcombine.low %v8662, %v8670
        %v9099 = vunpack.c.l.s4 1983009808
        %v9100 = vunpack.c.0.s8 %v9099
        %v9101 = vlaneseq
        %v9102 = vshrl.u32 %v9101, 7
        %v9103 = vsub.s32 %v9100, %v9102
        %v9104 = vrot.slane %v9096, %v9103
        %v9106 = vunpack.c.l.s4 1983009808
        %v9107 = vunpack.c.0.s8 %v9106
        %v9108 = vlaneseq
        %v9109 = vshrl.u32 %v9108, 7
        %v9110 = vsub.s32 %v9107, %v9109
        %v9111 = vrot.slane %v9097, %v9110
        %v9112 = vcombine.low %v9104, %v9111
        %v9113 = vcombine.low %v8678, %v8677
        %v9114 = vcombine.low %v8686, %v8694
        %v9116 = vunpack.c.l.s4 1983009808
        %v9117 = vunpack.c.0.s8 %v9116
        %v9118 = vlaneseq
        %v9119 = vshrl.u32 %v9118, 7
        %v9120 = vsub.s32 %v9117, %v9119
        %v9121 = vrot.slane %v9113, %v9120
        %v9123 = vunpack.c.l.s4 1983009808
        %v9124 = vunpack.c.0.s8 %v9123
        %v9125 = vlaneseq
        %v9126 = vshrl.u32 %v9125, 7
        %v9127 = vsub.s32 %v9124, %v9126
        %v9128 = vrot.slane %v9114, %v9127
        %v9129 = vcombine.low %v9121, %v9128
        %v9130 = vcombine.low %v8693, %v8695
        %v9131 = vcombine.low %v8703, %v8711
        %v9133 = vunpack.c.l.s4 1983009808
        %v9134 = vunpack.c.0.s8 %v9133
        %v9135 = vlaneseq
        %v9136 = vshrl.u32 %v9135, 7
        %v9137 = vsub.s32 %v9134, %v9136
        %v9138 = vrot.slane %v9130, %v9137
        %v9140 = vunpack.c.l.s4 1983009808
        %v9141 = vunpack.c.0.s8 %v9140
        %v9142 = vlaneseq
        %v9143 = vshrl.u32 %v9142, 7
        %v9144 = vsub.s32 %v9141, %v9143
        %v9145 = vrot.slane %v9131, %v9144
        %v9146 = vcombine.low %v9138, %v9145
        %v9147 = vcombine.low %v8710, %v8719
        %v9148 = vcombine.low %v8727, %v8726
        %v9150 = vunpack.c.l.s4 1983009808
        %v9151 = vunpack.c.0.s8 %v9150
        %v9152 = vlaneseq
        %v9153 = vshrl.u32 %v9152, 7
        %v9154 = vsub.s32 %v9151, %v9153
        %v9155 = vrot.slane %v9147, %v9154
        %v9157 = vunpack.c.l.s4 1983009808
        %v9158 = vunpack.c.0.s8 %v9157
        %v9159 = vlaneseq
        %v9160 = vshrl.u32 %v9159, 7
        %v9161 = vsub.s32 %v9158, %v9160
        %v9162 = vrot.slane %v9148, %v9161
        %v9163 = vcombine.low %v9155, %v9162
        %v9164 = vcombine.low %v8728, %v8736
        %v9165 = vcombine.low %v8744, %v8743
        %v9167 = vunpack.c.l.s4 1983009808
        %v9168 = vunpack.c.0.s8 %v9167
        %v9169 = vlaneseq
        %v9170 = vshrl.u32 %v9169, 7
        %v9171 = vsub.s32 %v9168, %v9170
        %v9172 = vrot.slane %v9164, %v9171
        %v9174 = vunpack.c.l.s4 1983009808
        %v9175 = vunpack.c.0.s8 %v9174
        %v9176 = vlaneseq
        %v9177 = vshrl.u32 %v9176, 7
        %v9178 = vsub.s32 %v9175, %v9177
        %v9179 = vrot.slane %v9165, %v9178
        %v9180 = vcombine.low %v9172, %v9179
        %v9181 = vcombine.low %v8752, %v8760
        %v9182 = vcombine.low %v8759, %v8761
        %v9184 = vunpack.c.l.s4 1983009808
        %v9185 = vunpack.c.0.s8 %v9184
        %v9186 = vlaneseq
        %v9187 = vshrl.u32 %v9186, 7
        %v9188 = vsub.s32 %v9185, %v9187
        %v9189 = vrot.slane %v9181, %v9188
        %v9191 = vunpack.c.l.s4 1983009808
        %v9192 = vunpack.c.0.s8 %v9191
        %v9193 = vlaneseq
        %v9194 = vshrl.u32 %v9193, 7
        %v9195 = vsub.s32 %v9192, %v9194
        %v9196 = vrot.slane %v9182, %v9195
        %v9197 = vcombine.low %v9189, %v9196
        %v9198 = vcombine.low %v8769, %v8777
        %v9199 = vcombine.low %v8776, %v8785
        %v9201 = vunpack.c.l.s4 1983009808
        %v9202 = vunpack.c.0.s8 %v9201
        %v9203 = vlaneseq
        %v9204 = vshrl.u32 %v9203, 7
        %v9205 = vsub.s32 %v9202, %v9204
        %v9206 = vrot.slane %v9198, %v9205
        %v9208 = vunpack.c.l.s4 1983009808
        %v9209 = vunpack.c.0.s8 %v9208
        %v9210 = vlaneseq
        %v9211 = vshrl.u32 %v9210, 7
        %v9212 = vsub.s32 %v9209, %v9211
        %v9213 = vrot.slane %v9199, %v9212
        %v9214 = vcombine.low %v9206, %v9213
        %v9215 = vcombine.low %v8793, %v8792
        %v9216 = vcombine.low %v8794, %v8802
        %v9218 = vunpack.c.l.s4 1983009808
        %v9219 = vunpack.c.0.s8 %v9218
        %v9220 = vlaneseq
        %v9221 = vshrl.u32 %v9220, 7
        %v9222 = vsub.s32 %v9219, %v9221
        %v9223 = vrot.slane %v9215, %v9222
        %v9225 = vunpack.c.l.s4 1983009808
        %v9226 = vunpack.c.0.s8 %v9225
        %v9227 = vlaneseq
        %v9228 = vshrl.u32 %v9227, 7
        %v9229 = vsub.s32 %v9226, %v9228
        %v9230 = vrot.slane %v9216, %v9229
        %v9231 = vcombine.low %v9223, %v9230
        %v9232 = vcombine.low %v8810, %v8809
        %v9233 = vcombine.low %v8818, %v8826
        %v9235 = vunpack.c.l.s4 1983009808
        %v9236 = vunpack.c.0.s8 %v9235
        %v9237 = vlaneseq
        %v9238 = vshrl.u32 %v9237, 7
        %v9239 = vsub.s32 %v9236, %v9238
        %v9240 = vrot.slane %v9232, %v9239
        %v9242 = vunpack.c.l.s4 1983009808
        %v9243 = vunpack.c.0.s8 %v9242
        %v9244 = vlaneseq
        %v9245 = vshrl.u32 %v9244, 7
        %v9246 = vsub.s32 %v9243, %v9245
        %v9247 = vrot.slane %v9233, %v9246
        %v9248 = vcombine.low %v9240, %v9247
        %v9249 = vcombine.low %v8825, %v8827
        %v9250 = vcombine.low %v8835, %v8843
        %v9252 = vunpack.c.l.s4 1983009808
        %v9253 = vunpack.c.0.s8 %v9252
        %v9254 = vlaneseq
        %v9255 = vshrl.u32 %v9254, 7
        %v9256 = vsub.s32 %v9253, %v9255
        %v9257 = vrot.slane %v9249, %v9256
        %v9259 = vunpack.c.l.s4 1983009808
        %v9260 = vunpack.c.0.s8 %v9259
        %v9261 = vlaneseq
        %v9262 = vshrl.u32 %v9261, 7
        %v9263 = vsub.s32 %v9260, %v9262
        %v9264 = vrot.slane %v9250, %v9263
        %v9265 = vcombine.low %v9257, %v9264
        %v9266 = vcombine.low %v8842, %v8851
        %v9267 = vcombine.low %v8859, %v8858
        %v9269 = vunpack.c.l.s4 1983009808
        %v9270 = vunpack.c.0.s8 %v9269
        %v9271 = vlaneseq
        %v9272 = vshrl.u32 %v9271, 7
        %v9273 = vsub.s32 %v9270, %v9272
        %v9274 = vrot.slane %v9266, %v9273
        %v9276 = vunpack.c.l.s4 1983009808
        %v9277 = vunpack.c.0.s8 %v9276
        %v9278 = vlaneseq
        %v9279 = vshrl.u32 %v9278, 7
        %v9280 = vsub.s32 %v9277, %v9279
        %v9281 = vrot.slane %v9267, %v9280
        %v9282 = vcombine.low %v9274, %v9281
        %v9283 = vcombine.low %v8860, %v8868
        %v9284 = vcombine.low %v8876, %v8875
        %v9286 = vunpack.c.l.s4 1983009808
        %v9287 = vunpack.c.0.s8 %v9286
        %v9288 = vlaneseq
        %v9289 = vshrl.u32 %v9288, 7
        %v9290 = vsub.s32 %v9287, %v9289
        %v9291 = vrot.slane %v9283, %v9290
        %v9293 = vunpack.c.l.s4 1983009808
        %v9294 = vunpack.c.0.s8 %v9293
        %v9295 = vlaneseq
        %v9296 = vshrl.u32 %v9295, 7
        %v9297 = vsub.s32 %v9294, %v9296
        %v9298 = vrot.slane %v9284, %v9297
        %v9299 = vcombine.low %v9291, %v9298
        %v9300 = vcombine.low %v8884, %v8892
        %v9301 = vcombine.low %v8891, %v8893
        %v9303 = vunpack.c.l.s4 1983009808
        %v9304 = vunpack.c.0.s8 %v9303
        %v9305 = vlaneseq
        %v9306 = vshrl.u32 %v9305, 7
        %v9307 = vsub.s32 %v9304, %v9306
        %v9308 = vrot.slane %v9300, %v9307
        %v9310 = vunpack.c.l.s4 1983009808
        %v9311 = vunpack.c.0.s8 %v9310
        %v9312 = vlaneseq
        %v9313 = vshrl.u32 %v9312, 7
        %v9314 = vsub.s32 %v9311, %v9313
        %v9315 = vrot.slane %v9301, %v9314
        %v9316 = vcombine.low %v9308, %v9315
        %v9317 = vcombine.low %v8901, %v8909
        %v9318 = vcombine.low %v8908, %v8917
        %v9320 = vunpack.c.l.s4 1983009808
        %v9321 = vunpack.c.0.s8 %v9320
        %v9322 = vlaneseq
        %v9323 = vshrl.u32 %v9322, 7
        %v9324 = vsub.s32 %v9321, %v9323
        %v9325 = vrot.slane %v9317, %v9324
        %v9327 = vunpack.c.l.s4 1983009808
        %v9328 = vunpack.c.0.s8 %v9327
        %v9329 = vlaneseq
        %v9330 = vshrl.u32 %v9329, 7
        %v9331 = vsub.s32 %v9328, %v9330
        %v9332 = vrot.slane %v9318, %v9331
        %v9333 = vcombine.low %v9325, %v9332
        %v9334 = vcombine.low %v8925, %v8924
        %v9335 = vcombine.low %v8926, %v8934
        %v9337 = vunpack.c.l.s4 1983009808
        %v9338 = vunpack.c.0.s8 %v9337
        %v9339 = vlaneseq
        %v9340 = vshrl.u32 %v9339, 7
        %v9341 = vsub.s32 %v9338, %v9340
        %v9342 = vrot.slane %v9334, %v9341
        %v9344 = vunpack.c.l.s4 1983009808
        %v9345 = vunpack.c.0.s8 %v9344
        %v9346 = vlaneseq
        %v9347 = vshrl.u32 %v9346, 7
        %v9348 = vsub.s32 %v9345, %v9347
        %v9349 = vrot.slane %v9335, %v9348
        %v9350 = vcombine.low %v9342, %v9349
        %v9351 = vcombine.low %v8942, %v8941
        %v9353 = vunpack.c.l.s4 1983009808
        %v9354 = vunpack.c.0.s8 %v9353
        %v9355 = vlaneseq
        %v9356 = vshrl.u32 %v9355, 7
        %v9357 = vsub.s32 %v9354, %v9356
        %v9358 = vrot.slane %v9351, %v9357
        %9359 = vrot.lane.b32.xlu0 %v8959, 32
        %v9360 = vpop.permute.xlu0 %9359
        %9361 = vrot.lane.b32.xlu0 %v8976, 32
        %v9362 = vpop.permute.xlu0 %9361
        %9363 = vrot.lane.b32.xlu0 %v8993, 32
        %v9364 = vpop.permute.xlu0 %9363
        %9365 = vrot.lane.b32.xlu0 %v9010, 32
        %v9366 = vpop.permute.xlu0 %9365
        %9367 = vrot.lane.b32.xlu0 %v9027, 32
        %v9368 = vpop.permute.xlu0 %9367
        %9369 = vrot.lane.b32.xlu0 %v9044, 32
        %v9370 = vpop.permute.xlu0 %9369
        %9371 = vrot.lane.b32.xlu0 %v9061, 32
        %v9372 = vpop.permute.xlu0 %9371
        %9373 = vrot.lane.b32.xlu0 %v9078, 32
        %v9374 = vpop.permute.xlu0 %9373
        %9375 = vrot.lane.b32.xlu0 %v9095, 32
        %v9376 = vpop.permute.xlu0 %9375
        %9377 = vrot.lane.b32.xlu0 %v9112, 32
        %v9378 = vpop.permute.xlu0 %9377
        %9379 = vrot.lane.b32.xlu0 %v9129, 32
        %v9380 = vpop.permute.xlu0 %9379
        %9381 = vrot.lane.b32.xlu0 %v9146, 32
        %v9382 = vpop.permute.xlu0 %9381
        %9383 = vrot.lane.b32.xlu0 %v9163, 32
        %v9384 = vpop.permute.xlu0 %9383
        %9385 = vrot.lane.b32.xlu0 %v9180, 32
        %v9386 = vpop.permute.xlu0 %9385
        %9387 = vrot.lane.b32.xlu0 %v9197, 32
        %v9388 = vpop.permute.xlu0 %9387
        %9389 = vrot.lane.b32.xlu0 %v9214, 32
        %v9390 = vpop.permute.xlu0 %9389
        %9391 = vrot.lane.b32.xlu0 %v9231, 32
        %v9392 = vpop.permute.xlu0 %9391
        %9393 = vrot.lane.b32.xlu0 %v9248, 32
        %v9394 = vpop.permute.xlu0 %9393
        %9395 = vrot.lane.b32.xlu0 %v9265, 32
        %v9396 = vpop.permute.xlu0 %9395
        %9397 = vrot.lane.b32.xlu0 %v9282, 32
        %v9398 = vpop.permute.xlu0 %9397
        %9399 = vrot.lane.b32.xlu0 %v9299, 32
        %v9400 = vpop.permute.xlu0 %9399
        %9401 = vrot.lane.b32.xlu0 %v9316, 32
        %v9402 = vpop.permute.xlu0 %9401
        %9403 = vrot.lane.b32.xlu0 %v9333, 32
        %v9404 = vpop.permute.xlu0 %9403
        %9405 = vrot.lane.b32.xlu0 %v9350, 32
        %v9406 = vpop.permute.xlu0 %9405
        %9407 = vrot.lane.b32.xlu0 %v9358, 32
        %v9408 = vpop.permute.xlu0 %9407
        %vm9434 = vcmask 294144
        %9435 = vst.msk [vmem:[#allocation2] sm:$0xff] %vm9434, %v9360
        %9436 = vst.msk [vmem:[#allocation2 + $0x8] sm:$0xff] %vm9434, %v9362
        %9437 = vst.msk [vmem:[#allocation2 + $0x10] sm:$0xff] %vm9434, %v9364
        %9438 = vst.msk [vmem:[#allocation2 + $0x18] sm:$0xff] %vm9434, %v9366
        %9439 = vst.msk [vmem:[#allocation2 + $0x20] sm:$0xff] %vm9434, %v9368
        %9440 = vst.msk [vmem:[#allocation2 + $0x28] sm:$0xff] %vm9434, %v9370
        %9441 = vst.msk [vmem:[#allocation2 + $0x30] sm:$0xff] %vm9434, %v9372
        %9442 = vst.msk [vmem:[#allocation2 + $0x38] sm:$0xff] %vm9434, %v9374
        %9443 = vst.msk [vmem:[#allocation2 + $0x40] sm:$0xff] %vm9434, %v9376
        %9444 = vst.msk [vmem:[#allocation2 + $0x48] sm:$0xff] %vm9434, %v9378
        %9445 = vst.msk [vmem:[#allocation2 + $0x50] sm:$0xff] %vm9434, %v9380
        %9446 = vst.msk [vmem:[#allocation2 + $0x58] sm:$0xff] %vm9434, %v9382
        %9447 = vst.msk [vmem:[#allocation2 + $0x60] sm:$0xff] %vm9434, %v9384
        %9448 = vst.msk [vmem:[#allocation2 + $0x68] sm:$0xff] %vm9434, %v9386
        %9449 = vst.msk [vmem:[#allocation2 + $0x70] sm:$0xff] %vm9434, %v9388
        %9450 = vst.msk [vmem:[#allocation2 + $0x78] sm:$0xff] %vm9434, %v9390
        %9451 = vst.msk [vmem:[#allocation2 + $0x80] sm:$0xff] %vm9434, %v9392
        %9452 = vst.msk [vmem:[#allocation2 + $0x88] sm:$0xff] %vm9434, %v9394
        %9453 = vst.msk [vmem:[#allocation2 + $0x90] sm:$0xff] %vm9434, %v9396
        %9454 = vst.msk [vmem:[#allocation2 + $0x98] sm:$0xff] %vm9434, %v9398
        %9455 = vst.msk [vmem:[#allocation2 + $0xa0] sm:$0xff] %vm9434, %v9400
        %9456 = vst.msk [vmem:[#allocation2 + $0xa8] sm:$0xff] %vm9434, %v9402
        %9457 = vst.msk [vmem:[#allocation2 + $0xb0] sm:$0xff] %vm9434, %v9404
        %9458 = vst.msk [vmem:[#allocation2 + $0xb8] sm:$0xff] %vm9434, %v9406
        %vm9459 = vcmask 290048
        %9460 = vst.msk [vmem:[#allocation2 + $0xc0] sm:$0xf] %vm9459, %v9408
      $region32: #{tpu_custom_call.1} parent=27 // pred_fallthru
        _
      %v9461 = vld [vmem:[#allocation2] sm:$0xff]
      %v9462 = vld [vmem:[#allocation2 + $0x8] sm:$0xff]
      %v9463 = vld [vmem:[#allocation2 + $0x10] sm:$0xff]
      %v9464 = vld [vmem:[#allocation2 + $0x18] sm:$0xff]
      %v9465 = vld [vmem:[#allocation2 + $0x20] sm:$0xff]
      %v9466 = vld [vmem:[#allocation2 + $0x28] sm:$0xff]
      %v9467 = vld [vmem:[#allocation2 + $0x30] sm:$0xff]
      %v9468 = vld [vmem:[#allocation2 + $0x38] sm:$0xff]
      %v9469 = vld [vmem:[#allocation2 + $0x40] sm:$0xff]
      %v9470 = vld [vmem:[#allocation2 + $0x48] sm:$0xff]
      %v9471 = vld [vmem:[#allocation2 + $0x50] sm:$0xff]
      %v9472 = vld [vmem:[#allocation2 + $0x58] sm:$0xff]
      %v9473 = vld [vmem:[#allocation2 + $0x60] sm:$0xff]
      %v9474 = vld [vmem:[#allocation2 + $0x68] sm:$0xff]
      %v9475 = vld [vmem:[#allocation2 + $0x70] sm:$0xff]
      %v9476 = vld [vmem:[#allocation2 + $0x78] sm:$0xff]
      %v9477 = vld [vmem:[#allocation2 + $0x80] sm:$0xff]
      %v9478 = vld [vmem:[#allocation2 + $0x88] sm:$0xff]
      %v9479 = vld [vmem:[#allocation2 + $0x90] sm:$0xff]
      %v9480 = vld [vmem:[#allocation2 + $0x98] sm:$0xff]
      %v9481 = vld [vmem:[#allocation2 + $0xa0] sm:$0xff]
      %v9482 = vld [vmem:[#allocation2 + $0xa8] sm:$0xff]
      %v9483 = vld [vmem:[#allocation2 + $0xb0] sm:$0xff]
      %v9484 = vld [vmem:[#allocation2 + $0xb8] sm:$0xff]
      %v9485 = vld [vmem:[#allocation2 + $0xc0] sm:$0xf]
      %v9486 = vld [vmem:[%s172] sm:$0xff]
      %v9487 = vld [vmem:[%s172 + $0x8] sm:$0xff]
      %v9488 = vld [vmem:[%s172 + $0x10] sm:$0xff]
      %v9489 = vld [vmem:[%s172 + $0x18] sm:$0xff]
      %v9490 = vld [vmem:[%s172 + $0x20] sm:$0xf]
      %vm9491 = vcmask 293888
      %v9493 = vsel %vm9491, %v9461, 0
      %v9496 = vsel %vm9491, %v9462, 0
      %v9499 = vsel %vm9491, %v9463, 0
      %v9502 = vsel %vm9491, %v9464, 0
      %v9505 = vsel %vm9491, %v9465, 0
      %v9508 = vsel %vm9491, %v9466, 0
      %v9511 = vsel %vm9491, %v9467, 0
      %v9514 = vsel %vm9491, %v9468, 0
      %v9517 = vsel %vm9491, %v9469, 0
      %v9520 = vsel %vm9491, %v9470, 0
      %v9523 = vsel %vm9491, %v9471, 0
      %v9526 = vsel %vm9491, %v9472, 0
      %v9529 = vsel %vm9491, %v9473, 0
      %v9532 = vsel %vm9491, %v9474, 0
      %v9535 = vsel %vm9491, %v9475, 0
      %v9538 = vsel %vm9491, %v9476, 0
      %v9541 = vsel %vm9491, %v9477, 0
      %v9544 = vsel %vm9491, %v9478, 0
      %v9547 = vsel %vm9491, %v9479, 0
      %v9550 = vsel %vm9491, %v9480, 0
      %v9553 = vsel %vm9491, %v9481, 0
      %v9556 = vsel %vm9491, %v9482, 0
      %v9559 = vsel %vm9491, %v9483, 0
      %v9562 = vsel %vm9491, %v9484, 0
      %v9565 = vsel %vm9491, %v9485, 0
      %vm9567 = vcmask 1043456
      %v9569 = vsel %vm9567, %v9490, 0
      %9571 = vmatprep.subr.mxu0 0.0
      %9572 = vmatpush1.msra.mxu0 %v9486
      %9573 = vmatprep.subr.mxu0 0.0
      %9574 = vmatpush1.msra.mxu0 %v9487
      %9575 = vmatprep.subr.mxu0 0.0
      %9576 = vmatpush1.msra.mxu0 %v9488
      %9577 = vmatprep.subr.mxu0 0.0
      %9578 = vmatpush1.msra.mxu0 %v9489
      %9579 = vmatprep.subr.mxu0 0.0
      %9580 = vmatpush1.msra.mxu0 %v9569
      %9581 = vmatprep.subr.mxu0 0.0
      %9582 = vmatpush1.msra.mxu0 0.0
      %9583 = vmatprep.subr.mxu0 0.0
      %9584 = vmatpush1.msra.mxu0 0.0
      %9585 = vmatprep.subr.mxu0 0.0
      %9586 = vmatpush1.msra.mxu0 0.0
      %9587 = vmatprep.subr.mxu0 0.0
      %9588 = vmatpush1.msra.mxu0 0.0
      %9589 = vmatprep.subr.mxu0 0.0
      %9590 = vmatpush1.msra.mxu0 0.0
      %9591 = vmatprep.subr.mxu0 0.0
      %9592 = vmatpush1.msra.mxu0 0.0
      %9593 = vmatprep.subr.mxu0 0.0
      %9594 = vmatpush1.msra.mxu0 0.0
      %9595 = vmatprep.subr.mxu0 0.0
      %9596 = vmatpush1.msra.mxu0 0.0
      %9597 = vmatprep.subr.mxu0 0.0
      %9598 = vmatpush1.msra.mxu0 0.0
      %9599 = vmatprep.subr.mxu0 0.0
      %9600 = vmatpush1.msra.mxu0 0.0
      %9601 = vmatprep.subr.mxu0 0.0
      %9602 = vmatpush1.msra.mxu0 0.0
      %9603 = vmatprep.subr.mxu0 0.0
      %9604 = vmatpush1.msra.mxu0 0.0
      %9605 = vmatprep.subr.mxu0 0.0
      %9606 = vmatpush1.msra.mxu0 0.0
      %9607 = vmatprep.subr.mxu0 0.0
      %9608 = vmatpush1.msra.mxu0 0.0
      %9609 = vmatprep.subr.mxu0 0.0
      %9610 = vmatpush1.msra.mxu0 0.0
      %9611 = vmatprep.subr.mxu0 0.0
      %9612 = vmatpush1.msra.mxu0 0.0
      %9613 = vmatprep.subr.mxu0 0.0
      %9614 = vmatpush1.msra.mxu0 0.0
      %9615 = vmatprep.subr.mxu0 0.0
      %9616 = vmatpush1.msra.mxu0 0.0
      %9617 = vmatprep.subr.mxu0 0.0
      %9618 = vmatpush1.msra.mxu0 0.0
      %9619 = vmatprep.subr.mxu0 0.0
      %9620 = vmatpush1.msra.mxu0 0.0
      %9621 = vmatprep.subr.mxu0 0.0
      %9622 = vmatpush1.msra.mxu0 0.0
      %9623 = vmatprep.subr.mxu0 0.0
      %9624 = vmatpush1.msra.mxu0 0.0
      %9625 = vmatprep.subr.mxu0 0.0
      %9626 = vmatpush1.msra.mxu0 0.0
      %9627 = vmatprep.subr.mxu0 0.0
      %9628 = vmatpush1.msra.mxu0 0.0
      %9629 = vmatprep.subr.mxu0 0.0
      %9630 = vmatpush1.msra.mxu0 0.0
      %9631 = vmatprep.subr.mxu0 0.0
      %9632 = vmatpush1.msra.mxu0 0.0
      %9633 = vmatprep.subr.mxu0 0.0
      %9634 = vmatpush1.msra.mxu0 0.0
      %9635 = vmatprep.mubr.f32.mxu0 0.0
      %9636 = vmatmul.mubr.f32.gmra.mrb[0].mxu0 %v9493
      %v9637 = vpop.f32.mrb[0].mxu0
      %v9638 = vadd.f32 0.0, %v9637
      %v9639 = vpop.f32.mrb[0].mxu0
      %9640 = vmatprep.mubr.f32.mxu0 0.0
      %9641 = vmatmul.mubr.f32.gmra.mrb[0].mxu0 %v9496
      %v9642 = vpop.f32.mrb[0].mxu0
      %v9643 = vadd.f32 0.0, %v9642
      %v9644 = vpop.f32.mrb[0].mxu0
      %9645 = vmatprep.mubr.f32.mxu0 0.0
      %9646 = vmatmul.mubr.f32.gmra.mrb[0].mxu0 %v9499
      %v9647 = vpop.f32.mrb[0].mxu0
      %v9648 = vadd.f32 0.0, %v9647
      %v9649 = vpop.f32.mrb[0].mxu0
      %9650 = vmatprep.mubr.f32.mxu0 0.0
      %9651 = vmatmul.mubr.f32.gmra.mrb[0].mxu0 %v9502
      %v9652 = vpop.f32.mrb[0].mxu0
      %v9653 = vadd.f32 0.0, %v9652
      %v9654 = vpop.f32.mrb[0].mxu0
      %9655 = vmatprep.mubr.f32.mxu0 0.0
      %9656 = vmatmul.mubr.f32.gmra.mrb[0].mxu0 %v9505
      %v9657 = vpop.f32.mrb[0].mxu0
      %v9658 = vadd.f32 0.0, %v9657
      %v9659 = vpop.f32.mrb[0].mxu0
      %9660 = vmatprep.mubr.f32.mxu0 0.0
      %9661 = vmatmul.mubr.f32.gmra.mrb[0].mxu0 %v9508
      %v9662 = vpop.f32.mrb[0].mxu0
      %v9663 = vadd.f32 0.0, %v9662
      %v9664 = vpop.f32.mrb[0].mxu0
      %9665 = vmatprep.mubr.f32.mxu0 0.0
      %9666 = vmatmul.mubr.f32.gmra.mrb[0].mxu0 %v9511
      %v9667 = vpop.f32.mrb[0].mxu0
      %v9668 = vadd.f32 0.0, %v9667
      %v9669 = vpop.f32.mrb[0].mxu0
      %9670 = vmatprep.mubr.f32.mxu0 0.0
      %9671 = vmatmul.mubr.f32.gmra.mrb[0].mxu0 %v9514
      %v9672 = vpop.f32.mrb[0].mxu0
      %v9673 = vadd.f32 0.0, %v9672
      %v9674 = vpop.f32.mrb[0].mxu0
      %9675 = vmatprep.mubr.f32.mxu0 0.0
      %9676 = vmatmul.mubr.f32.gmra.mrb[0].mxu0 %v9517
      %v9677 = vpop.f32.mrb[0].mxu0
      %v9678 = vadd.f32 0.0, %v9677
      %v9679 = vpop.f32.mrb[0].mxu0
      %9680 = vmatprep.mubr.f32.mxu0 0.0
      %9681 = vmatmul.mubr.f32.gmra.mrb[0].mxu0 %v9520
      %v9682 = vpop.f32.mrb[0].mxu0
      %v9683 = vadd.f32 0.0, %v9682
      %v9684 = vpop.f32.mrb[0].mxu0
      %9685 = vmatprep.mubr.f32.mxu0 0.0
      %9686 = vmatmul.mubr.f32.gmra.mrb[0].mxu0 %v9523
      %v9687 = vpop.f32.mrb[0].mxu0
      %v9688 = vadd.f32 0.0, %v9687
      %v9689 = vpop.f32.mrb[0].mxu0
      %9690 = vmatprep.mubr.f32.mxu0 0.0
      %9691 = vmatmul.mubr.f32.gmra.mrb[0].mxu0 %v9526
      %v9692 = vpop.f32.mrb[0].mxu0
      %v9693 = vadd.f32 0.0, %v9692
      %v9694 = vpop.f32.mrb[0].mxu0
      %9695 = vmatprep.mubr.f32.mxu0 0.0
      %9696 = vmatmul.mubr.f32.gmra.mrb[0].mxu0 %v9529
      %v9697 = vpop.f32.mrb[0].mxu0
      %v9698 = vadd.f32 0.0, %v9697
      %v9699 = vpop.f32.mrb[0].mxu0
      %9700 = vmatprep.mubr.f32.mxu0 0.0
      %9701 = vmatmul.mubr.f32.gmra.mrb[0].mxu0 %v9532
      %v9702 = vpop.f32.mrb[0].mxu0
      %v9703 = vadd.f32 0.0, %v9702
      %v9704 = vpop.f32.mrb[0].mxu0
      %9705 = vmatprep.mubr.f32.mxu0 0.0
      %9706 = vmatmul.mubr.f32.gmra.mrb[0].mxu0 %v9535
      %v9707 = vpop.f32.mrb[0].mxu0
      %v9708 = vadd.f32 0.0, %v9707
      %v9709 = vpop.f32.mrb[0].mxu0
      %9710 = vmatprep.mubr.f32.mxu0 0.0
      %9711 = vmatmul.mubr.f32.gmra.mrb[0].mxu0 %v9538
      %v9712 = vpop.f32.mrb[0].mxu0
      %v9713 = vadd.f32 0.0, %v9712
      %v9714 = vpop.f32.mrb[0].mxu0
      %9715 = vmatprep.mubr.f32.mxu0 0.0
      %9716 = vmatmul.mubr.f32.gmra.mrb[0].mxu0 %v9541
      %v9717 = vpop.f32.mrb[0].mxu0
      %v9718 = vadd.f32 0.0, %v9717
      %v9719 = vpop.f32.mrb[0].mxu0
      %9720 = vmatprep.mubr.f32.mxu0 0.0
      %9721 = vmatmul.mubr.f32.gmra.mrb[0].mxu0 %v9544
      %v9722 = vpop.f32.mrb[0].mxu0
      %v9723 = vadd.f32 0.0, %v9722
      %v9724 = vpop.f32.mrb[0].mxu0
      %9725 = vmatprep.mubr.f32.mxu0 0.0
      %9726 = vmatmul.mubr.f32.gmra.mrb[0].mxu0 %v9547
      %v9727 = vpop.f32.mrb[0].mxu0
      %v9728 = vadd.f32 0.0, %v9727
      %v9729 = vpop.f32.mrb[0].mxu0
      %9730 = vmatprep.mubr.f32.mxu0 0.0
      %9731 = vmatmul.mubr.f32.gmra.mrb[0].mxu0 %v9550
      %v9732 = vpop.f32.mrb[0].mxu0
      %v9733 = vadd.f32 0.0, %v9732
      %v9734 = vpop.f32.mrb[0].mxu0
      %9735 = vmatprep.mubr.f32.mxu0 0.0
      %9736 = vmatmul.mubr.f32.gmra.mrb[0].mxu0 %v9553
      %v9737 = vpop.f32.mrb[0].mxu0
      %v9738 = vadd.f32 0.0, %v9737
      %v9739 = vpop.f32.mrb[0].mxu0
      %9740 = vmatprep.mubr.f32.mxu0 0.0
      %9741 = vmatmul.mubr.f32.gmra.mrb[0].mxu0 %v9556
      %v9742 = vpop.f32.mrb[0].mxu0
      %v9743 = vadd.f32 0.0, %v9742
      %v9744 = vpop.f32.mrb[0].mxu0
      %9745 = vmatprep.mubr.f32.mxu0 0.0
      %9746 = vmatmul.mubr.f32.gmra.mrb[0].mxu0 %v9559
      %v9747 = vpop.f32.mrb[0].mxu0
      %v9748 = vadd.f32 0.0, %v9747
      %v9749 = vpop.f32.mrb[0].mxu0
      %9750 = vmatprep.mubr.f32.mxu0 0.0
      %9751 = vmatmul.mubr.f32.gmra.mrb[0].mxu0 %v9562
      %v9752 = vpop.f32.mrb[0].mxu0
      %v9753 = vadd.f32 0.0, %v9752
      %v9754 = vpop.f32.mrb[0].mxu0
      %9755 = vmatprep.mubr.f32.mxu0 0.0
      %9756 = vmatmul.mubr.f32.gmra.mrb[0].mxu0 %v9565
      %v9757 = vpop.f32.mrb[0].mxu0
      %v9758 = vadd.f32 0.0, %v9757
      %v9759 = vpop.f32.mrb[0].mxu0
      %9760 = vdwg.mxu0
      %v9761 = vmul.f32 %v9638, 0.01
      %v9762 = vmul.f32 %v9643, 0.01
      %v9763 = vmul.f32 %v9648, 0.01
      %v9764 = vmul.f32 %v9653, 0.01
      %v9765 = vmul.f32 %v9658, 0.01
      %v9766 = vmul.f32 %v9663, 0.01
      %v9767 = vmul.f32 %v9668, 0.01
      %v9768 = vmul.f32 %v9673, 0.01
      %v9769 = vmul.f32 %v9678, 0.01
      %v9770 = vmul.f32 %v9683, 0.01
      %v9771 = vmul.f32 %v9688, 0.01
      %v9772 = vmul.f32 %v9693, 0.01
      %v9773 = vmul.f32 %v9698, 0.01
      %v9774 = vmul.f32 %v9703, 0.01
      %v9775 = vmul.f32 %v9708, 0.01
      %v9776 = vmul.f32 %v9713, 0.01
      %v9777 = vmul.f32 %v9718, 0.01
      %v9778 = vmul.f32 %v9723, 0.01
      %v9779 = vmul.f32 %v9728, 0.01
      %v9780 = vmul.f32 %v9733, 0.01
      %v9781 = vmul.f32 %v9738, 0.01
      %v9782 = vmul.f32 %v9743, 0.01
      %v9783 = vmul.f32 %v9748, 0.01
      %v9784 = vmul.f32 %v9753, 0.01
      %v9785 = vmul.f32 %v9758, 0.01
      %v9786 = vmax.f32 %v9638, %v9761
      %v9787 = vmax.f32 %v9643, %v9762
      %v9788 = vmax.f32 %v9648, %v9763
      %v9789 = vmax.f32 %v9653, %v9764
      %v9790 = vmax.f32 %v9658, %v9765
      %v9791 = vmax.f32 %v9663, %v9766
      %v9792 = vmax.f32 %v9668, %v9767
      %v9793 = vmax.f32 %v9673, %v9768
      %v9794 = vmax.f32 %v9678, %v9769
      %v9795 = vmax.f32 %v9683, %v9770
      %v9796 = vmax.f32 %v9688, %v9771
      %v9797 = vmax.f32 %v9693, %v9772
      %v9798 = vmax.f32 %v9698, %v9773
      %v9799 = vmax.f32 %v9703, %v9774
      %v9800 = vmax.f32 %v9708, %v9775
      %v9801 = vmax.f32 %v9713, %v9776
      %v9802 = vmax.f32 %v9718, %v9777
      %v9803 = vmax.f32 %v9723, %v9778
      %v9804 = vmax.f32 %v9728, %v9779
      %v9805 = vmax.f32 %v9733, %v9780
      %v9806 = vmax.f32 %v9738, %v9781
      %v9807 = vmax.f32 %v9743, %v9782
      %v9808 = vmax.f32 %v9748, %v9783
      %v9809 = vmax.f32 %v9753, %v9784
      %v9810 = vmax.f32 %v9758, %v9785
      %9811 = vst [vmem:[%s180] sm:$0xff] %v9786
      %9812 = vst [vmem:[%s180 + $0x8] sm:$0xff] %v9787
      %9813 = vst [vmem:[%s180 + $0x10] sm:$0xff] %v9788
      %9814 = vst [vmem:[%s180 + $0x18] sm:$0xff] %v9789
      %9815 = vst [vmem:[%s180 + $0x20] sm:$0xff] %v9790
      %9816 = vst [vmem:[%s180 + $0x28] sm:$0xff] %v9791
      %9817 = vst [vmem:[%s180 + $0x30] sm:$0xff] %v9792
      %9818 = vst [vmem:[%s180 + $0x38] sm:$0xff] %v9793
      %9819 = vst [vmem:[%s180 + $0x40] sm:$0xff] %v9794
      %9820 = vst [vmem:[%s180 + $0x48] sm:$0xff] %v9795
      %9821 = vst [vmem:[%s180 + $0x50] sm:$0xff] %v9796
      %9822 = vst [vmem:[%s180 + $0x58] sm:$0xff] %v9797
      %9823 = vst [vmem:[%s180 + $0x60] sm:$0xff] %v9798
      %9824 = vst [vmem:[%s180 + $0x68] sm:$0xff] %v9799
      %9825 = vst [vmem:[%s180 + $0x70] sm:$0xff] %v9800
      %9826 = vst [vmem:[%s180 + $0x78] sm:$0xff] %v9801
      %9827 = vst [vmem:[%s180 + $0x80] sm:$0xff] %v9802
      %9828 = vst [vmem:[%s180 + $0x88] sm:$0xff] %v9803
      %9829 = vst [vmem:[%s180 + $0x90] sm:$0xff] %v9804
      %9830 = vst [vmem:[%s180 + $0x98] sm:$0xff] %v9805
      %9831 = vst [vmem:[%s180 + $0xa0] sm:$0xff] %v9806
      %9832 = vst [vmem:[%s180 + $0xa8] sm:$0xff] %v9807
      %9833 = vst [vmem:[%s180 + $0xb0] sm:$0xff] %v9808
      %9834 = vst [vmem:[%s180 + $0xb8] sm:$0xff] %v9809
      %9835 = vst [vmem:[%s180 + $0xc0] sm:$0xf] %v9810
      %p9836 = scmp.lt.s32.totalorder %s17, 1
      %s9837 = scalar_select %p9836, %s17, 1
      %p9838 = scmp.lt.s32.totalorder %s18, 0
      %s9839 = scalar_select %p9838, %s18, 0
      %s9840 = smul.addr %s9837, 25
      %s9841 = sadd.s32 %s9839, %s9840
      %s9842 = smul.addr %s9841, 8
      %s9843 = scalar_lea.vmem %s2, %s9842
      // Predicated region
      $region33: #{tpu_custom_call.1} parent=27 // pred_check
        %p9844 = pneg %p97
      $region34: #{tpu_custom_call.1} parent=27 // pred_check_branch
        %9846 = sbr.rel (%p9844) target = $region36
      $region35: #{tpu_custom_call.1} parent=27 // pred_region
        _
      $region36: #{tpu_custom_call.1} parent=27 // pred_fallthru
        _
    $region28: #{tpu_custom_call.1} parent=5 // pred_fallthru
      _
    %p9847 = scmp.le.s32.totalorder 2, %s8
    // Predicated region
    $region37: #{tpu_custom_call.1} parent=5 // pred_check
      %p9848 = pneg %p9847
    $region38: #{tpu_custom_call.1} parent=5 // pred_check_branch
      %9850 = sbr.rel (%p9848) target = $region40
    $region39: #{tpu_custom_call.1} parent=5 // pred_region
      %s9851 = ssub.s32 %s8, 2
      // Predicated region
      $region41: #{tpu_custom_call.1} parent=39 // pred_check
        %p9852 = pneg %p103
      $region42: #{tpu_custom_call.1} parent=39 // pred_check_branch
        %9854 = sbr.rel (%p9852) target = $region44
      $region43: #{tpu_custom_call.1} parent=39 // pred_region
        %p9855 = scmp.lt.s32.totalorder %s19, 1
        %s9856 = scalar_select %p9855, %s19, 1
        %p9857 = scmp.lt.s32.totalorder %s20, 0
        %s9858 = scalar_select %p9857, %s20, 0
        %s9859 = smul.addr %s9856, 25
        %s9860 = sadd.s32 %s9858, %s9859
        %s9861 = smul.addr %s9860, 8
        %s9862 = scalar_lea.vmem %s2, %s9861
      $region44: #{tpu_custom_call.1} parent=39 // pred_fallthru
        _
    $region40: #{tpu_custom_call.1} parent=5 // pred_fallthru
      _
  $region6: #{tpu_custom_call.1} parent=0 // loop_footer
    %s12 = sadd.s32 1, %s8
  $region7: #{tpu_custom_call.1} parent=0 // loop_footer_branch
    %7 = sbr.rel target = $region3
  $region8: #{tpu_custom_call.1} parent=0 // loop_exit
    _

</llo_original>
